<compile_context>
chip_gen: v5e
topology: v5e:2x2
jax: 0.10.0
libtpu: 0.0.40
codegen_flags: <defaults>
</compile_context>

<pallas_src>
import functools
import math

import jax
import jax.numpy as jnp
from jax.experimental import pallas as pl
from jax.experimental.pallas import tpu as pltpu


# ---------------------------------------------------------------------------
# Per-generation VMEM budget / tile targets
# ---------------------------------------------------------------------------
def _vmem_capacity_bytes():
    try:
        info = pltpu.get_tpu_info()
        cap = getattr(info, "vmem_capacity_bytes", None)
        if cap:
            return int(cap)
    except Exception:
        pass
    return 64 * 1024 * 1024          # conservative (v7x) fallback


_VMEM_CAP = _vmem_capacity_bytes()
# Scoped-VMEM budget: leave headroom for Mosaic-internal scratch.  v5e/v6e
# (128 MiB physical) get a bigger budget than v7x (64 MiB physical).
_VMEM_LIMIT = min(int(_VMEM_CAP * 3 // 4), 100 * 1024 * 1024)
_BIG_VMEM = _VMEM_CAP >= 96 * 1024 * 1024

_TM_TARGET = 512 if _BIG_VMEM else 256       # row (sublane) tile target
_TN_TARGET = 1024 if _BIG_VMEM else 512      # output-lane tile target
_TK_TARGET = 1024 if _BIG_VMEM else 512      # contraction tile target
_ATTN_TQ = 256
_ATTN_TK = 512 if _BIG_VMEM else 256


# ---------------------------------------------------------------------------
# Tiling helpers
# ---------------------------------------------------------------------------
def _pick_tile(dim, target, align):
    """Largest tile <= target that divides `dim` and is `align`-aligned, else full dim.

    Full-extent blocks always satisfy the (8,128) constraint, so falling back to
    `dim` is safe for small / odd sizes (e.g. the demo's E=32, vocab=16).
    """
    if dim <= target:
        return dim
    t = (min(target, dim) // align) * align
    while t >= align:
        if dim % t == 0:
            return t
        t -= align
    return dim


def _row_tile(M, target):
    """Row (sublane) tile: a divisor of M that is a multiple of 8 (or M itself).

    If the row axis would have a single grid step, split it once so every
    'parallel' grid axis gets >=2 steps when cheap (v7x megacore sharding).
    """
    tm = _pick_tile(M, target, 8)
    if tm == M and M % 16 == 0:
        tm = M // 2
    return tm


def _mosaic_params(semantics):
    return pltpu.CompilerParams(dimension_semantics=semantics,
                                vmem_limit_bytes=_VMEM_LIMIT)


# ---------------------------------------------------------------------------
# Linear (tiled, bf16 in/out, f32 accumulator)
# ---------------------------------------------------------------------------
def _linear_kernel(x_ref, w_ref, b_ref, o_ref, acc_ref, *, activation):
    @pl.when(pl.program_id(2) == 0)
    def _():
        acc_ref[...] = jnp.zeros_like(acc_ref)

    acc_ref[...] += jnp.dot(x_ref[...], w_ref[...],
                            preferred_element_type=jnp.float32)

    @pl.when(pl.program_id(2) == pl.num_programs(2) - 1)
    def _():
        y = acc_ref[...] + b_ref[...].astype(jnp.float32)
        if activation == "relu":
            y = jnp.maximum(y, 0.0)
        o_ref[...] = y.astype(o_ref.dtype)


def pallas_linear(x, w, b, activation=None, out_dtype=jnp.bfloat16):
    """x: (M, K) bf16, w: (K, N) bf16 (pre-transposed), b: (N,) f32 -> (M, N)."""
    if x.dtype != jnp.bfloat16:
        x = x.astype(jnp.bfloat16)
    M, K = x.shape
    Kw, N = w.shape
    assert K == Kw, (x.shape, w.shape)
    tm = _row_tile(M, _TM_TARGET)
    tn = _pick_tile(N, _TN_TARGET, 128)
    tk = _pick_tile(K, _TK_TARGET, 128)
    grid = (M // tm, N // tn, K // tk)
    kernel = functools.partial(_linear_kernel, activation=activation)
    return pl.pallas_call(
        kernel,
        out_shape=jax.ShapeDtypeStruct((M, N), out_dtype),
        grid_spec=pltpu.PrefetchScalarGridSpec(
            num_scalar_prefetch=0,
            grid=grid,
            in_specs=[
                pl.BlockSpec((tm, tk), lambda i, j, k: (i, k)),
                pl.BlockSpec((tk, tn), lambda i, j, k: (k, j)),
                pl.BlockSpec((1, tn), lambda i, j, k: (0, j)),
            ],
            out_specs=pl.BlockSpec((tm, tn), lambda i, j, k: (i, j)),
            scratch_shapes=[pltpu.VMEM((tm, tn), jnp.float32)],
        ),
        compiler_params=_mosaic_params(("parallel", "parallel", "arbitrary")),
    )(x, w, b.reshape(1, N))


# ---------------------------------------------------------------------------
# Fused projection with split outputs (QKV / KV) — no HBM-level jnp.split
# ---------------------------------------------------------------------------
def _fused_proj_kernel(x_ref, w_ref, b_ref, *refs, n_out):
    out_refs = refs[:n_out]
    acc_ref = refs[n_out]
    k_idx = pl.program_id(1)

    @pl.when(k_idx == 0)
    def _():
        acc_ref[...] = jnp.zeros_like(acc_ref)

    acc_ref[...] += jnp.dot(x_ref[...], w_ref[...],
                            preferred_element_type=jnp.float32)

    @pl.when(k_idx == pl.num_programs(1) - 1)
    def _():
        y = acc_ref[...] + b_ref[...].astype(jnp.float32)
        n = out_refs[0].shape[-1]
        for idx, o_ref in enumerate(out_refs):
            o_ref[...] = y[:, idx * n:(idx + 1) * n].astype(o_ref.dtype)


def pallas_fused_proj(x, w, b, n_out):
    """x:(M,K) bf16 @ w:(K, n_out*N) bf16 + b, written to n_out (M,N) bf16 outputs."""
    if x.dtype != jnp.bfloat16:
        x = x.astype(jnp.bfloat16)
    M, K = x.shape
    Kw, Ntot = w.shape
    assert K == Kw and Ntot % n_out == 0
    N = Ntot // n_out

    tm_target, tk_target = _TM_TARGET, _TK_TARGET
    while tm_target > 16 and tm_target * Ntot * 4 > 8 * 1024 * 1024:
        tm_target //= 2                      # keep the (tm, n_out*N) f32 accumulator small
    while tk_target > 128 and tk_target * Ntot * 4 > 16 * 1024 * 1024:
        tk_target //= 2                      # keep double-buffered weight blocks small
    tm = _row_tile(M, tm_target)
    tk = _pick_tile(K, tk_target, 128)
    grid = (M // tm, K // tk)
    kernel = functools.partial(_fused_proj_kernel, n_out=n_out)
    outs = pl.pallas_call(
        kernel,
        out_shape=[jax.ShapeDtypeStruct((M, N), jnp.bfloat16) for _ in range(n_out)],
        grid_spec=pltpu.PrefetchScalarGridSpec(
            num_scalar_prefetch=0,
            grid=grid,
            in_specs=[
                pl.BlockSpec((tm, tk), lambda i, k: (i, k)),
                pl.BlockSpec((tk, Ntot), lambda i, k: (k, 0)),
                pl.BlockSpec((1, Ntot), lambda i, k: (0, 0)),
            ],
            out_specs=[pl.BlockSpec((tm, N), lambda i, k: (i, 0))
                       for _ in range(n_out)],
            scratch_shapes=[pltpu.VMEM((tm, Ntot), jnp.float32)],
        ),
        compiler_params=_mosaic_params(("parallel", "arbitrary")),
    )(x, w, b.reshape(1, Ntot))
    return outs


# ---------------------------------------------------------------------------
# Fused feed-forward: relu(x@w1+b1)@w2+b2, hidden never written to HBM
# ---------------------------------------------------------------------------
def _ffn_kernel(x_ref, w1_ref, b1_ref, w2_ref, b2_ref, o_ref, acc_ref):
    j = pl.program_id(1)

    @pl.when(j == 0)
    def _():
        acc_ref[...] = jnp.zeros_like(acc_ref)

    h = jnp.dot(x_ref[...], w1_ref[...], preferred_element_type=jnp.float32)
    h = jnp.maximum(h + b1_ref[...].astype(jnp.float32), 0.0)
    acc_ref[...] += jnp.dot(h.astype(jnp.bfloat16), w2_ref[...],
                            preferred_element_type=jnp.float32)

    @pl.when(j == pl.num_programs(1) - 1)
    def _():
        o_ref[...] = (acc_ref[...] + b2_ref[...].astype(jnp.float32)).astype(o_ref.dtype)


def pallas_ffn(x, w1, b1, w2, b2):
    if x.dtype != jnp.bfloat16:
        x = x.astype(jnp.bfloat16)
    M, E = x.shape
    Ew, dff = w1.shape
    assert E == Ew and w2.shape == (dff, E)

    tdff_target = _TN_TARGET
    while tdff_target > 128 and tdff_target * E * 8 > 24 * 1024 * 1024:
        tdff_target //= 2                    # w1+w2 blocks, double buffered
    tm_target = _TM_TARGET
    while tm_target > 16 and tm_target * E * 8 > 8 * 1024 * 1024:
        tm_target //= 2                      # x blocks + f32 accumulator
    tm = _row_tile(M, tm_target)
    tdff = _pick_tile(dff, tdff_target, 128)
    grid = (M // tm, dff // tdff)
    return pl.pallas_call(
        _ffn_kernel,
        out_shape=jax.ShapeDtypeStruct((M, E), jnp.bfloat16),
        grid_spec=pltpu.PrefetchScalarGridSpec(
            num_scalar_prefetch=0,
            grid=grid,
            in_specs=[
                pl.BlockSpec((tm, E), lambda i, j: (i, 0)),
                pl.BlockSpec((E, tdff), lambda i, j: (0, j)),
                pl.BlockSpec((1, tdff), lambda i, j: (0, j)),
                pl.BlockSpec((tdff, E), lambda i, j: (j, 0)),
                pl.BlockSpec((1, E), lambda i, j: (0, 0)),
            ],
            out_specs=pl.BlockSpec((tm, E), lambda i, j: (i, 0)),
            scratch_shapes=[pltpu.VMEM((tm, E), jnp.float32)],
        ),
        compiler_params=_mosaic_params(("parallel", "arbitrary")),
    )(x, w1, b1.reshape(1, dff), w2, b2.reshape(1, E))


# ---------------------------------------------------------------------------
# LayerNorm (optionally fused with the residual add), bf16 out
# ---------------------------------------------------------------------------
def _ln_kernel(x_ref, g_ref, b_ref, o_ref, *, eps):
    x = x_ref[...].astype(jnp.float32)
    mu = jnp.mean(x, axis=-1, keepdims=True)
    mu2 = jnp.mean(x * x, axis=-1, keepdims=True)      # var = E[x^2] - mu^2 (one pass)
    y = (x - mu) * jax.lax.rsqrt((mu2 - mu * mu) + eps)
    o_ref[...] = (y * g_ref[...] + b_ref[...]).astype(o_ref.dtype)


def _add_ln_kernel(x_ref, r_ref, g_ref, b_ref, o_ref, *, eps):
    x = x_ref[...].astype(jnp.float32) + r_ref[...].astype(jnp.float32)
    mu = jnp.mean(x, axis=-1, keepdims=True)
    mu2 = jnp.mean(x * x, axis=-1, keepdims=True)
    y = (x - mu) * jax.lax.rsqrt((mu2 - mu * mu) + eps)
    o_ref[...] = (y * g_ref[...] + b_ref[...]).astype(o_ref.dtype)


def pallas_layernorm(x, gamma, beta, residual=None, eps=1e-5):
    """x (and optional residual): (M, E) -> LayerNorm(x [+ residual]) in bf16."""
    M, E = x.shape
    tm = _row_tile(M, _TM_TARGET)
    has_res = residual is not None
    kernel = functools.partial(_add_ln_kernel if has_res else _ln_kernel, eps=eps)

    in_specs = [pl.BlockSpec((tm, E), lambda i: (i, 0))]
    args = [x]
    if has_res:
        in_specs.append(pl.BlockSpec((tm, E), lambda i: (i, 0)))
        args.append(residual)
    in_specs += [pl.BlockSpec((1, E), lambda i: (0, 0)),
                 pl.BlockSpec((1, E), lambda i: (0, 0))]
    args += [gamma.reshape(1, E), beta.reshape(1, E)]

    return pl.pallas_call(
        kernel,
        out_shape=jax.ShapeDtypeStruct((M, E), jnp.bfloat16),
        grid_spec=pltpu.PrefetchScalarGridSpec(
            num_scalar_prefetch=0,
            grid=(M // tm,),
            in_specs=in_specs,
            out_specs=pl.BlockSpec((tm, E), lambda i: (i, 0)),
        ),
        compiler_params=_mosaic_params(("parallel",)),
    )(*args)


# ---------------------------------------------------------------------------
# Flash-style multi-head attention (KV grid axis, online softmax)
# ---------------------------------------------------------------------------
def _flash_attn_kernel(q_ref, k_ref, v_ref, o_ref, m_ref, l_ref, acc_ref, *, num_heads):
    """q_ref:(1,tq,E) bf16 (1/sqrt(dh) folded into W_q), k/v:(1,tk,E), o:(1,tq,E).

    Scratch m/l:(H,tq,1) f32 and acc:(H,tq,dh) f32 stay resident across KV steps.
    """
    ki = pl.program_id(2)
    dh = q_ref.shape[-1] // num_heads

    @pl.when(ki == 0)
    def _():
        m_ref[...] = jnp.full(m_ref.shape, -jnp.inf, jnp.float32)
        l_ref[...] = jnp.zeros_like(l_ref)
        acc_ref[...] = jnp.zeros_like(acc_ref)

    q = q_ref[0]
    k = k_ref[0]
    v = v_ref[0]
    for h in range(num_heads):              # static unroll; heads are E-column slices
        sl = slice(h * dh, (h + 1) * dh)
        s = jax.lax.dot_general(q[:, sl], k[:, sl], (((1,), (1,)), ((), ())),
                                preferred_element_type=jnp.float32)   # (tq, tk)
        m_prev = m_ref[h]
        m_new = jnp.maximum(m_prev, jnp.max(s, axis=-1, keepdims=True))
        alpha = jnp.exp(m_prev - m_new)
        p = jnp.exp(s - m_new)
        l_ref[h] = alpha * l_ref[h] + jnp.sum(p, axis=-1, keepdims=True)
        acc_ref[h] = alpha * acc_ref[h] + jnp.dot(
            p.astype(v.dtype), v[:, sl], preferred_element_type=jnp.float32)
        m_ref[h] = m_new

    @pl.when(ki == pl.num_programs(2) - 1)
    def _():
        outs = []
        for h in range(num_heads):
            inv = pl.reciprocal(l_ref[h], approx=True)   # EUP; applied to (tq,dh) output
            outs.append((acc_ref[h] * inv).astype(o_ref.dtype))
        o_ref[0] = jnp.concatenate(outs, axis=-1)        # single lane-dense (tq,E) store


def pallas_attention(q, k, v, num_heads):
    """q: (B, Lq, E) bf16, k/v: (B, Lk, E) bf16 -> (B, Lq, E) bf16."""
    B, Lq, E = q.shape
    Lk = k.shape[1]
    assert E % num_heads == 0
    dh = E // num_heads
    tq = _pick_tile(Lq, _ATTN_TQ, 8)
    tk = _pick_tile(Lk, _ATTN_TK, 8)
    grid = (B, Lq // tq, Lk // tk)
    kernel = functools.partial(_flash_attn_kernel, num_heads=num_heads)
    return pl.pallas_call(
        kernel,
        out_shape=jax.ShapeDtypeStruct((B, Lq, E), jnp.bfloat16),
        grid_spec=pltpu.PrefetchScalarGridSpec(
            num_scalar_prefetch=0,
            grid=grid,
            in_specs=[
                pl.BlockSpec((1, tq, E), lambda b, qi, ki: (b, qi, 0)),
                pl.BlockSpec((1, tk, E), lambda b, qi, ki: (b, ki, 0)),
                pl.BlockSpec((1, tk, E), lambda b, qi, ki: (b, ki, 0)),
            ],
            out_specs=pl.BlockSpec((1, tq, E), lambda b, qi, ki: (b, qi, 0)),
            scratch_shapes=[
                pltpu.VMEM((num_heads, tq, 1), jnp.float32),    # running max
                pltpu.VMEM((num_heads, tq, 1), jnp.float32),    # running denom
                pltpu.VMEM((num_heads, tq, dh), jnp.float32),   # running output
            ],
        ),
        compiler_params=_mosaic_params(("parallel", "parallel", "arbitrary")),
    )(q, k, v)


# ---------------------------------------------------------------------------
# Model building blocks (glue in plain JAX, hot path in Pallas)
# ---------------------------------------------------------------------------
def self_attention(p, x, num_heads):
    B, L, E = x.shape
    q, k, v = pallas_fused_proj(x.reshape(B * L, E), p["w_qkv"], p["b_qkv"], n_out=3)
    attn = pallas_attention(q.reshape(B, L, E), k.reshape(B, L, E),
                            v.reshape(B, L, E), num_heads)
    out = pallas_linear(attn.reshape(B * L, E), p["w_out"], p["b_out"])
    return out.reshape(B, L, E)


def cross_attention(p, x, memory, num_heads):
    B, Lq, E = x.shape
    Lk = memory.shape[1]
    q = pallas_linear(x.reshape(B * Lq, E), p["w_q"], p["b_q"])
    k, v = pallas_fused_proj(memory.reshape(B * Lk, E), p["w_kv"], p["b_kv"], n_out=2)
    attn = pallas_attention(q.reshape(B, Lq, E), k.reshape(B, Lk, E),
                            v.reshape(B, Lk, E), num_heads)
    out = pallas_linear(attn.reshape(B * Lq, E), p["w_out"], p["b_out"])
    return out.reshape(B, Lq, E)


def add_layer_norm(p, x, sublayer, eps=1e-5):
    """LayerNorm(x + sublayer) with the residual add fused into the kernel."""
    B, L, E = x.shape
    y = pallas_layernorm(sublayer.reshape(B * L, E), p["weight"], p["bias"],
                         residual=x.reshape(B * L, E), eps=eps)
    return y.reshape(B, L, E)


def final_layer_norm(p, x, eps=1e-5):
    B, L, E = x.shape
    return pallas_layernorm(x.reshape(B * L, E), p["weight"], p["bias"],
                            eps=eps).reshape(B, L, E)


def feed_forward(p, x):
    B, L, E = x.shape
    y = pallas_ffn(x.reshape(B * L, E), p["w1"], p["b1"], p["w2"], p["b2"])
    return y.reshape(B, L, E)


def encoder_layer(p, x, num_heads):
    sa = self_attention(p["self_attn"], x, num_heads)
    x = add_layer_norm(p["norm1"], x, sa)
    ff = feed_forward(p, x)
    x = add_layer_norm(p["norm2"], x, ff)
    return x


def decoder_layer(p, x, memory, num_heads):
    sa = self_attention(p["self_attn"], x, num_heads)
    x = add_layer_norm(p["norm1"], x, sa)
    ca = cross_attention(p["multihead_attn"], x, memory, num_heads)
    x = add_layer_norm(p["norm2"], x, ca)
    ff = feed_forward(p, x)
    x = add_layer_norm(p["norm3"], x, ff)
    return x


def positional_encoding(max_len, E):
    pos = jnp.arange(max_len, dtype=jnp.float32)[:, None]
    div = jnp.exp(jnp.arange(0, E, 2, dtype=jnp.float32) * (-math.log(10000.0) / E))
    pe = jnp.zeros((max_len, E), jnp.float32)
    pe = pe.at[:, 0::2].set(jnp.sin(pos * div))
    pe = pe.at[:, 1::2].set(jnp.cos(pos * div))
    return pe


def transformer_forward(params, src_ids, tgt_ids, num_heads):
    E = params["embedding"].shape[1]
    scale = math.sqrt(E)
    pe = params["pe"]

    # Batch-major (B, L, E) activations: attention is indexed per batch via BlockSpec,
    # so no HBM head transposes and no input/output batch transposes are needed.
    src = jnp.take(params["embedding"], src_ids, axis=0) * scale     # (B, S, E) f32
    src = (src + pe[None, : src.shape[1], :]).astype(jnp.bfloat16)
    tgt = jnp.take(params["embedding"], tgt_ids, axis=0) * scale     # (B, T, E)
    tgt = (tgt + pe[None, : tgt.shape[1], :]).astype(jnp.bfloat16)

    mem = src
    for lp in params["encoder_layers"]:
        mem = encoder_layer(lp, mem, num_heads)
    mem = final_layer_norm(params["encoder_norm"], mem)

    out = tgt
    for lp in params["decoder_layers"]:
        out = decoder_layer(lp, out, mem, num_heads)
    out = final_layer_norm(params["decoder_norm"], out)

    B, T, _ = out.shape
    logits = pallas_linear(out.reshape(B * T, E), params["fc_out_w"],
                           params["fc_out_b"], out_dtype=jnp.float32)
    return logits.reshape(B, T, -1)                                   # (B, T, vocab)


# ---------------------------------------------------------------------------
# Deterministic parameter init (shapes follow the PyTorch module).
# Matmul weights are stored PRE-TRANSPOSED to (in, out) layout and cast to bf16
# once at init (PyTorch keeps (out, in)); the attention softmax scale 1/sqrt(dh)
# is folded into W_q (and would be into b_q, which is zero here) at init time.
# ---------------------------------------------------------------------------
def init_params(key, vocab, E, num_heads, num_layers, dff, max_len=64):
    assert E % num_heads == 0
    dh = E // num_heads
    qscale = 1.0 / math.sqrt(dh)
    keys = iter(jax.random.split(key, 1024))

    def wf32(shape, s=0.02):
        return jax.random.normal(next(keys), shape, jnp.float32) * s

    def wbf16(shape, s=0.02):
        return wf32(shape, s).astype(jnp.bfloat16)

    def zeros(shape):
        return jnp.zeros(shape, jnp.float32)

    def self_attn_p():
        w = wf32((E, 3 * E))
        w = w.at[:, :E].multiply(qscale)          # fold 1/sqrt(dh) into W_q
        return dict(w_qkv=w.astype(jnp.bfloat16), b_qkv=zeros((3 * E,)),
                    w_out=wbf16((E, E)), b_out=zeros((E,)))

    def cross_attn_p():
        return dict(w_q=(wf32((E, E)) * qscale).astype(jnp.bfloat16), b_q=zeros((E,)),
                    w_kv=wbf16((E, 2 * E)), b_kv=zeros((2 * E,)),
                    w_out=wbf16((E, E)), b_out=zeros((E,)))

    def ln_p():
        return dict(weight=jnp.ones((E,), jnp.float32), bias=zeros((E,)))

    def enc_layer():
        return dict(self_attn=self_attn_p(),
                    w1=wbf16((E, dff)), b1=zeros((dff,)),
                    w2=wbf16((dff, E)), b2=zeros((E,)),
                    norm1=ln_p(), norm2=ln_p())

    def dec_layer():
        return dict(self_attn=self_attn_p(), multihead_attn=cross_attn_p(),
                    w1=wbf16((E, dff)), b1=zeros((dff,)),
                    w2=wbf16((dff, E)), b2=zeros((E,)),
                    norm1=ln_p(), norm2=ln_p(), norm3=ln_p())

    emb = wf32((vocab, E), 1.0)
    emb = emb.at[0].set(0.0)   # padding_idx row zeroed (nn.Embedding padding_idx)

    return dict(
        embedding=emb,
        pe=positional_encoding(max_len, E),
        encoder_layers=[enc_layer() for _ in range(num_layers)],
        decoder_layers=[dec_layer() for _ in range(num_layers)],
        encoder_norm=ln_p(),
        decoder_norm=ln_p(),
        fc_out_w=wbf16((E, vocab)),
        fc_out_b=zeros((vocab,)),
    )


# ---------------------------------------------------------------------------
if __name__ == "__main__":
    vocab_size, embedding_dim, num_heads, num_layers, dim_feedforward = 16, 32, 4, 2, 64
    B, S, T = 2, 8, 8

    key = jax.random.PRNGKey(0)
    pkey, skey, tkey = jax.random.split(key, 3)
    params = init_params(pkey, vocab_size, embedding_dim, num_heads, num_layers,
                         dim_feedforward)

    src = jax.random.randint(skey, (B, S), 0, vocab_size, dtype=jnp.int32)
    tgt = jax.random.randint(tkey, (B, T), 0, vocab_size, dtype=jnp.int32)

    fwd = jax.jit(functools.partial(transformer_forward, num_heads=num_heads))
    out = jax.block_until_ready(fwd(params, src, tgt))

    assert out.shape == (B, T, vocab_size), out.shape
    assert bool(jnp.all(jnp.isfinite(out)))
    print("KERNEL_OK")
</pallas_src>

<mosaic_0001>
module attributes {stable_mosaic.version = 11 : i64} {
  func.func @_flash_attn_kernel(%arg0: i32, %arg1: i32, %arg2: i32, %arg3: memref<1x8x32xbf16, #tpu.memory_space<vmem>>, %arg4: memref<1x8x32xbf16, #tpu.memory_space<vmem>>, %arg5: memref<1x8x32xbf16, #tpu.memory_space<vmem>>, %arg6: memref<1x8x32xbf16, #tpu.memory_space<vmem>>, %arg7: memref<4x8x1xf32, #tpu.memory_space<vmem>>, %arg8: memref<4x8x1xf32, #tpu.memory_space<vmem>>, %arg9: memref<4x8x8xf32, #tpu.memory_space<vmem>>) attributes {dimension_semantics = [#tpu.dimension_semantics<parallel>, #tpu.dimension_semantics<parallel>, #tpu.dimension_semantics<arbitrary>], iteration_bounds = array<i64: 2, 1, 1>, scalar_prefetch = 0 : i64, scratch_operands = 3 : i64, tpu.core_type = #tpu.core_type<tc>, window_params = [{transform_indices = @transform_0, window_bounds = array<i64: 1, 8, 32>}, {transform_indices = @transform_1, window_bounds = array<i64: 1, 8, 32>}, {transform_indices = @transform_2, window_bounds = array<i64: 1, 8, 32>}, {transform_indices = @transform_3, window_bounds = array<i64: 1, 8, 32>}]} {
    %c0_i32 = arith.constant 0 : i32
    %0 = arith.cmpi eq, %arg2, %c0_i32 : i32
    %1 = arith.extui %0 : i1 to i32
    %c0_i32_0 = arith.constant 0 : i32
    %2 = arith.cmpi ne, %1, %c0_i32_0 : i32
    scf.if %2 {
      %cst_95 = arith.constant 0xFF800000 : f32
      %156 = vector.broadcast %cst_95 : f32 to vector<4x8x1xf32>
      %c0_96 = arith.constant 0 : index
      %c0_97 = arith.constant 0 : index
      %c0_98 = arith.constant 0 : index
      %157 = vector.load %arg7[%c0_96, %c0_97, %c0_98] : memref<4x8x1xf32, #tpu.memory_space<vmem>>, vector<4x8x1xf32>
      tpu.vector_store %arg7[%c0_96, %c0_97, %c0_98], %156 {strides = array<i32>} : memref<4x8x1xf32, #tpu.memory_space<vmem>>, vector<4x8x1xf32>,
      %cst_99 = arith.constant 0.000000e+00 : f32
      %158 = vector.broadcast %cst_99 : f32 to vector<4x8x1xf32>
      %c0_100 = arith.constant 0 : index
      %c0_101 = arith.constant 0 : index
      %c0_102 = arith.constant 0 : index
      %159 = vector.load %arg8[%c0_100, %c0_101, %c0_102] : memref<4x8x1xf32, #tpu.memory_space<vmem>>, vector<4x8x1xf32>
      tpu.vector_store %arg8[%c0_100, %c0_101, %c0_102], %158 {strides = array<i32>} : memref<4x8x1xf32, #tpu.memory_space<vmem>>, vector<4x8x1xf32>,
      %cst_103 = arith.constant 0.000000e+00 : f32
      %160 = vector.broadcast %cst_103 : f32 to vector<4x8x8xf32>
      %c0_104 = arith.constant 0 : index
      %c0_105 = arith.constant 0 : index
      %c0_106 = arith.constant 0 : index
      %161 = vector.load %arg9[%c0_104, %c0_105, %c0_106] : memref<4x8x8xf32, #tpu.memory_space<vmem>>, vector<4x8x8xf32>
      tpu.vector_store %arg9[%c0_104, %c0_105, %c0_106], %160 {strides = array<i32>} : memref<4x8x8xf32, #tpu.memory_space<vmem>>, vector<4x8x8xf32>,
    } else {
    }
    %c0 = arith.constant 0 : index
    %c0_1 = arith.constant 0 : index
    %c0_2 = arith.constant 0 : index
    %3 = vector.load %arg3[%c0, %c0_1, %c0_2] : memref<1x8x32xbf16, #tpu.memory_space<vmem>>, vector<1x8x32xbf16>
    %4 = vector.shape_cast %3 : vector<1x8x32xbf16> to vector<8x32xbf16>
    %c0_3 = arith.constant 0 : index
    %c0_4 = arith.constant 0 : index
    %c0_5 = arith.constant 0 : index
    %5 = vector.load %arg4[%c0_3, %c0_4, %c0_5] : memref<1x8x32xbf16, #tpu.memory_space<vmem>>, vector<1x8x32xbf16>
    %6 = vector.shape_cast %5 : vector<1x8x32xbf16> to vector<8x32xbf16>
    %c0_6 = arith.constant 0 : index
    %c0_7 = arith.constant 0 : index
    %c0_8 = arith.constant 0 : index
    %7 = vector.load %arg5[%c0_6, %c0_7, %c0_8] : memref<1x8x32xbf16, #tpu.memory_space<vmem>>, vector<1x8x32xbf16>
    %8 = vector.shape_cast %7 : vector<1x8x32xbf16> to vector<8x32xbf16>
    %9 = vector.extract_strided_slice %4 {offsets = [0, 0], sizes = [8, 8], strides = [1, 1]} : vector<8x32xbf16> to vector<8x8xbf16>
    %10 = vector.extract_strided_slice %6 {offsets = [0, 0], sizes = [8, 8], strides = [1, 1]} : vector<8x32xbf16> to vector<8x8xbf16>
    %cst = arith.constant dense<0.000000e+00> : vector<8x8xf32>
    %11 = tpu.matmul %9, %10, %cst {dimension_numbers = #tpu.dot_dimension_numbers<[1], [1], [0], [0], [0, 0, 1, 0], [], []>} : vector<8x8xbf16>, vector<8x8xbf16>, vector<8x8xf32> -> vector<8x8xf32>
    %c0_9 = arith.constant 0 : index
    %c0_10 = arith.constant 0 : index
    %c0_11 = arith.constant 0 : index
    %12 = vector.load %arg7[%c0_9, %c0_10, %c0_11] : memref<4x8x1xf32, #tpu.memory_space<vmem>>, vector<1x8x1xf32>
    %13 = vector.shape_cast %12 : vector<1x8x1xf32> to vector<8x1xf32>
    %cst_12 = arith.constant dense<0xFF800000> : vector<8xf32>
    %14 = vector.multi_reduction <maximumf>, %11, %cst_12 [1] : vector<8x8xf32> to vector<8xf32>
    %15 = vector.shape_cast %14 : vector<8xf32> to vector<8x1xf32>
    %16 = arith.maximumf %13, %15 : vector<8x1xf32>
    %17 = arith.subf %13, %16 : vector<8x1xf32>
    %18 = math.exp %17 : vector<8x1xf32>
    %19 = vector.broadcast %16 : vector<8x1xf32> to vector<8x8xf32>
    %20 = arith.subf %11, %19 : vector<8x8xf32>
    %21 = math.exp %20 : vector<8x8xf32>
    %c0_13 = arith.constant 0 : index
    %c0_14 = arith.constant 0 : index
    %c0_15 = arith.constant 0 : index
    %22 = vector.load %arg8[%c0_13, %c0_14, %c0_15] : memref<4x8x1xf32, #tpu.memory_space<vmem>>, vector<1x8x1xf32>
    %23 = vector.shape_cast %22 : vector<1x8x1xf32> to vector<8x1xf32>
    %24 = arith.mulf %18, %23 : vector<8x1xf32>
    %cst_16 = arith.constant dense<0.000000e+00> : vector<8xf32>
    %25 = vector.multi_reduction <add>, %21, %cst_16 [1] : vector<8x8xf32> to vector<8xf32>
    %26 = vector.shape_cast %25 : vector<8xf32> to vector<8x1xf32>
    %27 = arith.addf %24, %26 : vector<8x1xf32>
    %c0_17 = arith.constant 0 : index
    %c0_18 = arith.constant 0 : index
    %c0_19 = arith.constant 0 : index
    %28 = vector.load %arg8[%c0_17, %c0_18, %c0_19] : memref<4x8x1xf32, #tpu.memory_space<vmem>>, vector<1x8x1xf32>
    %29 = vector.shape_cast %28 : vector<1x8x1xf32> to vector<8x1xf32>
    %30 = vector.shape_cast %27 : vector<8x1xf32> to vector<1x8x1xf32>
    tpu.vector_store %arg8[%c0_17, %c0_18, %c0_19], %30 {strides = array<i32>} : memref<4x8x1xf32, #tpu.memory_space<vmem>>, vector<1x8x1xf32>,
    %c0_20 = arith.constant 0 : index
    %c0_21 = arith.constant 0 : index
    %c0_22 = arith.constant 0 : index
    %31 = vector.load %arg9[%c0_20, %c0_21, %c0_22] : memref<4x8x8xf32, #tpu.memory_space<vmem>>, vector<1x8x8xf32>
    %32 = vector.shape_cast %31 : vector<1x8x8xf32> to vector<8x8xf32>
    %33 = vector.broadcast %18 : vector<8x1xf32> to vector<8x8xf32>
    %34 = arith.mulf %33, %32 : vector<8x8xf32>
    %35 = arith.truncf %21 : vector<8x8xf32> to vector<8x8xbf16>
    %36 = vector.extract_strided_slice %8 {offsets = [0, 0], sizes = [8, 8], strides = [1, 1]} : vector<8x32xbf16> to vector<8x8xbf16>
    %cst_23 = arith.constant dense<0.000000e+00> : vector<8x8xf32>
    %37 = tpu.matmul %35, %36, %cst_23 {dimension_numbers = #tpu.dot_dimension_numbers<[1], [0], [0], [1], [0, 0, 1, 1], [], []>} : vector<8x8xbf16>, vector<8x8xbf16>, vector<8x8xf32> -> vector<8x8xf32>
    %38 = arith.addf %34, %37 : vector<8x8xf32>
    %c0_24 = arith.constant 0 : index
    %c0_25 = arith.constant 0 : index
    %c0_26 = arith.constant 0 : index
    %39 = vector.load %arg9[%c0_24, %c0_25, %c0_26] : memref<4x8x8xf32, #tpu.memory_space<vmem>>, vector<1x8x8xf32>
    %40 = vector.shape_cast %39 : vector<1x8x8xf32> to vector<8x8xf32>
    %41 = vector.shape_cast %38 : vector<8x8xf32> to vector<1x8x8xf32>
    tpu.vector_store %arg9[%c0_24, %c0_25, %c0_26], %41 {strides = array<i32>} : memref<4x8x8xf32, #tpu.memory_space<vmem>>, vector<1x8x8xf32>,
    %c0_27 = arith.constant 0 : index
    %c0_28 = arith.constant 0 : index
    %c0_29 = arith.constant 0 : index
    %42 = vector.load %arg7[%c0_27, %c0_28, %c0_29] : memref<4x8x1xf32, #tpu.memory_space<vmem>>, vector<1x8x1xf32>
    %43 = vector.shape_cast %42 : vector<1x8x1xf32> to vector<8x1xf32>
    %44 = vector.shape_cast %16 : vector<8x1xf32> to vector<1x8x1xf32>
    tpu.vector_store %arg7[%c0_27, %c0_28, %c0_29], %44 {strides = array<i32>} : memref<4x8x1xf32, #tpu.memory_space<vmem>>, vector<1x8x1xf32>,
    %45 = vector.extract_strided_slice %4 {offsets = [0, 8], sizes = [8, 8], strides = [1, 1]} : vector<8x32xbf16> to vector<8x8xbf16>
    %46 = vector.extract_strided_slice %6 {offsets = [0, 8], sizes = [8, 8], strides = [1, 1]} : vector<8x32xbf16> to vector<8x8xbf16>
    %cst_30 = arith.constant dense<0.000000e+00> : vector<8x8xf32>
    %47 = tpu.matmul %45, %46, %cst_30 {dimension_numbers = #tpu.dot_dimension_numbers<[1], [1], [0], [0], [0, 0, 1, 0], [], []>} : vector<8x8xbf16>, vector<8x8xbf16>, vector<8x8xf32> -> vector<8x8xf32>
    %c1 = arith.constant 1 : index
    %c0_31 = arith.constant 0 : index
    %c0_32 = arith.constant 0 : index
    %48 = vector.load %arg7[%c1, %c0_31, %c0_32] : memref<4x8x1xf32, #tpu.memory_space<vmem>>, vector<1x8x1xf32>
    %49 = vector.shape_cast %48 : vector<1x8x1xf32> to vector<8x1xf32>
    %cst_33 = arith.constant dense<0xFF800000> : vector<8xf32>
    %50 = vector.multi_reduction <maximumf>, %47, %cst_33 [1] : vector<8x8xf32> to vector<8xf32>
    %51 = vector.shape_cast %50 : vector<8xf32> to vector<8x1xf32>
    %52 = arith.maximumf %49, %51 : vector<8x1xf32>
    %53 = arith.subf %49, %52 : vector<8x1xf32>
    %54 = math.exp %53 : vector<8x1xf32>
    %55 = vector.broadcast %52 : vector<8x1xf32> to vector<8x8xf32>
    %56 = arith.subf %47, %55 : vector<8x8xf32>
    %57 = math.exp %56 : vector<8x8xf32>
    %c1_34 = arith.constant 1 : index
    %c0_35 = arith.constant 0 : index
    %c0_36 = arith.constant 0 : index
    %58 = vector.load %arg8[%c1_34, %c0_35, %c0_36] : memref<4x8x1xf32, #tpu.memory_space<vmem>>, vector<1x8x1xf32>
    %59 = vector.shape_cast %58 : vector<1x8x1xf32> to vector<8x1xf32>
    %60 = arith.mulf %54, %59 : vector<8x1xf32>
    %cst_37 = arith.constant dense<0.000000e+00> : vector<8xf32>
    %61 = vector.multi_reduction <add>, %57, %cst_37 [1] : vector<8x8xf32> to vector<8xf32>
    %62 = vector.shape_cast %61 : vector<8xf32> to vector<8x1xf32>
    %63 = arith.addf %60, %62 : vector<8x1xf32>
    %c1_38 = arith.constant 1 : index
    %c0_39 = arith.constant 0 : index
    %c0_40 = arith.constant 0 : index
    %64 = vector.load %arg8[%c1_38, %c0_39, %c0_40] : memref<4x8x1xf32, #tpu.memory_space<vmem>>, vector<1x8x1xf32>
    %65 = vector.shape_cast %64 : vector<1x8x1xf32> to vector<8x1xf32>
    %66 = vector.shape_cast %63 : vector<8x1xf32> to vector<1x8x1xf32>
    tpu.vector_store %arg8[%c1_38, %c0_39, %c0_40], %66 {strides = array<i32>} : memref<4x8x1xf32, #tpu.memory_space<vmem>>, vector<1x8x1xf32>,
    %c1_41 = arith.constant 1 : index
    %c0_42 = arith.constant 0 : index
    %c0_43 = arith.constant 0 : index
    %67 = vector.load %arg9[%c1_41, %c0_42, %c0_43] : memref<4x8x8xf32, #tpu.memory_space<vmem>>, vector<1x8x8xf32>
    %68 = vector.shape_cast %67 : vector<1x8x8xf32> to vector<8x8xf32>
    %69 = vector.broadcast %54 : vector<8x1xf32> to vector<8x8xf32>
    %70 = arith.mulf %69, %68 : vector<8x8xf32>
    %71 = arith.truncf %57 : vector<8x8xf32> to vector<8x8xbf16>
    %72 = vector.extract_strided_slice %8 {offsets = [0, 8], sizes = [8, 8], strides = [1, 1]} : vector<8x32xbf16> to vector<8x8xbf16>
    %cst_44 = arith.constant dense<0.000000e+00> : vector<8x8xf32>
    %73 = tpu.matmul %71, %72, %cst_44 {dimension_numbers = #tpu.dot_dimension_numbers<[1], [0], [0], [1], [0, 0, 1, 1], [], []>} : vector<8x8xbf16>, vector<8x8xbf16>, vector<8x8xf32> -> vector<8x8xf32>
    %74 = arith.addf %70, %73 : vector<8x8xf32>
    %c1_45 = arith.constant 1 : index
    %c0_46 = arith.constant 0 : index
    %c0_47 = arith.constant 0 : index
    %75 = vector.load %arg9[%c1_45, %c0_46, %c0_47] : memref<4x8x8xf32, #tpu.memory_space<vmem>>, vector<1x8x8xf32>
    %76 = vector.shape_cast %75 : vector<1x8x8xf32> to vector<8x8xf32>
    %77 = vector.shape_cast %74 : vector<8x8xf32> to vector<1x8x8xf32>
    tpu.vector_store %arg9[%c1_45, %c0_46, %c0_47], %77 {strides = array<i32>} : memref<4x8x8xf32, #tpu.memory_space<vmem>>, vector<1x8x8xf32>,
    %c1_48 = arith.constant 1 : index
    %c0_49 = arith.constant 0 : index
    %c0_50 = arith.constant 0 : index
    %78 = vector.load %arg7[%c1_48, %c0_49, %c0_50] : memref<4x8x1xf32, #tpu.memory_space<vmem>>, vector<1x8x1xf32>
    %79 = vector.shape_cast %78 : vector<1x8x1xf32> to vector<8x1xf32>
    %80 = vector.shape_cast %52 : vector<8x1xf32> to vector<1x8x1xf32>
    tpu.vector_store %arg7[%c1_48, %c0_49, %c0_50], %80 {strides = array<i32>} : memref<4x8x1xf32, #tpu.memory_space<vmem>>, vector<1x8x1xf32>,
    %81 = vector.extract_strided_slice %4 {offsets = [0, 16], sizes = [8, 8], strides = [1, 1]} : vector<8x32xbf16> to vector<8x8xbf16>
    %82 = vector.extract_strided_slice %6 {offsets = [0, 16], sizes = [8, 8], strides = [1, 1]} : vector<8x32xbf16> to vector<8x8xbf16>
    %cst_51 = arith.constant dense<0.000000e+00> : vector<8x8xf32>
    %83 = tpu.matmul %81, %82, %cst_51 {dimension_numbers = #tpu.dot_dimension_numbers<[1], [1], [0], [0], [0, 0, 1, 0], [], []>} : vector<8x8xbf16>, vector<8x8xbf16>, vector<8x8xf32> -> vector<8x8xf32>
    %c2 = arith.constant 2 : index
    %c0_52 = arith.constant 0 : index
    %c0_53 = arith.constant 0 : index
    %84 = vector.load %arg7[%c2, %c0_52, %c0_53] : memref<4x8x1xf32, #tpu.memory_space<vmem>>, vector<1x8x1xf32>
    %85 = vector.shape_cast %84 : vector<1x8x1xf32> to vector<8x1xf32>
    %cst_54 = arith.constant dense<0xFF800000> : vector<8xf32>
    %86 = vector.multi_reduction <maximumf>, %83, %cst_54 [1] : vector<8x8xf32> to vector<8xf32>
    %87 = vector.shape_cast %86 : vector<8xf32> to vector<8x1xf32>
    %88 = arith.maximumf %85, %87 : vector<8x1xf32>
    %89 = arith.subf %85, %88 : vector<8x1xf32>
    %90 = math.exp %89 : vector<8x1xf32>
    %91 = vector.broadcast %88 : vector<8x1xf32> to vector<8x8xf32>
    %92 = arith.subf %83, %91 : vector<8x8xf32>
    %93 = math.exp %92 : vector<8x8xf32>
    %c2_55 = arith.constant 2 : index
    %c0_56 = arith.constant 0 : index
    %c0_57 = arith.constant 0 : index
    %94 = vector.load %arg8[%c2_55, %c0_56, %c0_57] : memref<4x8x1xf32, #tpu.memory_space<vmem>>, vector<1x8x1xf32>
    %95 = vector.shape_cast %94 : vector<1x8x1xf32> to vector<8x1xf32>
    %96 = arith.mulf %90, %95 : vector<8x1xf32>
    %cst_58 = arith.constant dense<0.000000e+00> : vector<8xf32>
    %97 = vector.multi_reduction <add>, %93, %cst_58 [1] : vector<8x8xf32> to vector<8xf32>
    %98 = vector.shape_cast %97 : vector<8xf32> to vector<8x1xf32>
    %99 = arith.addf %96, %98 : vector<8x1xf32>
    %c2_59 = arith.constant 2 : index
    %c0_60 = arith.constant 0 : index
    %c0_61 = arith.constant 0 : index
    %100 = vector.load %arg8[%c2_59, %c0_60, %c0_61] : memref<4x8x1xf32, #tpu.memory_space<vmem>>, vector<1x8x1xf32>
    %101 = vector.shape_cast %100 : vector<1x8x1xf32> to vector<8x1xf32>
    %102 = vector.shape_cast %99 : vector<8x1xf32> to vector<1x8x1xf32>
    tpu.vector_store %arg8[%c2_59, %c0_60, %c0_61], %102 {strides = array<i32>} : memref<4x8x1xf32, #tpu.memory_space<vmem>>, vector<1x8x1xf32>,
    %c2_62 = arith.constant 2 : index
    %c0_63 = arith.constant 0 : index
    %c0_64 = arith.constant 0 : index
    %103 = vector.load %arg9[%c2_62, %c0_63, %c0_64] : memref<4x8x8xf32, #tpu.memory_space<vmem>>, vector<1x8x8xf32>
    %104 = vector.shape_cast %103 : vector<1x8x8xf32> to vector<8x8xf32>
    %105 = vector.broadcast %90 : vector<8x1xf32> to vector<8x8xf32>
    %106 = arith.mulf %105, %104 : vector<8x8xf32>
    %107 = arith.truncf %93 : vector<8x8xf32> to vector<8x8xbf16>
    %108 = vector.extract_strided_slice %8 {offsets = [0, 16], sizes = [8, 8], strides = [1, 1]} : vector<8x32xbf16> to vector<8x8xbf16>
    %cst_65 = arith.constant dense<0.000000e+00> : vector<8x8xf32>
    %109 = tpu.matmul %107, %108, %cst_65 {dimension_numbers = #tpu.dot_dimension_numbers<[1], [0], [0], [1], [0, 0, 1, 1], [], []>} : vector<8x8xbf16>, vector<8x8xbf16>, vector<8x8xf32> -> vector<8x8xf32>
    %110 = arith.addf %106, %109 : vector<8x8xf32>
    %c2_66 = arith.constant 2 : index
    %c0_67 = arith.constant 0 : index
    %c0_68 = arith.constant 0 : index
    %111 = vector.load %arg9[%c2_66, %c0_67, %c0_68] : memref<4x8x8xf32, #tpu.memory_space<vmem>>, vector<1x8x8xf32>
    %112 = vector.shape_cast %111 : vector<1x8x8xf32> to vector<8x8xf32>
    %113 = vector.shape_cast %110 : vector<8x8xf32> to vector<1x8x8xf32>
    tpu.vector_store %arg9[%c2_66, %c0_67, %c0_68], %113 {strides = array<i32>} : memref<4x8x8xf32, #tpu.memory_space<vmem>>, vector<1x8x8xf32>,
    %c2_69 = arith.constant 2 : index
    %c0_70 = arith.constant 0 : index
    %c0_71 = arith.constant 0 : index
    %114 = vector.load %arg7[%c2_69, %c0_70, %c0_71] : memref<4x8x1xf32, #tpu.memory_space<vmem>>, vector<1x8x1xf32>
    %115 = vector.shape_cast %114 : vector<1x8x1xf32> to vector<8x1xf32>
    %116 = vector.shape_cast %88 : vector<8x1xf32> to vector<1x8x1xf32>
    tpu.vector_store %arg7[%c2_69, %c0_70, %c0_71], %116 {strides = array<i32>} : memref<4x8x1xf32, #tpu.memory_space<vmem>>, vector<1x8x1xf32>,
    %117 = vector.extract_strided_slice %4 {offsets = [0, 24], sizes = [8, 8], strides = [1, 1]} : vector<8x32xbf16> to vector<8x8xbf16>
    %118 = vector.extract_strided_slice %6 {offsets = [0, 24], sizes = [8, 8], strides = [1, 1]} : vector<8x32xbf16> to vector<8x8xbf16>
    %cst_72 = arith.constant dense<0.000000e+00> : vector<8x8xf32>
    %119 = tpu.matmul %117, %118, %cst_72 {dimension_numbers = #tpu.dot_dimension_numbers<[1], [1], [0], [0], [0, 0, 1, 0], [], []>} : vector<8x8xbf16>, vector<8x8xbf16>, vector<8x8xf32> -> vector<8x8xf32>
    %c3 = arith.constant 3 : index
    %c0_73 = arith.constant 0 : index
    %c0_74 = arith.constant 0 : index
    %120 = vector.load %arg7[%c3, %c0_73, %c0_74] : memref<4x8x1xf32, #tpu.memory_space<vmem>>, vector<1x8x1xf32>
    %121 = vector.shape_cast %120 : vector<1x8x1xf32> to vector<8x1xf32>
    %cst_75 = arith.constant dense<0xFF800000> : vector<8xf32>
    %122 = vector.multi_reduction <maximumf>, %119, %cst_75 [1] : vector<8x8xf32> to vector<8xf32>
    %123 = vector.shape_cast %122 : vector<8xf32> to vector<8x1xf32>
    %124 = arith.maximumf %121, %123 : vector<8x1xf32>
    %125 = arith.subf %121, %124 : vector<8x1xf32>
    %126 = math.exp %125 : vector<8x1xf32>
    %127 = vector.broadcast %124 : vector<8x1xf32> to vector<8x8xf32>
    %128 = arith.subf %119, %127 : vector<8x8xf32>
    %129 = math.exp %128 : vector<8x8xf32>
    %c3_76 = arith.constant 3 : index
    %c0_77 = arith.constant 0 : index
    %c0_78 = arith.constant 0 : index
    %130 = vector.load %arg8[%c3_76, %c0_77, %c0_78] : memref<4x8x1xf32, #tpu.memory_space<vmem>>, vector<1x8x1xf32>
    %131 = vector.shape_cast %130 : vector<1x8x1xf32> to vector<8x1xf32>
    %132 = arith.mulf %126, %131 : vector<8x1xf32>
    %cst_79 = arith.constant dense<0.000000e+00> : vector<8xf32>
    %133 = vector.multi_reduction <add>, %129, %cst_79 [1] : vector<8x8xf32> to vector<8xf32>
    %134 = vector.shape_cast %133 : vector<8xf32> to vector<8x1xf32>
    %135 = arith.addf %132, %134 : vector<8x1xf32>
    %c3_80 = arith.constant 3 : index
    %c0_81 = arith.constant 0 : index
    %c0_82 = arith.constant 0 : index
    %136 = vector.load %arg8[%c3_80, %c0_81, %c0_82] : memref<4x8x1xf32, #tpu.memory_space<vmem>>, vector<1x8x1xf32>
    %137 = vector.shape_cast %136 : vector<1x8x1xf32> to vector<8x1xf32>
    %138 = vector.shape_cast %135 : vector<8x1xf32> to vector<1x8x1xf32>
    tpu.vector_store %arg8[%c3_80, %c0_81, %c0_82], %138 {strides = array<i32>} : memref<4x8x1xf32, #tpu.memory_space<vmem>>, vector<1x8x1xf32>,
    %c3_83 = arith.constant 3 : index
    %c0_84 = arith.constant 0 : index
    %c0_85 = arith.constant 0 : index
    %139 = vector.load %arg9[%c3_83, %c0_84, %c0_85] : memref<4x8x8xf32, #tpu.memory_space<vmem>>, vector<1x8x8xf32>
    %140 = vector.shape_cast %139 : vector<1x8x8xf32> to vector<8x8xf32>
    %141 = vector.broadcast %126 : vector<8x1xf32> to vector<8x8xf32>
    %142 = arith.mulf %141, %140 : vector<8x8xf32>
    %143 = arith.truncf %129 : vector<8x8xf32> to vector<8x8xbf16>
    %144 = vector.extract_strided_slice %8 {offsets = [0, 24], sizes = [8, 8], strides = [1, 1]} : vector<8x32xbf16> to vector<8x8xbf16>
    %cst_86 = arith.constant dense<0.000000e+00> : vector<8x8xf32>
    %145 = tpu.matmul %143, %144, %cst_86 {dimension_numbers = #tpu.dot_dimension_numbers<[1], [0], [0], [1], [0, 0, 1, 1], [], []>} : vector<8x8xbf16>, vector<8x8xbf16>, vector<8x8xf32> -> vector<8x8xf32>
    %146 = arith.addf %142, %145 : vector<8x8xf32>
    %c3_87 = arith.constant 3 : index
    %c0_88 = arith.constant 0 : index
    %c0_89 = arith.constant 0 : index
    %147 = vector.load %arg9[%c3_87, %c0_88, %c0_89] : memref<4x8x8xf32, #tpu.memory_space<vmem>>, vector<1x8x8xf32>
    %148 = vector.shape_cast %147 : vector<1x8x8xf32> to vector<8x8xf32>
    %149 = vector.shape_cast %146 : vector<8x8xf32> to vector<1x8x8xf32>
    tpu.vector_store %arg9[%c3_87, %c0_88, %c0_89], %149 {strides = array<i32>} : memref<4x8x8xf32, #tpu.memory_space<vmem>>, vector<1x8x8xf32>,
    %c3_90 = arith.constant 3 : index
    %c0_91 = arith.constant 0 : index
    %c0_92 = arith.constant 0 : index
    %150 = vector.load %arg7[%c3_90, %c0_91, %c0_92] : memref<4x8x1xf32, #tpu.memory_space<vmem>>, vector<1x8x1xf32>
    %151 = vector.shape_cast %150 : vector<1x8x1xf32> to vector<8x1xf32>
    %152 = vector.shape_cast %124 : vector<8x1xf32> to vector<1x8x1xf32>
    tpu.vector_store %arg7[%c3_90, %c0_91, %c0_92], %152 {strides = array<i32>} : memref<4x8x1xf32, #tpu.memory_space<vmem>>, vector<1x8x1xf32>,
    %c0_i32_93 = arith.constant 0 : i32
    %153 = arith.cmpi eq, %arg2, %c0_i32_93 : i32
    %154 = arith.extui %153 : i1 to i32
    %c0_i32_94 = arith.constant 0 : i32
    %155 = arith.cmpi ne, %154, %c0_i32_94 : i32
    scf.if %155 {
      %c0_95 = arith.constant 0 : index
      %c0_96 = arith.constant 0 : index
      %c0_97 = arith.constant 0 : index
      %156 = vector.load %arg8[%c0_95, %c0_96, %c0_97] : memref<4x8x1xf32, #tpu.memory_space<vmem>>, vector<1x8x1xf32>
      %157 = vector.shape_cast %156 : vector<1x8x1xf32> to vector<8x1xf32>
      %158 = tpu.reciprocal %157 {approx = true} : vector<8x1xf32> -> vector<8x1xf32>
      %c0_98 = arith.constant 0 : index
      %c0_99 = arith.constant 0 : index
      %c0_100 = arith.constant 0 : index
      %159 = vector.load %arg9[%c0_98, %c0_99, %c0_100] : memref<4x8x8xf32, #tpu.memory_space<vmem>>, vector<1x8x8xf32>
      %160 = vector.shape_cast %159 : vector<1x8x8xf32> to vector<8x8xf32>
      %161 = vector.broadcast %158 : vector<8x1xf32> to vector<8x8xf32>
      %162 = arith.mulf %160, %161 : vector<8x8xf32>
      %163 = arith.truncf %162 : vector<8x8xf32> to vector<8x8xbf16>
      %c1_101 = arith.constant 1 : index
      %c0_102 = arith.constant 0 : index
      %c0_103 = arith.constant 0 : index
      %164 = vector.load %arg8[%c1_101, %c0_102, %c0_103] : memref<4x8x1xf32, #tpu.memory_space<vmem>>, vector<1x8x1xf32>
      %165 = vector.shape_cast %164 : vector<1x8x1xf32> to vector<8x1xf32>
      %166 = tpu.reciprocal %165 {approx = true} : vector<8x1xf32> -> vector<8x1xf32>
      %c1_104 = arith.constant 1 : index
      %c0_105 = arith.constant 0 : index
      %c0_106 = arith.constant 0 : index
      %167 = vector.load %arg9[%c1_104, %c0_105, %c0_106] : memref<4x8x8xf32, #tpu.memory_space<vmem>>, vector<1x8x8xf32>
      %168 = vector.shape_cast %167 : vector<1x8x8xf32> to vector<8x8xf32>
      %169 = vector.broadcast %166 : vector<8x1xf32> to vector<8x8xf32>
      %170 = arith.mulf %168, %169 : vector<8x8xf32>
      %171 = arith.truncf %170 : vector<8x8xf32> to vector<8x8xbf16>
      %c2_107 = arith.constant 2 : index
      %c0_108 = arith.constant 0 : index
      %c0_109 = arith.constant 0 : index
      %172 = vector.load %arg8[%c2_107, %c0_108, %c0_109] : memref<4x8x1xf32, #tpu.memory_space<vmem>>, vector<1x8x1xf32>
      %173 = vector.shape_cast %172 : vector<1x8x1xf32> to vector<8x1xf32>
      %174 = tpu.reciprocal %173 {approx = true} : vector<8x1xf32> -> vector<8x1xf32>
      %c2_110 = arith.constant 2 : index
      %c0_111 = arith.constant 0 : index
      %c0_112 = arith.constant 0 : index
      %175 = vector.load %arg9[%c2_110, %c0_111, %c0_112] : memref<4x8x8xf32, #tpu.memory_space<vmem>>, vector<1x8x8xf32>
      %176 = vector.shape_cast %175 : vector<1x8x8xf32> to vector<8x8xf32>
      %177 = vector.broadcast %174 : vector<8x1xf32> to vector<8x8xf32>
      %178 = arith.mulf %176, %177 : vector<8x8xf32>
      %179 = arith.truncf %178 : vector<8x8xf32> to vector<8x8xbf16>
      %c3_113 = arith.constant 3 : index
      %c0_114 = arith.constant 0 : index
      %c0_115 = arith.constant 0 : index
      %180 = vector.load %arg8[%c3_113, %c0_114, %c0_115] : memref<4x8x1xf32, #tpu.memory_space<vmem>>, vector<1x8x1xf32>
      %181 = vector.shape_cast %180 : vector<1x8x1xf32> to vector<8x1xf32>
      %182 = tpu.reciprocal %181 {approx = true} : vector<8x1xf32> -> vector<8x1xf32>
      %c3_116 = arith.constant 3 : index
      %c0_117 = arith.constant 0 : index
      %c0_118 = arith.constant 0 : index
      %183 = vector.load %arg9[%c3_116, %c0_117, %c0_118] : memref<4x8x8xf32, #tpu.memory_space<vmem>>, vector<1x8x8xf32>
      %184 = vector.shape_cast %183 : vector<1x8x8xf32> to vector<8x8xf32>
      %185 = vector.broadcast %182 : vector<8x1xf32> to vector<8x8xf32>
      %186 = arith.mulf %184, %185 : vector<8x8xf32>
      %187 = arith.truncf %186 : vector<8x8xf32> to vector<8x8xbf16>
      %188 = tpu.concatenate %163, %171, %179, %187 in 1 : vector<8x8xbf16>, vector<8x8xbf16>, vector<8x8xbf16>, vector<8x8xbf16> -> vector<8x32xbf16>
      %c0_119 = arith.constant 0 : index
      %c0_120 = arith.constant 0 : index
      %c0_121 = arith.constant 0 : index
      %189 = vector.load %arg6[%c0_119, %c0_120, %c0_121] : memref<1x8x32xbf16, #tpu.memory_space<vmem>>, vector<1x8x32xbf16>
      %190 = vector.shape_cast %189 : vector<1x8x32xbf16> to vector<8x32xbf16>
      %191 = vector.shape_cast %188 : vector<8x32xbf16> to vector<1x8x32xbf16>
      tpu.vector_store %arg6[%c0_119, %c0_120, %c0_121], %191 {strides = array<i32>} : memref<1x8x32xbf16, #tpu.memory_space<vmem>>, vector<1x8x32xbf16>,
    } else {
    }
    return
  }
  func.func @transform_0(%arg0: i32, %arg1: i32, %arg2: i32) -> (i32, i32, i32) {
    %c0_i32 = arith.constant 0 : i32
    %c0_i32_0 = arith.constant 0 : i32
    return %arg0, %arg1, %c0_i32 : i32, i32, i32
  }
  func.func @transform_1(%arg0: i32, %arg1: i32, %arg2: i32) -> (i32, i32, i32) {
    %c0_i32 = arith.constant 0 : i32
    %c0_i32_0 = arith.constant 0 : i32
    return %arg0, %arg2, %c0_i32 : i32, i32, i32
  }
  func.func @transform_2(%arg0: i32, %arg1: i32, %arg2: i32) -> (i32, i32, i32) {
    %c0_i32 = arith.constant 0 : i32
    %c0_i32_0 = arith.constant 0 : i32
    return %arg0, %arg2, %c0_i32 : i32, i32, i32
  }
  func.func @transform_3(%arg0: i32, %arg1: i32, %arg2: i32) -> (i32, i32, i32) {
    %c0_i32 = arith.constant 0 : i32
    %c0_i32_0 = arith.constant 0 : i32
    return %arg0, %arg1, %c0_i32 : i32, i32, i32
  }
}

module attributes {stable_mosaic.version = 11 : i64} {
  func.func @_linear_kernel(%arg0: i32, %arg1: i32, %arg2: i32, %arg3: memref<8x32xbf16, #tpu.memory_space<vmem>>, %arg4: memref<32x32xbf16, #tpu.memory_space<vmem>>, %arg5: memref<1x32xf32, #tpu.memory_space<vmem>>, %arg6: memref<8x32xbf16, #tpu.memory_space<vmem>>, %arg7: memref<8x32xf32, #tpu.memory_space<vmem>>) attributes {dimension_semantics = [#tpu.dimension_semantics<parallel>, #tpu.dimension_semantics<parallel>, #tpu.dimension_semantics<arbitrary>], iteration_bounds = array<i64: 2, 1, 1>, scalar_prefetch = 0 : i64, scratch_operands = 1 : i64, tpu.core_type = #tpu.core_type<tc>, window_params = [{transform_indices = @transform_0, window_bounds = array<i64: 8, 32>}, {transform_indices = @transform_1, window_bounds = array<i64: 32, 32>}, {transform_indices = @transform_2, window_bounds = array<i64: 1, 32>}, {transform_indices = @transform_3, window_bounds = array<i64: 8, 32>}]} {
    %c0_i32 = arith.constant 0 : i32
    %0 = arith.cmpi eq, %arg2, %c0_i32 : i32
    %1 = arith.extui %0 : i1 to i32
    %c0_i32_0 = arith.constant 0 : i32
    %2 = arith.cmpi ne, %1, %c0_i32_0 : i32
    scf.if %2 {
      %cst_10 = arith.constant 0.000000e+00 : f32
      %12 = vector.broadcast %cst_10 : f32 to vector<8x32xf32>
      %c0_11 = arith.constant 0 : index
      %c0_12 = arith.constant 0 : index
      %13 = vector.load %arg7[%c0_11, %c0_12] : memref<8x32xf32, #tpu.memory_space<vmem>>, vector<8x32xf32>
      tpu.vector_store %arg7[%c0_11, %c0_12], %12 {strides = array<i32>} : memref<8x32xf32, #tpu.memory_space<vmem>>, vector<8x32xf32>,
    } else {
    }
    %c0 = arith.constant 0 : index
    %c0_1 = arith.constant 0 : index
    %3 = vector.load %arg7[%c0, %c0_1] : memref<8x32xf32, #tpu.memory_space<vmem>>, vector<8x32xf32>
    %c0_2 = arith.constant 0 : index
    %c0_3 = arith.constant 0 : index
    %4 = vector.load %arg3[%c0_2, %c0_3] : memref<8x32xbf16, #tpu.memory_space<vmem>>, vector<8x32xbf16>
    %c0_4 = arith.constant 0 : index
    %c0_5 = arith.constant 0 : index
    %5 = vector.load %arg4[%c0_4, %c0_5] : memref<32x32xbf16, #tpu.memory_space<vmem>>, vector<32x32xbf16>
    %cst = arith.constant dense<0.000000e+00> : vector<8x32xf32>
    %6 = tpu.matmul %4, %5, %cst {dimension_numbers = #tpu.dot_dimension_numbers<[1], [0], [0], [1], [0, 0, 1, 1], [], []>} : vector<8x32xbf16>, vector<32x32xbf16>, vector<8x32xf32> -> vector<8x32xf32>
    %7 = arith.addf %3, %6 : vector<8x32xf32>
    %c0_6 = arith.constant 0 : index
    %c0_7 = arith.constant 0 : index
    %8 = vector.load %arg7[%c0_6, %c0_7] : memref<8x32xf32, #tpu.memory_space<vmem>>, vector<8x32xf32>
    tpu.vector_store %arg7[%c0_6, %c0_7], %7 {strides = array<i32>} : memref<8x32xf32, #tpu.memory_space<vmem>>, vector<8x32xf32>,
    %c0_i32_8 = arith.constant 0 : i32
    %9 = arith.cmpi eq, %arg2, %c0_i32_8 : i32
    %10 = arith.extui %9 : i1 to i32
    %c0_i32_9 = arith.constant 0 : i32
    %11 = arith.cmpi ne, %10, %c0_i32_9 : i32
    scf.if %11 {
      %c0_10 = arith.constant 0 : index
      %c0_11 = arith.constant 0 : index
      %12 = vector.load %arg7[%c0_10, %c0_11] : memref<8x32xf32, #tpu.memory_space<vmem>>, vector<8x32xf32>
      %c0_12 = arith.constant 0 : index
      %c0_13 = arith.constant 0 : index
      %13 = vector.load %arg5[%c0_12, %c0_13] : memref<1x32xf32, #tpu.memory_space<vmem>>, vector<1x32xf32>
      %14 = vector.broadcast %13 : vector<1x32xf32> to vector<8x32xf32>
      %15 = arith.addf %12, %14 : vector<8x32xf32>
      %16 = arith.truncf %15 : vector<8x32xf32> to vector<8x32xbf16>
      %c0_14 = arith.constant 0 : index
      %c0_15 = arith.constant 0 : index
      %17 = vector.load %arg6[%c0_14, %c0_15] : memref<8x32xbf16, #tpu.memory_space<vmem>>, vector<8x32xbf16>
      tpu.vector_store %arg6[%c0_14, %c0_15], %16 {strides = array<i32>} : memref<8x32xbf16, #tpu.memory_space<vmem>>, vector<8x32xbf16>,
    } else {
    }
    return
  }
  func.func @transform_0(%arg0: i32, %arg1: i32, %arg2: i32) -> (i32, i32) {
    %c0_i32 = arith.constant 0 : i32
    return %arg0, %arg2 : i32, i32
  }
  func.func @transform_1(%arg0: i32, %arg1: i32, %arg2: i32) -> (i32, i32) {
    %c0_i32 = arith.constant 0 : i32
    return %arg2, %arg1 : i32, i32
  }
  func.func @transform_2(%arg0: i32, %arg1: i32, %arg2: i32) -> (i32, i32) {
    %c0_i32 = arith.constant 0 : i32
    %c0_i32_0 = arith.constant 0 : i32
    return %c0_i32, %arg1 : i32, i32
  }
  func.func @transform_3(%arg0: i32, %arg1: i32, %arg2: i32) -> (i32, i32) {
    %c0_i32 = arith.constant 0 : i32
    return %arg0, %arg1 : i32, i32
  }
}

module attributes {stable_mosaic.version = 11 : i64} {
  func.func @_fused_proj_kernel(%arg0: i32, %arg1: i32, %arg2: memref<8x32xbf16, #tpu.memory_space<vmem>>, %arg3: memref<32x96xbf16, #tpu.memory_space<vmem>>, %arg4: memref<1x96xf32, #tpu.memory_space<vmem>>, %arg5: memref<8x32xbf16, #tpu.memory_space<vmem>>, %arg6: memref<8x32xbf16, #tpu.memory_space<vmem>>, %arg7: memref<8x32xbf16, #tpu.memory_space<vmem>>, %arg8: memref<8x96xf32, #tpu.memory_space<vmem>>) attributes {dimension_semantics = [#tpu.dimension_semantics<parallel>, #tpu.dimension_semantics<arbitrary>], iteration_bounds = array<i64: 2, 1>, scalar_prefetch = 0 : i64, scratch_operands = 1 : i64, tpu.core_type = #tpu.core_type<tc>, window_params = [{transform_indices = @transform_0, window_bounds = array<i64: 8, 32>}, {transform_indices = @transform_1, window_bounds = array<i64: 32, 96>}, {pipeline_mode = #tpu.pipeline_mode<synchronous>, transform_indices = @transform_2, window_bounds = array<i64: 1, 96>}, {transform_indices = @transform_3, window_bounds = array<i64: 8, 32>}, {transform_indices = @transform_4, window_bounds = array<i64: 8, 32>}, {transform_indices = @transform_5, window_bounds = array<i64: 8, 32>}]} {
    %c0_i32 = arith.constant 0 : i32
    %0 = arith.cmpi eq, %arg1, %c0_i32 : i32
    %1 = arith.extui %0 : i1 to i32
    %c0_i32_0 = arith.constant 0 : i32
    %2 = arith.cmpi ne, %1, %c0_i32_0 : i32
    scf.if %2 {
      %cst_10 = arith.constant 0.000000e+00 : f32
      %12 = vector.broadcast %cst_10 : f32 to vector<8x96xf32>
      %c0_11 = arith.constant 0 : index
      %c0_12 = arith.constant 0 : index
      %13 = vector.load %arg8[%c0_11, %c0_12] : memref<8x96xf32, #tpu.memory_space<vmem>>, vector<8x96xf32>
      tpu.vector_store %arg8[%c0_11, %c0_12], %12 {strides = array<i32>} : memref<8x96xf32, #tpu.memory_space<vmem>>, vector<8x96xf32>,
    } else {
    }
    %c0 = arith.constant 0 : index
    %c0_1 = arith.constant 0 : index
    %3 = vector.load %arg8[%c0, %c0_1] : memref<8x96xf32, #tpu.memory_space<vmem>>, vector<8x96xf32>
    %c0_2 = arith.constant 0 : index
    %c0_3 = arith.constant 0 : index
    %4 = vector.load %arg2[%c0_2, %c0_3] : memref<8x32xbf16, #tpu.memory_space<vmem>>, vector<8x32xbf16>
    %c0_4 = arith.constant 0 : index
    %c0_5 = arith.constant 0 : index
    %5 = vector.load %arg3[%c0_4, %c0_5] : memref<32x96xbf16, #tpu.memory_space<vmem>>, vector<32x96xbf16>
    %cst = arith.constant dense<0.000000e+00> : vector<8x96xf32>
    %6 = tpu.matmul %4, %5, %cst {dimension_numbers = #tpu.dot_dimension_numbers<[1], [0], [0], [1], [0, 0, 1, 1], [], []>} : vector<8x32xbf16>, vector<32x96xbf16>, vector<8x96xf32> -> vector<8x96xf32>
    %7 = arith.addf %3, %6 : vector<8x96xf32>
    %c0_6 = arith.constant 0 : index
    %c0_7 = arith.constant 0 : index
    %8 = vector.load %arg8[%c0_6, %c0_7] : memref<8x96xf32, #tpu.memory_space<vmem>>, vector<8x96xf32>
    tpu.vector_store %arg8[%c0_6, %c0_7], %7 {strides = array<i32>} : memref<8x96xf32, #tpu.memory_space<vmem>>, vector<8x96xf32>,
    %c0_i32_8 = arith.constant 0 : i32
    %9 = arith.cmpi eq, %arg1, %c0_i32_8 : i32
    %10 = arith.extui %9 : i1 to i32
    %c0_i32_9 = arith.constant 0 : i32
    %11 = arith.cmpi ne, %10, %c0_i32_9 : i32
    scf.if %11 {
      %c0_10 = arith.constant 0 : index
      %c0_11 = arith.constant 0 : index
      %12 = vector.load %arg8[%c0_10, %c0_11] : memref<8x96xf32, #tpu.memory_space<vmem>>, vector<8x96xf32>
      %c0_12 = arith.constant 0 : index
      %c0_13 = arith.constant 0 : index
      %13 = vector.load %arg4[%c0_12, %c0_13] : memref<1x96xf32, #tpu.memory_space<vmem>>, vector<1x96xf32>
      %14 = vector.broadcast %13 : vector<1x96xf32> to vector<8x96xf32>
      %15 = arith.addf %12, %14 : vector<8x96xf32>
      %16 = vector.extract_strided_slice %15 {offsets = [0, 0], sizes = [8, 32], strides = [1, 1]} : vector<8x96xf32> to vector<8x32xf32>
      %17 = arith.truncf %16 : vector<8x32xf32> to vector<8x32xbf16>
      %c0_14 = arith.constant 0 : index
      %c0_15 = arith.constant 0 : index
      %18 = vector.load %arg5[%c0_14, %c0_15] : memref<8x32xbf16, #tpu.memory_space<vmem>>, vector<8x32xbf16>
      tpu.vector_store %arg5[%c0_14, %c0_15], %17 {strides = array<i32>} : memref<8x32xbf16, #tpu.memory_space<vmem>>, vector<8x32xbf16>,
      %19 = vector.extract_strided_slice %15 {offsets = [0, 32], sizes = [8, 32], strides = [1, 1]} : vector<8x96xf32> to vector<8x32xf32>
      %20 = arith.truncf %19 : vector<8x32xf32> to vector<8x32xbf16>
      %c0_16 = arith.constant 0 : index
      %c0_17 = arith.constant 0 : index
      %21 = vector.load %arg6[%c0_16, %c0_17] : memref<8x32xbf16, #tpu.memory_space<vmem>>, vector<8x32xbf16>
      tpu.vector_store %arg6[%c0_16, %c0_17], %20 {strides = array<i32>} : memref<8x32xbf16, #tpu.memory_space<vmem>>, vector<8x32xbf16>,
      %22 = vector.extract_strided_slice %15 {offsets = [0, 64], sizes = [8, 32], strides = [1, 1]} : vector<8x96xf32> to vector<8x32xf32>
      %23 = arith.truncf %22 : vector<8x32xf32> to vector<8x32xbf16>
      %c0_18 = arith.constant 0 : index
      %c0_19 = arith.constant 0 : index
      %24 = vector.load %arg7[%c0_18, %c0_19] : memref<8x32xbf16, #tpu.memory_space<vmem>>, vector<8x32xbf16>
      tpu.vector_store %arg7[%c0_18, %c0_19], %23 {strides = array<i32>} : memref<8x32xbf16, #tpu.memory_space<vmem>>, vector<8x32xbf16>,
    } else {
    }
    return
  }
  func.func @transform_0(%arg0: i32, %arg1: i32) -> (i32, i32) {
    %c0_i32 = arith.constant 0 : i32
    return %arg0, %arg1 : i32, i32
  }
  func.func @transform_1(%arg0: i32, %arg1: i32) -> (i32, i32) {
    %c0_i32 = arith.constant 0 : i32
    %c0_i32_0 = arith.constant 0 : i32
    return %arg1, %c0_i32 : i32, i32
  }
  func.func @transform_2(%arg0: i32, %arg1: i32) -> (i32, i32) {
    %c0_i32 = arith.constant 0 : i32
    %c0_i32_0 = arith.constant 0 : i32
    %c0_i32_1 = arith.constant 0 : i32
    return %c0_i32, %c0_i32_0 : i32, i32
  }
  func.func @transform_3(%arg0: i32, %arg1: i32) -> (i32, i32) {
    %c0_i32 = arith.constant 0 : i32
    %c0_i32_0 = arith.constant 0 : i32
    return %arg0, %c0_i32 : i32, i32
  }
  func.func @transform_4(%arg0: i32, %arg1: i32) -> (i32, i32) {
    %c0_i32 = arith.constant 0 : i32
    %c0_i32_0 = arith.constant 0 : i32
    return %arg0, %c0_i32 : i32, i32
  }
  func.func @transform_5(%arg0: i32, %arg1: i32) -> (i32, i32) {
    %c0_i32 = arith.constant 0 : i32
    %c0_i32_0 = arith.constant 0 : i32
    return %arg0, %c0_i32 : i32, i32
  }
}

module attributes {stable_mosaic.version = 11 : i64} {
  func.func @_add_ln_kernel(%arg0: i32, %arg1: memref<8x32xbf16, #tpu.memory_space<vmem>>, %arg2: memref<8x32xbf16, #tpu.memory_space<vmem>>, %arg3: memref<1x32xf32, #tpu.memory_space<vmem>>, %arg4: memref<1x32xf32, #tpu.memory_space<vmem>>, %arg5: memref<8x32xbf16, #tpu.memory_space<vmem>>) attributes {dimension_semantics = [#tpu.dimension_semantics<parallel>], iteration_bounds = array<i64: 2>, scalar_prefetch = 0 : i64, scratch_operands = 0 : i64, tpu.core_type = #tpu.core_type<tc>, window_params = [{transform_indices = @transform_0, window_bounds = array<i64: 8, 32>}, {transform_indices = @transform_1, window_bounds = array<i64: 8, 32>}, {pipeline_mode = #tpu.pipeline_mode<synchronous>, transform_indices = @transform_2, window_bounds = array<i64: 1, 32>}, {pipeline_mode = #tpu.pipeline_mode<synchronous>, transform_indices = @transform_3, window_bounds = array<i64: 1, 32>}, {transform_indices = @transform_4, window_bounds = array<i64: 8, 32>}]} {
    %c0 = arith.constant 0 : index
    %c0_0 = arith.constant 0 : index
    %0 = vector.load %arg1[%c0, %c0_0] : memref<8x32xbf16, #tpu.memory_space<vmem>>, vector<8x32xbf16>
    %1 = arith.extf %0 : vector<8x32xbf16> to vector<8x32xf32>
    %c0_1 = arith.constant 0 : index
    %c0_2 = arith.constant 0 : index
    %2 = vector.load %arg2[%c0_1, %c0_2] : memref<8x32xbf16, #tpu.memory_space<vmem>>, vector<8x32xbf16>
    %3 = arith.extf %2 : vector<8x32xbf16> to vector<8x32xf32>
    %4 = arith.addf %1, %3 : vector<8x32xf32>
    %cst = arith.constant dense<0.000000e+00> : vector<8xf32>
    %5 = vector.multi_reduction <add>, %4, %cst [1] : vector<8x32xf32> to vector<8xf32>
    %6 = vector.shape_cast %5 : vector<8xf32> to vector<8x1xf32>
    %cst_3 = arith.constant 3.200000e+01 : f32
    %7 = vector.broadcast %cst_3 : f32 to vector<8x1xf32>
    %8 = arith.divf %6, %7 : vector<8x1xf32>
    %9 = arith.mulf %4, %4 : vector<8x32xf32>
    %cst_4 = arith.constant dense<0.000000e+00> : vector<8xf32>
    %10 = vector.multi_reduction <add>, %9, %cst_4 [1] : vector<8x32xf32> to vector<8xf32>
    %11 = vector.shape_cast %10 : vector<8xf32> to vector<8x1xf32>
    %cst_5 = arith.constant 3.200000e+01 : f32
    %12 = vector.broadcast %cst_5 : f32 to vector<8x1xf32>
    %13 = arith.divf %11, %12 : vector<8x1xf32>
    %14 = vector.broadcast %8 : vector<8x1xf32> to vector<8x32xf32>
    %15 = arith.subf %4, %14 : vector<8x32xf32>
    %16 = arith.mulf %8, %8 : vector<8x1xf32>
    %17 = arith.subf %13, %16 : vector<8x1xf32>
    %cst_6 = arith.constant 9.99999974E-6 : f32
    %18 = vector.broadcast %cst_6 : f32 to vector<8x1xf32>
    %19 = arith.addf %17, %18 : vector<8x1xf32>
    %20 = math.rsqrt %19 : vector<8x1xf32>
    %21 = vector.broadcast %20 : vector<8x1xf32> to vector<8x32xf32>
    %22 = arith.mulf %15, %21 : vector<8x32xf32>
    %c0_7 = arith.constant 0 : index
    %c0_8 = arith.constant 0 : index
    %23 = vector.load %arg3[%c0_7, %c0_8] : memref<1x32xf32, #tpu.memory_space<vmem>>, vector<1x32xf32>
    %24 = vector.broadcast %23 : vector<1x32xf32> to vector<8x32xf32>
    %25 = arith.mulf %22, %24 : vector<8x32xf32>
    %c0_9 = arith.constant 0 : index
    %c0_10 = arith.constant 0 : index
    %26 = vector.load %arg4[%c0_9, %c0_10] : memref<1x32xf32, #tpu.memory_space<vmem>>, vector<1x32xf32>
    %27 = vector.broadcast %26 : vector<1x32xf32> to vector<8x32xf32>
    %28 = arith.addf %25, %27 : vector<8x32xf32>
    %29 = arith.truncf %28 : vector<8x32xf32> to vector<8x32xbf16>
    %c0_11 = arith.constant 0 : index
    %c0_12 = arith.constant 0 : index
    %30 = vector.load %arg5[%c0_11, %c0_12] : memref<8x32xbf16, #tpu.memory_space<vmem>>, vector<8x32xbf16>
    tpu.vector_store %arg5[%c0_11, %c0_12], %29 {strides = array<i32>} : memref<8x32xbf16, #tpu.memory_space<vmem>>, vector<8x32xbf16>,
    return
  }
  func.func @transform_0(%arg0: i32) -> (i32, i32) {
    %c0_i32 = arith.constant 0 : i32
    %c0_i32_0 = arith.constant 0 : i32
    return %arg0, %c0_i32 : i32, i32
  }
  func.func @transform_1(%arg0: i32) -> (i32, i32) {
    %c0_i32 = arith.constant 0 : i32
    %c0_i32_0 = arith.constant 0 : i32
    return %arg0, %c0_i32 : i32, i32
  }
  func.func @transform_2(%arg0: i32) -> (i32, i32) {
    %c0_i32 = arith.constant 0 : i32
    %c0_i32_0 = arith.constant 0 : i32
    %c0_i32_1 = arith.constant 0 : i32
    return %c0_i32, %c0_i32_0 : i32, i32
  }
  func.func @transform_3(%arg0: i32) -> (i32, i32) {
    %c0_i32 = arith.constant 0 : i32
    %c0_i32_0 = arith.constant 0 : i32
    %c0_i32_1 = arith.constant 0 : i32
    return %c0_i32, %c0_i32_0 : i32, i32
  }
  func.func @transform_4(%arg0: i32) -> (i32, i32) {
    %c0_i32 = arith.constant 0 : i32
    %c0_i32_0 = arith.constant 0 : i32
    return %arg0, %c0_i32 : i32, i32
  }
}

module attributes {stable_mosaic.version = 11 : i64} {
  func.func @_ffn_kernel(%arg0: i32, %arg1: i32, %arg2: memref<8x32xbf16, #tpu.memory_space<vmem>>, %arg3: memref<32x64xbf16, #tpu.memory_space<vmem>>, %arg4: memref<1x64xf32, #tpu.memory_space<vmem>>, %arg5: memref<64x32xbf16, #tpu.memory_space<vmem>>, %arg6: memref<1x32xf32, #tpu.memory_space<vmem>>, %arg7: memref<8x32xbf16, #tpu.memory_space<vmem>>, %arg8: memref<8x32xf32, #tpu.memory_space<vmem>>) attributes {dimension_semantics = [#tpu.dimension_semantics<parallel>, #tpu.dimension_semantics<arbitrary>], iteration_bounds = array<i64: 2, 1>, scalar_prefetch = 0 : i64, scratch_operands = 1 : i64, tpu.core_type = #tpu.core_type<tc>, window_params = [{transform_indices = @transform_0, window_bounds = array<i64: 8, 32>}, {transform_indices = @transform_1, window_bounds = array<i64: 32, 64>}, {transform_indices = @transform_2, window_bounds = array<i64: 1, 64>}, {transform_indices = @transform_3, window_bounds = array<i64: 64, 32>}, {pipeline_mode = #tpu.pipeline_mode<synchronous>, transform_indices = @transform_4, window_bounds = array<i64: 1, 32>}, {transform_indices = @transform_5, window_bounds = array<i64: 8, 32>}]} {
    %c0_i32 = arith.constant 0 : i32
    %0 = arith.cmpi eq, %arg1, %c0_i32 : i32
    %1 = arith.extui %0 : i1 to i32
    %c0_i32_0 = arith.constant 0 : i32
    %2 = arith.cmpi ne, %1, %c0_i32_0 : i32
    scf.if %2 {
      %cst_16 = arith.constant 0.000000e+00 : f32
      %20 = vector.broadcast %cst_16 : f32 to vector<8x32xf32>
      %c0_17 = arith.constant 0 : index
      %c0_18 = arith.constant 0 : index
      %21 = vector.load %arg8[%c0_17, %c0_18] : memref<8x32xf32, #tpu.memory_space<vmem>>, vector<8x32xf32>
      tpu.vector_store %arg8[%c0_17, %c0_18], %20 {strides = array<i32>} : memref<8x32xf32, #tpu.memory_space<vmem>>, vector<8x32xf32>,
    } else {
    }
    %c0 = arith.constant 0 : index
    %c0_1 = arith.constant 0 : index
    %3 = vector.load %arg2[%c0, %c0_1] : memref<8x32xbf16, #tpu.memory_space<vmem>>, vector<8x32xbf16>
    %c0_2 = arith.constant 0 : index
    %c0_3 = arith.constant 0 : index
    %4 = vector.load %arg3[%c0_2, %c0_3] : memref<32x64xbf16, #tpu.memory_space<vmem>>, vector<32x64xbf16>
    %cst = arith.constant dense<0.000000e+00> : vector<8x64xf32>
    %5 = tpu.matmul %3, %4, %cst {dimension_numbers = #tpu.dot_dimension_numbers<[1], [0], [0], [1], [0, 0, 1, 1], [], []>} : vector<8x32xbf16>, vector<32x64xbf16>, vector<8x64xf32> -> vector<8x64xf32>
    %c0_4 = arith.constant 0 : index
    %c0_5 = arith.constant 0 : index
    %6 = vector.load %arg4[%c0_4, %c0_5] : memref<1x64xf32, #tpu.memory_space<vmem>>, vector<1x64xf32>
    %7 = vector.broadcast %6 : vector<1x64xf32> to vector<8x64xf32>
    %8 = arith.addf %5, %7 : vector<8x64xf32>
    %cst_6 = arith.constant 0.000000e+00 : f32
    %9 = vector.broadcast %cst_6 : f32 to vector<8x64xf32>
    %10 = arith.maximumf %8, %9 : vector<8x64xf32>
    %c0_7 = arith.constant 0 : index
    %c0_8 = arith.constant 0 : index
    %11 = vector.load %arg8[%c0_7, %c0_8] : memref<8x32xf32, #tpu.memory_space<vmem>>, vector<8x32xf32>
    %12 = arith.truncf %10 : vector<8x64xf32> to vector<8x64xbf16>
    %c0_9 = arith.constant 0 : index
    %c0_10 = arith.constant 0 : index
    %13 = vector.load %arg5[%c0_9, %c0_10] : memref<64x32xbf16, #tpu.memory_space<vmem>>, vector<64x32xbf16>
    %cst_11 = arith.constant dense<0.000000e+00> : vector<8x32xf32>
    %14 = tpu.matmul %12, %13, %cst_11 {dimension_numbers = #tpu.dot_dimension_numbers<[1], [0], [0], [1], [0, 0, 1, 1], [], []>} : vector<8x64xbf16>, vector<64x32xbf16>, vector<8x32xf32> -> vector<8x32xf32>
    %15 = arith.addf %11, %14 : vector<8x32xf32>
    %c0_12 = arith.constant 0 : index
    %c0_13 = arith.constant 0 : index
    %16 = vector.load %arg8[%c0_12, %c0_13] : memref<8x32xf32, #tpu.memory_space<vmem>>, vector<8x32xf32>
    tpu.vector_store %arg8[%c0_12, %c0_13], %15 {strides = array<i32>} : memref<8x32xf32, #tpu.memory_space<vmem>>, vector<8x32xf32>,
    %c0_i32_14 = arith.constant 0 : i32
    %17 = arith.cmpi eq, %arg1, %c0_i32_14 : i32
    %18 = arith.extui %17 : i1 to i32
    %c0_i32_15 = arith.constant 0 : i32
    %19 = arith.cmpi ne, %18, %c0_i32_15 : i32
    scf.if %19 {
      %c0_16 = arith.constant 0 : index
      %c0_17 = arith.constant 0 : index
      %20 = vector.load %arg8[%c0_16, %c0_17] : memref<8x32xf32, #tpu.memory_space<vmem>>, vector<8x32xf32>
      %c0_18 = arith.constant 0 : index
      %c0_19 = arith.constant 0 : index
      %21 = vector.load %arg6[%c0_18, %c0_19] : memref<1x32xf32, #tpu.memory_space<vmem>>, vector<1x32xf32>
      %22 = vector.broadcast %21 : vector<1x32xf32> to vector<8x32xf32>
      %23 = arith.addf %20, %22 : vector<8x32xf32>
      %24 = arith.truncf %23 : vector<8x32xf32> to vector<8x32xbf16>
      %c0_20 = arith.constant 0 : index
      %c0_21 = arith.constant 0 : index
      %25 = vector.load %arg7[%c0_20, %c0_21] : memref<8x32xbf16, #tpu.memory_space<vmem>>, vector<8x32xbf16>
      tpu.vector_store %arg7[%c0_20, %c0_21], %24 {strides = array<i32>} : memref<8x32xbf16, #tpu.memory_space<vmem>>, vector<8x32xbf16>,
    } else {
    }
    return
  }
  func.func @transform_0(%arg0: i32, %arg1: i32) -> (i32, i32) {
    %c0_i32 = arith.constant 0 : i32
    %c0_i32_0 = arith.constant 0 : i32
    return %arg0, %c0_i32 : i32, i32
  }
  func.func @transform_1(%arg0: i32, %arg1: i32) -> (i32, i32) {
    %c0_i32 = arith.constant 0 : i32
    %c0_i32_0 = arith.constant 0 : i32
    return %c0_i32, %arg1 : i32, i32
  }
  func.func @transform_2(%arg0: i32, %arg1: i32) -> (i32, i32) {
    %c0_i32 = arith.constant 0 : i32
    %c0_i32_0 = arith.constant 0 : i32
    return %c0_i32, %arg1 : i32, i32
  }
  func.func @transform_3(%arg0: i32, %arg1: i32) -> (i32, i32) {
    %c0_i32 = arith.constant 0 : i32
    %c0_i32_0 = arith.constant 0 : i32
    return %arg1, %c0_i32 : i32, i32
  }
  func.func @transform_4(%arg0: i32, %arg1: i32) -> (i32, i32) {
    %c0_i32 = arith.constant 0 : i32
    %c0_i32_0 = arith.constant 0 : i32
    %c0_i32_1 = arith.constant 0 : i32
    return %c0_i32, %c0_i32_0 : i32, i32
  }
  func.func @transform_5(%arg0: i32, %arg1: i32) -> (i32, i32) {
    %c0_i32 = arith.constant 0 : i32
    %c0_i32_0 = arith.constant 0 : i32
    return %arg0, %c0_i32 : i32, i32
  }
}

module attributes {stable_mosaic.version = 11 : i64} {
  func.func @_ln_kernel(%arg0: i32, %arg1: memref<8x32xbf16, #tpu.memory_space<vmem>>, %arg2: memref<1x32xf32, #tpu.memory_space<vmem>>, %arg3: memref<1x32xf32, #tpu.memory_space<vmem>>, %arg4: memref<8x32xbf16, #tpu.memory_space<vmem>>) attributes {dimension_semantics = [#tpu.dimension_semantics<parallel>], iteration_bounds = array<i64: 2>, scalar_prefetch = 0 : i64, scratch_operands = 0 : i64, tpu.core_type = #tpu.core_type<tc>, window_params = [{transform_indices = @transform_0, window_bounds = array<i64: 8, 32>}, {pipeline_mode = #tpu.pipeline_mode<synchronous>, transform_indices = @transform_1, window_bounds = array<i64: 1, 32>}, {pipeline_mode = #tpu.pipeline_mode<synchronous>, transform_indices = @transform_2, window_bounds = array<i64: 1, 32>}, {transform_indices = @transform_3, window_bounds = array<i64: 8, 32>}]} {
    %c0 = arith.constant 0 : index
    %c0_0 = arith.constant 0 : index
    %0 = vector.load %arg1[%c0, %c0_0] : memref<8x32xbf16, #tpu.memory_space<vmem>>, vector<8x32xbf16>
    %1 = arith.extf %0 : vector<8x32xbf16> to vector<8x32xf32>
    %cst = arith.constant dense<0.000000e+00> : vector<8xf32>
    %2 = vector.multi_reduction <add>, %1, %cst [1] : vector<8x32xf32> to vector<8xf32>
    %3 = vector.shape_cast %2 : vector<8xf32> to vector<8x1xf32>
    %cst_1 = arith.constant 3.200000e+01 : f32
    %4 = vector.broadcast %cst_1 : f32 to vector<8x1xf32>
    %5 = arith.divf %3, %4 : vector<8x1xf32>
    %6 = arith.mulf %1, %1 : vector<8x32xf32>
    %cst_2 = arith.constant dense<0.000000e+00> : vector<8xf32>
    %7 = vector.multi_reduction <add>, %6, %cst_2 [1] : vector<8x32xf32> to vector<8xf32>
    %8 = vector.shape_cast %7 : vector<8xf32> to vector<8x1xf32>
    %cst_3 = arith.constant 3.200000e+01 : f32
    %9 = vector.broadcast %cst_3 : f32 to vector<8x1xf32>
    %10 = arith.divf %8, %9 : vector<8x1xf32>
    %11 = vector.broadcast %5 : vector<8x1xf32> to vector<8x32xf32>
    %12 = arith.subf %1, %11 : vector<8x32xf32>
    %13 = arith.mulf %5, %5 : vector<8x1xf32>
    %14 = arith.subf %10, %13 : vector<8x1xf32>
    %cst_4 = arith.constant 9.99999974E-6 : f32
    %15 = vector.broadcast %cst_4 : f32 to vector<8x1xf32>
    %16 = arith.addf %14, %15 : vector<8x1xf32>
    %17 = math.rsqrt %16 : vector<8x1xf32>
    %18 = vector.broadcast %17 : vector<8x1xf32> to vector<8x32xf32>
    %19 = arith.mulf %12, %18 : vector<8x32xf32>
    %c0_5 = arith.constant 0 : index
    %c0_6 = arith.constant 0 : index
    %20 = vector.load %arg2[%c0_5, %c0_6] : memref<1x32xf32, #tpu.memory_space<vmem>>, vector<1x32xf32>
    %21 = vector.broadcast %20 : vector<1x32xf32> to vector<8x32xf32>
    %22 = arith.mulf %19, %21 : vector<8x32xf32>
    %c0_7 = arith.constant 0 : index
    %c0_8 = arith.constant 0 : index
    %23 = vector.load %arg3[%c0_7, %c0_8] : memref<1x32xf32, #tpu.memory_space<vmem>>, vector<1x32xf32>
    %24 = vector.broadcast %23 : vector<1x32xf32> to vector<8x32xf32>
    %25 = arith.addf %22, %24 : vector<8x32xf32>
    %26 = arith.truncf %25 : vector<8x32xf32> to vector<8x32xbf16>
    %c0_9 = arith.constant 0 : index
    %c0_10 = arith.constant 0 : index
    %27 = vector.load %arg4[%c0_9, %c0_10] : memref<8x32xbf16, #tpu.memory_space<vmem>>, vector<8x32xbf16>
    tpu.vector_store %arg4[%c0_9, %c0_10], %26 {strides = array<i32>} : memref<8x32xbf16, #tpu.memory_space<vmem>>, vector<8x32xbf16>,
    return
  }
  func.func @transform_0(%arg0: i32) -> (i32, i32) {
    %c0_i32 = arith.constant 0 : i32
    %c0_i32_0 = arith.constant 0 : i32
    return %arg0, %c0_i32 : i32, i32
  }
  func.func @transform_1(%arg0: i32) -> (i32, i32) {
    %c0_i32 = arith.constant 0 : i32
    %c0_i32_0 = arith.constant 0 : i32
    %c0_i32_1 = arith.constant 0 : i32
    return %c0_i32, %c0_i32_0 : i32, i32
  }
  func.func @transform_2(%arg0: i32) -> (i32, i32) {
    %c0_i32 = arith.constant 0 : i32
    %c0_i32_0 = arith.constant 0 : i32
    %c0_i32_1 = arith.constant 0 : i32
    return %c0_i32, %c0_i32_0 : i32, i32
  }
  func.func @transform_3(%arg0: i32) -> (i32, i32) {
    %c0_i32 = arith.constant 0 : i32
    %c0_i32_0 = arith.constant 0 : i32
    return %arg0, %c0_i32 : i32, i32
  }
}

module attributes {stable_mosaic.version = 11 : i64} {
  func.func @_fused_proj_kernel(%arg0: i32, %arg1: i32, %arg2: memref<8x32xbf16, #tpu.memory_space<vmem>>, %arg3: memref<32x64xbf16, #tpu.memory_space<vmem>>, %arg4: memref<1x64xf32, #tpu.memory_space<vmem>>, %arg5: memref<8x32xbf16, #tpu.memory_space<vmem>>, %arg6: memref<8x32xbf16, #tpu.memory_space<vmem>>, %arg7: memref<8x64xf32, #tpu.memory_space<vmem>>) attributes {dimension_semantics = [#tpu.dimension_semantics<parallel>, #tpu.dimension_semantics<arbitrary>], iteration_bounds = array<i64: 2, 1>, scalar_prefetch = 0 : i64, scratch_operands = 1 : i64, tpu.core_type = #tpu.core_type<tc>, window_params = [{transform_indices = @transform_0, window_bounds = array<i64: 8, 32>}, {transform_indices = @transform_1, window_bounds = array<i64: 32, 64>}, {pipeline_mode = #tpu.pipeline_mode<synchronous>, transform_indices = @transform_2, window_bounds = array<i64: 1, 64>}, {transform_indices = @transform_3, window_bounds = array<i64: 8, 32>}, {transform_indices = @transform_4, window_bounds = array<i64: 8, 32>}]} {
    %c0_i32 = arith.constant 0 : i32
    %0 = arith.cmpi eq, %arg1, %c0_i32 : i32
    %1 = arith.extui %0 : i1 to i32
    %c0_i32_0 = arith.constant 0 : i32
    %2 = arith.cmpi ne, %1, %c0_i32_0 : i32
    scf.if %2 {
      %cst_10 = arith.constant 0.000000e+00 : f32
      %12 = vector.broadcast %cst_10 : f32 to vector<8x64xf32>
      %c0_11 = arith.constant 0 : index
      %c0_12 = arith.constant 0 : index
      %13 = vector.load %arg7[%c0_11, %c0_12] : memref<8x64xf32, #tpu.memory_space<vmem>>, vector<8x64xf32>
      tpu.vector_store %arg7[%c0_11, %c0_12], %12 {strides = array<i32>} : memref<8x64xf32, #tpu.memory_space<vmem>>, vector<8x64xf32>,
    } else {
    }
    %c0 = arith.constant 0 : index
    %c0_1 = arith.constant 0 : index
    %3 = vector.load %arg7[%c0, %c0_1] : memref<8x64xf32, #tpu.memory_space<vmem>>, vector<8x64xf32>
    %c0_2 = arith.constant 0 : index
    %c0_3 = arith.constant 0 : index
    %4 = vector.load %arg2[%c0_2, %c0_3] : memref<8x32xbf16, #tpu.memory_space<vmem>>, vector<8x32xbf16>
    %c0_4 = arith.constant 0 : index
    %c0_5 = arith.constant 0 : index
    %5 = vector.load %arg3[%c0_4, %c0_5] : memref<32x64xbf16, #tpu.memory_space<vmem>>, vector<32x64xbf16>
    %cst = arith.constant dense<0.000000e+00> : vector<8x64xf32>
    %6 = tpu.matmul %4, %5, %cst {dimension_numbers = #tpu.dot_dimension_numbers<[1], [0], [0], [1], [0, 0, 1, 1], [], []>} : vector<8x32xbf16>, vector<32x64xbf16>, vector<8x64xf32> -> vector<8x64xf32>
    %7 = arith.addf %3, %6 : vector<8x64xf32>
    %c0_6 = arith.constant 0 : index
    %c0_7 = arith.constant 0 : index
    %8 = vector.load %arg7[%c0_6, %c0_7] : memref<8x64xf32, #tpu.memory_space<vmem>>, vector<8x64xf32>
    tpu.vector_store %arg7[%c0_6, %c0_7], %7 {strides = array<i32>} : memref<8x64xf32, #tpu.memory_space<vmem>>, vector<8x64xf32>,
    %c0_i32_8 = arith.constant 0 : i32
    %9 = arith.cmpi eq, %arg1, %c0_i32_8 : i32
    %10 = arith.extui %9 : i1 to i32
    %c0_i32_9 = arith.constant 0 : i32
    %11 = arith.cmpi ne, %10, %c0_i32_9 : i32
    scf.if %11 {
      %c0_10 = arith.constant 0 : index
      %c0_11 = arith.constant 0 : index
      %12 = vector.load %arg7[%c0_10, %c0_11] : memref<8x64xf32, #tpu.memory_space<vmem>>, vector<8x64xf32>
      %c0_12 = arith.constant 0 : index
      %c0_13 = arith.constant 0 : index
      %13 = vector.load %arg4[%c0_12, %c0_13] : memref<1x64xf32, #tpu.memory_space<vmem>>, vector<1x64xf32>
      %14 = vector.broadcast %13 : vector<1x64xf32> to vector<8x64xf32>
      %15 = arith.addf %12, %14 : vector<8x64xf32>
      %16 = vector.extract_strided_slice %15 {offsets = [0, 0], sizes = [8, 32], strides = [1, 1]} : vector<8x64xf32> to vector<8x32xf32>
      %17 = arith.truncf %16 : vector<8x32xf32> to vector<8x32xbf16>
      %c0_14 = arith.constant 0 : index
      %c0_15 = arith.constant 0 : index
      %18 = vector.load %arg5[%c0_14, %c0_15] : memref<8x32xbf16, #tpu.memory_space<vmem>>, vector<8x32xbf16>
      tpu.vector_store %arg5[%c0_14, %c0_15], %17 {strides = array<i32>} : memref<8x32xbf16, #tpu.memory_space<vmem>>, vector<8x32xbf16>,
      %19 = vector.extract_strided_slice %15 {offsets = [0, 32], sizes = [8, 32], strides = [1, 1]} : vector<8x64xf32> to vector<8x32xf32>
      %20 = arith.truncf %19 : vector<8x32xf32> to vector<8x32xbf16>
      %c0_16 = arith.constant 0 : index
      %c0_17 = arith.constant 0 : index
      %21 = vector.load %arg6[%c0_16, %c0_17] : memref<8x32xbf16, #tpu.memory_space<vmem>>, vector<8x32xbf16>
      tpu.vector_store %arg6[%c0_16, %c0_17], %20 {strides = array<i32>} : memref<8x32xbf16, #tpu.memory_space<vmem>>, vector<8x32xbf16>,
    } else {
    }
    return
  }
  func.func @transform_0(%arg0: i32, %arg1: i32) -> (i32, i32) {
    %c0_i32 = arith.constant 0 : i32
    return %arg0, %arg1 : i32, i32
  }
  func.func @transform_1(%arg0: i32, %arg1: i32) -> (i32, i32) {
    %c0_i32 = arith.constant 0 : i32
    %c0_i32_0 = arith.constant 0 : i32
    return %arg1, %c0_i32 : i32, i32
  }
  func.func @transform_2(%arg0: i32, %arg1: i32) -> (i32, i32) {
    %c0_i32 = arith.constant 0 : i32
    %c0_i32_0 = arith.constant 0 : i32
    %c0_i32_1 = arith.constant 0 : i32
    return %c0_i32, %c0_i32_0 : i32, i32
  }
  func.func @transform_3(%arg0: i32, %arg1: i32) -> (i32, i32) {
    %c0_i32 = arith.constant 0 : i32
    %c0_i32_0 = arith.constant 0 : i32
    return %arg0, %c0_i32 : i32, i32
  }
  func.func @transform_4(%arg0: i32, %arg1: i32) -> (i32, i32) {
    %c0_i32 = arith.constant 0 : i32
    %c0_i32_0 = arith.constant 0 : i32
    return %arg0, %c0_i32 : i32, i32
  }
}

module attributes {stable_mosaic.version = 11 : i64} {
  func.func @_add_ln_kernel(%arg0: i32, %arg1: memref<8x32xbf16, #tpu.memory_space<vmem>>, %arg2: memref<8x32xbf16, #tpu.memory_space<vmem>>, %arg3: memref<1x32xf32, #tpu.memory_space<vmem>>, %arg4: memref<1x32xf32, #tpu.memory_space<vmem>>, %arg5: memref<8x32xbf16, #tpu.memory_space<vmem>>) attributes {dimension_semantics = [#tpu.dimension_semantics<parallel>], iteration_bounds = array<i64: 2>, scalar_prefetch = 0 : i64, scratch_operands = 0 : i64, tpu.core_type = #tpu.core_type<tc>, window_params = [{transform_indices = @transform_0, window_bounds = array<i64: 8, 32>}, {transform_indices = @transform_1, window_bounds = array<i64: 8, 32>}, {pipeline_mode = #tpu.pipeline_mode<synchronous>, transform_indices = @transform_2, window_bounds = array<i64: 1, 32>}, {pipeline_mode = #tpu.pipeline_mode<synchronous>, transform_indices = @transform_3, window_bounds = array<i64: 1, 32>}, {transform_indices = @transform_4, window_bounds = array<i64: 8, 32>}]} {
    %c0 = arith.constant 0 : index
    %c0_0 = arith.constant 0 : index
    %0 = vector.load %arg1[%c0, %c0_0] : memref<8x32xbf16, #tpu.memory_space<vmem>>, vector<8x32xbf16>
    %1 = arith.extf %0 : vector<8x32xbf16> to vector<8x32xf32>
    %c0_1 = arith.constant 0 : index
    %c0_2 = arith.constant 0 : index
    %2 = vector.load %arg2[%c0_1, %c0_2] : memref<8x32xbf16, #tpu.memory_space<vmem>>, vector<8x32xbf16>
    %3 = arith.extf %2 : vector<8x32xbf16> to vector<8x32xf32>
    %4 = arith.addf %1, %3 : vector<8x32xf32>
    %cst = arith.constant dense<0.000000e+00> : vector<8xf32>
    %5 = vector.multi_reduction <add>, %4, %cst [1] : vector<8x32xf32> to vector<8xf32>
    %6 = vector.shape_cast %5 : vector<8xf32> to vector<8x1xf32>
    %cst_3 = arith.constant 3.200000e+01 : f32
    %7 = vector.broadcast %cst_3 : f32 to vector<8x1xf32>
    %8 = arith.divf %6, %7 : vector<8x1xf32>
    %9 = arith.mulf %4, %4 : vector<8x32xf32>
    %cst_4 = arith.constant dense<0.000000e+00> : vector<8xf32>
    %10 = vector.multi_reduction <add>, %9, %cst_4 [1] : vector<8x32xf32> to vector<8xf32>
    %11 = vector.shape_cast %10 : vector<8xf32> to vector<8x1xf32>
    %cst_5 = arith.constant 3.200000e+01 : f32
    %12 = vector.broadcast %cst_5 : f32 to vector<8x1xf32>
    %13 = arith.divf %11, %12 : vector<8x1xf32>
    %14 = vector.broadcast %8 : vector<8x1xf32> to vector<8x32xf32>
    %15 = arith.subf %4, %14 : vector<8x32xf32>
    %16 = arith.mulf %8, %8 : vector<8x1xf32>
    %17 = arith.subf %13, %16 : vector<8x1xf32>
    %cst_6 = arith.constant 9.99999974E-6 : f32
    %18 = vector.broadcast %cst_6 : f32 to vector<8x1xf32>
    %19 = arith.addf %17, %18 : vector<8x1xf32>
    %20 = math.rsqrt %19 : vector<8x1xf32>
    %21 = vector.broadcast %20 : vector<8x1xf32> to vector<8x32xf32>
    %22 = arith.mulf %15, %21 : vector<8x32xf32>
    %c0_7 = arith.constant 0 : index
    %c0_8 = arith.constant 0 : index
    %23 = vector.load %arg3[%c0_7, %c0_8] : memref<1x32xf32, #tpu.memory_space<vmem>>, vector<1x32xf32>
    %24 = vector.broadcast %23 : vector<1x32xf32> to vector<8x32xf32>
    %25 = arith.mulf %22, %24 : vector<8x32xf32>
    %c0_9 = arith.constant 0 : index
    %c0_10 = arith.constant 0 : index
    %26 = vector.load %arg4[%c0_9, %c0_10] : memref<1x32xf32, #tpu.memory_space<vmem>>, vector<1x32xf32>
    %27 = vector.broadcast %26 : vector<1x32xf32> to vector<8x32xf32>
    %28 = arith.addf %25, %27 : vector<8x32xf32>
    %29 = arith.truncf %28 : vector<8x32xf32> to vector<8x32xbf16>
    %c0_11 = arith.constant 0 : index
    %c0_12 = arith.constant 0 : index
    %30 = vector.load %arg5[%c0_11, %c0_12] : memref<8x32xbf16, #tpu.memory_space<vmem>>, vector<8x32xbf16>
    tpu.vector_store %arg5[%c0_11, %c0_12], %29 {strides = array<i32>} : memref<8x32xbf16, #tpu.memory_space<vmem>>, vector<8x32xbf16>,
    return
  }
  func.func @transform_0(%arg0: i32) -> (i32, i32) {
    %c0_i32 = arith.constant 0 : i32
    %c0_i32_0 = arith.constant 0 : i32
    return %arg0, %c0_i32 : i32, i32
  }
  func.func @transform_1(%arg0: i32) -> (i32, i32) {
    %c0_i32 = arith.constant 0 : i32
    %c0_i32_0 = arith.constant 0 : i32
    return %arg0, %c0_i32 : i32, i32
  }
  func.func @transform_2(%arg0: i32) -> (i32, i32) {
    %c0_i32 = arith.constant 0 : i32
    %c0_i32_0 = arith.constant 0 : i32
    %c0_i32_1 = arith.constant 0 : i32
    return %c0_i32, %c0_i32_0 : i32, i32
  }
  func.func @transform_3(%arg0: i32) -> (i32, i32) {
    %c0_i32 = arith.constant 0 : i32
    %c0_i32_0 = arith.constant 0 : i32
    %c0_i32_1 = arith.constant 0 : i32
    return %c0_i32, %c0_i32_0 : i32, i32
  }
  func.func @transform_4(%arg0: i32) -> (i32, i32) {
    %c0_i32 = arith.constant 0 : i32
    %c0_i32_0 = arith.constant 0 : i32
    return %arg0, %c0_i32 : i32, i32
  }
}

module attributes {stable_mosaic.version = 11 : i64} {
  func.func @_ffn_kernel(%arg0: i32, %arg1: i32, %arg2: memref<8x32xbf16, #tpu.memory_space<vmem>>, %arg3: memref<32x64xbf16, #tpu.memory_space<vmem>>, %arg4: memref<1x64xf32, #tpu.memory_space<vmem>>, %arg5: memref<64x32xbf16, #tpu.memory_space<vmem>>, %arg6: memref<1x32xf32, #tpu.memory_space<vmem>>, %arg7: memref<8x32xbf16, #tpu.memory_space<vmem>>, %arg8: memref<8x32xf32, #tpu.memory_space<vmem>>) attributes {dimension_semantics = [#tpu.dimension_semantics<parallel>, #tpu.dimension_semantics<arbitrary>], iteration_bounds = array<i64: 2, 1>, scalar_prefetch = 0 : i64, scratch_operands = 1 : i64, tpu.core_type = #tpu.core_type<tc>, window_params = [{transform_indices = @transform_0, window_bounds = array<i64: 8, 32>}, {transform_indices = @transform_1, window_bounds = array<i64: 32, 64>}, {transform_indices = @transform_2, window_bounds = array<i64: 1, 64>}, {transform_indices = @transform_3, window_bounds = array<i64: 64, 32>}, {pipeline_mode = #tpu.pipeline_mode<synchronous>, transform_indices = @transform_4, window_bounds = array<i64: 1, 32>}, {transform_indices = @transform_5, window_bounds = array<i64: 8, 32>}]} {
    %c0_i32 = arith.constant 0 : i32
    %0 = arith.cmpi eq, %arg1, %c0_i32 : i32
    %1 = arith.extui %0 : i1 to i32
    %c0_i32_0 = arith.constant 0 : i32
    %2 = arith.cmpi ne, %1, %c0_i32_0 : i32
    scf.if %2 {
      %cst_16 = arith.constant 0.000000e+00 : f32
      %20 = vector.broadcast %cst_16 : f32 to vector<8x32xf32>
      %c0_17 = arith.constant 0 : index
      %c0_18 = arith.constant 0 : index
      %21 = vector.load %arg8[%c0_17, %c0_18] : memref<8x32xf32, #tpu.memory_space<vmem>>, vector<8x32xf32>
      tpu.vector_store %arg8[%c0_17, %c0_18], %20 {strides = array<i32>} : memref<8x32xf32, #tpu.memory_space<vmem>>, vector<8x32xf32>,
    } else {
    }
    %c0 = arith.constant 0 : index
    %c0_1 = arith.constant 0 : index
    %3 = vector.load %arg2[%c0, %c0_1] : memref<8x32xbf16, #tpu.memory_space<vmem>>, vector<8x32xbf16>
    %c0_2 = arith.constant 0 : index
    %c0_3 = arith.constant 0 : index
    %4 = vector.load %arg3[%c0_2, %c0_3] : memref<32x64xbf16, #tpu.memory_space<vmem>>, vector<32x64xbf16>
    %cst = arith.constant dense<0.000000e+00> : vector<8x64xf32>
    %5 = tpu.matmul %3, %4, %cst {dimension_numbers = #tpu.dot_dimension_numbers<[1], [0], [0], [1], [0, 0, 1, 1], [], []>} : vector<8x32xbf16>, vector<32x64xbf16>, vector<8x64xf32> -> vector<8x64xf32>
    %c0_4 = arith.constant 0 : index
    %c0_5 = arith.constant 0 : index
    %6 = vector.load %arg4[%c0_4, %c0_5] : memref<1x64xf32, #tpu.memory_space<vmem>>, vector<1x64xf32>
    %7 = vector.broadcast %6 : vector<1x64xf32> to vector<8x64xf32>
    %8 = arith.addf %5, %7 : vector<8x64xf32>
    %cst_6 = arith.constant 0.000000e+00 : f32
    %9 = vector.broadcast %cst_6 : f32 to vector<8x64xf32>
    %10 = arith.maximumf %8, %9 : vector<8x64xf32>
    %c0_7 = arith.constant 0 : index
    %c0_8 = arith.constant 0 : index
    %11 = vector.load %arg8[%c0_7, %c0_8] : memref<8x32xf32, #tpu.memory_space<vmem>>, vector<8x32xf32>
    %12 = arith.truncf %10 : vector<8x64xf32> to vector<8x64xbf16>
    %c0_9 = arith.constant 0 : index
    %c0_10 = arith.constant 0 : index
    %13 = vector.load %arg5[%c0_9, %c0_10] : memref<64x32xbf16, #tpu.memory_space<vmem>>, vector<64x32xbf16>
    %cst_11 = arith.constant dense<0.000000e+00> : vector<8x32xf32>
    %14 = tpu.matmul %12, %13, %cst_11 {dimension_numbers = #tpu.dot_dimension_numbers<[1], [0], [0], [1], [0, 0, 1, 1], [], []>} : vector<8x64xbf16>, vector<64x32xbf16>, vector<8x32xf32> -> vector<8x32xf32>
    %15 = arith.addf %11, %14 : vector<8x32xf32>
    %c0_12 = arith.constant 0 : index
    %c0_13 = arith.constant 0 : index
    %16 = vector.load %arg8[%c0_12, %c0_13] : memref<8x32xf32, #tpu.memory_space<vmem>>, vector<8x32xf32>
    tpu.vector_store %arg8[%c0_12, %c0_13], %15 {strides = array<i32>} : memref<8x32xf32, #tpu.memory_space<vmem>>, vector<8x32xf32>,
    %c0_i32_14 = arith.constant 0 : i32
    %17 = arith.cmpi eq, %arg1, %c0_i32_14 : i32
    %18 = arith.extui %17 : i1 to i32
    %c0_i32_15 = arith.constant 0 : i32
    %19 = arith.cmpi ne, %18, %c0_i32_15 : i32
    scf.if %19 {
      %c0_16 = arith.constant 0 : index
      %c0_17 = arith.constant 0 : index
      %20 = vector.load %arg8[%c0_16, %c0_17] : memref<8x32xf32, #tpu.memory_space<vmem>>, vector<8x32xf32>
      %c0_18 = arith.constant 0 : index
      %c0_19 = arith.constant 0 : index
      %21 = vector.load %arg6[%c0_18, %c0_19] : memref<1x32xf32, #tpu.memory_space<vmem>>, vector<1x32xf32>
      %22 = vector.broadcast %21 : vector<1x32xf32> to vector<8x32xf32>
      %23 = arith.addf %20, %22 : vector<8x32xf32>
      %24 = arith.truncf %23 : vector<8x32xf32> to vector<8x32xbf16>
      %c0_20 = arith.constant 0 : index
      %c0_21 = arith.constant 0 : index
      %25 = vector.load %arg7[%c0_20, %c0_21] : memref<8x32xbf16, #tpu.memory_space<vmem>>, vector<8x32xbf16>
      tpu.vector_store %arg7[%c0_20, %c0_21], %24 {strides = array<i32>} : memref<8x32xbf16, #tpu.memory_space<vmem>>, vector<8x32xbf16>,
    } else {
    }
    return
  }
  func.func @transform_0(%arg0: i32, %arg1: i32) -> (i32, i32) {
    %c0_i32 = arith.constant 0 : i32
    %c0_i32_0 = arith.constant 0 : i32
    return %arg0, %c0_i32 : i32, i32
  }
  func.func @transform_1(%arg0: i32, %arg1: i32) -> (i32, i32) {
    %c0_i32 = arith.constant 0 : i32
    %c0_i32_0 = arith.constant 0 : i32
    return %c0_i32, %arg1 : i32, i32
  }
  func.func @transform_2(%arg0: i32, %arg1: i32) -> (i32, i32) {
    %c0_i32 = arith.constant 0 : i32
    %c0_i32_0 = arith.constant 0 : i32
    return %c0_i32, %arg1 : i32, i32
  }
  func.func @transform_3(%arg0: i32, %arg1: i32) -> (i32, i32) {
    %c0_i32 = arith.constant 0 : i32
    %c0_i32_0 = arith.constant 0 : i32
    return %arg1, %c0_i32 : i32, i32
  }
  func.func @transform_4(%arg0: i32, %arg1: i32) -> (i32, i32) {
    %c0_i32 = arith.constant 0 : i32
    %c0_i32_0 = arith.constant 0 : i32
    %c0_i32_1 = arith.constant 0 : i32
    return %c0_i32, %c0_i32_0 : i32, i32
  }
  func.func @transform_5(%arg0: i32, %arg1: i32) -> (i32, i32) {
    %c0_i32 = arith.constant 0 : i32
    %c0_i32_0 = arith.constant 0 : i32
    return %arg0, %c0_i32 : i32, i32
  }
}

module attributes {stable_mosaic.version = 11 : i64} {
  func.func @_add_ln_kernel(%arg0: i32, %arg1: memref<8x32xbf16, #tpu.memory_space<vmem>>, %arg2: memref<8x32xbf16, #tpu.memory_space<vmem>>, %arg3: memref<1x32xf32, #tpu.memory_space<vmem>>, %arg4: memref<1x32xf32, #tpu.memory_space<vmem>>, %arg5: memref<8x32xbf16, #tpu.memory_space<vmem>>) attributes {dimension_semantics = [#tpu.dimension_semantics<parallel>], iteration_bounds = array<i64: 2>, scalar_prefetch = 0 : i64, scratch_operands = 0 : i64, tpu.core_type = #tpu.core_type<tc>, window_params = [{transform_indices = @transform_0, window_bounds = array<i64: 8, 32>}, {transform_indices = @transform_1, window_bounds = array<i64: 8, 32>}, {pipeline_mode = #tpu.pipeline_mode<synchronous>, transform_indices = @transform_2, window_bounds = array<i64: 1, 32>}, {pipeline_mode = #tpu.pipeline_mode<synchronous>, transform_indices = @transform_3, window_bounds = array<i64: 1, 32>}, {transform_indices = @transform_4, window_bounds = array<i64: 8, 32>}]} {
    %c0 = arith.constant 0 : index
    %c0_0 = arith.constant 0 : index
    %0 = vector.load %arg1[%c0, %c0_0] : memref<8x32xbf16, #tpu.memory_space<vmem>>, vector<8x32xbf16>
    %1 = arith.extf %0 : vector<8x32xbf16> to vector<8x32xf32>
    %c0_1 = arith.constant 0 : index
    %c0_2 = arith.constant 0 : index
    %2 = vector.load %arg2[%c0_1, %c0_2] : memref<8x32xbf16, #tpu.memory_space<vmem>>, vector<8x32xbf16>
    %3 = arith.extf %2 : vector<8x32xbf16> to vector<8x32xf32>
    %4 = arith.addf %1, %3 : vector<8x32xf32>
    %cst = arith.constant dense<0.000000e+00> : vector<8xf32>
    %5 = vector.multi_reduction <add>, %4, %cst [1] : vector<8x32xf32> to vector<8xf32>
    %6 = vector.shape_cast %5 : vector<8xf32> to vector<8x1xf32>
    %cst_3 = arith.constant 3.200000e+01 : f32
    %7 = vector.broadcast %cst_3 : f32 to vector<8x1xf32>
    %8 = arith.divf %6, %7 : vector<8x1xf32>
    %9 = arith.mulf %4, %4 : vector<8x32xf32>
    %cst_4 = arith.constant dense<0.000000e+00> : vector<8xf32>
    %10 = vector.multi_reduction <add>, %9, %cst_4 [1] : vector<8x32xf32> to vector<8xf32>
    %11 = vector.shape_cast %10 : vector<8xf32> to vector<8x1xf32>
    %cst_5 = arith.constant 3.200000e+01 : f32
    %12 = vector.broadcast %cst_5 : f32 to vector<8x1xf32>
    %13 = arith.divf %11, %12 : vector<8x1xf32>
    %14 = vector.broadcast %8 : vector<8x1xf32> to vector<8x32xf32>
    %15 = arith.subf %4, %14 : vector<8x32xf32>
    %16 = arith.mulf %8, %8 : vector<8x1xf32>
    %17 = arith.subf %13, %16 : vector<8x1xf32>
    %cst_6 = arith.constant 9.99999974E-6 : f32
    %18 = vector.broadcast %cst_6 : f32 to vector<8x1xf32>
    %19 = arith.addf %17, %18 : vector<8x1xf32>
    %20 = math.rsqrt %19 : vector<8x1xf32>
    %21 = vector.broadcast %20 : vector<8x1xf32> to vector<8x32xf32>
    %22 = arith.mulf %15, %21 : vector<8x32xf32>
    %c0_7 = arith.constant 0 : index
    %c0_8 = arith.constant 0 : index
    %23 = vector.load %arg3[%c0_7, %c0_8] : memref<1x32xf32, #tpu.memory_space<vmem>>, vector<1x32xf32>
    %24 = vector.broadcast %23 : vector<1x32xf32> to vector<8x32xf32>
    %25 = arith.mulf %22, %24 : vector<8x32xf32>
    %c0_9 = arith.constant 0 : index
    %c0_10 = arith.constant 0 : index
    %26 = vector.load %arg4[%c0_9, %c0_10] : memref<1x32xf32, #tpu.memory_space<vmem>>, vector<1x32xf32>
    %27 = vector.broadcast %26 : vector<1x32xf32> to vector<8x32xf32>
    %28 = arith.addf %25, %27 : vector<8x32xf32>
    %29 = arith.truncf %28 : vector<8x32xf32> to vector<8x32xbf16>
    %c0_11 = arith.constant 0 : index
    %c0_12 = arith.constant 0 : index
    %30 = vector.load %arg5[%c0_11, %c0_12] : memref<8x32xbf16, #tpu.memory_space<vmem>>, vector<8x32xbf16>
    tpu.vector_store %arg5[%c0_11, %c0_12], %29 {strides = array<i32>} : memref<8x32xbf16, #tpu.memory_space<vmem>>, vector<8x32xbf16>,
    return
  }
  func.func @transform_0(%arg0: i32) -> (i32, i32) {
    %c0_i32 = arith.constant 0 : i32
    %c0_i32_0 = arith.constant 0 : i32
    return %arg0, %c0_i32 : i32, i32
  }
  func.func @transform_1(%arg0: i32) -> (i32, i32) {
    %c0_i32 = arith.constant 0 : i32
    %c0_i32_0 = arith.constant 0 : i32
    return %arg0, %c0_i32 : i32, i32
  }
  func.func @transform_2(%arg0: i32) -> (i32, i32) {
    %c0_i32 = arith.constant 0 : i32
    %c0_i32_0 = arith.constant 0 : i32
    %c0_i32_1 = arith.constant 0 : i32
    return %c0_i32, %c0_i32_0 : i32, i32
  }
  func.func @transform_3(%arg0: i32) -> (i32, i32) {
    %c0_i32 = arith.constant 0 : i32
    %c0_i32_0 = arith.constant 0 : i32
    %c0_i32_1 = arith.constant 0 : i32
    return %c0_i32, %c0_i32_0 : i32, i32
  }
  func.func @transform_4(%arg0: i32) -> (i32, i32) {
    %c0_i32 = arith.constant 0 : i32
    %c0_i32_0 = arith.constant 0 : i32
    return %arg0, %c0_i32 : i32, i32
  }
}

module attributes {stable_mosaic.version = 11 : i64} {
  func.func @_fused_proj_kernel(%arg0: i32, %arg1: i32, %arg2: memref<8x32xbf16, #tpu.memory_space<vmem>>, %arg3: memref<32x96xbf16, #tpu.memory_space<vmem>>, %arg4: memref<1x96xf32, #tpu.memory_space<vmem>>, %arg5: memref<8x32xbf16, #tpu.memory_space<vmem>>, %arg6: memref<8x32xbf16, #tpu.memory_space<vmem>>, %arg7: memref<8x32xbf16, #tpu.memory_space<vmem>>, %arg8: memref<8x96xf32, #tpu.memory_space<vmem>>) attributes {dimension_semantics = [#tpu.dimension_semantics<parallel>, #tpu.dimension_semantics<arbitrary>], iteration_bounds = array<i64: 2, 1>, scalar_prefetch = 0 : i64, scratch_operands = 1 : i64, tpu.core_type = #tpu.core_type<tc>, window_params = [{transform_indices = @transform_0, window_bounds = array<i64: 8, 32>}, {transform_indices = @transform_1, window_bounds = array<i64: 32, 96>}, {pipeline_mode = #tpu.pipeline_mode<synchronous>, transform_indices = @transform_2, window_bounds = array<i64: 1, 96>}, {transform_indices = @transform_3, window_bounds = array<i64: 8, 32>}, {transform_indices = @transform_4, window_bounds = array<i64: 8, 32>}, {transform_indices = @transform_5, window_bounds = array<i64: 8, 32>}]} {
    %c0_i32 = arith.constant 0 : i32
    %0 = arith.cmpi eq, %arg1, %c0_i32 : i32
    %1 = arith.extui %0 : i1 to i32
    %c0_i32_0 = arith.constant 0 : i32
    %2 = arith.cmpi ne, %1, %c0_i32_0 : i32
    scf.if %2 {
      %cst_10 = arith.constant 0.000000e+00 : f32
      %12 = vector.broadcast %cst_10 : f32 to vector<8x96xf32>
      %c0_11 = arith.constant 0 : index
      %c0_12 = arith.constant 0 : index
      %13 = vector.load %arg8[%c0_11, %c0_12] : memref<8x96xf32, #tpu.memory_space<vmem>>, vector<8x96xf32>
      tpu.vector_store %arg8[%c0_11, %c0_12], %12 {strides = array<i32>} : memref<8x96xf32, #tpu.memory_space<vmem>>, vector<8x96xf32>,
    } else {
    }
    %c0 = arith.constant 0 : index
    %c0_1 = arith.constant 0 : index
    %3 = vector.load %arg8[%c0, %c0_1] : memref<8x96xf32, #tpu.memory_space<vmem>>, vector<8x96xf32>
    %c0_2 = arith.constant 0 : index
    %c0_3 = arith.constant 0 : index
    %4 = vector.load %arg2[%c0_2, %c0_3] : memref<8x32xbf16, #tpu.memory_space<vmem>>, vector<8x32xbf16>
    %c0_4 = arith.constant 0 : index
    %c0_5 = arith.constant 0 : index
    %5 = vector.load %arg3[%c0_4, %c0_5] : memref<32x96xbf16, #tpu.memory_space<vmem>>, vector<32x96xbf16>
    %cst = arith.constant dense<0.000000e+00> : vector<8x96xf32>
    %6 = tpu.matmul %4, %5, %cst {dimension_numbers = #tpu.dot_dimension_numbers<[1], [0], [0], [1], [0, 0, 1, 1], [], []>} : vector<8x32xbf16>, vector<32x96xbf16>, vector<8x96xf32> -> vector<8x96xf32>
    %7 = arith.addf %3, %6 : vector<8x96xf32>
    %c0_6 = arith.constant 0 : index
    %c0_7 = arith.constant 0 : index
    %8 = vector.load %arg8[%c0_6, %c0_7] : memref<8x96xf32, #tpu.memory_space<vmem>>, vector<8x96xf32>
    tpu.vector_store %arg8[%c0_6, %c0_7], %7 {strides = array<i32>} : memref<8x96xf32, #tpu.memory_space<vmem>>, vector<8x96xf32>,
    %c0_i32_8 = arith.constant 0 : i32
    %9 = arith.cmpi eq, %arg1, %c0_i32_8 : i32
    %10 = arith.extui %9 : i1 to i32
    %c0_i32_9 = arith.constant 0 : i32
    %11 = arith.cmpi ne, %10, %c0_i32_9 : i32
    scf.if %11 {
      %c0_10 = arith.constant 0 : index
      %c0_11 = arith.constant 0 : index
      %12 = vector.load %arg8[%c0_10, %c0_11] : memref<8x96xf32, #tpu.memory_space<vmem>>, vector<8x96xf32>
      %c0_12 = arith.constant 0 : index
      %c0_13 = arith.constant 0 : index
      %13 = vector.load %arg4[%c0_12, %c0_13] : memref<1x96xf32, #tpu.memory_space<vmem>>, vector<1x96xf32>
      %14 = vector.broadcast %13 : vector<1x96xf32> to vector<8x96xf32>
      %15 = arith.addf %12, %14 : vector<8x96xf32>
      %16 = vector.extract_strided_slice %15 {offsets = [0, 0], sizes = [8, 32], strides = [1, 1]} : vector<8x96xf32> to vector<8x32xf32>
      %17 = arith.truncf %16 : vector<8x32xf32> to vector<8x32xbf16>
      %c0_14 = arith.constant 0 : index
      %c0_15 = arith.constant 0 : index
      %18 = vector.load %arg5[%c0_14, %c0_15] : memref<8x32xbf16, #tpu.memory_space<vmem>>, vector<8x32xbf16>
      tpu.vector_store %arg5[%c0_14, %c0_15], %17 {strides = array<i32>} : memref<8x32xbf16, #tpu.memory_space<vmem>>, vector<8x32xbf16>,
      %19 = vector.extract_strided_slice %15 {offsets = [0, 32], sizes = [8, 32], strides = [1, 1]} : vector<8x96xf32> to vector<8x32xf32>
      %20 = arith.truncf %19 : vector<8x32xf32> to vector<8x32xbf16>
      %c0_16 = arith.constant 0 : index
      %c0_17 = arith.constant 0 : index
      %21 = vector.load %arg6[%c0_16, %c0_17] : memref<8x32xbf16, #tpu.memory_space<vmem>>, vector<8x32xbf16>
      tpu.vector_store %arg6[%c0_16, %c0_17], %20 {strides = array<i32>} : memref<8x32xbf16, #tpu.memory_space<vmem>>, vector<8x32xbf16>,
      %22 = vector.extract_strided_slice %15 {offsets = [0, 64], sizes = [8, 32], strides = [1, 1]} : vector<8x96xf32> to vector<8x32xf32>
      %23 = arith.truncf %22 : vector<8x32xf32> to vector<8x32xbf16>
      %c0_18 = arith.constant 0 : index
      %c0_19 = arith.constant 0 : index
      %24 = vector.load %arg7[%c0_18, %c0_19] : memref<8x32xbf16, #tpu.memory_space<vmem>>, vector<8x32xbf16>
      tpu.vector_store %arg7[%c0_18, %c0_19], %23 {strides = array<i32>} : memref<8x32xbf16, #tpu.memory_space<vmem>>, vector<8x32xbf16>,
    } else {
    }
    return
  }
  func.func @transform_0(%arg0: i32, %arg1: i32) -> (i32, i32) {
    %c0_i32 = arith.constant 0 : i32
    return %arg0, %arg1 : i32, i32
  }
  func.func @transform_1(%arg0: i32, %arg1: i32) -> (i32, i32) {
    %c0_i32 = arith.constant 0 : i32
    %c0_i32_0 = arith.constant 0 : i32
    return %arg1, %c0_i32 : i32, i32
  }
  func.func @transform_2(%arg0: i32, %arg1: i32) -> (i32, i32) {
    %c0_i32 = arith.constant 0 : i32
    %c0_i32_0 = arith.constant 0 : i32
    %c0_i32_1 = arith.constant 0 : i32
    return %c0_i32, %c0_i32_0 : i32, i32
  }
  func.func @transform_3(%arg0: i32, %arg1: i32) -> (i32, i32) {
    %c0_i32 = arith.constant 0 : i32
    %c0_i32_0 = arith.constant 0 : i32
    return %arg0, %c0_i32 : i32, i32
  }
  func.func @transform_4(%arg0: i32, %arg1: i32) -> (i32, i32) {
    %c0_i32 = arith.constant 0 : i32
    %c0_i32_0 = arith.constant 0 : i32
    return %arg0, %c0_i32 : i32, i32
  }
  func.func @transform_5(%arg0: i32, %arg1: i32) -> (i32, i32) {
    %c0_i32 = arith.constant 0 : i32
    %c0_i32_0 = arith.constant 0 : i32
    return %arg0, %c0_i32 : i32, i32
  }
}

module attributes {stable_mosaic.version = 11 : i64} {
  func.func @_linear_kernel(%arg0: i32, %arg1: i32, %arg2: i32, %arg3: memref<8x32xbf16, #tpu.memory_space<vmem>>, %arg4: memref<32x32xbf16, #tpu.memory_space<vmem>>, %arg5: memref<1x32xf32, #tpu.memory_space<vmem>>, %arg6: memref<8x32xbf16, #tpu.memory_space<vmem>>, %arg7: memref<8x32xf32, #tpu.memory_space<vmem>>) attributes {dimension_semantics = [#tpu.dimension_semantics<parallel>, #tpu.dimension_semantics<parallel>, #tpu.dimension_semantics<arbitrary>], iteration_bounds = array<i64: 2, 1, 1>, scalar_prefetch = 0 : i64, scratch_operands = 1 : i64, tpu.core_type = #tpu.core_type<tc>, window_params = [{transform_indices = @transform_0, window_bounds = array<i64: 8, 32>}, {transform_indices = @transform_1, window_bounds = array<i64: 32, 32>}, {transform_indices = @transform_2, window_bounds = array<i64: 1, 32>}, {transform_indices = @transform_3, window_bounds = array<i64: 8, 32>}]} {
    %c0_i32 = arith.constant 0 : i32
    %0 = arith.cmpi eq, %arg2, %c0_i32 : i32
    %1 = arith.extui %0 : i1 to i32
    %c0_i32_0 = arith.constant 0 : i32
    %2 = arith.cmpi ne, %1, %c0_i32_0 : i32
    scf.if %2 {
      %cst_10 = arith.constant 0.000000e+00 : f32
      %12 = vector.broadcast %cst_10 : f32 to vector<8x32xf32>
      %c0_11 = arith.constant 0 : index
      %c0_12 = arith.constant 0 : index
      %13 = vector.load %arg7[%c0_11, %c0_12] : memref<8x32xf32, #tpu.memory_space<vmem>>, vector<8x32xf32>
      tpu.vector_store %arg7[%c0_11, %c0_12], %12 {strides = array<i32>} : memref<8x32xf32, #tpu.memory_space<vmem>>, vector<8x32xf32>,
    } else {
    }
    %c0 = arith.constant 0 : index
    %c0_1 = arith.constant 0 : index
    %3 = vector.load %arg7[%c0, %c0_1] : memref<8x32xf32, #tpu.memory_space<vmem>>, vector<8x32xf32>
    %c0_2 = arith.constant 0 : index
    %c0_3 = arith.constant 0 : index
    %4 = vector.load %arg3[%c0_2, %c0_3] : memref<8x32xbf16, #tpu.memory_space<vmem>>, vector<8x32xbf16>
    %c0_4 = arith.constant 0 : index
    %c0_5 = arith.constant 0 : index
    %5 = vector.load %arg4[%c0_4, %c0_5] : memref<32x32xbf16, #tpu.memory_space<vmem>>, vector<32x32xbf16>
    %cst = arith.constant dense<0.000000e+00> : vector<8x32xf32>
    %6 = tpu.matmul %4, %5, %cst {dimension_numbers = #tpu.dot_dimension_numbers<[1], [0], [0], [1], [0, 0, 1, 1], [], []>} : vector<8x32xbf16>, vector<32x32xbf16>, vector<8x32xf32> -> vector<8x32xf32>
    %7 = arith.addf %3, %6 : vector<8x32xf32>
    %c0_6 = arith.constant 0 : index
    %c0_7 = arith.constant 0 : index
    %8 = vector.load %arg7[%c0_6, %c0_7] : memref<8x32xf32, #tpu.memory_space<vmem>>, vector<8x32xf32>
    tpu.vector_store %arg7[%c0_6, %c0_7], %7 {strides = array<i32>} : memref<8x32xf32, #tpu.memory_space<vmem>>, vector<8x32xf32>,
    %c0_i32_8 = arith.constant 0 : i32
    %9 = arith.cmpi eq, %arg2, %c0_i32_8 : i32
    %10 = arith.extui %9 : i1 to i32
    %c0_i32_9 = arith.constant 0 : i32
    %11 = arith.cmpi ne, %10, %c0_i32_9 : i32
    scf.if %11 {
      %c0_10 = arith.constant 0 : index
      %c0_11 = arith.constant 0 : index
      %12 = vector.load %arg7[%c0_10, %c0_11] : memref<8x32xf32, #tpu.memory_space<vmem>>, vector<8x32xf32>
      %c0_12 = arith.constant 0 : index
      %c0_13 = arith.constant 0 : index
      %13 = vector.load %arg5[%c0_12, %c0_13] : memref<1x32xf32, #tpu.memory_space<vmem>>, vector<1x32xf32>
      %14 = vector.broadcast %13 : vector<1x32xf32> to vector<8x32xf32>
      %15 = arith.addf %12, %14 : vector<8x32xf32>
      %16 = arith.truncf %15 : vector<8x32xf32> to vector<8x32xbf16>
      %c0_14 = arith.constant 0 : index
      %c0_15 = arith.constant 0 : index
      %17 = vector.load %arg6[%c0_14, %c0_15] : memref<8x32xbf16, #tpu.memory_space<vmem>>, vector<8x32xbf16>
      tpu.vector_store %arg6[%c0_14, %c0_15], %16 {strides = array<i32>} : memref<8x32xbf16, #tpu.memory_space<vmem>>, vector<8x32xbf16>,
    } else {
    }
    return
  }
  func.func @transform_0(%arg0: i32, %arg1: i32, %arg2: i32) -> (i32, i32) {
    %c0_i32 = arith.constant 0 : i32
    return %arg0, %arg2 : i32, i32
  }
  func.func @transform_1(%arg0: i32, %arg1: i32, %arg2: i32) -> (i32, i32) {
    %c0_i32 = arith.constant 0 : i32
    return %arg2, %arg1 : i32, i32
  }
  func.func @transform_2(%arg0: i32, %arg1: i32, %arg2: i32) -> (i32, i32) {
    %c0_i32 = arith.constant 0 : i32
    %c0_i32_0 = arith.constant 0 : i32
    return %c0_i32, %arg1 : i32, i32
  }
  func.func @transform_3(%arg0: i32, %arg1: i32, %arg2: i32) -> (i32, i32) {
    %c0_i32 = arith.constant 0 : i32
    return %arg0, %arg1 : i32, i32
  }
}

module attributes {stable_mosaic.version = 11 : i64} {
  func.func @_fused_proj_kernel(%arg0: i32, %arg1: i32, %arg2: memref<8x32xbf16, #tpu.memory_space<vmem>>, %arg3: memref<32x64xbf16, #tpu.memory_space<vmem>>, %arg4: memref<1x64xf32, #tpu.memory_space<vmem>>, %arg5: memref<8x32xbf16, #tpu.memory_space<vmem>>, %arg6: memref<8x32xbf16, #tpu.memory_space<vmem>>, %arg7: memref<8x64xf32, #tpu.memory_space<vmem>>) attributes {dimension_semantics = [#tpu.dimension_semantics<parallel>, #tpu.dimension_semantics<arbitrary>], iteration_bounds = array<i64: 2, 1>, scalar_prefetch = 0 : i64, scratch_operands = 1 : i64, tpu.core_type = #tpu.core_type<tc>, window_params = [{transform_indices = @transform_0, window_bounds = array<i64: 8, 32>}, {transform_indices = @transform_1, window_bounds = array<i64: 32, 64>}, {pipeline_mode = #tpu.pipeline_mode<synchronous>, transform_indices = @transform_2, window_bounds = array<i64: 1, 64>}, {transform_indices = @transform_3, window_bounds = array<i64: 8, 32>}, {transform_indices = @transform_4, window_bounds = array<i64: 8, 32>}]} {
    %c0_i32 = arith.constant 0 : i32
    %0 = arith.cmpi eq, %arg1, %c0_i32 : i32
    %1 = arith.extui %0 : i1 to i32
    %c0_i32_0 = arith.constant 0 : i32
    %2 = arith.cmpi ne, %1, %c0_i32_0 : i32
    scf.if %2 {
      %cst_10 = arith.constant 0.000000e+00 : f32
      %12 = vector.broadcast %cst_10 : f32 to vector<8x64xf32>
      %c0_11 = arith.constant 0 : index
      %c0_12 = arith.constant 0 : index
      %13 = vector.load %arg7[%c0_11, %c0_12] : memref<8x64xf32, #tpu.memory_space<vmem>>, vector<8x64xf32>
      tpu.vector_store %arg7[%c0_11, %c0_12], %12 {strides = array<i32>} : memref<8x64xf32, #tpu.memory_space<vmem>>, vector<8x64xf32>,
    } else {
    }
    %c0 = arith.constant 0 : index
    %c0_1 = arith.constant 0 : index
    %3 = vector.load %arg7[%c0, %c0_1] : memref<8x64xf32, #tpu.memory_space<vmem>>, vector<8x64xf32>
    %c0_2 = arith.constant 0 : index
    %c0_3 = arith.constant 0 : index
    %4 = vector.load %arg2[%c0_2, %c0_3] : memref<8x32xbf16, #tpu.memory_space<vmem>>, vector<8x32xbf16>
    %c0_4 = arith.constant 0 : index
    %c0_5 = arith.constant 0 : index
    %5 = vector.load %arg3[%c0_4, %c0_5] : memref<32x64xbf16, #tpu.memory_space<vmem>>, vector<32x64xbf16>
    %cst = arith.constant dense<0.000000e+00> : vector<8x64xf32>
    %6 = tpu.matmul %4, %5, %cst {dimension_numbers = #tpu.dot_dimension_numbers<[1], [0], [0], [1], [0, 0, 1, 1], [], []>} : vector<8x32xbf16>, vector<32x64xbf16>, vector<8x64xf32> -> vector<8x64xf32>
    %7 = arith.addf %3, %6 : vector<8x64xf32>
    %c0_6 = arith.constant 0 : index
    %c0_7 = arith.constant 0 : index
    %8 = vector.load %arg7[%c0_6, %c0_7] : memref<8x64xf32, #tpu.memory_space<vmem>>, vector<8x64xf32>
    tpu.vector_store %arg7[%c0_6, %c0_7], %7 {strides = array<i32>} : memref<8x64xf32, #tpu.memory_space<vmem>>, vector<8x64xf32>,
    %c0_i32_8 = arith.constant 0 : i32
    %9 = arith.cmpi eq, %arg1, %c0_i32_8 : i32
    %10 = arith.extui %9 : i1 to i32
    %c0_i32_9 = arith.constant 0 : i32
    %11 = arith.cmpi ne, %10, %c0_i32_9 : i32
    scf.if %11 {
      %c0_10 = arith.constant 0 : index
      %c0_11 = arith.constant 0 : index
      %12 = vector.load %arg7[%c0_10, %c0_11] : memref<8x64xf32, #tpu.memory_space<vmem>>, vector<8x64xf32>
      %c0_12 = arith.constant 0 : index
      %c0_13 = arith.constant 0 : index
      %13 = vector.load %arg4[%c0_12, %c0_13] : memref<1x64xf32, #tpu.memory_space<vmem>>, vector<1x64xf32>
      %14 = vector.broadcast %13 : vector<1x64xf32> to vector<8x64xf32>
      %15 = arith.addf %12, %14 : vector<8x64xf32>
      %16 = vector.extract_strided_slice %15 {offsets = [0, 0], sizes = [8, 32], strides = [1, 1]} : vector<8x64xf32> to vector<8x32xf32>
      %17 = arith.truncf %16 : vector<8x32xf32> to vector<8x32xbf16>
      %c0_14 = arith.constant 0 : index
      %c0_15 = arith.constant 0 : index
      %18 = vector.load %arg5[%c0_14, %c0_15] : memref<8x32xbf16, #tpu.memory_space<vmem>>, vector<8x32xbf16>
      tpu.vector_store %arg5[%c0_14, %c0_15], %17 {strides = array<i32>} : memref<8x32xbf16, #tpu.memory_space<vmem>>, vector<8x32xbf16>,
      %19 = vector.extract_strided_slice %15 {offsets = [0, 32], sizes = [8, 32], strides = [1, 1]} : vector<8x64xf32> to vector<8x32xf32>
      %20 = arith.truncf %19 : vector<8x32xf32> to vector<8x32xbf16>
      %c0_16 = arith.constant 0 : index
      %c0_17 = arith.constant 0 : index
      %21 = vector.load %arg6[%c0_16, %c0_17] : memref<8x32xbf16, #tpu.memory_space<vmem>>, vector<8x32xbf16>
      tpu.vector_store %arg6[%c0_16, %c0_17], %20 {strides = array<i32>} : memref<8x32xbf16, #tpu.memory_space<vmem>>, vector<8x32xbf16>,
    } else {
    }
    return
  }
  func.func @transform_0(%arg0: i32, %arg1: i32) -> (i32, i32) {
    %c0_i32 = arith.constant 0 : i32
    return %arg0, %arg1 : i32, i32
  }
  func.func @transform_1(%arg0: i32, %arg1: i32) -> (i32, i32) {
    %c0_i32 = arith.constant 0 : i32
    %c0_i32_0 = arith.constant 0 : i32
    return %arg1, %c0_i32 : i32, i32
  }
  func.func @transform_2(%arg0: i32, %arg1: i32) -> (i32, i32) {
    %c0_i32 = arith.constant 0 : i32
    %c0_i32_0 = arith.constant 0 : i32
    %c0_i32_1 = arith.constant 0 : i32
    return %c0_i32, %c0_i32_0 : i32, i32
  }
  func.func @transform_3(%arg0: i32, %arg1: i32) -> (i32, i32) {
    %c0_i32 = arith.constant 0 : i32
    %c0_i32_0 = arith.constant 0 : i32
    return %arg0, %c0_i32 : i32, i32
  }
  func.func @transform_4(%arg0: i32, %arg1: i32) -> (i32, i32) {
    %c0_i32 = arith.constant 0 : i32
    %c0_i32_0 = arith.constant 0 : i32
    return %arg0, %c0_i32 : i32, i32
  }
}

module attributes {stable_mosaic.version = 11 : i64} {
  func.func @_linear_kernel(%arg0: i32, %arg1: i32, %arg2: i32, %arg3: memref<8x32xbf16, #tpu.memory_space<vmem>>, %arg4: memref<32x16xbf16, #tpu.memory_space<vmem>>, %arg5: memref<1x16xf32, #tpu.memory_space<vmem>>, %arg6: memref<8x16xf32, #tpu.memory_space<vmem>>, %arg7: memref<8x16xf32, #tpu.memory_space<vmem>>) attributes {dimension_semantics = [#tpu.dimension_semantics<parallel>, #tpu.dimension_semantics<parallel>, #tpu.dimension_semantics<arbitrary>], iteration_bounds = array<i64: 2, 1, 1>, scalar_prefetch = 0 : i64, scratch_operands = 1 : i64, tpu.core_type = #tpu.core_type<tc>, window_params = [{transform_indices = @transform_0, window_bounds = array<i64: 8, 32>}, {transform_indices = @transform_1, window_bounds = array<i64: 32, 16>}, {transform_indices = @transform_2, window_bounds = array<i64: 1, 16>}, {transform_indices = @transform_3, window_bounds = array<i64: 8, 16>}]} {
    %c0_i32 = arith.constant 0 : i32
    %0 = arith.cmpi eq, %arg2, %c0_i32 : i32
    %1 = arith.extui %0 : i1 to i32
    %c0_i32_0 = arith.constant 0 : i32
    %2 = arith.cmpi ne, %1, %c0_i32_0 : i32
    scf.if %2 {
      %cst_10 = arith.constant 0.000000e+00 : f32
      %12 = vector.broadcast %cst_10 : f32 to vector<8x16xf32>
      %c0_11 = arith.constant 0 : index
      %c0_12 = arith.constant 0 : index
      %13 = vector.load %arg7[%c0_11, %c0_12] : memref<8x16xf32, #tpu.memory_space<vmem>>, vector<8x16xf32>
      tpu.vector_store %arg7[%c0_11, %c0_12], %12 {strides = array<i32>} : memref<8x16xf32, #tpu.memory_space<vmem>>, vector<8x16xf32>,
    } else {
    }
    %c0 = arith.constant 0 : index
    %c0_1 = arith.constant 0 : index
    %3 = vector.load %arg7[%c0, %c0_1] : memref<8x16xf32, #tpu.memory_space<vmem>>, vector<8x16xf32>
    %c0_2 = arith.constant 0 : index
    %c0_3 = arith.constant 0 : index
    %4 = vector.load %arg3[%c0_2, %c0_3] : memref<8x32xbf16, #tpu.memory_space<vmem>>, vector<8x32xbf16>
    %c0_4 = arith.constant 0 : index
    %c0_5 = arith.constant 0 : index
    %5 = vector.load %arg4[%c0_4, %c0_5] : memref<32x16xbf16, #tpu.memory_space<vmem>>, vector<32x16xbf16>
    %cst = arith.constant dense<0.000000e+00> : vector<8x16xf32>
    %6 = tpu.matmul %4, %5, %cst {dimension_numbers = #tpu.dot_dimension_numbers<[1], [0], [0], [1], [0, 0, 1, 1], [], []>} : vector<8x32xbf16>, vector<32x16xbf16>, vector<8x16xf32> -> vector<8x16xf32>
    %7 = arith.addf %3, %6 : vector<8x16xf32>
    %c0_6 = arith.constant 0 : index
    %c0_7 = arith.constant 0 : index
    %8 = vector.load %arg7[%c0_6, %c0_7] : memref<8x16xf32, #tpu.memory_space<vmem>>, vector<8x16xf32>
    tpu.vector_store %arg7[%c0_6, %c0_7], %7 {strides = array<i32>} : memref<8x16xf32, #tpu.memory_space<vmem>>, vector<8x16xf32>,
    %c0_i32_8 = arith.constant 0 : i32
    %9 = arith.cmpi eq, %arg2, %c0_i32_8 : i32
    %10 = arith.extui %9 : i1 to i32
    %c0_i32_9 = arith.constant 0 : i32
    %11 = arith.cmpi ne, %10, %c0_i32_9 : i32
    scf.if %11 {
      %c0_10 = arith.constant 0 : index
      %c0_11 = arith.constant 0 : index
      %12 = vector.load %arg7[%c0_10, %c0_11] : memref<8x16xf32, #tpu.memory_space<vmem>>, vector<8x16xf32>
      %c0_12 = arith.constant 0 : index
      %c0_13 = arith.constant 0 : index
      %13 = vector.load %arg5[%c0_12, %c0_13] : memref<1x16xf32, #tpu.memory_space<vmem>>, vector<1x16xf32>
      %14 = vector.broadcast %13 : vector<1x16xf32> to vector<8x16xf32>
      %15 = arith.addf %12, %14 : vector<8x16xf32>
      %c0_14 = arith.constant 0 : index
      %c0_15 = arith.constant 0 : index
      %16 = vector.load %arg6[%c0_14, %c0_15] : memref<8x16xf32, #tpu.memory_space<vmem>>, vector<8x16xf32>
      tpu.vector_store %arg6[%c0_14, %c0_15], %15 {strides = array<i32>} : memref<8x16xf32, #tpu.memory_space<vmem>>, vector<8x16xf32>,
    } else {
    }
    return
  }
  func.func @transform_0(%arg0: i32, %arg1: i32, %arg2: i32) -> (i32, i32) {
    %c0_i32 = arith.constant 0 : i32
    return %arg0, %arg2 : i32, i32
  }
  func.func @transform_1(%arg0: i32, %arg1: i32, %arg2: i32) -> (i32, i32) {
    %c0_i32 = arith.constant 0 : i32
    return %arg2, %arg1 : i32, i32
  }
  func.func @transform_2(%arg0: i32, %arg1: i32, %arg2: i32) -> (i32, i32) {
    %c0_i32 = arith.constant 0 : i32
    %c0_i32_0 = arith.constant 0 : i32
    return %c0_i32, %arg1 : i32, i32
  }
  func.func @transform_3(%arg0: i32, %arg1: i32, %arg2: i32) -> (i32, i32) {
    %c0_i32 = arith.constant 0 : i32
    return %arg0, %arg1 : i32, i32
  }
}

</mosaic_0001>

<llo_original>
// kernel: transformer_forward.39
$region0: #{transformer_forward.39}
  #allocation0 [shape = 'u32[]', space=smem, size = 0x4, offset = 0x4, fixed_abs, tag = 'smem constant byte address 0x4 - core index']
  #allocation1 [shape = 'u32[72,128]{1,0:T(1,128)}', space=vmem, size = 0x9000, scoped, tag = 'internal scratch']
  #allocation2 [shape = 'f32[8,32]{1,0:T(8,128)}', space=vmem, size = 0x1000, scoped, tag = 'scratch operand']
  %s0 = inlined_call_operand.vmem [shape: bf16[16,32], index: 0, kind: input, shape index: {}]
  %s1 = inlined_call_operand.vmem [shape: bf16[32,32], index: 1, kind: input, shape index: {}]
  %s2 = inlined_call_operand.vmem [shape: f32[1,32], index: 2, kind: input, shape index: {}]
  %s3 = inlined_call_operand.vmem [shape: bf16[16,32], index: 3, kind: output, shape index: {}]
  %s4 = sld [smem:[#allocation0]]
  $region53: #{transformer_forward.39} parent=0
    _
  %s6 = ssub.s32 1, %s4
  %s7 = scalar_select 0, %s6, %s4
  loop: start=0, step=1, limit=4
  $region2: #{transformer_forward.39} parent=0 // loop_pre_header
    _
  $region3: #{transformer_forward.39} parent=0 // loop_header
    %s9 = sphi 0, %s13
    %p10 = scmp.ge.s32.totalorder %s9, 4
    %s16 = sphi 0, %s35
    %s17 = sphi 0, %s31
    %s18 = sphi 0, %s27
    %s19 = sphi 0, %s16
    %s20 = sphi 0, %s17
    %s21 = sphi 0, %s18
    %s22 = sphi 0, %s19
    %s23 = sphi 0, %s20
    %s24 = sphi 0, %s21
    %s40 = sphi 0, %s42
    %s43 = sphi 0, %s40
    %s44 = sphi 0, %s43
    %s60 = sphi 0, %s44
    %s68 = sphi 0, %s70
    %s71 = sphi 0, %s68
    %s72 = sphi 0, %s71
    %s88 = sphi 0, %s72
    %s94 = sphi 0, %s96
    %s97 = sphi 0, %s94
    %s98 = sphi 0, %s97
    %s114 = sphi 0, %s98
    %s122 = sphi 0, %s124
    %s125 = sphi 0, %s122
    %s126 = sphi 0, %s125
    %s142 = sphi 0, %s126
  $region4: #{transformer_forward.39} parent=0 // loop_header_branch
    %12 = sbr.rel (%p10) target = $region8
  $region5: #{transformer_forward.39} parent=0 // loop_body
    %s14 = ssub.s32 %s9, 1
    %s15 = ssub.s32 %s9, 2
    %s25 = sadd.s32 1, %s18
    %p26 = scmp.ge.s32.totalorder %s25, 1
    %s27 = scalar_select %p26, 0, %s25
    %s28 = sadd.s32 1, %s17
    %s29 = scalar_select %p26, %s28, %s17
    %p30 = scmp.ge.s32.totalorder %s29, 1
    %s31 = scalar_select %p30, 0, %s29
    %s32 = sadd.s32 1, %s16
    %s33 = scalar_select %p30, %s32, %s16
    %p34 = scmp.ge.s32.totalorder %s33, 2
    %s35 = scalar_select %p34, 0, %s33
    %s36 = ssub.s32 %s16, %s35
    %s37 = ssub.s32 %s18, %s27
    %s38 = sor.u32 %s36, %s37
    %p39 = scmp.eq.s32.totalorder %s38, 0
    %s41 = sadd.s32 %s40, 1
    %s42 = scalar_select %p39, %s40, %s41
    %p45 = pneg %p39
    %p46 = scmp.eq.s32.totalorder %s9, 1
    %p47 = por %p45, %p46
    %p48 = scmp.ne.s32.totalorder %s40, %s43
    %p49 = scmp.eq.s32.totalorder %s9, 0
    %p50 = por %p48, %p49
    %p51 = scmp.ne.s32.totalorder %s40, %s43
    %p52 = scmp.eq.s32.totalorder %s14, 1
    %p53 = por %p51, %p52
    %p54 = scmp.ne.s32.totalorder %s43, %s44
    %p55 = scmp.eq.s32.totalorder %s14, 0
    %p56 = por %p54, %p55
    %p57 = scmp.ne.s32.totalorder %s43, %s44
    %p58 = scmp.eq.s32.totalorder %s15, 1
    %p59 = por %p57, %p58
    %p61 = scmp.ne.s32.totalorder %s44, %s60
    %p62 = scmp.eq.s32.totalorder %s15, 0
    %p63 = por %p61, %p62
    %s64 = ssub.s32 %s18, %s27
    %s65 = ssub.s32 %s17, %s31
    %s66 = sor.u32 %s64, %s65
    %p67 = scmp.eq.s32.totalorder %s66, 0
    %s69 = sadd.s32 %s68, 1
    %s70 = scalar_select %p67, %s68, %s69
    %p73 = pneg %p67
    %p74 = scmp.eq.s32.totalorder %s9, 1
    %p75 = por %p73, %p74
    %p76 = scmp.ne.s32.totalorder %s68, %s71
    %p77 = scmp.eq.s32.totalorder %s9, 0
    %p78 = por %p76, %p77
    %p79 = scmp.ne.s32.totalorder %s68, %s71
    %p80 = scmp.eq.s32.totalorder %s14, 1
    %p81 = por %p79, %p80
    %p82 = scmp.ne.s32.totalorder %s71, %s72
    %p83 = scmp.eq.s32.totalorder %s14, 0
    %p84 = por %p82, %p83
    %p85 = scmp.ne.s32.totalorder %s71, %s72
    %p86 = scmp.eq.s32.totalorder %s15, 1
    %p87 = por %p85, %p86
    %p89 = scmp.ne.s32.totalorder %s72, %s88
    %p90 = scmp.eq.s32.totalorder %s15, 0
    %p91 = por %p89, %p90
    %s92 = ssub.s32 %s17, %s31
    %p93 = scmp.eq.s32.totalorder %s92, 0
    %s95 = sadd.s32 %s94, 1
    %s96 = scalar_select %p93, %s94, %s95
    %p99 = pneg %p93
    %p100 = scmp.eq.s32.totalorder %s9, 1
    %p101 = por %p99, %p100
    %p102 = scmp.ne.s32.totalorder %s94, %s97
    %p103 = scmp.eq.s32.totalorder %s9, 0
    %p104 = por %p102, %p103
    %p105 = scmp.ne.s32.totalorder %s94, %s97
    %p106 = scmp.eq.s32.totalorder %s14, 1
    %p107 = por %p105, %p106
    %p108 = scmp.ne.s32.totalorder %s97, %s98
    %p109 = scmp.eq.s32.totalorder %s14, 0
    %p110 = por %p108, %p109
    %p111 = scmp.ne.s32.totalorder %s97, %s98
    %p112 = scmp.eq.s32.totalorder %s15, 1
    %p113 = por %p111, %p112
    %p115 = scmp.ne.s32.totalorder %s98, %s114
    %p116 = scmp.eq.s32.totalorder %s15, 0
    %p117 = por %p115, %p116
    %s118 = ssub.s32 %s16, %s35
    %s119 = ssub.s32 %s17, %s31
    %s120 = sor.u32 %s118, %s119
    %p121 = scmp.eq.s32.totalorder %s120, 0
    %s123 = sadd.s32 %s122, 1
    %s124 = scalar_select %p121, %s122, %s123
    %p127 = pneg %p121
    %p128 = scmp.eq.s32.totalorder %s9, 1
    %p129 = por %p127, %p128
    %p130 = scmp.ne.s32.totalorder %s122, %s125
    %p131 = scmp.eq.s32.totalorder %s9, 0
    %p132 = por %p130, %p131
    %p133 = scmp.ne.s32.totalorder %s122, %s125
    %p134 = scmp.eq.s32.totalorder %s14, 1
    %p135 = por %p133, %p134
    %p136 = scmp.ne.s32.totalorder %s125, %s126
    %p137 = scmp.eq.s32.totalorder %s14, 0
    %p138 = por %p136, %p137
    %p139 = scmp.ne.s32.totalorder %s125, %s126
    %p140 = scmp.eq.s32.totalorder %s15, 1
    %p141 = por %p139, %p140
    %p143 = scmp.ne.s32.totalorder %s126, %s142
    %p144 = scmp.eq.s32.totalorder %s15, 0
    %p145 = por %p143, %p144
    %p146 = scmp.le.s32.totalorder 1, %s9
    %p147 = scmp.lt.s32.totalorder %s9, 3
    %p148 = pnand %p146, %p147
    %p149 = pneg %p148
    // Predicated region
    $region9: #{transformer_forward.39} parent=5 // pred_check
      _
    $region10: #{transformer_forward.39} parent=5 // pred_check_branch
      %151 = sbr.rel (%p148) target = $region12
    $region11: #{transformer_forward.39} parent=5 // pred_region
      %s152 = ssub.s32 %s9, 1
      // Predicated region
      $region13: #{transformer_forward.39} parent=11 // pred_check
        %p153 = pneg %p84
      $region14: #{transformer_forward.39} parent=11 // pred_check_branch
        %155 = sbr.rel (%p153) target = $region16
      $region15: #{transformer_forward.39} parent=11 // pred_region
        %s156 = smul.u32 4, %s21
        %p157 = scmp.lt.s32.totalorder %s156, 3
        %s158 = scalar_select %p157, %s156, 3
        %p159 = scmp.lt.s32.totalorder %s20, 0
        %s160 = scalar_select %p159, %s20, 0
        %s161 = sadd.s32 %s160, %s158
        %s162 = smul.addr %s161, 4
        %s163 = scalar_lea.vmem %s1, %s162
        %s164 = smul.u32 4, %s21
      $region16: #{transformer_forward.39} parent=11 // pred_fallthru
        _
      // Predicated region
      $region17: #{transformer_forward.39} parent=11 // pred_check
        %p165 = pneg %p110
      $region18: #{transformer_forward.39} parent=11 // pred_check_branch
        %167 = sbr.rel (%p165) target = $region20
      $region19: #{transformer_forward.39} parent=11 // pred_region
        %p168 = scmp.lt.s32.totalorder %s20, 0
        %s169 = scalar_select %p168, %s20, 0
        %s170 = scalar_lea.vmem %s2, %s169
      $region20: #{transformer_forward.39} parent=11 // pred_fallthru
        _
    $region12: #{transformer_forward.39} parent=5 // pred_fallthru
      _
    %p171 = scmp.lt.s32.totalorder %s9, 2
    // Predicated region
    $region21: #{transformer_forward.39} parent=5 // pred_check
      %p172 = pneg %p171
    $region22: #{transformer_forward.39} parent=5 // pred_check_branch
      %174 = sbr.rel (%p172) target = $region24
    $region23: #{transformer_forward.39} parent=5 // pred_region
      // Predicated region
      $region25: #{transformer_forward.39} parent=23 // pred_check
        %p175 = pneg %p50
      $region26: #{transformer_forward.39} parent=23 // pred_check_branch
        %177 = sbr.rel (%p175) target = $region28
      $region27: #{transformer_forward.39} parent=23 // pred_region
        %p178 = scmp.lt.s32.totalorder %s16, 1
        %s179 = scalar_select %p178, %s16, 1
        %p180 = scmp.lt.s32.totalorder %s18, 0
        %s181 = scalar_select %p180, %s18, 0
        %s182 = sadd.s32 %s181, %s179
        %s183 = smul.addr %s182, 4
        %s184 = scalar_lea.vmem %s0, %s183
      $region28: #{transformer_forward.39} parent=23 // pred_fallthru
        _
    $region24: #{transformer_forward.39} parent=5 // pred_fallthru
      _
    %p185 = scmp.le.s32.totalorder 1, %s9
    %p186 = scmp.lt.s32.totalorder %s9, 3
    %p187 = pnand %p185, %p186
    %p188 = pneg %p187
    // Predicated region
    $region29: #{transformer_forward.39} parent=5 // pred_check
      _
    $region30: #{transformer_forward.39} parent=5 // pred_check_branch
      %190 = sbr.rel (%p187) target = $region32
    $region31: #{transformer_forward.39} parent=5 // pred_region
      %s191 = ssub.s32 %s9, 1
      %p192 = scmp.lt.s32.totalorder %s19, 1
      %s193 = scalar_select %p192, %s19, 1
      %p194 = scmp.lt.s32.totalorder %s21, 0
      %s195 = scalar_select %p194, %s21, 0
      %s196 = sadd.s32 %s195, %s193
      %s197 = smul.addr %s196, 4
      %s198 = scalar_lea.vmem %s0, %s197
      %p199 = pneg %p56
      %p200 = pneg %p53
      %s201 = smul.u32 4, %s21
      %p202 = scmp.lt.s32.totalorder %s201, 3
      %s203 = scalar_select %p202, %s201, 3
      %p204 = scmp.lt.s32.totalorder %s20, 0
      %s205 = scalar_select %p204, %s20, 0
      %s206 = sadd.s32 %s205, %s203
      %s207 = smul.addr %s206, 4
      %s208 = scalar_lea.vmem %s1, %s207
      %p209 = pneg %p84
      %p210 = pneg %p81
      %p211 = scmp.lt.s32.totalorder %s20, 0
      %s212 = scalar_select %p211, %s20, 0
      %s213 = scalar_lea.vmem %s2, %s212
      %p214 = pneg %p110
      %p215 = pneg %p107
      %p216 = pneg %p138
      %p217 = pneg %p135
      %p218 = scmp.lt.s32.totalorder %s19, 1
      %s219 = scalar_select %p218, %s19, 1
      %p220 = scmp.lt.s32.totalorder %s20, 0
      %s221 = scalar_select %p220, %s20, 0
      %s222 = sadd.s32 %s221, %s219
      %s223 = smul.addr %s222, 4
      %s224 = scalar_lea.vmem %s3, %s223
      %p225 = scmp.lt.s32.totalorder %s19, 1
      %s226 = scalar_select %p225, %s19, 1
      %p227 = scmp.lt.s32.totalorder %s21, 0
      %s228 = scalar_select %p227, %s21, 0
      %s229 = sadd.s32 %s228, %s226
      %s230 = smul.addr %s229, 4
      %s231 = scalar_lea.vmem %s0, %s230
      %s232 = smul.u32 4, %s21
      %p233 = scmp.lt.s32.totalorder %s232, 3
      %s234 = scalar_select %p233, %s232, 3
      %p235 = scmp.lt.s32.totalorder %s20, 0
      %s236 = scalar_select %p235, %s20, 0
      %s237 = sadd.s32 %s236, %s234
      %s238 = smul.addr %s237, 4
      %s239 = scalar_lea.vmem %s1, %s238
      %s240 = smul.u32 4, %s21
      %p241 = scmp.lt.s32.totalorder %s20, 0
      %s242 = scalar_select %p241, %s20, 0
      %s243 = scalar_lea.vmem %s2, %s242
      %p244 = scmp.lt.s32.totalorder %s19, 1
      %s245 = scalar_select %p244, %s19, 1
      %p246 = scmp.lt.s32.totalorder %s20, 0
      %s247 = scalar_select %p246, %s20, 0
      %s248 = sadd.s32 %s247, %s245
      %s249 = smul.addr %s248, 4
      %s250 = scalar_lea.vmem %s3, %s249
      %p252 = scmp.eq.s32.totalorder %s21, 0
      // Predicated region
      $region33: #{transformer_forward.39} parent=31 // pred_check
        %p253 = pneg %p252
      $region34: #{transformer_forward.39} parent=31 // pred_check_branch
        %255 = sbr.rel (%p253) target = $region36
      $region35: #{transformer_forward.39} parent=31 // pred_region
        %vm256 = vcmask 261120
        %257 = vst.msk [vmem:[#allocation2] sm:$0xff] %vm256, 0.0
      $region36: #{transformer_forward.39} parent=31 // pred_fallthru
        _
      %v258 = vld [vmem:[#allocation2] sm:$0xff]
      %v259 = vld [vmem:[%s231] sm:$0xf]
      %v260 = vld [vmem:[%s239] sm:$0xf]
      %v261 = vld [vmem:[%s239 + $0x4] sm:$0xf]
      %v262 = vld [vmem:[%s239 + $0x8] sm:$0xf]
      %v263 = vld [vmem:[%s239 + $0xc] sm:$0xf]
      %v268 = vunpack.c.l.b16 %v260
      %v269 = vunpack.c.l.b16 %v261
      %v270 = vunpack.c.l.b16 %v262
      %v271 = vunpack.c.l.b16 %v263
      %v272 = vpack.c.b16 %v269, %v268
      %v273 = vpack.c.b16 %v271, %v270
      %vm276 = vcmask 261120
      %v278 = vsel %vm276, %v259, 0
      %280 = vmatpush.bf16.msra.mxu0 0
      %281 = vmatpush.bf16.msra.mxu0 0
      %282 = vmatpush.bf16.msra.mxu0 0
      %283 = vmatpush.bf16.msra.mxu0 0
      %284 = vmatpush.bf16.msra.mxu0 0
      %285 = vmatpush.bf16.msra.mxu0 0
      %286 = vmatpush.bf16.msra.mxu0 %v273
      %287 = vmatpush.bf16.msra.mxu0 %v272
      %288 = vmatmul.bf16.gmra.mxu0 %v278
      %v289 = vpop.f32.mrf.mxu0
      %v290 = vadd.f32 0.0, %v289
      %v291 = vpop.f32.mrf.mxu0
      %292 = vdwg.mxu0
      %v293 = vadd.f32 %v258, %v290
      %294 = vst.msk [vmem:[#allocation2] sm:$0xff] %vm276, %v293
      // Predicated region
      $region37: #{transformer_forward.39} parent=31 // pred_check
        %p295 = pneg %p252
      $region38: #{transformer_forward.39} parent=31 // pred_check_branch
        %297 = sbr.rel (%p295) target = $region40
      $region39: #{transformer_forward.39} parent=31 // pred_region
        %v298 = vld [vmem:[#allocation2] sm:$0xff]
        %v299 = vld [vmem:[%s243] sm:$0x1]
        %v301 = vperm.slane %v299, 0
        %v303 = vadd.f32 %v298, %v301
        %v304 = vpack.c.bf16 %v303, %v303
        %vm305 = vcmask 257024
        %306 = vst.msk [vmem:[%s250] sm:$0xf] %vm305, %v304
      $region40: #{transformer_forward.39} parent=31 // pred_fallthru
        _
      %p307 = scmp.lt.s32.totalorder %s19, 1
      %s308 = scalar_select %p307, %s19, 1
      %p309 = scmp.lt.s32.totalorder %s20, 0
      %s310 = scalar_select %p309, %s20, 0
      %s311 = sadd.s32 %s310, %s308
      %s312 = smul.addr %s311, 4
      %s313 = scalar_lea.vmem %s3, %s312
      // Predicated region
      $region41: #{transformer_forward.39} parent=31 // pred_check
        %p314 = pneg %p135
      $region42: #{transformer_forward.39} parent=31 // pred_check_branch
        %316 = sbr.rel (%p314) target = $region44
      $region43: #{transformer_forward.39} parent=31 // pred_region
        _
      $region44: #{transformer_forward.39} parent=31 // pred_fallthru
        _
    $region32: #{transformer_forward.39} parent=5 // pred_fallthru
      _
    %p317 = scmp.le.s32.totalorder 2, %s9
    // Predicated region
    $region45: #{transformer_forward.39} parent=5 // pred_check
      %p318 = pneg %p317
    $region46: #{transformer_forward.39} parent=5 // pred_check_branch
      %320 = sbr.rel (%p318) target = $region48
    $region47: #{transformer_forward.39} parent=5 // pred_region
      %s321 = ssub.s32 %s9, 2
      // Predicated region
      $region49: #{transformer_forward.39} parent=47 // pred_check
        %p322 = pneg %p141
      $region50: #{transformer_forward.39} parent=47 // pred_check_branch
        %324 = sbr.rel (%p322) target = $region52
      $region51: #{transformer_forward.39} parent=47 // pred_region
        %p325 = scmp.lt.s32.totalorder %s22, 1
        %s326 = scalar_select %p325, %s22, 1
        %p327 = scmp.lt.s32.totalorder %s23, 0
        %s328 = scalar_select %p327, %s23, 0
        %s329 = sadd.s32 %s328, %s326
        %s330 = smul.addr %s329, 4
        %s331 = scalar_lea.vmem %s3, %s330
      $region52: #{transformer_forward.39} parent=47 // pred_fallthru
        _
    $region48: #{transformer_forward.39} parent=5 // pred_fallthru
      _
  $region6: #{transformer_forward.39} parent=0 // loop_footer
    %s13 = sadd.s32 1, %s9
  $region7: #{transformer_forward.39} parent=0 // loop_footer_branch
    %8 = sbr.rel target = $region3
  $region8: #{transformer_forward.39} parent=0 // loop_exit
    _

// kernel: transformer_forward.37
$region0: #{transformer_forward.37}
  #allocation0 [shape = 'u32[]', space=smem, size = 0x4, offset = 0x4, fixed_abs, tag = 'smem constant byte address 0x4 - core index']
  #allocation1 [shape = 'u32[72,128]{1,0:T(1,128)}', space=vmem, size = 0x9000, scoped, tag = 'internal scratch']
  #allocation2 [shape = 'f32[8,96]{1,0:T(8,128)}', space=vmem, size = 0x1000, scoped, tag = 'scratch operand']
  %s0 = inlined_call_operand.vmem [shape: bf16[16,32], index: 0, kind: input, shape index: {}]
  %s1 = inlined_call_operand.vmem [shape: bf16[32,96], index: 1, kind: input, shape index: {}]
  %s2 = inlined_call_operand.vmem [shape: f32[1,96], index: 2, kind: input, shape index: {}]
  %s3 = inlined_call_operand.vmem [shape: bf16[16,32], index: 3, kind: output, shape index: {0}]
  %s4 = inlined_call_operand.vmem [shape: bf16[16,32], index: 4, kind: output, shape index: {1}]
  %s5 = inlined_call_operand.vmem [shape: bf16[16,32], index: 5, kind: output, shape index: {2}]
  %6 = xla_tuple %s3, %s4, %s5
  %s7 = sld [smem:[#allocation0]]
  $region69: #{transformer_forward.37} parent=0
    _
  %s9 = ssub.s32 1, %s7
  %s10 = scalar_select 0, %s9, %s7
  loop: start=0, step=1, limit=4
  $region2: #{transformer_forward.37} parent=0 // loop_pre_header
    _
  $region3: #{transformer_forward.37} parent=0 // loop_header
    %s12 = sphi 0, %s16
    %p13 = scmp.ge.s32.totalorder %s12, 4
    %s19 = sphi 0, %s31
    %s20 = sphi 0, %s27
    %s21 = sphi 0, %s19
    %s22 = sphi 0, %s20
    %s23 = sphi 0, %s21
    %s24 = sphi 0, %s22
    %s36 = sphi 0, %s38
    %s39 = sphi 0, %s36
    %s40 = sphi 0, %s39
    %s56 = sphi 0, %s40
    %s62 = sphi 0, %s64
    %s65 = sphi 0, %s62
    %s66 = sphi 0, %s65
    %s82 = sphi 0, %s66
    %s86 = sphi 0, %s86
    %s88 = sphi 0, %s86
    %s89 = sphi 0, %s88
    %s103 = sphi 0, %s89
    %s109 = sphi 0, %s111
    %s112 = sphi 0, %s109
    %s113 = sphi 0, %s112
    %s129 = sphi 0, %s113
    %s135 = sphi 0, %s137
    %s138 = sphi 0, %s135
    %s139 = sphi 0, %s138
    %s155 = sphi 0, %s139
    %s161 = sphi 0, %s163
    %s164 = sphi 0, %s161
    %s165 = sphi 0, %s164
    %s181 = sphi 0, %s165
  $region4: #{transformer_forward.37} parent=0 // loop_header_branch
    %15 = sbr.rel (%p13) target = $region8
  $region5: #{transformer_forward.37} parent=0 // loop_body
    %s17 = ssub.s32 %s12, 1
    %s18 = ssub.s32 %s12, 2
    %s25 = sadd.s32 1, %s20
    %p26 = scmp.ge.s32.totalorder %s25, 1
    %s27 = scalar_select %p26, 0, %s25
    %s28 = sadd.s32 1, %s19
    %s29 = scalar_select %p26, %s28, %s19
    %p30 = scmp.ge.s32.totalorder %s29, 2
    %s31 = scalar_select %p30, 0, %s29
    %s32 = ssub.s32 %s19, %s31
    %s33 = ssub.s32 %s20, %s27
    %s34 = sor.u32 %s32, %s33
    %p35 = scmp.eq.s32.totalorder %s34, 0
    %s37 = sadd.s32 %s36, 1
    %s38 = scalar_select %p35, %s36, %s37
    %p41 = pneg %p35
    %p42 = scmp.eq.s32.totalorder %s12, 1
    %p43 = por %p41, %p42
    %p44 = scmp.ne.s32.totalorder %s36, %s39
    %p45 = scmp.eq.s32.totalorder %s12, 0
    %p46 = por %p44, %p45
    %p47 = scmp.ne.s32.totalorder %s36, %s39
    %p48 = scmp.eq.s32.totalorder %s17, 1
    %p49 = por %p47, %p48
    %p50 = scmp.ne.s32.totalorder %s39, %s40
    %p51 = scmp.eq.s32.totalorder %s17, 0
    %p52 = por %p50, %p51
    %p53 = scmp.ne.s32.totalorder %s39, %s40
    %p54 = scmp.eq.s32.totalorder %s18, 1
    %p55 = por %p53, %p54
    %p57 = scmp.ne.s32.totalorder %s40, %s56
    %p58 = scmp.eq.s32.totalorder %s18, 0
    %p59 = por %p57, %p58
    %s60 = ssub.s32 %s20, %s27
    %p61 = scmp.eq.s32.totalorder %s60, 0
    %s63 = sadd.s32 %s62, 1
    %s64 = scalar_select %p61, %s62, %s63
    %p67 = pneg %p61
    %p68 = scmp.eq.s32.totalorder %s12, 1
    %p69 = por %p67, %p68
    %p70 = scmp.ne.s32.totalorder %s62, %s65
    %p71 = scmp.eq.s32.totalorder %s12, 0
    %p72 = por %p70, %p71
    %p73 = scmp.ne.s32.totalorder %s62, %s65
    %p74 = scmp.eq.s32.totalorder %s17, 1
    %p75 = por %p73, %p74
    %p76 = scmp.ne.s32.totalorder %s65, %s66
    %p77 = scmp.eq.s32.totalorder %s17, 0
    %p78 = por %p76, %p77
    %p79 = scmp.ne.s32.totalorder %s65, %s66
    %p80 = scmp.eq.s32.totalorder %s18, 1
    %p81 = por %p79, %p80
    %p83 = scmp.ne.s32.totalorder %s66, %s82
    %p84 = scmp.eq.s32.totalorder %s18, 0
    %p85 = por %p83, %p84
    %s87 = sadd.s32 %s86, 1
    %p90 = scmp.eq.s32.totalorder %s12, 1
    %p91 = scmp.ne.s32.totalorder %s86, %s88
    %p92 = scmp.eq.s32.totalorder %s12, 0
    %p93 = por %p91, %p92
    %p94 = scmp.ne.s32.totalorder %s86, %s88
    %p95 = scmp.eq.s32.totalorder %s17, 1
    %p96 = por %p94, %p95
    %p97 = scmp.ne.s32.totalorder %s88, %s89
    %p98 = scmp.eq.s32.totalorder %s17, 0
    %p99 = por %p97, %p98
    %p100 = scmp.ne.s32.totalorder %s88, %s89
    %p101 = scmp.eq.s32.totalorder %s18, 1
    %p102 = por %p100, %p101
    %p104 = scmp.ne.s32.totalorder %s89, %s103
    %p105 = scmp.eq.s32.totalorder %s18, 0
    %p106 = por %p104, %p105
    %s107 = ssub.s32 %s19, %s31
    %p108 = scmp.eq.s32.totalorder %s107, 0
    %s110 = sadd.s32 %s109, 1
    %s111 = scalar_select %p108, %s109, %s110
    %p114 = pneg %p108
    %p115 = scmp.eq.s32.totalorder %s12, 1
    %p116 = por %p114, %p115
    %p117 = scmp.ne.s32.totalorder %s109, %s112
    %p118 = scmp.eq.s32.totalorder %s12, 0
    %p119 = por %p117, %p118
    %p120 = scmp.ne.s32.totalorder %s109, %s112
    %p121 = scmp.eq.s32.totalorder %s17, 1
    %p122 = por %p120, %p121
    %p123 = scmp.ne.s32.totalorder %s112, %s113
    %p124 = scmp.eq.s32.totalorder %s17, 0
    %p125 = por %p123, %p124
    %p126 = scmp.ne.s32.totalorder %s112, %s113
    %p127 = scmp.eq.s32.totalorder %s18, 1
    %p128 = por %p126, %p127
    %p130 = scmp.ne.s32.totalorder %s113, %s129
    %p131 = scmp.eq.s32.totalorder %s18, 0
    %p132 = por %p130, %p131
    %s133 = ssub.s32 %s19, %s31
    %p134 = scmp.eq.s32.totalorder %s133, 0
    %s136 = sadd.s32 %s135, 1
    %s137 = scalar_select %p134, %s135, %s136
    %p140 = pneg %p134
    %p141 = scmp.eq.s32.totalorder %s12, 1
    %p142 = por %p140, %p141
    %p143 = scmp.ne.s32.totalorder %s135, %s138
    %p144 = scmp.eq.s32.totalorder %s12, 0
    %p145 = por %p143, %p144
    %p146 = scmp.ne.s32.totalorder %s135, %s138
    %p147 = scmp.eq.s32.totalorder %s17, 1
    %p148 = por %p146, %p147
    %p149 = scmp.ne.s32.totalorder %s138, %s139
    %p150 = scmp.eq.s32.totalorder %s17, 0
    %p151 = por %p149, %p150
    %p152 = scmp.ne.s32.totalorder %s138, %s139
    %p153 = scmp.eq.s32.totalorder %s18, 1
    %p154 = por %p152, %p153
    %p156 = scmp.ne.s32.totalorder %s139, %s155
    %p157 = scmp.eq.s32.totalorder %s18, 0
    %p158 = por %p156, %p157
    %s159 = ssub.s32 %s19, %s31
    %p160 = scmp.eq.s32.totalorder %s159, 0
    %s162 = sadd.s32 %s161, 1
    %s163 = scalar_select %p160, %s161, %s162
    %p166 = pneg %p160
    %p167 = scmp.eq.s32.totalorder %s12, 1
    %p168 = por %p166, %p167
    %p169 = scmp.ne.s32.totalorder %s161, %s164
    %p170 = scmp.eq.s32.totalorder %s12, 0
    %p171 = por %p169, %p170
    %p172 = scmp.ne.s32.totalorder %s161, %s164
    %p173 = scmp.eq.s32.totalorder %s17, 1
    %p174 = por %p172, %p173
    %p175 = scmp.ne.s32.totalorder %s164, %s165
    %p176 = scmp.eq.s32.totalorder %s17, 0
    %p177 = por %p175, %p176
    %p178 = scmp.ne.s32.totalorder %s164, %s165
    %p179 = scmp.eq.s32.totalorder %s18, 1
    %p180 = por %p178, %p179
    %p182 = scmp.ne.s32.totalorder %s165, %s181
    %p183 = scmp.eq.s32.totalorder %s18, 0
    %p184 = por %p182, %p183
    %p185 = scmp.le.s32.totalorder 1, %s12
    %p186 = scmp.lt.s32.totalorder %s12, 3
    %p187 = pnand %p185, %p186
    %p188 = pneg %p187
    // Predicated region
    $region9: #{transformer_forward.37} parent=5 // pred_check
      _
    $region10: #{transformer_forward.37} parent=5 // pred_check_branch
      %190 = sbr.rel (%p187) target = $region12
    $region11: #{transformer_forward.37} parent=5 // pred_region
      %s191 = ssub.s32 %s12, 1
      // Predicated region
      $region13: #{transformer_forward.37} parent=11 // pred_check
        %p192 = pneg %p78
      $region14: #{transformer_forward.37} parent=11 // pred_check_branch
        %194 = sbr.rel (%p192) target = $region16
      $region15: #{transformer_forward.37} parent=11 // pred_region
        %s195 = smul.u32 4, %s22
        %p196 = scmp.lt.s32.totalorder %s195, 3
        %s197 = scalar_select %p196, %s195, 3
        %s198 = smul.addr %s197, 4
        %s199 = scalar_lea.vmem %s1, %s198
        %s200 = smul.u32 4, %s22
      $region16: #{transformer_forward.37} parent=11 // pred_fallthru
        _
      // Predicated region
      $region17: #{transformer_forward.37} parent=11 // pred_check
        %p201 = pneg %p99
      $region18: #{transformer_forward.37} parent=11 // pred_check_branch
        %203 = sbr.rel (%p201) target = $region20
      $region19: #{transformer_forward.37} parent=11 // pred_region
        _
      $region20: #{transformer_forward.37} parent=11 // pred_fallthru
        _
    $region12: #{transformer_forward.37} parent=5 // pred_fallthru
      _
    %p204 = scmp.lt.s32.totalorder %s12, 2
    // Predicated region
    $region21: #{transformer_forward.37} parent=5 // pred_check
      %p205 = pneg %p204
    $region22: #{transformer_forward.37} parent=5 // pred_check_branch
      %207 = sbr.rel (%p205) target = $region24
    $region23: #{transformer_forward.37} parent=5 // pred_region
      // Predicated region
      $region25: #{transformer_forward.37} parent=23 // pred_check
        %p208 = pneg %p46
      $region26: #{transformer_forward.37} parent=23 // pred_check_branch
        %210 = sbr.rel (%p208) target = $region28
      $region27: #{transformer_forward.37} parent=23 // pred_region
        %p211 = scmp.lt.s32.totalorder %s19, 1
        %s212 = scalar_select %p211, %s19, 1
        %p213 = scmp.lt.s32.totalorder %s20, 0
        %s214 = scalar_select %p213, %s20, 0
        %s215 = sadd.s32 %s214, %s212
        %s216 = smul.addr %s215, 4
        %s217 = scalar_lea.vmem %s0, %s216
      $region28: #{transformer_forward.37} parent=23 // pred_fallthru
        _
    $region24: #{transformer_forward.37} parent=5 // pred_fallthru
      _
    %p218 = scmp.le.s32.totalorder 1, %s12
    %p219 = scmp.lt.s32.totalorder %s12, 3
    %p220 = pnand %p218, %p219
    %p221 = pneg %p220
    // Predicated region
    $region29: #{transformer_forward.37} parent=5 // pred_check
      _
    $region30: #{transformer_forward.37} parent=5 // pred_check_branch
      %223 = sbr.rel (%p220) target = $region32
    $region31: #{transformer_forward.37} parent=5 // pred_region
      %s224 = ssub.s32 %s12, 1
      %p225 = scmp.lt.s32.totalorder %s21, 1
      %s226 = scalar_select %p225, %s21, 1
      %p227 = scmp.lt.s32.totalorder %s22, 0
      %s228 = scalar_select %p227, %s22, 0
      %s229 = sadd.s32 %s228, %s226
      %s230 = smul.addr %s229, 4
      %s231 = scalar_lea.vmem %s0, %s230
      %p232 = pneg %p52
      %p233 = pneg %p49
      %s234 = smul.u32 4, %s22
      %p235 = scmp.lt.s32.totalorder %s234, 3
      %s236 = scalar_select %p235, %s234, 3
      %s237 = smul.addr %s236, 4
      %s238 = scalar_lea.vmem %s1, %s237
      %p239 = pneg %p78
      %p240 = pneg %p75
      %p241 = pneg %p99
      %p242 = pneg %p96
      %p243 = pneg %p125
      %p244 = pneg %p122
      %p245 = scmp.lt.s32.totalorder %s21, 1
      %s246 = scalar_select %p245, %s21, 1
      %s247 = smul.addr %s246, 4
      %s248 = scalar_lea.vmem %s3, %s247
      %p249 = pneg %p151
      %p250 = pneg %p148
      %p251 = scmp.lt.s32.totalorder %s21, 1
      %s252 = scalar_select %p251, %s21, 1
      %s253 = smul.addr %s252, 4
      %s254 = scalar_lea.vmem %s4, %s253
      %p255 = pneg %p177
      %p256 = pneg %p174
      %p257 = scmp.lt.s32.totalorder %s21, 1
      %s258 = scalar_select %p257, %s21, 1
      %s259 = smul.addr %s258, 4
      %s260 = scalar_lea.vmem %s5, %s259
      %p261 = scmp.lt.s32.totalorder %s21, 1
      %s262 = scalar_select %p261, %s21, 1
      %p263 = scmp.lt.s32.totalorder %s22, 0
      %s264 = scalar_select %p263, %s22, 0
      %s265 = sadd.s32 %s264, %s262
      %s266 = smul.addr %s265, 4
      %s267 = scalar_lea.vmem %s0, %s266
      %s268 = smul.u32 4, %s22
      %p269 = scmp.lt.s32.totalorder %s268, 3
      %s270 = scalar_select %p269, %s268, 3
      %s271 = smul.addr %s270, 4
      %s272 = scalar_lea.vmem %s1, %s271
      %s273 = smul.u32 4, %s22
      %p274 = scmp.lt.s32.totalorder %s21, 1
      %s275 = scalar_select %p274, %s21, 1
      %s276 = smul.addr %s275, 4
      %s277 = scalar_lea.vmem %s3, %s276
      %p278 = scmp.lt.s32.totalorder %s21, 1
      %s279 = scalar_select %p278, %s21, 1
      %s280 = smul.addr %s279, 4
      %s281 = scalar_lea.vmem %s4, %s280
      %p282 = scmp.lt.s32.totalorder %s21, 1
      %s283 = scalar_select %p282, %s21, 1
      %s284 = smul.addr %s283, 4
      %s285 = scalar_lea.vmem %s5, %s284
      %p287 = scmp.eq.s32.totalorder %s22, 0
      // Predicated region
      $region33: #{transformer_forward.37} parent=31 // pred_check
        %p288 = pneg %p287
      $region34: #{transformer_forward.37} parent=31 // pred_check_branch
        %290 = sbr.rel (%p288) target = $region36
      $region35: #{transformer_forward.37} parent=31 // pred_region
        %vm291 = vcmask 785408
        %292 = vst.msk [vmem:[#allocation2] sm:$0xff] %vm291, 0.0
      $region36: #{transformer_forward.37} parent=31 // pred_fallthru
        _
      %v293 = vld [vmem:[#allocation2] sm:$0xff]
      %v294 = vld [vmem:[%s267] sm:$0xf]
      %v295 = vld [vmem:[%s272] sm:$0xf]
      %v296 = vld [vmem:[%s272 + $0x4] sm:$0xf]
      %v297 = vld [vmem:[%s272 + $0x8] sm:$0xf]
      %v298 = vld [vmem:[%s272 + $0xc] sm:$0xf]
      %v303 = vunpack.c.l.b16 %v295
      %v304 = vunpack.c.l.b16 %v296
      %v305 = vunpack.c.l.b16 %v297
      %v306 = vunpack.c.l.b16 %v298
      %v307 = vpack.c.b16 %v304, %v303
      %v308 = vpack.c.b16 %v306, %v305
      %vm311 = vcmask 261120
      %v313 = vsel %vm311, %v294, 0
      %315 = vmatpush.bf16.msra.mxu0 0
      %316 = vmatpush.bf16.msra.mxu0 0
      %317 = vmatpush.bf16.msra.mxu0 0
      %318 = vmatpush.bf16.msra.mxu0 0
      %319 = vmatpush.bf16.msra.mxu0 0
      %320 = vmatpush.bf16.msra.mxu0 0
      %321 = vmatpush.bf16.msra.mxu0 %v308
      %322 = vmatpush.bf16.msra.mxu0 %v307
      %323 = vmatmul.bf16.gmra.mxu0 %v313
      %v324 = vpop.f32.mrf.mxu0
      %v325 = vadd.f32 0.0, %v324
      %v326 = vpop.f32.mrf.mxu0
      %327 = vdwg.mxu0
      %v328 = vadd.f32 %v293, %v325
      %vm329 = vcmask 785408
      %330 = vst.msk [vmem:[#allocation2] sm:$0xff] %vm329, %v328
      // Predicated region
      $region37: #{transformer_forward.37} parent=31 // pred_check
        %p331 = pneg %p287
      $region38: #{transformer_forward.37} parent=31 // pred_check_branch
        %333 = sbr.rel (%p331) target = $region40
      $region39: #{transformer_forward.37} parent=31 // pred_region
        %v334 = vld [vmem:[#allocation2] sm:$0xff]
        %v335 = vld [vmem:[%s2] sm:$0x1]
        %v337 = vperm.slane %v335, 0
        %v339 = vadd.f32 %v334, %v337
        %v340 = vpack.c.bf16 %v339, %v339
        %vm341 = vcmask 257024
        %342 = vst.msk [vmem:[%s277] sm:$0xf] %vm341, %v340
        %344 = vrot.lane.b32.xlu0 %v340, 96
        %v345 = vpop.permute.xlu0 %344
        %347 = vst.msk [vmem:[%s281] sm:$0xf] %vm341, %v345
        %348 = vrot.lane.b32.xlu0 %v340, 64
        %v349 = vpop.permute.xlu0 %348
        %351 = vst.msk [vmem:[%s285] sm:$0xf] %vm341, %v349
      $region40: #{transformer_forward.37} parent=31 // pred_fallthru
        _
      %p352 = scmp.lt.s32.totalorder %s21, 1
      %s353 = scalar_select %p352, %s21, 1
      %s354 = smul.addr %s353, 4
      %s355 = scalar_lea.vmem %s3, %s354
      %p356 = scmp.lt.s32.totalorder %s21, 1
      %s357 = scalar_select %p356, %s21, 1
      %s358 = smul.addr %s357, 4
      %s359 = scalar_lea.vmem %s4, %s358
      %p360 = scmp.lt.s32.totalorder %s21, 1
      %s361 = scalar_select %p360, %s21, 1
      %s362 = smul.addr %s361, 4
      %s363 = scalar_lea.vmem %s5, %s362
      // Predicated region
      $region41: #{transformer_forward.37} parent=31 // pred_check
        %p364 = pneg %p122
      $region42: #{transformer_forward.37} parent=31 // pred_check_branch
        %366 = sbr.rel (%p364) target = $region44
      $region43: #{transformer_forward.37} parent=31 // pred_region
        _
      $region44: #{transformer_forward.37} parent=31 // pred_fallthru
        _
      // Predicated region
      $region45: #{transformer_forward.37} parent=31 // pred_check
        %p367 = pneg %p148
      $region46: #{transformer_forward.37} parent=31 // pred_check_branch
        %369 = sbr.rel (%p367) target = $region48
      $region47: #{transformer_forward.37} parent=31 // pred_region
        _
      $region48: #{transformer_forward.37} parent=31 // pred_fallthru
        _
      // Predicated region
      $region49: #{transformer_forward.37} parent=31 // pred_check
        %p370 = pneg %p174
      $region50: #{transformer_forward.37} parent=31 // pred_check_branch
        %372 = sbr.rel (%p370) target = $region52
      $region51: #{transformer_forward.37} parent=31 // pred_region
        _
      $region52: #{transformer_forward.37} parent=31 // pred_fallthru
        _
    $region32: #{transformer_forward.37} parent=5 // pred_fallthru
      _
    %p373 = scmp.le.s32.totalorder 2, %s12
    // Predicated region
    $region53: #{transformer_forward.37} parent=5 // pred_check
      %p374 = pneg %p373
    $region54: #{transformer_forward.37} parent=5 // pred_check_branch
      %376 = sbr.rel (%p374) target = $region56
    $region55: #{transformer_forward.37} parent=5 // pred_region
      %s377 = ssub.s32 %s12, 2
      // Predicated region
      $region57: #{transformer_forward.37} parent=55 // pred_check
        %p378 = pneg %p128
      $region58: #{transformer_forward.37} parent=55 // pred_check_branch
        %380 = sbr.rel (%p378) target = $region60
      $region59: #{transformer_forward.37} parent=55 // pred_region
        %p381 = scmp.lt.s32.totalorder %s23, 1
        %s382 = scalar_select %p381, %s23, 1
        %s383 = smul.addr %s382, 4
        %s384 = scalar_lea.vmem %s3, %s383
      $region60: #{transformer_forward.37} parent=55 // pred_fallthru
        _
      // Predicated region
      $region61: #{transformer_forward.37} parent=55 // pred_check
        %p385 = pneg %p154
      $region62: #{transformer_forward.37} parent=55 // pred_check_branch
        %387 = sbr.rel (%p385) target = $region64
      $region63: #{transformer_forward.37} parent=55 // pred_region
        %p388 = scmp.lt.s32.totalorder %s23, 1
        %s389 = scalar_select %p388, %s23, 1
        %s390 = smul.addr %s389, 4
        %s391 = scalar_lea.vmem %s4, %s390
      $region64: #{transformer_forward.37} parent=55 // pred_fallthru
        _
      // Predicated region
      $region65: #{transformer_forward.37} parent=55 // pred_check
        %p392 = pneg %p180
      $region66: #{transformer_forward.37} parent=55 // pred_check_branch
        %394 = sbr.rel (%p392) target = $region68
      $region67: #{transformer_forward.37} parent=55 // pred_region
        %p395 = scmp.lt.s32.totalorder %s23, 1
        %s396 = scalar_select %p395, %s23, 1
        %s397 = smul.addr %s396, 4
        %s398 = scalar_lea.vmem %s5, %s397
      $region68: #{transformer_forward.37} parent=55 // pred_fallthru
        _
    $region56: #{transformer_forward.37} parent=5 // pred_fallthru
      _
  $region6: #{transformer_forward.37} parent=0 // loop_footer
    %s16 = sadd.s32 1, %s12
  $region7: #{transformer_forward.37} parent=0 // loop_footer_branch
    %11 = sbr.rel target = $region3
  $region8: #{transformer_forward.37} parent=0 // loop_exit
    _

// kernel: transformer_forward.40
$region0: #{transformer_forward.40}
  #allocation0 [shape = 'u32[]', space=smem, size = 0x4, offset = 0x4, fixed_abs, tag = 'smem constant byte address 0x4 - core index']
  #allocation1 [shape = 'u32[72,128]{1,0:T(1,128)}', space=vmem, size = 0x9000, scoped, tag = 'internal scratch']
  %s0 = inlined_call_operand.vmem [shape: bf16[16,32], index: 0, kind: input, shape index: {}]
  %s1 = inlined_call_operand.vmem [shape: bf16[16,32], index: 1, kind: input, shape index: {}]
  %s2 = inlined_call_operand.vmem [shape: f32[1,32], index: 2, kind: input, shape index: {}]
  %s3 = inlined_call_operand.vmem [shape: f32[1,32], index: 3, kind: input, shape index: {}]
  %s4 = inlined_call_operand.vmem [shape: bf16[16,32], index: 4, kind: output, shape index: {}]
  %s5 = sld [smem:[#allocation0]]
  $region49: #{transformer_forward.40} parent=0
    _
  %s7 = ssub.s32 1, %s5
  %s8 = scalar_select 0, %s7, %s5
  loop: start=0, step=1, limit=4
  $region2: #{transformer_forward.40} parent=0 // loop_pre_header
    _
  $region3: #{transformer_forward.40} parent=0 // loop_header
    %s10 = sphi 0, %s14
    %p11 = scmp.ge.s32.totalorder %s10, 4
    %s20 = sphi 0, %s22
    %s23 = sphi 0, %s20
    %s24 = sphi 0, %s23
    %s40 = sphi 0, %s24
    %s46 = sphi 0, %s48
    %s49 = sphi 0, %s46
    %s50 = sphi 0, %s49
    %s66 = sphi 0, %s50
    %s70 = sphi 0, %s70
    %s72 = sphi 0, %s70
    %s73 = sphi 0, %s72
    %s87 = sphi 0, %s73
    %s91 = sphi 0, %s91
    %s93 = sphi 0, %s91
    %s94 = sphi 0, %s93
    %s108 = sphi 0, %s94
    %s114 = sphi 0, %s116
    %s117 = sphi 0, %s114
    %s118 = sphi 0, %s117
    %s134 = sphi 0, %s118
  $region4: #{transformer_forward.40} parent=0 // loop_header_branch
    %13 = sbr.rel (%p11) target = $region8
  $region5: #{transformer_forward.40} parent=0 // loop_body
    %s15 = ssub.s32 %s10, 1
    %s16 = ssub.s32 %s10, 2
    %s17 = sadd.s32 %s10, 1
    %s18 = ssub.s32 %s10, %s17
    %p19 = scmp.eq.s32.totalorder %s18, 0
    %s21 = sadd.s32 %s20, 1
    %s22 = scalar_select %p19, %s20, %s21
    %p25 = pneg %p19
    %p26 = scmp.eq.s32.totalorder %s10, 1
    %p27 = por %p25, %p26
    %p28 = scmp.ne.s32.totalorder %s20, %s23
    %p29 = scmp.eq.s32.totalorder %s10, 0
    %p30 = por %p28, %p29
    %p31 = scmp.ne.s32.totalorder %s20, %s23
    %p32 = scmp.eq.s32.totalorder %s15, 1
    %p33 = por %p31, %p32
    %p34 = scmp.ne.s32.totalorder %s23, %s24
    %p35 = scmp.eq.s32.totalorder %s15, 0
    %p36 = por %p34, %p35
    %p37 = scmp.ne.s32.totalorder %s23, %s24
    %p38 = scmp.eq.s32.totalorder %s16, 1
    %p39 = por %p37, %p38
    %p41 = scmp.ne.s32.totalorder %s24, %s40
    %p42 = scmp.eq.s32.totalorder %s16, 0
    %p43 = por %p41, %p42
    %s44 = ssub.s32 %s10, %s17
    %p45 = scmp.eq.s32.totalorder %s44, 0
    %s47 = sadd.s32 %s46, 1
    %s48 = scalar_select %p45, %s46, %s47
    %p51 = pneg %p45
    %p52 = scmp.eq.s32.totalorder %s10, 1
    %p53 = por %p51, %p52
    %p54 = scmp.ne.s32.totalorder %s46, %s49
    %p55 = scmp.eq.s32.totalorder %s10, 0
    %p56 = por %p54, %p55
    %p57 = scmp.ne.s32.totalorder %s46, %s49
    %p58 = scmp.eq.s32.totalorder %s15, 1
    %p59 = por %p57, %p58
    %p60 = scmp.ne.s32.totalorder %s49, %s50
    %p61 = scmp.eq.s32.totalorder %s15, 0
    %p62 = por %p60, %p61
    %p63 = scmp.ne.s32.totalorder %s49, %s50
    %p64 = scmp.eq.s32.totalorder %s16, 1
    %p65 = por %p63, %p64
    %p67 = scmp.ne.s32.totalorder %s50, %s66
    %p68 = scmp.eq.s32.totalorder %s16, 0
    %p69 = por %p67, %p68
    %s71 = sadd.s32 %s70, 1
    %p74 = scmp.eq.s32.totalorder %s10, 1
    %p75 = scmp.ne.s32.totalorder %s70, %s72
    %p76 = scmp.eq.s32.totalorder %s10, 0
    %p77 = por %p75, %p76
    %p78 = scmp.ne.s32.totalorder %s70, %s72
    %p79 = scmp.eq.s32.totalorder %s15, 1
    %p80 = por %p78, %p79
    %p81 = scmp.ne.s32.totalorder %s72, %s73
    %p82 = scmp.eq.s32.totalorder %s15, 0
    %p83 = por %p81, %p82
    %p84 = scmp.ne.s32.totalorder %s72, %s73
    %p85 = scmp.eq.s32.totalorder %s16, 1
    %p86 = por %p84, %p85
    %p88 = scmp.ne.s32.totalorder %s73, %s87
    %p89 = scmp.eq.s32.totalorder %s16, 0
    %p90 = por %p88, %p89
    %s92 = sadd.s32 %s91, 1
    %p95 = scmp.eq.s32.totalorder %s10, 1
    %p96 = scmp.ne.s32.totalorder %s91, %s93
    %p97 = scmp.eq.s32.totalorder %s10, 0
    %p98 = por %p96, %p97
    %p99 = scmp.ne.s32.totalorder %s91, %s93
    %p100 = scmp.eq.s32.totalorder %s15, 1
    %p101 = por %p99, %p100
    %p102 = scmp.ne.s32.totalorder %s93, %s94
    %p103 = scmp.eq.s32.totalorder %s15, 0
    %p104 = por %p102, %p103
    %p105 = scmp.ne.s32.totalorder %s93, %s94
    %p106 = scmp.eq.s32.totalorder %s16, 1
    %p107 = por %p105, %p106
    %p109 = scmp.ne.s32.totalorder %s94, %s108
    %p110 = scmp.eq.s32.totalorder %s16, 0
    %p111 = por %p109, %p110
    %s112 = ssub.s32 %s10, %s17
    %p113 = scmp.eq.s32.totalorder %s112, 0
    %s115 = sadd.s32 %s114, 1
    %s116 = scalar_select %p113, %s114, %s115
    %p119 = pneg %p113
    %p120 = scmp.eq.s32.totalorder %s10, 1
    %p121 = por %p119, %p120
    %p122 = scmp.ne.s32.totalorder %s114, %s117
    %p123 = scmp.eq.s32.totalorder %s10, 0
    %p124 = por %p122, %p123
    %p125 = scmp.ne.s32.totalorder %s114, %s117
    %p126 = scmp.eq.s32.totalorder %s15, 1
    %p127 = por %p125, %p126
    %p128 = scmp.ne.s32.totalorder %s117, %s118
    %p129 = scmp.eq.s32.totalorder %s15, 0
    %p130 = por %p128, %p129
    %p131 = scmp.ne.s32.totalorder %s117, %s118
    %p132 = scmp.eq.s32.totalorder %s16, 1
    %p133 = por %p131, %p132
    %p135 = scmp.ne.s32.totalorder %s118, %s134
    %p136 = scmp.eq.s32.totalorder %s16, 0
    %p137 = por %p135, %p136
    %p138 = scmp.le.s32.totalorder 1, %s10
    %p139 = scmp.lt.s32.totalorder %s10, 3
    %p140 = pnand %p138, %p139
    %p141 = pneg %p140
    // Predicated region
    $region9: #{transformer_forward.40} parent=5 // pred_check
      _
    $region10: #{transformer_forward.40} parent=5 // pred_check_branch
      %143 = sbr.rel (%p140) target = $region12
    $region11: #{transformer_forward.40} parent=5 // pred_region
      %s144 = ssub.s32 %s10, 1
      // Predicated region
      $region13: #{transformer_forward.40} parent=11 // pred_check
        %p145 = pneg %p83
      $region14: #{transformer_forward.40} parent=11 // pred_check_branch
        %147 = sbr.rel (%p145) target = $region16
      $region15: #{transformer_forward.40} parent=11 // pred_region
        _
      $region16: #{transformer_forward.40} parent=11 // pred_fallthru
        _
      // Predicated region
      $region17: #{transformer_forward.40} parent=11 // pred_check
        %p148 = pneg %p104
      $region18: #{transformer_forward.40} parent=11 // pred_check_branch
        %150 = sbr.rel (%p148) target = $region20
      $region19: #{transformer_forward.40} parent=11 // pred_region
        _
      $region20: #{transformer_forward.40} parent=11 // pred_fallthru
        _
    $region12: #{transformer_forward.40} parent=5 // pred_fallthru
      _
    %p151 = scmp.lt.s32.totalorder %s10, 2
    // Predicated region
    $region21: #{transformer_forward.40} parent=5 // pred_check
      %p152 = pneg %p151
    $region22: #{transformer_forward.40} parent=5 // pred_check_branch
      %154 = sbr.rel (%p152) target = $region24
    $region23: #{transformer_forward.40} parent=5 // pred_region
      // Predicated region
      $region25: #{transformer_forward.40} parent=23 // pred_check
        %p155 = pneg %p30
      $region26: #{transformer_forward.40} parent=23 // pred_check_branch
        %157 = sbr.rel (%p155) target = $region28
      $region27: #{transformer_forward.40} parent=23 // pred_region
        %p158 = scmp.lt.s32.totalorder %s10, 1
        %s159 = scalar_select %p158, %s10, 1
        %s160 = smul.addr %s159, 4
        %s161 = scalar_lea.vmem %s0, %s160
      $region28: #{transformer_forward.40} parent=23 // pred_fallthru
        _
      // Predicated region
      $region29: #{transformer_forward.40} parent=23 // pred_check
        %p162 = pneg %p56
      $region30: #{transformer_forward.40} parent=23 // pred_check_branch
        %164 = sbr.rel (%p162) target = $region32
      $region31: #{transformer_forward.40} parent=23 // pred_region
        %p165 = scmp.lt.s32.totalorder %s10, 1
        %s166 = scalar_select %p165, %s10, 1
        %s167 = smul.addr %s166, 4
        %s168 = scalar_lea.vmem %s1, %s167
      $region32: #{transformer_forward.40} parent=23 // pred_fallthru
        _
    $region24: #{transformer_forward.40} parent=5 // pred_fallthru
      _
    %p169 = scmp.le.s32.totalorder 1, %s10
    %p170 = scmp.lt.s32.totalorder %s10, 3
    %p171 = pnand %p169, %p170
    %p172 = pneg %p171
    // Predicated region
    $region33: #{transformer_forward.40} parent=5 // pred_check
      _
    $region34: #{transformer_forward.40} parent=5 // pred_check_branch
      %174 = sbr.rel (%p171) target = $region36
    $region35: #{transformer_forward.40} parent=5 // pred_region
      %s175 = ssub.s32 %s10, 1
      %p176 = scmp.lt.s32.totalorder %s15, 1
      %s177 = scalar_select %p176, %s15, 1
      %s178 = smul.addr %s177, 4
      %s179 = scalar_lea.vmem %s0, %s178
      %p180 = pneg %p36
      %p181 = pneg %p33
      %p182 = scmp.lt.s32.totalorder %s15, 1
      %s183 = scalar_select %p182, %s15, 1
      %s184 = smul.addr %s183, 4
      %s185 = scalar_lea.vmem %s1, %s184
      %p186 = pneg %p62
      %p187 = pneg %p59
      %p188 = pneg %p83
      %p189 = pneg %p80
      %p190 = pneg %p104
      %p191 = pneg %p101
      %p192 = pneg %p130
      %p193 = pneg %p127
      %p194 = scmp.lt.s32.totalorder %s15, 1
      %s195 = scalar_select %p194, %s15, 1
      %s196 = smul.addr %s195, 4
      %s197 = scalar_lea.vmem %s4, %s196
      %p198 = scmp.lt.s32.totalorder %s15, 1
      %s199 = scalar_select %p198, %s15, 1
      %s200 = smul.addr %s199, 4
      %s201 = scalar_lea.vmem %s0, %s200
      %p202 = scmp.lt.s32.totalorder %s15, 1
      %s203 = scalar_select %p202, %s15, 1
      %s204 = smul.addr %s203, 4
      %s205 = scalar_lea.vmem %s1, %s204
      %p206 = scmp.lt.s32.totalorder %s15, 1
      %s207 = scalar_select %p206, %s15, 1
      %s208 = smul.addr %s207, 4
      %s209 = scalar_lea.vmem %s4, %s208
      %v210 = vld [vmem:[%s201] sm:$0xf]
      %v211 = vunpack.c.l.bf16 %v210
      %v212 = vld [vmem:[%s205] sm:$0xf]
      %v213 = vunpack.c.l.bf16 %v212
      %v214 = vadd.f32 %v211, %v213
      %vm215 = vcmask 261120
      %v216 = vsel %vm215, %v214, 0.0
      %217 = vadd.xlane.f32.xlu0 %v216
      %v218 = vpop.xlane.xlu0 %217
      %v219 = vrcp.pop 32.0
      %v220 = vmul.f32 32.0, %v219
      %v221 = vsub.f32 1.0, %v220
      %v222 = vmul.f32 %v219, %v221
      %v223 = vadd.f32 %v219, %v222
      %vm224 = vweird.f32 %v219
      %v225 = vsel %vm224, %v219, %v223
      %v226 = vmul.f32 %v218, %v225
      %v227 = vmul.f32 %v214, %v214
      %v228 = vsel %vm215, %v227, 0.0
      %229 = vadd.xlane.f32.xlu0 %v228
      %v230 = vpop.xlane.xlu0 %229
      %v231 = vmul.f32 %v230, %v225
      %v232 = vsub.f32 %v214, %v226
      %v233 = vmul.f32 %v226, %v226
      %v234 = vsub.f32 %v231, %v233
      %v235 = vadd.f32 %v234, 1e-05
      %v236 = vrsqrt.pop %v235
      %v237 = vmul.f32 %v236, %v235
      %v238 = vmul.f32 %v237, %v236
      %v239 = vmul.f32 0.5, %v238
      %v240 = vsub.f32 1.5, %v239
      %v241 = vmul.f32 %v236, %v240
      %vm242 = vweird.f32 %v235
      %vm243 = vweird.f32 %v236
      %vm244 = vmor %vm242, %vm243
      %v245 = vsel %vm244, %v236, %v241
      %v246 = vmul.f32 %v232, %v245
      %v247 = vld [vmem:[%s2] sm:$0x1]
      %v249 = vperm.slane %v247, 0
      %v251 = vmul.f32 %v246, %v249
      %v252 = vld [vmem:[%s3] sm:$0x1]
      %v254 = vperm.slane %v252, 0
      %v256 = vadd.f32 %v251, %v254
      %v257 = vpack.c.bf16 %v256, %v256
      %vm258 = vcmask 257024
      %259 = vst.msk [vmem:[%s209] sm:$0xf] %vm258, %v257
      %p260 = scmp.lt.s32.totalorder %s15, 1
      %s261 = scalar_select %p260, %s15, 1
      %s262 = smul.addr %s261, 4
      %s263 = scalar_lea.vmem %s4, %s262
      // Predicated region
      $region37: #{transformer_forward.40} parent=35 // pred_check
        %p264 = pneg %p127
      $region38: #{transformer_forward.40} parent=35 // pred_check_branch
        %266 = sbr.rel (%p264) target = $region40
      $region39: #{transformer_forward.40} parent=35 // pred_region
        _
      $region40: #{transformer_forward.40} parent=35 // pred_fallthru
        _
    $region36: #{transformer_forward.40} parent=5 // pred_fallthru
      _
    %p267 = scmp.le.s32.totalorder 2, %s10
    // Predicated region
    $region41: #{transformer_forward.40} parent=5 // pred_check
      %p268 = pneg %p267
    $region42: #{transformer_forward.40} parent=5 // pred_check_branch
      %270 = sbr.rel (%p268) target = $region44
    $region43: #{transformer_forward.40} parent=5 // pred_region
      %s271 = ssub.s32 %s10, 2
      // Predicated region
      $region45: #{transformer_forward.40} parent=43 // pred_check
        %p272 = pneg %p133
      $region46: #{transformer_forward.40} parent=43 // pred_check_branch
        %274 = sbr.rel (%p272) target = $region48
      $region47: #{transformer_forward.40} parent=43 // pred_region
        %p275 = scmp.lt.s32.totalorder %s16, 1
        %s276 = scalar_select %p275, %s16, 1
        %s277 = smul.addr %s276, 4
        %s278 = scalar_lea.vmem %s4, %s277
      $region48: #{transformer_forward.40} parent=43 // pred_fallthru
        _
    $region44: #{transformer_forward.40} parent=5 // pred_fallthru
      _
  $region6: #{transformer_forward.40} parent=0 // loop_footer
    %s14 = sadd.s32 1, %s10
  $region7: #{transformer_forward.40} parent=0 // loop_footer_branch
    %9 = sbr.rel target = $region3
  $region8: #{transformer_forward.40} parent=0 // loop_exit
    _

// kernel: transformer_forward.38
$region0: #{transformer_forward.38}
  #allocation0 [shape = 'u32[]', space=smem, size = 0x4, offset = 0x4, fixed_abs, tag = 'smem constant byte address 0x4 - core index']
  #allocation1 [shape = 'u32[72,128]{1,0:T(1,128)}', space=vmem, size = 0x9000, scoped, tag = 'internal scratch']
  #allocation2 [shape = 'f32[4,8,1]{2,1,0:T(8,128)}', space=vmem, size = 0x4000, scoped, tag = 'scratch operand']
  #allocation3 [shape = 'f32[4,8,1]{2,1,0:T(8,128)}', space=vmem, size = 0x4000, scoped, tag = 'scratch operand']
  #allocation4 [shape = 'f32[4,8,8]{2,1,0:T(8,128)}', space=vmem, size = 0x4000, scoped, tag = 'scratch operand']
  %s0 = inlined_call_operand.vmem [shape: bf16[2,8,32], index: 0, kind: input, shape index: {}]
  %s1 = inlined_call_operand.vmem [shape: bf16[2,8,32], index: 1, kind: input, shape index: {}]
  %s2 = inlined_call_operand.vmem [shape: bf16[2,8,32], index: 2, kind: input, shape index: {}]
  %s3 = inlined_call_operand.vmem [shape: bf16[2,8,32], index: 3, kind: output, shape index: {}]
  %s4 = sld [smem:[#allocation0]]
  $region53: #{transformer_forward.38} parent=0
    _
  %s6 = ssub.s32 1, %s4
  %s7 = scalar_select 0, %s6, %s4
  loop: start=0, step=1, limit=4
  $region2: #{transformer_forward.38} parent=0 // loop_pre_header
    _
  $region3: #{transformer_forward.38} parent=0 // loop_header
    %s9 = sphi 0, %s13
    %p10 = scmp.ge.s32.totalorder %s9, 4
    %s16 = sphi 0, %s35
    %s17 = sphi 0, %s31
    %s18 = sphi 0, %s27
    %s19 = sphi 0, %s16
    %s20 = sphi 0, %s17
    %s21 = sphi 0, %s18
    %s22 = sphi 0, %s19
    %s23 = sphi 0, %s20
    %s24 = sphi 0, %s21
    %s40 = sphi 0, %s42
    %s43 = sphi 0, %s40
    %s44 = sphi 0, %s43
    %s60 = sphi 0, %s44
    %s68 = sphi 0, %s70
    %s71 = sphi 0, %s68
    %s72 = sphi 0, %s71
    %s88 = sphi 0, %s72
    %s96 = sphi 0, %s98
    %s99 = sphi 0, %s96
    %s100 = sphi 0, %s99
    %s116 = sphi 0, %s100
    %s124 = sphi 0, %s126
    %s127 = sphi 0, %s124
    %s128 = sphi 0, %s127
    %s144 = sphi 0, %s128
  $region4: #{transformer_forward.38} parent=0 // loop_header_branch
    %12 = sbr.rel (%p10) target = $region8
  $region5: #{transformer_forward.38} parent=0 // loop_body
    %s14 = ssub.s32 %s9, 1
    %s15 = ssub.s32 %s9, 2
    %s25 = sadd.s32 1, %s18
    %p26 = scmp.ge.s32.totalorder %s25, 1
    %s27 = scalar_select %p26, 0, %s25
    %s28 = sadd.s32 1, %s17
    %s29 = scalar_select %p26, %s28, %s17
    %p30 = scmp.ge.s32.totalorder %s29, 1
    %s31 = scalar_select %p30, 0, %s29
    %s32 = sadd.s32 1, %s16
    %s33 = scalar_select %p30, %s32, %s16
    %p34 = scmp.ge.s32.totalorder %s33, 2
    %s35 = scalar_select %p34, 0, %s33
    %s36 = ssub.s32 %s16, %s35
    %s37 = ssub.s32 %s17, %s31
    %s38 = sor.u32 %s36, %s37
    %p39 = scmp.eq.s32.totalorder %s38, 0
    %s41 = sadd.s32 %s40, 1
    %s42 = scalar_select %p39, %s40, %s41
    %p45 = pneg %p39
    %p46 = scmp.eq.s32.totalorder %s9, 1
    %p47 = por %p45, %p46
    %p48 = scmp.ne.s32.totalorder %s40, %s43
    %p49 = scmp.eq.s32.totalorder %s9, 0
    %p50 = por %p48, %p49
    %p51 = scmp.ne.s32.totalorder %s40, %s43
    %p52 = scmp.eq.s32.totalorder %s14, 1
    %p53 = por %p51, %p52
    %p54 = scmp.ne.s32.totalorder %s43, %s44
    %p55 = scmp.eq.s32.totalorder %s14, 0
    %p56 = por %p54, %p55
    %p57 = scmp.ne.s32.totalorder %s43, %s44
    %p58 = scmp.eq.s32.totalorder %s15, 1
    %p59 = por %p57, %p58
    %p61 = scmp.ne.s32.totalorder %s44, %s60
    %p62 = scmp.eq.s32.totalorder %s15, 0
    %p63 = por %p61, %p62
    %s64 = ssub.s32 %s16, %s35
    %s65 = ssub.s32 %s18, %s27
    %s66 = sor.u32 %s64, %s65
    %p67 = scmp.eq.s32.totalorder %s66, 0
    %s69 = sadd.s32 %s68, 1
    %s70 = scalar_select %p67, %s68, %s69
    %p73 = pneg %p67
    %p74 = scmp.eq.s32.totalorder %s9, 1
    %p75 = por %p73, %p74
    %p76 = scmp.ne.s32.totalorder %s68, %s71
    %p77 = scmp.eq.s32.totalorder %s9, 0
    %p78 = por %p76, %p77
    %p79 = scmp.ne.s32.totalorder %s68, %s71
    %p80 = scmp.eq.s32.totalorder %s14, 1
    %p81 = por %p79, %p80
    %p82 = scmp.ne.s32.totalorder %s71, %s72
    %p83 = scmp.eq.s32.totalorder %s14, 0
    %p84 = por %p82, %p83
    %p85 = scmp.ne.s32.totalorder %s71, %s72
    %p86 = scmp.eq.s32.totalorder %s15, 1
    %p87 = por %p85, %p86
    %p89 = scmp.ne.s32.totalorder %s72, %s88
    %p90 = scmp.eq.s32.totalorder %s15, 0
    %p91 = por %p89, %p90
    %s92 = ssub.s32 %s16, %s35
    %s93 = ssub.s32 %s18, %s27
    %s94 = sor.u32 %s92, %s93
    %p95 = scmp.eq.s32.totalorder %s94, 0
    %s97 = sadd.s32 %s96, 1
    %s98 = scalar_select %p95, %s96, %s97
    %p101 = pneg %p95
    %p102 = scmp.eq.s32.totalorder %s9, 1
    %p103 = por %p101, %p102
    %p104 = scmp.ne.s32.totalorder %s96, %s99
    %p105 = scmp.eq.s32.totalorder %s9, 0
    %p106 = por %p104, %p105
    %p107 = scmp.ne.s32.totalorder %s96, %s99
    %p108 = scmp.eq.s32.totalorder %s14, 1
    %p109 = por %p107, %p108
    %p110 = scmp.ne.s32.totalorder %s99, %s100
    %p111 = scmp.eq.s32.totalorder %s14, 0
    %p112 = por %p110, %p111
    %p113 = scmp.ne.s32.totalorder %s99, %s100
    %p114 = scmp.eq.s32.totalorder %s15, 1
    %p115 = por %p113, %p114
    %p117 = scmp.ne.s32.totalorder %s100, %s116
    %p118 = scmp.eq.s32.totalorder %s15, 0
    %p119 = por %p117, %p118
    %s120 = ssub.s32 %s16, %s35
    %s121 = ssub.s32 %s17, %s31
    %s122 = sor.u32 %s120, %s121
    %p123 = scmp.eq.s32.totalorder %s122, 0
    %s125 = sadd.s32 %s124, 1
    %s126 = scalar_select %p123, %s124, %s125
    %p129 = pneg %p123
    %p130 = scmp.eq.s32.totalorder %s9, 1
    %p131 = por %p129, %p130
    %p132 = scmp.ne.s32.totalorder %s124, %s127
    %p133 = scmp.eq.s32.totalorder %s9, 0
    %p134 = por %p132, %p133
    %p135 = scmp.ne.s32.totalorder %s124, %s127
    %p136 = scmp.eq.s32.totalorder %s14, 1
    %p137 = por %p135, %p136
    %p138 = scmp.ne.s32.totalorder %s127, %s128
    %p139 = scmp.eq.s32.totalorder %s14, 0
    %p140 = por %p138, %p139
    %p141 = scmp.ne.s32.totalorder %s127, %s128
    %p142 = scmp.eq.s32.totalorder %s15, 1
    %p143 = por %p141, %p142
    %p145 = scmp.ne.s32.totalorder %s128, %s144
    %p146 = scmp.eq.s32.totalorder %s15, 0
    %p147 = por %p145, %p146
    %p148 = scmp.le.s32.totalorder 1, %s9
    %p149 = scmp.lt.s32.totalorder %s9, 3
    %p150 = pnand %p148, %p149
    %p151 = pneg %p150
    // Predicated region
    $region9: #{transformer_forward.38} parent=5 // pred_check
      _
    $region10: #{transformer_forward.38} parent=5 // pred_check_branch
      %153 = sbr.rel (%p150) target = $region12
    $region11: #{transformer_forward.38} parent=5 // pred_region
      %s154 = ssub.s32 %s9, 1
    $region12: #{transformer_forward.38} parent=5 // pred_fallthru
      _
    %p155 = scmp.lt.s32.totalorder %s9, 2
    // Predicated region
    $region13: #{transformer_forward.38} parent=5 // pred_check
      %p156 = pneg %p155
    $region14: #{transformer_forward.38} parent=5 // pred_check_branch
      %158 = sbr.rel (%p156) target = $region16
    $region15: #{transformer_forward.38} parent=5 // pred_region
      // Predicated region
      $region17: #{transformer_forward.38} parent=15 // pred_check
        %p159 = pneg %p50
      $region18: #{transformer_forward.38} parent=15 // pred_check_branch
        %161 = sbr.rel (%p159) target = $region20
      $region19: #{transformer_forward.38} parent=15 // pred_region
        %p162 = scmp.lt.s32.totalorder %s16, 1
        %s163 = scalar_select %p162, %s16, 1
        %p164 = scmp.lt.s32.totalorder %s17, 0
        %s165 = scalar_select %p164, %s17, 0
        %s166 = sadd.s32 %s165, %s163
        %s167 = smul.addr %s166, 4
        %s168 = scalar_lea.vmem %s0, %s167
      $region20: #{transformer_forward.38} parent=15 // pred_fallthru
        _
      // Predicated region
      $region21: #{transformer_forward.38} parent=15 // pred_check
        %p169 = pneg %p78
      $region22: #{transformer_forward.38} parent=15 // pred_check_branch
        %171 = sbr.rel (%p169) target = $region24
      $region23: #{transformer_forward.38} parent=15 // pred_region
        %p172 = scmp.lt.s32.totalorder %s16, 1
        %s173 = scalar_select %p172, %s16, 1
        %p174 = scmp.lt.s32.totalorder %s18, 0
        %s175 = scalar_select %p174, %s18, 0
        %s176 = sadd.s32 %s175, %s173
        %s177 = smul.addr %s176, 4
        %s178 = scalar_lea.vmem %s1, %s177
      $region24: #{transformer_forward.38} parent=15 // pred_fallthru
        _
      // Predicated region
      $region25: #{transformer_forward.38} parent=15 // pred_check
        %p179 = pneg %p106
      $region26: #{transformer_forward.38} parent=15 // pred_check_branch
        %181 = sbr.rel (%p179) target = $region28
      $region27: #{transformer_forward.38} parent=15 // pred_region
        %p182 = scmp.lt.s32.totalorder %s16, 1
        %s183 = scalar_select %p182, %s16, 1
        %p184 = scmp.lt.s32.totalorder %s18, 0
        %s185 = scalar_select %p184, %s18, 0
        %s186 = sadd.s32 %s185, %s183
        %s187 = smul.addr %s186, 4
        %s188 = scalar_lea.vmem %s2, %s187
      $region28: #{transformer_forward.38} parent=15 // pred_fallthru
        _
    $region16: #{transformer_forward.38} parent=5 // pred_fallthru
      _
    %p189 = scmp.le.s32.totalorder 1, %s9
    %p190 = scmp.lt.s32.totalorder %s9, 3
    %p191 = pnand %p189, %p190
    %p192 = pneg %p191
    // Predicated region
    $region29: #{transformer_forward.38} parent=5 // pred_check
      _
    $region30: #{transformer_forward.38} parent=5 // pred_check_branch
      %194 = sbr.rel (%p191) target = $region32
    $region31: #{transformer_forward.38} parent=5 // pred_region
      %s195 = ssub.s32 %s9, 1
      %p196 = scmp.lt.s32.totalorder %s19, 1
      %s197 = scalar_select %p196, %s19, 1
      %p198 = scmp.lt.s32.totalorder %s20, 0
      %s199 = scalar_select %p198, %s20, 0
      %s200 = sadd.s32 %s199, %s197
      %s201 = smul.addr %s200, 4
      %s202 = scalar_lea.vmem %s0, %s201
      %p203 = pneg %p56
      %p204 = pneg %p53
      %p205 = scmp.lt.s32.totalorder %s19, 1
      %s206 = scalar_select %p205, %s19, 1
      %p207 = scmp.lt.s32.totalorder %s21, 0
      %s208 = scalar_select %p207, %s21, 0
      %s209 = sadd.s32 %s208, %s206
      %s210 = smul.addr %s209, 4
      %s211 = scalar_lea.vmem %s1, %s210
      %p212 = pneg %p84
      %p213 = pneg %p81
      %p214 = scmp.lt.s32.totalorder %s19, 1
      %s215 = scalar_select %p214, %s19, 1
      %p216 = scmp.lt.s32.totalorder %s21, 0
      %s217 = scalar_select %p216, %s21, 0
      %s218 = sadd.s32 %s217, %s215
      %s219 = smul.addr %s218, 4
      %s220 = scalar_lea.vmem %s2, %s219
      %p221 = pneg %p112
      %p222 = pneg %p109
      %p223 = pneg %p140
      %p224 = pneg %p137
      %p225 = scmp.lt.s32.totalorder %s19, 1
      %s226 = scalar_select %p225, %s19, 1
      %p227 = scmp.lt.s32.totalorder %s20, 0
      %s228 = scalar_select %p227, %s20, 0
      %s229 = sadd.s32 %s228, %s226
      %s230 = smul.addr %s229, 4
      %s231 = scalar_lea.vmem %s3, %s230
      %p232 = scmp.lt.s32.totalorder %s19, 1
      %s233 = scalar_select %p232, %s19, 1
      %p234 = scmp.lt.s32.totalorder %s20, 0
      %s235 = scalar_select %p234, %s20, 0
      %s236 = sadd.s32 %s235, %s233
      %s237 = smul.addr %s236, 4
      %s238 = scalar_lea.vmem %s0, %s237
      %p239 = scmp.lt.s32.totalorder %s19, 1
      %s240 = scalar_select %p239, %s19, 1
      %p241 = scmp.lt.s32.totalorder %s21, 0
      %s242 = scalar_select %p241, %s21, 0
      %s243 = sadd.s32 %s242, %s240
      %s244 = smul.addr %s243, 4
      %s245 = scalar_lea.vmem %s1, %s244
      %p246 = scmp.lt.s32.totalorder %s19, 1
      %s247 = scalar_select %p246, %s19, 1
      %p248 = scmp.lt.s32.totalorder %s21, 0
      %s249 = scalar_select %p248, %s21, 0
      %s250 = sadd.s32 %s249, %s247
      %s251 = smul.addr %s250, 4
      %s252 = scalar_lea.vmem %s2, %s251
      %p253 = scmp.lt.s32.totalorder %s19, 1
      %s254 = scalar_select %p253, %s19, 1
      %p255 = scmp.lt.s32.totalorder %s20, 0
      %s256 = scalar_select %p255, %s20, 0
      %s257 = sadd.s32 %s256, %s254
      %s258 = smul.addr %s257, 4
      %s259 = scalar_lea.vmem %s3, %s258
      %p261 = scmp.eq.s32.totalorder %s21, 0
      // Predicated region
      $region33: #{transformer_forward.38} parent=31 // pred_check
        %p262 = pneg %p261
      $region34: #{transformer_forward.38} parent=31 // pred_check_branch
        %264 = sbr.rel (%p262) target = $region36
      $region35: #{transformer_forward.38} parent=31 // pred_region
        %vm265 = vcmask 7168
        %266 = vst.msk [vmem:[#allocation2] sm:$0xff] %vm265, -inf
        %267 = vst.msk [vmem:[#allocation2 + $0x8] sm:$0xff] %vm265, -inf
        %268 = vst.msk [vmem:[#allocation2 + $0x10] sm:$0xff] %vm265, -inf
        %269 = vst.msk [vmem:[#allocation2 + $0x18] sm:$0xff] %vm265, -inf
        %270 = vst.msk [vmem:[#allocation3] sm:$0xff] %vm265, 0.0
        %271 = vst.msk [vmem:[#allocation3 + $0x8] sm:$0xff] %vm265, 0.0
        %272 = vst.msk [vmem:[#allocation3 + $0x10] sm:$0xff] %vm265, 0.0
        %273 = vst.msk [vmem:[#allocation3 + $0x18] sm:$0xff] %vm265, 0.0
        %vm274 = vcmask 64512
        %275 = vst.msk [vmem:[#allocation4] sm:$0xff] %vm274, 0.0
        %276 = vst.msk [vmem:[#allocation4 + $0x8] sm:$0xff] %vm274, 0.0
        %277 = vst.msk [vmem:[#allocation4 + $0x10] sm:$0xff] %vm274, 0.0
        %278 = vst.msk [vmem:[#allocation4 + $0x18] sm:$0xff] %vm274, 0.0
      $region36: #{transformer_forward.38} parent=31 // pred_fallthru
        _
      %v279 = vld [vmem:[%s238] sm:$0xf]
      %v280 = vld [vmem:[%s245] sm:$0xf]
      %v281 = vld [vmem:[%s252] sm:$0xf]
      %vm282 = vcmask 64512
      %v284 = vsel %vm282, %v279, 0
      %v287 = vsel %vm282, %v280, 0
      %289 = vmatpush.bf16.xpose.msra.mxu0 0
      %290 = vmatpush.bf16.xpose.msra.mxu0 0
      %291 = vmatpush.bf16.xpose.msra.mxu0 0
      %292 = vmatpush.bf16.xpose.msra.mxu0 0
      %293 = vmatpush.bf16.xpose.msra.mxu0 0
      %294 = vmatpush.bf16.xpose.msra.mxu0 0
      %295 = vmatpush.bf16.xpose.msra.mxu0 0
      %296 = vmatpush.bf16.xpose.msra.mxu0 %v287
      %297 = vmatmul.bf16.gmra.mxu0 %v284
      %v298 = vpop.f32.mrf.mxu0
      %v299 = vadd.f32 0.0, %v298
      %v300 = vpop.f32.mrf.mxu0
      %301 = vdwg.mxu0
      %v302 = vld [vmem:[#allocation2] sm:$0xff]
      %v303 = vsel %vm282, %v299, -inf
      %304 = vmax.xlane.f32.xlu0 %v303
      %v305 = vpop.xlane.xlu0 %304
      %v306 = vmax.f32 %v302, %v305
      %v307 = vsub.f32 %v302, %v306
      %v308 = vmul.f32 %v307, 1.442695
      %v309 = vpow.pop %v308
      %311 = vset.pattern.permute.xlu0 0
      %312 = vperm.xlu0 %311, %v306
      %v313 = vpop.permute.xlu0 %312
      %v315 = vsub.f32 %v299, %v313
      %v316 = vmul.f32 %v315, 1.442695
      %v317 = vpow.pop %v316
      %v318 = vld [vmem:[#allocation3] sm:$0xff]
      %v319 = vmul.f32 %v309, %v318
      %v320 = vsel %vm282, %v317, 0.0
      %321 = vadd.xlane.f32.xlu0 %v320
      %v322 = vpop.xlane.xlu0 %321
      %v323 = vadd.f32 %v319, %v322
      %vm324 = vcmask 7168
      %325 = vst.msk [vmem:[#allocation3] sm:$0xff] %vm324, %v323
      %v326 = vld [vmem:[#allocation4] sm:$0xff]
      %328 = vset.pattern.permute.xlu0 0
      %329 = vperm.xlu0 %328, %v309
      %v330 = vpop.permute.xlu0 %329
      %v332 = vmul.f32 %v330, %v326
      %v333 = vpack.c.bf16 %v317, %v317
      %v335 = vsel %vm282, %v333, 0
      %vm337 = vcmask 1043456
      %v339 = vsel %vm337, %v281, 0
      %341 = vmatpush.bf16.msra.mxu0 0
      %342 = vmatpush.bf16.msra.mxu0 0
      %343 = vmatpush.bf16.msra.mxu0 0
      %344 = vmatpush.bf16.msra.mxu0 0
      %345 = vmatpush.bf16.msra.mxu0 0
      %346 = vmatpush.bf16.msra.mxu0 0
      %347 = vmatpush.bf16.msra.mxu0 0
      %348 = vmatpush.bf16.msra.mxu0 %v339
      %349 = vmatmul.bf16.gmra.mxu0 %v335
      %v350 = vpop.f32.mrf.mxu0
      %v351 = vadd.f32 0.0, %v350
      %v352 = vpop.f32.mrf.mxu0
      %353 = vdwg.mxu0
      %v354 = vadd.f32 %v332, %v351
      %355 = vst.msk [vmem:[#allocation4] sm:$0xff] %vm282, %v354
      %356 = vst.msk [vmem:[#allocation2] sm:$0xff] %vm324, %v306
      %v358 = vunpack.c.l.b16 %v279
      %v359 = vpack.c.b16 %v358, %v358
      %360 = vrot.lane.b32.xlu0 %v359, 120
      %v361 = vpop.permute.xlu0 %360
      %v363 = vunpack.c.l.b16 %v280
      %v364 = vpack.c.b16 %v363, %v363
      %365 = vrot.lane.b32.xlu0 %v364, 120
      %v366 = vpop.permute.xlu0 %365
      %v368 = vsel %vm282, %v361, 0
      %v371 = vsel %vm282, %v366, 0
      %373 = vmatpush.bf16.xpose.msra.mxu0 0
      %374 = vmatpush.bf16.xpose.msra.mxu0 0
      %375 = vmatpush.bf16.xpose.msra.mxu0 0
      %376 = vmatpush.bf16.xpose.msra.mxu0 0
      %377 = vmatpush.bf16.xpose.msra.mxu0 0
      %378 = vmatpush.bf16.xpose.msra.mxu0 0
      %379 = vmatpush.bf16.xpose.msra.mxu0 0
      %380 = vmatpush.bf16.xpose.msra.mxu0 %v371
      %381 = vmatmul.bf16.gmra.mxu0 %v368
      %v382 = vpop.f32.mrf.mxu0
      %v383 = vadd.f32 0.0, %v382
      %v384 = vpop.f32.mrf.mxu0
      %385 = vdwg.mxu0
      %s386 = scalar_lea.vmem [#allocation2], 8
      %v387 = vld [vmem:[%s386] sm:$0xff]
      %v388 = vsel %vm282, %v383, -inf
      %389 = vmax.xlane.f32.xlu0 %v388
      %v390 = vpop.xlane.xlu0 %389
      %v391 = vmax.f32 %v387, %v390
      %v392 = vsub.f32 %v387, %v391
      %v393 = vmul.f32 %v392, 1.442695
      %v394 = vpow.pop %v393
      %396 = vset.pattern.permute.xlu0 0
      %397 = vperm.xlu0 %396, %v391
      %v398 = vpop.permute.xlu0 %397
      %v400 = vsub.f32 %v383, %v398
      %v401 = vmul.f32 %v400, 1.442695
      %v402 = vpow.pop %v401
      %s403 = scalar_lea.vmem [#allocation3], 8
      %v404 = vld [vmem:[%s403] sm:$0xff]
      %v405 = vmul.f32 %v394, %v404
      %v406 = vsel %vm282, %v402, 0.0
      %407 = vadd.xlane.f32.xlu0 %v406
      %v408 = vpop.xlane.xlu0 %407
      %v409 = vadd.f32 %v405, %v408
      %410 = vst.msk [vmem:[%s403] sm:$0xff] %vm324, %v409
      %s411 = scalar_lea.vmem [#allocation4], 8
      %v412 = vld [vmem:[%s411] sm:$0xff]
      %414 = vset.pattern.permute.xlu0 0
      %415 = vperm.xlu0 %414, %v394
      %v416 = vpop.permute.xlu0 %415
      %v418 = vmul.f32 %v416, %v412
      %v419 = vpack.c.bf16 %v402, %v402
      %v421 = vunpack.c.l.b16 %v281
      %v422 = vpack.c.b16 %v421, %v421
      %423 = vrot.lane.b32.xlu0 %v422, 120
      %v424 = vpop.permute.xlu0 %423
      %v426 = vsel %vm282, %v419, 0
      %v429 = vsel %vm337, %v424, 0
      %431 = vmatpush.bf16.msra.mxu0 0
      %432 = vmatpush.bf16.msra.mxu0 0
      %433 = vmatpush.bf16.msra.mxu0 0
      %434 = vmatpush.bf16.msra.mxu0 0
      %435 = vmatpush.bf16.msra.mxu0 0
      %436 = vmatpush.bf16.msra.mxu0 0
      %437 = vmatpush.bf16.msra.mxu0 0
      %438 = vmatpush.bf16.msra.mxu0 %v429
      %439 = vmatmul.bf16.gmra.mxu0 %v426
      %v440 = vpop.f32.mrf.mxu0
      %v441 = vadd.f32 0.0, %v440
      %v442 = vpop.f32.mrf.mxu0
      %443 = vdwg.mxu0
      %v444 = vadd.f32 %v418, %v441
      %445 = vst.msk [vmem:[%s411] sm:$0xff] %vm282, %v444
      %446 = vst.msk [vmem:[%s386] sm:$0xff] %vm324, %v391
      %447 = vrot.lane.b32.xlu0 %v359, 112
      %v448 = vpop.permute.xlu0 %447
      %449 = vrot.lane.b32.xlu0 %v364, 112
      %v450 = vpop.permute.xlu0 %449
      %v452 = vsel %vm282, %v448, 0
      %v455 = vsel %vm282, %v450, 0
      %457 = vmatpush.bf16.xpose.msra.mxu0 0
      %458 = vmatpush.bf16.xpose.msra.mxu0 0
      %459 = vmatpush.bf16.xpose.msra.mxu0 0
      %460 = vmatpush.bf16.xpose.msra.mxu0 0
      %461 = vmatpush.bf16.xpose.msra.mxu0 0
      %462 = vmatpush.bf16.xpose.msra.mxu0 0
      %463 = vmatpush.bf16.xpose.msra.mxu0 0
      %464 = vmatpush.bf16.xpose.msra.mxu0 %v455
      %465 = vmatmul.bf16.gmra.mxu0 %v452
      %v466 = vpop.f32.mrf.mxu0
      %v467 = vadd.f32 0.0, %v466
      %v468 = vpop.f32.mrf.mxu0
      %469 = vdwg.mxu0
      %s470 = scalar_lea.vmem [#allocation2], 16
      %v471 = vld [vmem:[%s470] sm:$0xff]
      %v472 = vsel %vm282, %v467, -inf
      %473 = vmax.xlane.f32.xlu0 %v472
      %v474 = vpop.xlane.xlu0 %473
      %v475 = vmax.f32 %v471, %v474
      %v476 = vsub.f32 %v471, %v475
      %v477 = vmul.f32 %v476, 1.442695
      %v478 = vpow.pop %v477
      %480 = vset.pattern.permute.xlu0 0
      %481 = vperm.xlu0 %480, %v475
      %v482 = vpop.permute.xlu0 %481
      %v484 = vsub.f32 %v467, %v482
      %v485 = vmul.f32 %v484, 1.442695
      %v486 = vpow.pop %v485
      %s487 = scalar_lea.vmem [#allocation3], 16
      %v488 = vld [vmem:[%s487] sm:$0xff]
      %v489 = vmul.f32 %v478, %v488
      %v490 = vsel %vm282, %v486, 0.0
      %491 = vadd.xlane.f32.xlu0 %v490
      %v492 = vpop.xlane.xlu0 %491
      %v493 = vadd.f32 %v489, %v492
      %494 = vst.msk [vmem:[%s487] sm:$0xff] %vm324, %v493
      %s495 = scalar_lea.vmem [#allocation4], 16
      %v496 = vld [vmem:[%s495] sm:$0xff]
      %498 = vset.pattern.permute.xlu0 0
      %499 = vperm.xlu0 %498, %v478
      %v500 = vpop.permute.xlu0 %499
      %v502 = vmul.f32 %v500, %v496
      %v503 = vpack.c.bf16 %v486, %v486
      %504 = vrot.lane.b32.xlu0 %v422, 112
      %v505 = vpop.permute.xlu0 %504
      %v507 = vsel %vm282, %v503, 0
      %v510 = vsel %vm337, %v505, 0
      %512 = vmatpush.bf16.msra.mxu0 0
      %513 = vmatpush.bf16.msra.mxu0 0
      %514 = vmatpush.bf16.msra.mxu0 0
      %515 = vmatpush.bf16.msra.mxu0 0
      %516 = vmatpush.bf16.msra.mxu0 0
      %517 = vmatpush.bf16.msra.mxu0 0
      %518 = vmatpush.bf16.msra.mxu0 0
      %519 = vmatpush.bf16.msra.mxu0 %v510
      %520 = vmatmul.bf16.gmra.mxu0 %v507
      %v521 = vpop.f32.mrf.mxu0
      %v522 = vadd.f32 0.0, %v521
      %v523 = vpop.f32.mrf.mxu0
      %524 = vdwg.mxu0
      %v525 = vadd.f32 %v502, %v522
      %526 = vst.msk [vmem:[%s495] sm:$0xff] %vm282, %v525
      %527 = vst.msk [vmem:[%s470] sm:$0xff] %vm324, %v475
      %528 = vrot.lane.b32.xlu0 %v359, 104
      %v529 = vpop.permute.xlu0 %528
      %530 = vrot.lane.b32.xlu0 %v364, 104
      %v531 = vpop.permute.xlu0 %530
      %v533 = vsel %vm282, %v529, 0
      %v536 = vsel %vm282, %v531, 0
      %538 = vmatpush.bf16.xpose.msra.mxu0 0
      %539 = vmatpush.bf16.xpose.msra.mxu0 0
      %540 = vmatpush.bf16.xpose.msra.mxu0 0
      %541 = vmatpush.bf16.xpose.msra.mxu0 0
      %542 = vmatpush.bf16.xpose.msra.mxu0 0
      %543 = vmatpush.bf16.xpose.msra.mxu0 0
      %544 = vmatpush.bf16.xpose.msra.mxu0 0
      %545 = vmatpush.bf16.xpose.msra.mxu0 %v536
      %546 = vmatmul.bf16.gmra.mxu0 %v533
      %v547 = vpop.f32.mrf.mxu0
      %v548 = vadd.f32 0.0, %v547
      %v549 = vpop.f32.mrf.mxu0
      %550 = vdwg.mxu0
      %s551 = scalar_lea.vmem [#allocation2], 24
      %v552 = vld [vmem:[%s551] sm:$0xff]
      %v553 = vsel %vm282, %v548, -inf
      %554 = vmax.xlane.f32.xlu0 %v553
      %v555 = vpop.xlane.xlu0 %554
      %v556 = vmax.f32 %v552, %v555
      %v557 = vsub.f32 %v552, %v556
      %v558 = vmul.f32 %v557, 1.442695
      %v559 = vpow.pop %v558
      %561 = vset.pattern.permute.xlu0 0
      %562 = vperm.xlu0 %561, %v556
      %v563 = vpop.permute.xlu0 %562
      %v565 = vsub.f32 %v548, %v563
      %v566 = vmul.f32 %v565, 1.442695
      %v567 = vpow.pop %v566
      %s568 = scalar_lea.vmem [#allocation3], 24
      %v569 = vld [vmem:[%s568] sm:$0xff]
      %v570 = vmul.f32 %v559, %v569
      %v571 = vsel %vm282, %v567, 0.0
      %572 = vadd.xlane.f32.xlu0 %v571
      %v573 = vpop.xlane.xlu0 %572
      %v574 = vadd.f32 %v570, %v573
      %575 = vst.msk [vmem:[%s568] sm:$0xff] %vm324, %v574
      %s576 = scalar_lea.vmem [#allocation4], 24
      %v577 = vld [vmem:[%s576] sm:$0xff]
      %579 = vset.pattern.permute.xlu0 0
      %580 = vperm.xlu0 %579, %v559
      %v581 = vpop.permute.xlu0 %580
      %v583 = vmul.f32 %v581, %v577
      %v584 = vpack.c.bf16 %v567, %v567
      %585 = vrot.lane.b32.xlu0 %v422, 104
      %v586 = vpop.permute.xlu0 %585
      %v588 = vsel %vm282, %v584, 0
      %v591 = vsel %vm337, %v586, 0
      %593 = vmatpush.bf16.msra.mxu0 0
      %594 = vmatpush.bf16.msra.mxu0 0
      %595 = vmatpush.bf16.msra.mxu0 0
      %596 = vmatpush.bf16.msra.mxu0 0
      %597 = vmatpush.bf16.msra.mxu0 0
      %598 = vmatpush.bf16.msra.mxu0 0
      %599 = vmatpush.bf16.msra.mxu0 0
      %600 = vmatpush.bf16.msra.mxu0 %v591
      %601 = vmatmul.bf16.gmra.mxu0 %v588
      %v602 = vpop.f32.mrf.mxu0
      %v603 = vadd.f32 0.0, %v602
      %v604 = vpop.f32.mrf.mxu0
      %605 = vdwg.mxu0
      %v606 = vadd.f32 %v583, %v603
      %607 = vst.msk [vmem:[%s576] sm:$0xff] %vm282, %v606
      %608 = vst.msk [vmem:[%s551] sm:$0xff] %vm324, %v556
      // Predicated region
      $region37: #{transformer_forward.38} parent=31 // pred_check
        %p609 = pneg %p261
      $region38: #{transformer_forward.38} parent=31 // pred_check_branch
        %611 = sbr.rel (%p609) target = $region40
      $region39: #{transformer_forward.38} parent=31 // pred_region
        %v612 = vld [vmem:[#allocation3] sm:$0xff]
        %v613 = vrcp.pop %v612
        %v614 = vld [vmem:[#allocation4] sm:$0xff]
        %616 = vset.pattern.permute.xlu0 0
        %617 = vperm.xlu0 %616, %v613
        %v618 = vpop.permute.xlu0 %617
        %v620 = vmul.f32 %v614, %v618
        %v621 = vpack.c.bf16 %v620, %v620
        %v622 = vld [vmem:[%s403] sm:$0xff]
        %v623 = vrcp.pop %v622
        %v624 = vld [vmem:[%s411] sm:$0xff]
        %626 = vset.pattern.permute.xlu0 0
        %627 = vperm.xlu0 %626, %v623
        %v628 = vpop.permute.xlu0 %627
        %v630 = vmul.f32 %v624, %v628
        %v631 = vpack.c.bf16 %v630, %v630
        %v632 = vld [vmem:[%s487] sm:$0xff]
        %v633 = vrcp.pop %v632
        %v634 = vld [vmem:[%s495] sm:$0xff]
        %636 = vset.pattern.permute.xlu0 0
        %637 = vperm.xlu0 %636, %v633
        %v638 = vpop.permute.xlu0 %637
        %v640 = vmul.f32 %v634, %v638
        %v641 = vpack.c.bf16 %v640, %v640
        %v642 = vld [vmem:[%s568] sm:$0xff]
        %v643 = vrcp.pop %v642
        %v644 = vld [vmem:[%s576] sm:$0xff]
        %646 = vset.pattern.permute.xlu0 0
        %647 = vperm.xlu0 %646, %v643
        %v648 = vpop.permute.xlu0 %647
        %v650 = vmul.f32 %v644, %v648
        %v651 = vpack.c.bf16 %v650, %v650
        %v653 = vunpack.c.l.b16 %v631
        %v654 = vpack.c.b16 %v653, %v653
        %655 = vrot.lane.b32.xlu0 %v654, 8
        %v656 = vpop.permute.xlu0 %655
        %v658 = vunpack.c.l.b16 %v641
        %v659 = vpack.c.b16 %v658, %v658
        %660 = vrot.lane.b32.xlu0 %v659, 16
        %v661 = vpop.permute.xlu0 %660
        %v663 = vunpack.c.l.b16 %v651
        %v664 = vpack.c.b16 %v663, %v663
        %665 = vrot.lane.b32.xlu0 %v664, 24
        %v666 = vpop.permute.xlu0 %665
        %v669 = vsel %vm282, %v621, %v656
        %vm670 = vcmask 130048
        %v672 = vsel %vm670, %v669, %v661
        %vm673 = vcmask 195584
        %v675 = vsel %vm673, %v672, %v666
        %vm677 = vcmask 257024
        %678 = vst.msk [vmem:[%s259] sm:$0xf] %vm677, %v675
      $region40: #{transformer_forward.38} parent=31 // pred_fallthru
        _
      %p679 = scmp.lt.s32.totalorder %s19, 1
      %s680 = scalar_select %p679, %s19, 1
      %p681 = scmp.lt.s32.totalorder %s20, 0
      %s682 = scalar_select %p681, %s20, 0
      %s683 = sadd.s32 %s682, %s680
      %s684 = smul.addr %s683, 4
      %s685 = scalar_lea.vmem %s3, %s684
      // Predicated region
      $region41: #{transformer_forward.38} parent=31 // pred_check
        %p686 = pneg %p137
      $region42: #{transformer_forward.38} parent=31 // pred_check_branch
        %688 = sbr.rel (%p686) target = $region44
      $region43: #{transformer_forward.38} parent=31 // pred_region
        _
      $region44: #{transformer_forward.38} parent=31 // pred_fallthru
        _
    $region32: #{transformer_forward.38} parent=5 // pred_fallthru
      _
    %p689 = scmp.le.s32.totalorder 2, %s9
    // Predicated region
    $region45: #{transformer_forward.38} parent=5 // pred_check
      %p690 = pneg %p689
    $region46: #{transformer_forward.38} parent=5 // pred_check_branch
      %692 = sbr.rel (%p690) target = $region48
    $region47: #{transformer_forward.38} parent=5 // pred_region
      %s693 = ssub.s32 %s9, 2
      // Predicated region
      $region49: #{transformer_forward.38} parent=47 // pred_check
        %p694 = pneg %p143
      $region50: #{transformer_forward.38} parent=47 // pred_check_branch
        %696 = sbr.rel (%p694) target = $region52
      $region51: #{transformer_forward.38} parent=47 // pred_region
        %p697 = scmp.lt.s32.totalorder %s22, 1
        %s698 = scalar_select %p697, %s22, 1
        %p699 = scmp.lt.s32.totalorder %s23, 0
        %s700 = scalar_select %p699, %s23, 0
        %s701 = sadd.s32 %s700, %s698
        %s702 = smul.addr %s701, 4
        %s703 = scalar_lea.vmem %s3, %s702
      $region52: #{transformer_forward.38} parent=47 // pred_fallthru
        _
    $region48: #{transformer_forward.38} parent=5 // pred_fallthru
      _
  $region6: #{transformer_forward.38} parent=0 // loop_footer
    %s13 = sadd.s32 1, %s9
  $region7: #{transformer_forward.38} parent=0 // loop_footer_branch
    %8 = sbr.rel target = $region3
  $region8: #{transformer_forward.38} parent=0 // loop_exit
    _

// kernel: transformer_forward.41
$region0: #{transformer_forward.41}
  #allocation0 [shape = 'u32[]', space=smem, size = 0x4, offset = 0x4, fixed_abs, tag = 'smem constant byte address 0x4 - core index']
  #allocation1 [shape = 'u32[72,128]{1,0:T(1,128)}', space=vmem, size = 0x9000, scoped, tag = 'internal scratch']
  #allocation2 [shape = 'f32[8,32]{1,0:T(8,128)}', space=vmem, size = 0x1000, scoped, tag = 'scratch operand']
  %s0 = inlined_call_operand.vmem [shape: bf16[16,32], index: 0, kind: input, shape index: {}]
  %s1 = inlined_call_operand.vmem [shape: bf16[32,64], index: 1, kind: input, shape index: {}]
  %s2 = inlined_call_operand.vmem [shape: f32[1,64], index: 2, kind: input, shape index: {}]
  %s3 = inlined_call_operand.vmem [shape: bf16[64,32], index: 3, kind: input, shape index: {}]
  %s4 = inlined_call_operand.vmem [shape: f32[1,32], index: 4, kind: input, shape index: {}]
  %s5 = inlined_call_operand.vmem [shape: bf16[16,32], index: 5, kind: output, shape index: {}]
  %s6 = sld [smem:[#allocation0]]
  $region61: #{transformer_forward.41} parent=0
    _
  %s8 = ssub.s32 1, %s6
  %s9 = scalar_select 0, %s8, %s6
  loop: start=0, step=1, limit=4
  $region2: #{transformer_forward.41} parent=0 // loop_pre_header
    _
  $region3: #{transformer_forward.41} parent=0 // loop_header
    %s11 = sphi 0, %s15
    %p12 = scmp.ge.s32.totalorder %s11, 4
    %s18 = sphi 0, %s30
    %s19 = sphi 0, %s26
    %s20 = sphi 0, %s18
    %s21 = sphi 0, %s19
    %s22 = sphi 0, %s20
    %s23 = sphi 0, %s21
    %s33 = sphi 0, %s35
    %s36 = sphi 0, %s33
    %s37 = sphi 0, %s36
    %s53 = sphi 0, %s37
    %s59 = sphi 0, %s61
    %s62 = sphi 0, %s59
    %s63 = sphi 0, %s62
    %s79 = sphi 0, %s63
    %s85 = sphi 0, %s87
    %s88 = sphi 0, %s85
    %s89 = sphi 0, %s88
    %s105 = sphi 0, %s89
    %s111 = sphi 0, %s113
    %s114 = sphi 0, %s111
    %s115 = sphi 0, %s114
    %s131 = sphi 0, %s115
    %s135 = sphi 0, %s135
    %s137 = sphi 0, %s135
    %s138 = sphi 0, %s137
    %s152 = sphi 0, %s138
    %s158 = sphi 0, %s160
    %s161 = sphi 0, %s158
    %s162 = sphi 0, %s161
    %s178 = sphi 0, %s162
  $region4: #{transformer_forward.41} parent=0 // loop_header_branch
    %14 = sbr.rel (%p12) target = $region8
  $region5: #{transformer_forward.41} parent=0 // loop_body
    %s16 = ssub.s32 %s11, 1
    %s17 = ssub.s32 %s11, 2
    %s24 = sadd.s32 1, %s19
    %p25 = scmp.ge.s32.totalorder %s24, 1
    %s26 = scalar_select %p25, 0, %s24
    %s27 = sadd.s32 1, %s18
    %s28 = scalar_select %p25, %s27, %s18
    %p29 = scmp.ge.s32.totalorder %s28, 2
    %s30 = scalar_select %p29, 0, %s28
    %s31 = ssub.s32 %s18, %s30
    %p32 = scmp.eq.s32.totalorder %s31, 0
    %s34 = sadd.s32 %s33, 1
    %s35 = scalar_select %p32, %s33, %s34
    %p38 = pneg %p32
    %p39 = scmp.eq.s32.totalorder %s11, 1
    %p40 = por %p38, %p39
    %p41 = scmp.ne.s32.totalorder %s33, %s36
    %p42 = scmp.eq.s32.totalorder %s11, 0
    %p43 = por %p41, %p42
    %p44 = scmp.ne.s32.totalorder %s33, %s36
    %p45 = scmp.eq.s32.totalorder %s16, 1
    %p46 = por %p44, %p45
    %p47 = scmp.ne.s32.totalorder %s36, %s37
    %p48 = scmp.eq.s32.totalorder %s16, 0
    %p49 = por %p47, %p48
    %p50 = scmp.ne.s32.totalorder %s36, %s37
    %p51 = scmp.eq.s32.totalorder %s17, 1
    %p52 = por %p50, %p51
    %p54 = scmp.ne.s32.totalorder %s37, %s53
    %p55 = scmp.eq.s32.totalorder %s17, 0
    %p56 = por %p54, %p55
    %s57 = ssub.s32 %s19, %s26
    %p58 = scmp.eq.s32.totalorder %s57, 0
    %s60 = sadd.s32 %s59, 1
    %s61 = scalar_select %p58, %s59, %s60
    %p64 = pneg %p58
    %p65 = scmp.eq.s32.totalorder %s11, 1
    %p66 = por %p64, %p65
    %p67 = scmp.ne.s32.totalorder %s59, %s62
    %p68 = scmp.eq.s32.totalorder %s11, 0
    %p69 = por %p67, %p68
    %p70 = scmp.ne.s32.totalorder %s59, %s62
    %p71 = scmp.eq.s32.totalorder %s16, 1
    %p72 = por %p70, %p71
    %p73 = scmp.ne.s32.totalorder %s62, %s63
    %p74 = scmp.eq.s32.totalorder %s16, 0
    %p75 = por %p73, %p74
    %p76 = scmp.ne.s32.totalorder %s62, %s63
    %p77 = scmp.eq.s32.totalorder %s17, 1
    %p78 = por %p76, %p77
    %p80 = scmp.ne.s32.totalorder %s63, %s79
    %p81 = scmp.eq.s32.totalorder %s17, 0
    %p82 = por %p80, %p81
    %s83 = ssub.s32 %s19, %s26
    %p84 = scmp.eq.s32.totalorder %s83, 0
    %s86 = sadd.s32 %s85, 1
    %s87 = scalar_select %p84, %s85, %s86
    %p90 = pneg %p84
    %p91 = scmp.eq.s32.totalorder %s11, 1
    %p92 = por %p90, %p91
    %p93 = scmp.ne.s32.totalorder %s85, %s88
    %p94 = scmp.eq.s32.totalorder %s11, 0
    %p95 = por %p93, %p94
    %p96 = scmp.ne.s32.totalorder %s85, %s88
    %p97 = scmp.eq.s32.totalorder %s16, 1
    %p98 = por %p96, %p97
    %p99 = scmp.ne.s32.totalorder %s88, %s89
    %p100 = scmp.eq.s32.totalorder %s16, 0
    %p101 = por %p99, %p100
    %p102 = scmp.ne.s32.totalorder %s88, %s89
    %p103 = scmp.eq.s32.totalorder %s17, 1
    %p104 = por %p102, %p103
    %p106 = scmp.ne.s32.totalorder %s89, %s105
    %p107 = scmp.eq.s32.totalorder %s17, 0
    %p108 = por %p106, %p107
    %s109 = ssub.s32 %s19, %s26
    %p110 = scmp.eq.s32.totalorder %s109, 0
    %s112 = sadd.s32 %s111, 1
    %s113 = scalar_select %p110, %s111, %s112
    %p116 = pneg %p110
    %p117 = scmp.eq.s32.totalorder %s11, 1
    %p118 = por %p116, %p117
    %p119 = scmp.ne.s32.totalorder %s111, %s114
    %p120 = scmp.eq.s32.totalorder %s11, 0
    %p121 = por %p119, %p120
    %p122 = scmp.ne.s32.totalorder %s111, %s114
    %p123 = scmp.eq.s32.totalorder %s16, 1
    %p124 = por %p122, %p123
    %p125 = scmp.ne.s32.totalorder %s114, %s115
    %p126 = scmp.eq.s32.totalorder %s16, 0
    %p127 = por %p125, %p126
    %p128 = scmp.ne.s32.totalorder %s114, %s115
    %p129 = scmp.eq.s32.totalorder %s17, 1
    %p130 = por %p128, %p129
    %p132 = scmp.ne.s32.totalorder %s115, %s131
    %p133 = scmp.eq.s32.totalorder %s17, 0
    %p134 = por %p132, %p133
    %s136 = sadd.s32 %s135, 1
    %p139 = scmp.eq.s32.totalorder %s11, 1
    %p140 = scmp.ne.s32.totalorder %s135, %s137
    %p141 = scmp.eq.s32.totalorder %s11, 0
    %p142 = por %p140, %p141
    %p143 = scmp.ne.s32.totalorder %s135, %s137
    %p144 = scmp.eq.s32.totalorder %s16, 1
    %p145 = por %p143, %p144
    %p146 = scmp.ne.s32.totalorder %s137, %s138
    %p147 = scmp.eq.s32.totalorder %s16, 0
    %p148 = por %p146, %p147
    %p149 = scmp.ne.s32.totalorder %s137, %s138
    %p150 = scmp.eq.s32.totalorder %s17, 1
    %p151 = por %p149, %p150
    %p153 = scmp.ne.s32.totalorder %s138, %s152
    %p154 = scmp.eq.s32.totalorder %s17, 0
    %p155 = por %p153, %p154
    %s156 = ssub.s32 %s18, %s30
    %p157 = scmp.eq.s32.totalorder %s156, 0
    %s159 = sadd.s32 %s158, 1
    %s160 = scalar_select %p157, %s158, %s159
    %p163 = pneg %p157
    %p164 = scmp.eq.s32.totalorder %s11, 1
    %p165 = por %p163, %p164
    %p166 = scmp.ne.s32.totalorder %s158, %s161
    %p167 = scmp.eq.s32.totalorder %s11, 0
    %p168 = por %p166, %p167
    %p169 = scmp.ne.s32.totalorder %s158, %s161
    %p170 = scmp.eq.s32.totalorder %s16, 1
    %p171 = por %p169, %p170
    %p172 = scmp.ne.s32.totalorder %s161, %s162
    %p173 = scmp.eq.s32.totalorder %s16, 0
    %p174 = por %p172, %p173
    %p175 = scmp.ne.s32.totalorder %s161, %s162
    %p176 = scmp.eq.s32.totalorder %s17, 1
    %p177 = por %p175, %p176
    %p179 = scmp.ne.s32.totalorder %s162, %s178
    %p180 = scmp.eq.s32.totalorder %s17, 0
    %p181 = por %p179, %p180
    %p182 = scmp.le.s32.totalorder 1, %s11
    %p183 = scmp.lt.s32.totalorder %s11, 3
    %p184 = pnand %p182, %p183
    %p185 = pneg %p184
    // Predicated region
    $region9: #{transformer_forward.41} parent=5 // pred_check
      _
    $region10: #{transformer_forward.41} parent=5 // pred_check_branch
      %187 = sbr.rel (%p184) target = $region12
    $region11: #{transformer_forward.41} parent=5 // pred_region
      %s188 = ssub.s32 %s11, 1
      // Predicated region
      $region13: #{transformer_forward.41} parent=11 // pred_check
        %p189 = pneg %p75
      $region14: #{transformer_forward.41} parent=11 // pred_check_branch
        %191 = sbr.rel (%p189) target = $region16
      $region15: #{transformer_forward.41} parent=11 // pred_region
        %p192 = scmp.lt.s32.totalorder %s21, 0
        %s193 = scalar_select %p192, %s21, 0
        %s194 = smul.addr %s193, 4
        %s195 = scalar_lea.vmem %s1, %s194
      $region16: #{transformer_forward.41} parent=11 // pred_fallthru
        _
      // Predicated region
      $region17: #{transformer_forward.41} parent=11 // pred_check
        %p196 = pneg %p101
      $region18: #{transformer_forward.41} parent=11 // pred_check_branch
        %198 = sbr.rel (%p196) target = $region20
      $region19: #{transformer_forward.41} parent=11 // pred_region
        %p199 = scmp.lt.s32.totalorder %s21, 0
        %s200 = scalar_select %p199, %s21, 0
        %s201 = scalar_lea.vmem %s2, %s200
      $region20: #{transformer_forward.41} parent=11 // pred_fallthru
        _
      // Predicated region
      $region21: #{transformer_forward.41} parent=11 // pred_check
        %p202 = pneg %p127
      $region22: #{transformer_forward.41} parent=11 // pred_check_branch
        %204 = sbr.rel (%p202) target = $region24
      $region23: #{transformer_forward.41} parent=11 // pred_region
        %s205 = smul.u32 8, %s21
        %p206 = scmp.lt.s32.totalorder %s205, 7
        %s207 = scalar_select %p206, %s205, 7
        %s208 = smul.addr %s207, 4
        %s209 = scalar_lea.vmem %s3, %s208
        %s210 = smul.u32 8, %s21
      $region24: #{transformer_forward.41} parent=11 // pred_fallthru
        _
      // Predicated region
      $region25: #{transformer_forward.41} parent=11 // pred_check
        %p211 = pneg %p148
      $region26: #{transformer_forward.41} parent=11 // pred_check_branch
        %213 = sbr.rel (%p211) target = $region28
      $region27: #{transformer_forward.41} parent=11 // pred_region
        _
      $region28: #{transformer_forward.41} parent=11 // pred_fallthru
        _
    $region12: #{transformer_forward.41} parent=5 // pred_fallthru
      _
    %p214 = scmp.lt.s32.totalorder %s11, 2
    // Predicated region
    $region29: #{transformer_forward.41} parent=5 // pred_check
      %p215 = pneg %p214
    $region30: #{transformer_forward.41} parent=5 // pred_check_branch
      %217 = sbr.rel (%p215) target = $region32
    $region31: #{transformer_forward.41} parent=5 // pred_region
      // Predicated region
      $region33: #{transformer_forward.41} parent=31 // pred_check
        %p218 = pneg %p43
      $region34: #{transformer_forward.41} parent=31 // pred_check_branch
        %220 = sbr.rel (%p218) target = $region36
      $region35: #{transformer_forward.41} parent=31 // pred_region
        %p221 = scmp.lt.s32.totalorder %s18, 1
        %s222 = scalar_select %p221, %s18, 1
        %s223 = smul.addr %s222, 4
        %s224 = scalar_lea.vmem %s0, %s223
      $region36: #{transformer_forward.41} parent=31 // pred_fallthru
        _
    $region32: #{transformer_forward.41} parent=5 // pred_fallthru
      _
    %p225 = scmp.le.s32.totalorder 1, %s11
    %p226 = scmp.lt.s32.totalorder %s11, 3
    %p227 = pnand %p225, %p226
    %p228 = pneg %p227
    // Predicated region
    $region37: #{transformer_forward.41} parent=5 // pred_check
      _
    $region38: #{transformer_forward.41} parent=5 // pred_check_branch
      %230 = sbr.rel (%p227) target = $region40
    $region39: #{transformer_forward.41} parent=5 // pred_region
      %s231 = ssub.s32 %s11, 1
      %p232 = scmp.lt.s32.totalorder %s20, 1
      %s233 = scalar_select %p232, %s20, 1
      %s234 = smul.addr %s233, 4
      %s235 = scalar_lea.vmem %s0, %s234
      %p236 = pneg %p49
      %p237 = pneg %p46
      %p238 = scmp.lt.s32.totalorder %s21, 0
      %s239 = scalar_select %p238, %s21, 0
      %s240 = smul.addr %s239, 4
      %s241 = scalar_lea.vmem %s1, %s240
      %p242 = pneg %p75
      %p243 = pneg %p72
      %p244 = scmp.lt.s32.totalorder %s21, 0
      %s245 = scalar_select %p244, %s21, 0
      %s246 = scalar_lea.vmem %s2, %s245
      %p247 = pneg %p101
      %p248 = pneg %p98
      %s249 = smul.u32 8, %s21
      %p250 = scmp.lt.s32.totalorder %s249, 7
      %s251 = scalar_select %p250, %s249, 7
      %s252 = smul.addr %s251, 4
      %s253 = scalar_lea.vmem %s3, %s252
      %p254 = pneg %p127
      %p255 = pneg %p124
      %p256 = pneg %p148
      %p257 = pneg %p145
      %p258 = pneg %p174
      %p259 = pneg %p171
      %p260 = scmp.lt.s32.totalorder %s20, 1
      %s261 = scalar_select %p260, %s20, 1
      %s262 = smul.addr %s261, 4
      %s263 = scalar_lea.vmem %s5, %s262
      %p264 = scmp.lt.s32.totalorder %s20, 1
      %s265 = scalar_select %p264, %s20, 1
      %s266 = smul.addr %s265, 4
      %s267 = scalar_lea.vmem %s0, %s266
      %p268 = scmp.lt.s32.totalorder %s21, 0
      %s269 = scalar_select %p268, %s21, 0
      %s270 = smul.addr %s269, 4
      %s271 = scalar_lea.vmem %s1, %s270
      %p272 = scmp.lt.s32.totalorder %s21, 0
      %s273 = scalar_select %p272, %s21, 0
      %s274 = scalar_lea.vmem %s2, %s273
      %s275 = smul.u32 8, %s21
      %p276 = scmp.lt.s32.totalorder %s275, 7
      %s277 = scalar_select %p276, %s275, 7
      %s278 = smul.addr %s277, 4
      %s279 = scalar_lea.vmem %s3, %s278
      %s280 = smul.u32 8, %s21
      %p281 = scmp.lt.s32.totalorder %s20, 1
      %s282 = scalar_select %p281, %s20, 1
      %s283 = smul.addr %s282, 4
      %s284 = scalar_lea.vmem %s5, %s283
      %p286 = scmp.eq.s32.totalorder %s21, 0
      // Predicated region
      $region41: #{transformer_forward.41} parent=39 // pred_check
        %p287 = pneg %p286
      $region42: #{transformer_forward.41} parent=39 // pred_check_branch
        %289 = sbr.rel (%p287) target = $region44
      $region43: #{transformer_forward.41} parent=39 // pred_region
        %vm290 = vcmask 261120
        %291 = vst.msk [vmem:[#allocation2] sm:$0xff] %vm290, 0.0
      $region44: #{transformer_forward.41} parent=39 // pred_fallthru
        _
      %v292 = vld [vmem:[%s267] sm:$0xf]
      %v293 = vld [vmem:[%s271] sm:$0xf]
      %v294 = vld [vmem:[%s271 + $0x4] sm:$0xf]
      %v295 = vld [vmem:[%s271 + $0x8] sm:$0xf]
      %v296 = vld [vmem:[%s271 + $0xc] sm:$0xf]
      %v297 = vld [vmem:[%s274] sm:$0x1]
      %v299 = vperm.slane %v297, 0
      %v305 = vunpack.c.l.b16 %v293
      %v306 = vunpack.c.l.b16 %v294
      %v307 = vunpack.c.l.b16 %v295
      %v308 = vunpack.c.l.b16 %v296
      %v309 = vpack.c.b16 %v306, %v305
      %v310 = vpack.c.b16 %v308, %v307
      %vm313 = vcmask 261120
      %v315 = vsel %vm313, %v292, 0
      %317 = vmatpush.bf16.msra.mxu0 0
      %318 = vmatpush.bf16.msra.mxu0 0
      %319 = vmatpush.bf16.msra.mxu0 0
      %320 = vmatpush.bf16.msra.mxu0 0
      %321 = vmatpush.bf16.msra.mxu0 0
      %322 = vmatpush.bf16.msra.mxu0 0
      %323 = vmatpush.bf16.msra.mxu0 %v310
      %324 = vmatpush.bf16.msra.mxu0 %v309
      %325 = vmatmul.bf16.gmra.mxu0 %v315
      %v326 = vpop.f32.mrf.mxu0
      %v327 = vadd.f32 %v299, %v326
      %v328 = vpop.f32.mrf.mxu0
      %329 = vdwg.mxu0
      %v330 = vmax.f32 %v327, 0.0
      %v331 = vld [vmem:[#allocation2] sm:$0xff]
      %v332 = vpack.c.bf16 %v330, %v330
      %v333 = vld [vmem:[%s279] sm:$0xf]
      %v334 = vld [vmem:[%s279 + $0x4] sm:$0xf]
      %v335 = vld [vmem:[%s279 + $0x8] sm:$0xf]
      %v336 = vld [vmem:[%s279 + $0xc] sm:$0xf]
      %v337 = vld [vmem:[%s279 + $0x10] sm:$0xf]
      %v338 = vld [vmem:[%s279 + $0x14] sm:$0xf]
      %v339 = vld [vmem:[%s279 + $0x18] sm:$0xf]
      %v340 = vld [vmem:[%s279 + $0x1c] sm:$0xf]
      %v349 = vunpack.c.l.b16 %v333
      %v350 = vunpack.c.l.b16 %v334
      %v351 = vunpack.c.l.b16 %v335
      %v352 = vunpack.c.l.b16 %v336
      %v353 = vunpack.c.l.b16 %v337
      %v354 = vunpack.c.l.b16 %v338
      %v355 = vunpack.c.l.b16 %v339
      %v356 = vunpack.c.l.b16 %v340
      %v357 = vpack.c.b16 %v350, %v349
      %v358 = vpack.c.b16 %v352, %v351
      %v359 = vpack.c.b16 %v354, %v353
      %v360 = vpack.c.b16 %v356, %v355
      %vm365 = vcmask 523264
      %v367 = vsel %vm365, %v332, 0
      %369 = vmatpush.bf16.msra.mxu0 0
      %370 = vmatpush.bf16.msra.mxu0 0
      %371 = vmatpush.bf16.msra.mxu0 0
      %372 = vmatpush.bf16.msra.mxu0 0
      %373 = vmatpush.bf16.msra.mxu0 %v360
      %374 = vmatpush.bf16.msra.mxu0 %v359
      %375 = vmatpush.bf16.msra.mxu0 %v358
      %376 = vmatpush.bf16.msra.mxu0 %v357
      %377 = vmatmul.bf16.gmra.mxu0 %v367
      %v378 = vpop.f32.mrf.mxu0
      %v379 = vadd.f32 0.0, %v378
      %v380 = vpop.f32.mrf.mxu0
      %381 = vdwg.mxu0
      %v382 = vadd.f32 %v331, %v379
      %383 = vst.msk [vmem:[#allocation2] sm:$0xff] %vm313, %v382
      // Predicated region
      $region45: #{transformer_forward.41} parent=39 // pred_check
        %p384 = pneg %p286
      $region46: #{transformer_forward.41} parent=39 // pred_check_branch
        %386 = sbr.rel (%p384) target = $region48
      $region47: #{transformer_forward.41} parent=39 // pred_region
        %v387 = vld [vmem:[#allocation2] sm:$0xff]
        %v388 = vld [vmem:[%s4] sm:$0x1]
        %v390 = vperm.slane %v388, 0
        %v392 = vadd.f32 %v387, %v390
        %v393 = vpack.c.bf16 %v392, %v392
        %vm394 = vcmask 257024
        %395 = vst.msk [vmem:[%s284] sm:$0xf] %vm394, %v393
      $region48: #{transformer_forward.41} parent=39 // pred_fallthru
        _
      %p396 = scmp.lt.s32.totalorder %s20, 1
      %s397 = scalar_select %p396, %s20, 1
      %s398 = smul.addr %s397, 4
      %s399 = scalar_lea.vmem %s5, %s398
      // Predicated region
      $region49: #{transformer_forward.41} parent=39 // pred_check
        %p400 = pneg %p171
      $region50: #{transformer_forward.41} parent=39 // pred_check_branch
        %402 = sbr.rel (%p400) target = $region52
      $region51: #{transformer_forward.41} parent=39 // pred_region
        _
      $region52: #{transformer_forward.41} parent=39 // pred_fallthru
        _
    $region40: #{transformer_forward.41} parent=5 // pred_fallthru
      _
    %p403 = scmp.le.s32.totalorder 2, %s11
    // Predicated region
    $region53: #{transformer_forward.41} parent=5 // pred_check
      %p404 = pneg %p403
    $region54: #{transformer_forward.41} parent=5 // pred_check_branch
      %406 = sbr.rel (%p404) target = $region56
    $region55: #{transformer_forward.41} parent=5 // pred_region
      %s407 = ssub.s32 %s11, 2
      // Predicated region
      $region57: #{transformer_forward.41} parent=55 // pred_check
        %p408 = pneg %p177
      $region58: #{transformer_forward.41} parent=55 // pred_check_branch
        %410 = sbr.rel (%p408) target = $region60
      $region59: #{transformer_forward.41} parent=55 // pred_region
        %p411 = scmp.lt.s32.totalorder %s22, 1
        %s412 = scalar_select %p411, %s22, 1
        %s413 = smul.addr %s412, 4
        %s414 = scalar_lea.vmem %s5, %s413
      $region60: #{transformer_forward.41} parent=55 // pred_fallthru
        _
    $region56: #{transformer_forward.41} parent=5 // pred_fallthru
      _
  $region6: #{transformer_forward.41} parent=0 // loop_footer
    %s15 = sadd.s32 1, %s11
  $region7: #{transformer_forward.41} parent=0 // loop_footer_branch
    %10 = sbr.rel target = $region3
  $region8: #{transformer_forward.41} parent=0 // loop_exit
    _

// kernel: transformer_forward.55
$region0: #{transformer_forward.55}
  #allocation0 [shape = 'u32[]', space=smem, size = 0x4, offset = 0x4, fixed_abs, tag = 'smem constant byte address 0x4 - core index']
  #allocation1 [shape = 'u32[72,128]{1,0:T(1,128)}', space=vmem, size = 0x9000, scoped, tag = 'internal scratch']
  #allocation2 [shape = 'f32[8,64]{1,0:T(8,128)}', space=vmem, size = 0x1000, scoped, tag = 'scratch operand']
  %s0 = inlined_call_operand.vmem [shape: bf16[16,32], index: 0, kind: input, shape index: {}]
  %s1 = inlined_call_operand.vmem [shape: bf16[32,64], index: 1, kind: input, shape index: {}]
  %s2 = inlined_call_operand.vmem [shape: f32[1,64], index: 2, kind: input, shape index: {}]
  %s3 = inlined_call_operand.vmem [shape: bf16[16,32], index: 3, kind: output, shape index: {0}]
  %s4 = inlined_call_operand.vmem [shape: bf16[16,32], index: 4, kind: output, shape index: {1}]
  %5 = xla_tuple %s3, %s4
  %s6 = sld [smem:[#allocation0]]
  $region61: #{transformer_forward.55} parent=0
    _
  %s8 = ssub.s32 1, %s6
  %s9 = scalar_select 0, %s8, %s6
  loop: start=0, step=1, limit=4
  $region2: #{transformer_forward.55} parent=0 // loop_pre_header
    _
  $region3: #{transformer_forward.55} parent=0 // loop_header
    %s11 = sphi 0, %s15
    %p12 = scmp.ge.s32.totalorder %s11, 4
    %s18 = sphi 0, %s30
    %s19 = sphi 0, %s26
    %s20 = sphi 0, %s18
    %s21 = sphi 0, %s19
    %s22 = sphi 0, %s20
    %s23 = sphi 0, %s21
    %s35 = sphi 0, %s37
    %s38 = sphi 0, %s35
    %s39 = sphi 0, %s38
    %s55 = sphi 0, %s39
    %s61 = sphi 0, %s63
    %s64 = sphi 0, %s61
    %s65 = sphi 0, %s64
    %s81 = sphi 0, %s65
    %s85 = sphi 0, %s85
    %s87 = sphi 0, %s85
    %s88 = sphi 0, %s87
    %s102 = sphi 0, %s88
    %s108 = sphi 0, %s110
    %s111 = sphi 0, %s108
    %s112 = sphi 0, %s111
    %s128 = sphi 0, %s112
    %s134 = sphi 0, %s136
    %s137 = sphi 0, %s134
    %s138 = sphi 0, %s137
    %s154 = sphi 0, %s138
  $region4: #{transformer_forward.55} parent=0 // loop_header_branch
    %14 = sbr.rel (%p12) target = $region8
  $region5: #{transformer_forward.55} parent=0 // loop_body
    %s16 = ssub.s32 %s11, 1
    %s17 = ssub.s32 %s11, 2
    %s24 = sadd.s32 1, %s19
    %p25 = scmp.ge.s32.totalorder %s24, 1
    %s26 = scalar_select %p25, 0, %s24
    %s27 = sadd.s32 1, %s18
    %s28 = scalar_select %p25, %s27, %s18
    %p29 = scmp.ge.s32.totalorder %s28, 2
    %s30 = scalar_select %p29, 0, %s28
    %s31 = ssub.s32 %s18, %s30
    %s32 = ssub.s32 %s19, %s26
    %s33 = sor.u32 %s31, %s32
    %p34 = scmp.eq.s32.totalorder %s33, 0
    %s36 = sadd.s32 %s35, 1
    %s37 = scalar_select %p34, %s35, %s36
    %p40 = pneg %p34
    %p41 = scmp.eq.s32.totalorder %s11, 1
    %p42 = por %p40, %p41
    %p43 = scmp.ne.s32.totalorder %s35, %s38
    %p44 = scmp.eq.s32.totalorder %s11, 0
    %p45 = por %p43, %p44
    %p46 = scmp.ne.s32.totalorder %s35, %s38
    %p47 = scmp.eq.s32.totalorder %s16, 1
    %p48 = por %p46, %p47
    %p49 = scmp.ne.s32.totalorder %s38, %s39
    %p50 = scmp.eq.s32.totalorder %s16, 0
    %p51 = por %p49, %p50
    %p52 = scmp.ne.s32.totalorder %s38, %s39
    %p53 = scmp.eq.s32.totalorder %s17, 1
    %p54 = por %p52, %p53
    %p56 = scmp.ne.s32.totalorder %s39, %s55
    %p57 = scmp.eq.s32.totalorder %s17, 0
    %p58 = por %p56, %p57
    %s59 = ssub.s32 %s19, %s26
    %p60 = scmp.eq.s32.totalorder %s59, 0
    %s62 = sadd.s32 %s61, 1
    %s63 = scalar_select %p60, %s61, %s62
    %p66 = pneg %p60
    %p67 = scmp.eq.s32.totalorder %s11, 1
    %p68 = por %p66, %p67
    %p69 = scmp.ne.s32.totalorder %s61, %s64
    %p70 = scmp.eq.s32.totalorder %s11, 0
    %p71 = por %p69, %p70
    %p72 = scmp.ne.s32.totalorder %s61, %s64
    %p73 = scmp.eq.s32.totalorder %s16, 1
    %p74 = por %p72, %p73
    %p75 = scmp.ne.s32.totalorder %s64, %s65
    %p76 = scmp.eq.s32.totalorder %s16, 0
    %p77 = por %p75, %p76
    %p78 = scmp.ne.s32.totalorder %s64, %s65
    %p79 = scmp.eq.s32.totalorder %s17, 1
    %p80 = por %p78, %p79
    %p82 = scmp.ne.s32.totalorder %s65, %s81
    %p83 = scmp.eq.s32.totalorder %s17, 0
    %p84 = por %p82, %p83
    %s86 = sadd.s32 %s85, 1
    %p89 = scmp.eq.s32.totalorder %s11, 1
    %p90 = scmp.ne.s32.totalorder %s85, %s87
    %p91 = scmp.eq.s32.totalorder %s11, 0
    %p92 = por %p90, %p91
    %p93 = scmp.ne.s32.totalorder %s85, %s87
    %p94 = scmp.eq.s32.totalorder %s16, 1
    %p95 = por %p93, %p94
    %p96 = scmp.ne.s32.totalorder %s87, %s88
    %p97 = scmp.eq.s32.totalorder %s16, 0
    %p98 = por %p96, %p97
    %p99 = scmp.ne.s32.totalorder %s87, %s88
    %p100 = scmp.eq.s32.totalorder %s17, 1
    %p101 = por %p99, %p100
    %p103 = scmp.ne.s32.totalorder %s88, %s102
    %p104 = scmp.eq.s32.totalorder %s17, 0
    %p105 = por %p103, %p104
    %s106 = ssub.s32 %s18, %s30
    %p107 = scmp.eq.s32.totalorder %s106, 0
    %s109 = sadd.s32 %s108, 1
    %s110 = scalar_select %p107, %s108, %s109
    %p113 = pneg %p107
    %p114 = scmp.eq.s32.totalorder %s11, 1
    %p115 = por %p113, %p114
    %p116 = scmp.ne.s32.totalorder %s108, %s111
    %p117 = scmp.eq.s32.totalorder %s11, 0
    %p118 = por %p116, %p117
    %p119 = scmp.ne.s32.totalorder %s108, %s111
    %p120 = scmp.eq.s32.totalorder %s16, 1
    %p121 = por %p119, %p120
    %p122 = scmp.ne.s32.totalorder %s111, %s112
    %p123 = scmp.eq.s32.totalorder %s16, 0
    %p124 = por %p122, %p123
    %p125 = scmp.ne.s32.totalorder %s111, %s112
    %p126 = scmp.eq.s32.totalorder %s17, 1
    %p127 = por %p125, %p126
    %p129 = scmp.ne.s32.totalorder %s112, %s128
    %p130 = scmp.eq.s32.totalorder %s17, 0
    %p131 = por %p129, %p130
    %s132 = ssub.s32 %s18, %s30
    %p133 = scmp.eq.s32.totalorder %s132, 0
    %s135 = sadd.s32 %s134, 1
    %s136 = scalar_select %p133, %s134, %s135
    %p139 = pneg %p133
    %p140 = scmp.eq.s32.totalorder %s11, 1
    %p141 = por %p139, %p140
    %p142 = scmp.ne.s32.totalorder %s134, %s137
    %p143 = scmp.eq.s32.totalorder %s11, 0
    %p144 = por %p142, %p143
    %p145 = scmp.ne.s32.totalorder %s134, %s137
    %p146 = scmp.eq.s32.totalorder %s16, 1
    %p147 = por %p145, %p146
    %p148 = scmp.ne.s32.totalorder %s137, %s138
    %p149 = scmp.eq.s32.totalorder %s16, 0
    %p150 = por %p148, %p149
    %p151 = scmp.ne.s32.totalorder %s137, %s138
    %p152 = scmp.eq.s32.totalorder %s17, 1
    %p153 = por %p151, %p152
    %p155 = scmp.ne.s32.totalorder %s138, %s154
    %p156 = scmp.eq.s32.totalorder %s17, 0
    %p157 = por %p155, %p156
    %p158 = scmp.le.s32.totalorder 1, %s11
    %p159 = scmp.lt.s32.totalorder %s11, 3
    %p160 = pnand %p158, %p159
    %p161 = pneg %p160
    // Predicated region
    $region9: #{transformer_forward.55} parent=5 // pred_check
      _
    $region10: #{transformer_forward.55} parent=5 // pred_check_branch
      %163 = sbr.rel (%p160) target = $region12
    $region11: #{transformer_forward.55} parent=5 // pred_region
      %s164 = ssub.s32 %s11, 1
      // Predicated region
      $region13: #{transformer_forward.55} parent=11 // pred_check
        %p165 = pneg %p77
      $region14: #{transformer_forward.55} parent=11 // pred_check_branch
        %167 = sbr.rel (%p165) target = $region16
      $region15: #{transformer_forward.55} parent=11 // pred_region
        %s168 = smul.u32 4, %s21
        %p169 = scmp.lt.s32.totalorder %s168, 3
        %s170 = scalar_select %p169, %s168, 3
        %s171 = smul.addr %s170, 4
        %s172 = scalar_lea.vmem %s1, %s171
        %s173 = smul.u32 4, %s21
      $region16: #{transformer_forward.55} parent=11 // pred_fallthru
        _
      // Predicated region
      $region17: #{transformer_forward.55} parent=11 // pred_check
        %p174 = pneg %p98
      $region18: #{transformer_forward.55} parent=11 // pred_check_branch
        %176 = sbr.rel (%p174) target = $region20
      $region19: #{transformer_forward.55} parent=11 // pred_region
        _
      $region20: #{transformer_forward.55} parent=11 // pred_fallthru
        _
    $region12: #{transformer_forward.55} parent=5 // pred_fallthru
      _
    %p177 = scmp.lt.s32.totalorder %s11, 2
    // Predicated region
    $region21: #{transformer_forward.55} parent=5 // pred_check
      %p178 = pneg %p177
    $region22: #{transformer_forward.55} parent=5 // pred_check_branch
      %180 = sbr.rel (%p178) target = $region24
    $region23: #{transformer_forward.55} parent=5 // pred_region
      // Predicated region
      $region25: #{transformer_forward.55} parent=23 // pred_check
        %p181 = pneg %p45
      $region26: #{transformer_forward.55} parent=23 // pred_check_branch
        %183 = sbr.rel (%p181) target = $region28
      $region27: #{transformer_forward.55} parent=23 // pred_region
        %p184 = scmp.lt.s32.totalorder %s18, 1
        %s185 = scalar_select %p184, %s18, 1
        %p186 = scmp.lt.s32.totalorder %s19, 0
        %s187 = scalar_select %p186, %s19, 0
        %s188 = sadd.s32 %s187, %s185
        %s189 = smul.addr %s188, 4
        %s190 = scalar_lea.vmem %s0, %s189
      $region28: #{transformer_forward.55} parent=23 // pred_fallthru
        _
    $region24: #{transformer_forward.55} parent=5 // pred_fallthru
      _
    %p191 = scmp.le.s32.totalorder 1, %s11
    %p192 = scmp.lt.s32.totalorder %s11, 3
    %p193 = pnand %p191, %p192
    %p194 = pneg %p193
    // Predicated region
    $region29: #{transformer_forward.55} parent=5 // pred_check
      _
    $region30: #{transformer_forward.55} parent=5 // pred_check_branch
      %196 = sbr.rel (%p193) target = $region32
    $region31: #{transformer_forward.55} parent=5 // pred_region
      %s197 = ssub.s32 %s11, 1
      %p198 = scmp.lt.s32.totalorder %s20, 1
      %s199 = scalar_select %p198, %s20, 1
      %p200 = scmp.lt.s32.totalorder %s21, 0
      %s201 = scalar_select %p200, %s21, 0
      %s202 = sadd.s32 %s201, %s199
      %s203 = smul.addr %s202, 4
      %s204 = scalar_lea.vmem %s0, %s203
      %p205 = pneg %p51
      %p206 = pneg %p48
      %s207 = smul.u32 4, %s21
      %p208 = scmp.lt.s32.totalorder %s207, 3
      %s209 = scalar_select %p208, %s207, 3
      %s210 = smul.addr %s209, 4
      %s211 = scalar_lea.vmem %s1, %s210
      %p212 = pneg %p77
      %p213 = pneg %p74
      %p214 = pneg %p98
      %p215 = pneg %p95
      %p216 = pneg %p124
      %p217 = pneg %p121
      %p218 = scmp.lt.s32.totalorder %s20, 1
      %s219 = scalar_select %p218, %s20, 1
      %s220 = smul.addr %s219, 4
      %s221 = scalar_lea.vmem %s3, %s220
      %p222 = pneg %p150
      %p223 = pneg %p147
      %p224 = scmp.lt.s32.totalorder %s20, 1
      %s225 = scalar_select %p224, %s20, 1
      %s226 = smul.addr %s225, 4
      %s227 = scalar_lea.vmem %s4, %s226
      %p228 = scmp.lt.s32.totalorder %s20, 1
      %s229 = scalar_select %p228, %s20, 1
      %p230 = scmp.lt.s32.totalorder %s21, 0
      %s231 = scalar_select %p230, %s21, 0
      %s232 = sadd.s32 %s231, %s229
      %s233 = smul.addr %s232, 4
      %s234 = scalar_lea.vmem %s0, %s233
      %s235 = smul.u32 4, %s21
      %p236 = scmp.lt.s32.totalorder %s235, 3
      %s237 = scalar_select %p236, %s235, 3
      %s238 = smul.addr %s237, 4
      %s239 = scalar_lea.vmem %s1, %s238
      %s240 = smul.u32 4, %s21
      %p241 = scmp.lt.s32.totalorder %s20, 1
      %s242 = scalar_select %p241, %s20, 1
      %s243 = smul.addr %s242, 4
      %s244 = scalar_lea.vmem %s3, %s243
      %p245 = scmp.lt.s32.totalorder %s20, 1
      %s246 = scalar_select %p245, %s20, 1
      %s247 = smul.addr %s246, 4
      %s248 = scalar_lea.vmem %s4, %s247
      %p250 = scmp.eq.s32.totalorder %s21, 0
      // Predicated region
      $region33: #{transformer_forward.55} parent=31 // pred_check
        %p251 = pneg %p250
      $region34: #{transformer_forward.55} parent=31 // pred_check_branch
        %253 = sbr.rel (%p251) target = $region36
      $region35: #{transformer_forward.55} parent=31 // pred_region
        %vm254 = vcmask 523264
        %255 = vst.msk [vmem:[#allocation2] sm:$0xff] %vm254, 0.0
      $region36: #{transformer_forward.55} parent=31 // pred_fallthru
        _
      %v256 = vld [vmem:[#allocation2] sm:$0xff]
      %v257 = vld [vmem:[%s234] sm:$0xf]
      %v258 = vld [vmem:[%s239] sm:$0xf]
      %v259 = vld [vmem:[%s239 + $0x4] sm:$0xf]
      %v260 = vld [vmem:[%s239 + $0x8] sm:$0xf]
      %v261 = vld [vmem:[%s239 + $0xc] sm:$0xf]
      %v266 = vunpack.c.l.b16 %v258
      %v267 = vunpack.c.l.b16 %v259
      %v268 = vunpack.c.l.b16 %v260
      %v269 = vunpack.c.l.b16 %v261
      %v270 = vpack.c.b16 %v267, %v266
      %v271 = vpack.c.b16 %v269, %v268
      %vm274 = vcmask 261120
      %v276 = vsel %vm274, %v257, 0
      %278 = vmatpush.bf16.msra.mxu0 0
      %279 = vmatpush.bf16.msra.mxu0 0
      %280 = vmatpush.bf16.msra.mxu0 0
      %281 = vmatpush.bf16.msra.mxu0 0
      %282 = vmatpush.bf16.msra.mxu0 0
      %283 = vmatpush.bf16.msra.mxu0 0
      %284 = vmatpush.bf16.msra.mxu0 %v271
      %285 = vmatpush.bf16.msra.mxu0 %v270
      %286 = vmatmul.bf16.gmra.mxu0 %v276
      %v287 = vpop.f32.mrf.mxu0
      %v288 = vadd.f32 0.0, %v287
      %v289 = vpop.f32.mrf.mxu0
      %290 = vdwg.mxu0
      %v291 = vadd.f32 %v256, %v288
      %vm292 = vcmask 523264
      %293 = vst.msk [vmem:[#allocation2] sm:$0xff] %vm292, %v291
      // Predicated region
      $region37: #{transformer_forward.55} parent=31 // pred_check
        %p294 = pneg %p250
      $region38: #{transformer_forward.55} parent=31 // pred_check_branch
        %296 = sbr.rel (%p294) target = $region40
      $region39: #{transformer_forward.55} parent=31 // pred_region
        %v297 = vld [vmem:[#allocation2] sm:$0xff]
        %v298 = vld [vmem:[%s2] sm:$0x1]
        %v300 = vperm.slane %v298, 0
        %v302 = vadd.f32 %v297, %v300
        %v303 = vpack.c.bf16 %v302, %v302
        %vm304 = vcmask 257024
        %305 = vst.msk [vmem:[%s244] sm:$0xf] %vm304, %v303
        %307 = vrot.lane.b32.xlu0 %v303, 96
        %v308 = vpop.permute.xlu0 %307
        %310 = vst.msk [vmem:[%s248] sm:$0xf] %vm304, %v308
      $region40: #{transformer_forward.55} parent=31 // pred_fallthru
        _
      %p311 = scmp.lt.s32.totalorder %s20, 1
      %s312 = scalar_select %p311, %s20, 1
      %s313 = smul.addr %s312, 4
      %s314 = scalar_lea.vmem %s3, %s313
      %p315 = scmp.lt.s32.totalorder %s20, 1
      %s316 = scalar_select %p315, %s20, 1
      %s317 = smul.addr %s316, 4
      %s318 = scalar_lea.vmem %s4, %s317
      // Predicated region
      $region41: #{transformer_forward.55} parent=31 // pred_check
        %p319 = pneg %p121
      $region42: #{transformer_forward.55} parent=31 // pred_check_branch
        %321 = sbr.rel (%p319) target = $region44
      $region43: #{transformer_forward.55} parent=31 // pred_region
        _
      $region44: #{transformer_forward.55} parent=31 // pred_fallthru
        _
      // Predicated region
      $region45: #{transformer_forward.55} parent=31 // pred_check
        %p322 = pneg %p147
      $region46: #{transformer_forward.55} parent=31 // pred_check_branch
        %324 = sbr.rel (%p322) target = $region48
      $region47: #{transformer_forward.55} parent=31 // pred_region
        _
      $region48: #{transformer_forward.55} parent=31 // pred_fallthru
        _
    $region32: #{transformer_forward.55} parent=5 // pred_fallthru
      _
    %p325 = scmp.le.s32.totalorder 2, %s11
    // Predicated region
    $region49: #{transformer_forward.55} parent=5 // pred_check
      %p326 = pneg %p325
    $region50: #{transformer_forward.55} parent=5 // pred_check_branch
      %328 = sbr.rel (%p326) target = $region52
    $region51: #{transformer_forward.55} parent=5 // pred_region
      %s329 = ssub.s32 %s11, 2
      // Predicated region
      $region53: #{transformer_forward.55} parent=51 // pred_check
        %p330 = pneg %p127
      $region54: #{transformer_forward.55} parent=51 // pred_check_branch
        %332 = sbr.rel (%p330) target = $region56
      $region55: #{transformer_forward.55} parent=51 // pred_region
        %p333 = scmp.lt.s32.totalorder %s22, 1
        %s334 = scalar_select %p333, %s22, 1
        %s335 = smul.addr %s334, 4
        %s336 = scalar_lea.vmem %s3, %s335
      $region56: #{transformer_forward.55} parent=51 // pred_fallthru
        _
      // Predicated region
      $region57: #{transformer_forward.55} parent=51 // pred_check
        %p337 = pneg %p153
      $region58: #{transformer_forward.55} parent=51 // pred_check_branch
        %339 = sbr.rel (%p337) target = $region60
      $region59: #{transformer_forward.55} parent=51 // pred_region
        %p340 = scmp.lt.s32.totalorder %s22, 1
        %s341 = scalar_select %p340, %s22, 1
        %s342 = smul.addr %s341, 4
        %s343 = scalar_lea.vmem %s4, %s342
      $region60: #{transformer_forward.55} parent=51 // pred_fallthru
        _
    $region52: #{transformer_forward.55} parent=5 // pred_fallthru
      _
  $region6: #{transformer_forward.55} parent=0 // loop_footer
    %s15 = sadd.s32 1, %s11
  $region7: #{transformer_forward.55} parent=0 // loop_footer_branch
    %10 = sbr.rel target = $region3
  $region8: #{transformer_forward.55} parent=0 // loop_exit
    _

// kernel: transformer_forward.49
$region0: #{transformer_forward.49}
  #allocation0 [shape = 'u32[]', space=smem, size = 0x4, offset = 0x4, fixed_abs, tag = 'smem constant byte address 0x4 - core index']
  #allocation1 [shape = 'u32[72,128]{1,0:T(1,128)}', space=vmem, size = 0x9000, scoped, tag = 'internal scratch']
  %s0 = inlined_call_operand.vmem [shape: bf16[16,32], index: 0, kind: input, shape index: {}]
  %s1 = inlined_call_operand.vmem [shape: f32[1,32], index: 1, kind: input, shape index: {}]
  %s2 = inlined_call_operand.vmem [shape: f32[1,32], index: 2, kind: input, shape index: {}]
  %s3 = inlined_call_operand.vmem [shape: bf16[16,32], index: 3, kind: output, shape index: {}]
  %s4 = sld [smem:[#allocation0]]
  $region45: #{transformer_forward.49} parent=0
    _
  %s6 = ssub.s32 1, %s4
  %s7 = scalar_select 0, %s6, %s4
  loop: start=0, step=1, limit=4
  $region2: #{transformer_forward.49} parent=0 // loop_pre_header
    _
  $region3: #{transformer_forward.49} parent=0 // loop_header
    %s9 = sphi 0, %s13
    %p10 = scmp.ge.s32.totalorder %s9, 4
    %s19 = sphi 0, %s21
    %s22 = sphi 0, %s19
    %s23 = sphi 0, %s22
    %s39 = sphi 0, %s23
    %s43 = sphi 0, %s43
    %s45 = sphi 0, %s43
    %s46 = sphi 0, %s45
    %s60 = sphi 0, %s46
    %s64 = sphi 0, %s64
    %s66 = sphi 0, %s64
    %s67 = sphi 0, %s66
    %s81 = sphi 0, %s67
    %s87 = sphi 0, %s89
    %s90 = sphi 0, %s87
    %s91 = sphi 0, %s90
    %s107 = sphi 0, %s91
  $region4: #{transformer_forward.49} parent=0 // loop_header_branch
    %12 = sbr.rel (%p10) target = $region8
  $region5: #{transformer_forward.49} parent=0 // loop_body
    %s14 = ssub.s32 %s9, 1
    %s15 = ssub.s32 %s9, 2
    %s16 = sadd.s32 %s9, 1
    %s17 = ssub.s32 %s9, %s16
    %p18 = scmp.eq.s32.totalorder %s17, 0
    %s20 = sadd.s32 %s19, 1
    %s21 = scalar_select %p18, %s19, %s20
    %p24 = pneg %p18
    %p25 = scmp.eq.s32.totalorder %s9, 1
    %p26 = por %p24, %p25
    %p27 = scmp.ne.s32.totalorder %s19, %s22
    %p28 = scmp.eq.s32.totalorder %s9, 0
    %p29 = por %p27, %p28
    %p30 = scmp.ne.s32.totalorder %s19, %s22
    %p31 = scmp.eq.s32.totalorder %s14, 1
    %p32 = por %p30, %p31
    %p33 = scmp.ne.s32.totalorder %s22, %s23
    %p34 = scmp.eq.s32.totalorder %s14, 0
    %p35 = por %p33, %p34
    %p36 = scmp.ne.s32.totalorder %s22, %s23
    %p37 = scmp.eq.s32.totalorder %s15, 1
    %p38 = por %p36, %p37
    %p40 = scmp.ne.s32.totalorder %s23, %s39
    %p41 = scmp.eq.s32.totalorder %s15, 0
    %p42 = por %p40, %p41
    %s44 = sadd.s32 %s43, 1
    %p47 = scmp.eq.s32.totalorder %s9, 1
    %p48 = scmp.ne.s32.totalorder %s43, %s45
    %p49 = scmp.eq.s32.totalorder %s9, 0
    %p50 = por %p48, %p49
    %p51 = scmp.ne.s32.totalorder %s43, %s45
    %p52 = scmp.eq.s32.totalorder %s14, 1
    %p53 = por %p51, %p52
    %p54 = scmp.ne.s32.totalorder %s45, %s46
    %p55 = scmp.eq.s32.totalorder %s14, 0
    %p56 = por %p54, %p55
    %p57 = scmp.ne.s32.totalorder %s45, %s46
    %p58 = scmp.eq.s32.totalorder %s15, 1
    %p59 = por %p57, %p58
    %p61 = scmp.ne.s32.totalorder %s46, %s60
    %p62 = scmp.eq.s32.totalorder %s15, 0
    %p63 = por %p61, %p62
    %s65 = sadd.s32 %s64, 1
    %p68 = scmp.eq.s32.totalorder %s9, 1
    %p69 = scmp.ne.s32.totalorder %s64, %s66
    %p70 = scmp.eq.s32.totalorder %s9, 0
    %p71 = por %p69, %p70
    %p72 = scmp.ne.s32.totalorder %s64, %s66
    %p73 = scmp.eq.s32.totalorder %s14, 1
    %p74 = por %p72, %p73
    %p75 = scmp.ne.s32.totalorder %s66, %s67
    %p76 = scmp.eq.s32.totalorder %s14, 0
    %p77 = por %p75, %p76
    %p78 = scmp.ne.s32.totalorder %s66, %s67
    %p79 = scmp.eq.s32.totalorder %s15, 1
    %p80 = por %p78, %p79
    %p82 = scmp.ne.s32.totalorder %s67, %s81
    %p83 = scmp.eq.s32.totalorder %s15, 0
    %p84 = por %p82, %p83
    %s85 = ssub.s32 %s9, %s16
    %p86 = scmp.eq.s32.totalorder %s85, 0
    %s88 = sadd.s32 %s87, 1
    %s89 = scalar_select %p86, %s87, %s88
    %p92 = pneg %p86
    %p93 = scmp.eq.s32.totalorder %s9, 1
    %p94 = por %p92, %p93
    %p95 = scmp.ne.s32.totalorder %s87, %s90
    %p96 = scmp.eq.s32.totalorder %s9, 0
    %p97 = por %p95, %p96
    %p98 = scmp.ne.s32.totalorder %s87, %s90
    %p99 = scmp.eq.s32.totalorder %s14, 1
    %p100 = por %p98, %p99
    %p101 = scmp.ne.s32.totalorder %s90, %s91
    %p102 = scmp.eq.s32.totalorder %s14, 0
    %p103 = por %p101, %p102
    %p104 = scmp.ne.s32.totalorder %s90, %s91
    %p105 = scmp.eq.s32.totalorder %s15, 1
    %p106 = por %p104, %p105
    %p108 = scmp.ne.s32.totalorder %s91, %s107
    %p109 = scmp.eq.s32.totalorder %s15, 0
    %p110 = por %p108, %p109
    %p111 = scmp.le.s32.totalorder 1, %s9
    %p112 = scmp.lt.s32.totalorder %s9, 3
    %p113 = pnand %p111, %p112
    %p114 = pneg %p113
    // Predicated region
    $region9: #{transformer_forward.49} parent=5 // pred_check
      _
    $region10: #{transformer_forward.49} parent=5 // pred_check_branch
      %116 = sbr.rel (%p113) target = $region12
    $region11: #{transformer_forward.49} parent=5 // pred_region
      %s117 = ssub.s32 %s9, 1
      // Predicated region
      $region13: #{transformer_forward.49} parent=11 // pred_check
        %p118 = pneg %p56
      $region14: #{transformer_forward.49} parent=11 // pred_check_branch
        %120 = sbr.rel (%p118) target = $region16
      $region15: #{transformer_forward.49} parent=11 // pred_region
        _
      $region16: #{transformer_forward.49} parent=11 // pred_fallthru
        _
      // Predicated region
      $region17: #{transformer_forward.49} parent=11 // pred_check
        %p121 = pneg %p77
      $region18: #{transformer_forward.49} parent=11 // pred_check_branch
        %123 = sbr.rel (%p121) target = $region20
      $region19: #{transformer_forward.49} parent=11 // pred_region
        _
      $region20: #{transformer_forward.49} parent=11 // pred_fallthru
        _
    $region12: #{transformer_forward.49} parent=5 // pred_fallthru
      _
    %p124 = scmp.lt.s32.totalorder %s9, 2
    // Predicated region
    $region21: #{transformer_forward.49} parent=5 // pred_check
      %p125 = pneg %p124
    $region22: #{transformer_forward.49} parent=5 // pred_check_branch
      %127 = sbr.rel (%p125) target = $region24
    $region23: #{transformer_forward.49} parent=5 // pred_region
      // Predicated region
      $region25: #{transformer_forward.49} parent=23 // pred_check
        %p128 = pneg %p29
      $region26: #{transformer_forward.49} parent=23 // pred_check_branch
        %130 = sbr.rel (%p128) target = $region28
      $region27: #{transformer_forward.49} parent=23 // pred_region
        %p131 = scmp.lt.s32.totalorder %s9, 1
        %s132 = scalar_select %p131, %s9, 1
        %s133 = smul.addr %s132, 4
        %s134 = scalar_lea.vmem %s0, %s133
      $region28: #{transformer_forward.49} parent=23 // pred_fallthru
        _
    $region24: #{transformer_forward.49} parent=5 // pred_fallthru
      _
    %p135 = scmp.le.s32.totalorder 1, %s9
    %p136 = scmp.lt.s32.totalorder %s9, 3
    %p137 = pnand %p135, %p136
    %p138 = pneg %p137
    // Predicated region
    $region29: #{transformer_forward.49} parent=5 // pred_check
      _
    $region30: #{transformer_forward.49} parent=5 // pred_check_branch
      %140 = sbr.rel (%p137) target = $region32
    $region31: #{transformer_forward.49} parent=5 // pred_region
      %s141 = ssub.s32 %s9, 1
      %p142 = scmp.lt.s32.totalorder %s14, 1
      %s143 = scalar_select %p142, %s14, 1
      %s144 = smul.addr %s143, 4
      %s145 = scalar_lea.vmem %s0, %s144
      %p146 = pneg %p35
      %p147 = pneg %p32
      %p148 = pneg %p56
      %p149 = pneg %p53
      %p150 = pneg %p77
      %p151 = pneg %p74
      %p152 = pneg %p103
      %p153 = pneg %p100
      %p154 = scmp.lt.s32.totalorder %s14, 1
      %s155 = scalar_select %p154, %s14, 1
      %s156 = smul.addr %s155, 4
      %s157 = scalar_lea.vmem %s3, %s156
      %p158 = scmp.lt.s32.totalorder %s14, 1
      %s159 = scalar_select %p158, %s14, 1
      %s160 = smul.addr %s159, 4
      %s161 = scalar_lea.vmem %s0, %s160
      %p162 = scmp.lt.s32.totalorder %s14, 1
      %s163 = scalar_select %p162, %s14, 1
      %s164 = smul.addr %s163, 4
      %s165 = scalar_lea.vmem %s3, %s164
      %v166 = vld [vmem:[%s161] sm:$0xf]
      %v167 = vunpack.c.l.bf16 %v166
      %vm168 = vcmask 261120
      %v169 = vsel %vm168, %v167, 0.0
      %170 = vadd.xlane.f32.xlu0 %v169
      %v171 = vpop.xlane.xlu0 %170
      %v172 = vrcp.pop 32.0
      %v173 = vmul.f32 32.0, %v172
      %v174 = vsub.f32 1.0, %v173
      %v175 = vmul.f32 %v172, %v174
      %v176 = vadd.f32 %v172, %v175
      %vm177 = vweird.f32 %v172
      %v178 = vsel %vm177, %v172, %v176
      %v179 = vmul.f32 %v171, %v178
      %v180 = vmul.f32 %v167, %v167
      %v181 = vsel %vm168, %v180, 0.0
      %182 = vadd.xlane.f32.xlu0 %v181
      %v183 = vpop.xlane.xlu0 %182
      %v184 = vmul.f32 %v183, %v178
      %v185 = vsub.f32 %v167, %v179
      %v186 = vmul.f32 %v179, %v179
      %v187 = vsub.f32 %v184, %v186
      %v188 = vadd.f32 %v187, 1e-05
      %v189 = vrsqrt.pop %v188
      %v190 = vmul.f32 %v189, %v188
      %v191 = vmul.f32 %v190, %v189
      %v192 = vmul.f32 0.5, %v191
      %v193 = vsub.f32 1.5, %v192
      %v194 = vmul.f32 %v189, %v193
      %vm195 = vweird.f32 %v188
      %vm196 = vweird.f32 %v189
      %vm197 = vmor %vm195, %vm196
      %v198 = vsel %vm197, %v189, %v194
      %v199 = vmul.f32 %v185, %v198
      %v200 = vld [vmem:[%s1] sm:$0x1]
      %v202 = vperm.slane %v200, 0
      %v204 = vmul.f32 %v199, %v202
      %v205 = vld [vmem:[%s2] sm:$0x1]
      %v207 = vperm.slane %v205, 0
      %v209 = vadd.f32 %v204, %v207
      %v210 = vpack.c.bf16 %v209, %v209
      %vm211 = vcmask 257024
      %212 = vst.msk [vmem:[%s165] sm:$0xf] %vm211, %v210
      %p213 = scmp.lt.s32.totalorder %s14, 1
      %s214 = scalar_select %p213, %s14, 1
      %s215 = smul.addr %s214, 4
      %s216 = scalar_lea.vmem %s3, %s215
      // Predicated region
      $region33: #{transformer_forward.49} parent=31 // pred_check
        %p217 = pneg %p100
      $region34: #{transformer_forward.49} parent=31 // pred_check_branch
        %219 = sbr.rel (%p217) target = $region36
      $region35: #{transformer_forward.49} parent=31 // pred_region
        _
      $region36: #{transformer_forward.49} parent=31 // pred_fallthru
        _
    $region32: #{transformer_forward.49} parent=5 // pred_fallthru
      _
    %p220 = scmp.le.s32.totalorder 2, %s9
    // Predicated region
    $region37: #{transformer_forward.49} parent=5 // pred_check
      %p221 = pneg %p220
    $region38: #{transformer_forward.49} parent=5 // pred_check_branch
      %223 = sbr.rel (%p221) target = $region40
    $region39: #{transformer_forward.49} parent=5 // pred_region
      %s224 = ssub.s32 %s9, 2
      // Predicated region
      $region41: #{transformer_forward.49} parent=39 // pred_check
        %p225 = pneg %p106
      $region42: #{transformer_forward.49} parent=39 // pred_check_branch
        %227 = sbr.rel (%p225) target = $region44
      $region43: #{transformer_forward.49} parent=39 // pred_region
        %p228 = scmp.lt.s32.totalorder %s15, 1
        %s229 = scalar_select %p228, %s15, 1
        %s230 = smul.addr %s229, 4
        %s231 = scalar_lea.vmem %s3, %s230
      $region44: #{transformer_forward.49} parent=39 // pred_fallthru
        _
    $region40: #{transformer_forward.49} parent=5 // pred_fallthru
      _
  $region6: #{transformer_forward.49} parent=0 // loop_footer
    %s13 = sadd.s32 1, %s9
  $region7: #{transformer_forward.49} parent=0 // loop_footer_branch
    %8 = sbr.rel target = $region3
  $region8: #{transformer_forward.49} parent=0 // loop_exit
    _

// kernel: transformer_forward.58
$region0: #{transformer_forward.58}
  #allocation0 [shape = 'u32[]', space=smem, size = 0x4, offset = 0x4, fixed_abs, tag = 'smem constant byte address 0x4 - core index']
  #allocation1 [shape = 'u32[72,128]{1,0:T(1,128)}', space=vmem, size = 0x9000, scoped, tag = 'internal scratch']
  %s0 = inlined_call_operand.vmem [shape: bf16[16,32], index: 0, kind: input, shape index: {}]
  %s1 = inlined_call_operand.vmem [shape: bf16[16,32], index: 1, kind: input, shape index: {}]
  %s2 = inlined_call_operand.vmem [shape: f32[1,32], index: 2, kind: input, shape index: {}]
  %s3 = inlined_call_operand.hbm [shape: f32[1,32], index: 3, kind: input, shape index: {}]
  %s4 = inlined_call_operand.vmem [shape: bf16[16,32], index: 4, kind: output, shape index: {}]
  %s5 = sld [smem:[#allocation0]]
  $region53: #{transformer_forward.58} parent=0
    _
  %s7 = ssub.s32 1, %s5
  %s8 = scalar_select 0, %s7, %s5
  $region1: #{transformer_forward.58} parent=0
    #allocation2 [shape = 'u8[512]{0}', space=vmem, size = 0x400, scoped, tag = 'input window, operand 3, single buffered']
    #allocation3 [shape = 's32[2]{0}', space=sflag, size = 0x8, scoped, tag = 'scoped memory for transformer_forward.58']
    %9 = vsyncpa [#allocation3], 0
    loop: start=0, step=1, limit=4
    $region2: #{transformer_forward.58} parent=1 // loop_pre_header
      _
    $region3: #{transformer_forward.58} parent=1 // loop_header
      %s11 = sphi 0, %s15
      %p12 = scmp.ge.s32.totalorder %s11, 4
      %s21 = sphi 0, %s23
      %s24 = sphi 0, %s21
      %s25 = sphi 0, %s24
      %s41 = sphi 0, %s25
      %s47 = sphi 0, %s49
      %s50 = sphi 0, %s47
      %s51 = sphi 0, %s50
      %s67 = sphi 0, %s51
      %s71 = sphi 0, %s71
      %s73 = sphi 0, %s71
      %s74 = sphi 0, %s73
      %s88 = sphi 0, %s74
      %s92 = sphi 0, %s92
      %s94 = sphi 0, %s92
      %s95 = sphi 0, %s94
      %s109 = sphi 0, %s95
      %s115 = sphi 0, %s117
      %s118 = sphi 0, %s115
      %s119 = sphi 0, %s118
      %s135 = sphi 0, %s119
    $region4: #{transformer_forward.58} parent=1 // loop_header_branch
      %14 = sbr.rel (%p12) target = $region8
    $region5: #{transformer_forward.58} parent=1 // loop_body
      %s16 = ssub.s32 %s11, 1
      %s17 = ssub.s32 %s11, 2
      %s18 = sadd.s32 %s11, 1
      %s19 = ssub.s32 %s11, %s18
      %p20 = scmp.eq.s32.totalorder %s19, 0
      %s22 = sadd.s32 %s21, 1
      %s23 = scalar_select %p20, %s21, %s22
      %p26 = pneg %p20
      %p27 = scmp.eq.s32.totalorder %s11, 1
      %p28 = por %p26, %p27
      %p29 = scmp.ne.s32.totalorder %s21, %s24
      %p30 = scmp.eq.s32.totalorder %s11, 0
      %p31 = por %p29, %p30
      %p32 = scmp.ne.s32.totalorder %s21, %s24
      %p33 = scmp.eq.s32.totalorder %s16, 1
      %p34 = por %p32, %p33
      %p35 = scmp.ne.s32.totalorder %s24, %s25
      %p36 = scmp.eq.s32.totalorder %s16, 0
      %p37 = por %p35, %p36
      %p38 = scmp.ne.s32.totalorder %s24, %s25
      %p39 = scmp.eq.s32.totalorder %s17, 1
      %p40 = por %p38, %p39
      %p42 = scmp.ne.s32.totalorder %s25, %s41
      %p43 = scmp.eq.s32.totalorder %s17, 0
      %p44 = por %p42, %p43
      %s45 = ssub.s32 %s11, %s18
      %p46 = scmp.eq.s32.totalorder %s45, 0
      %s48 = sadd.s32 %s47, 1
      %s49 = scalar_select %p46, %s47, %s48
      %p52 = pneg %p46
      %p53 = scmp.eq.s32.totalorder %s11, 1
      %p54 = por %p52, %p53
      %p55 = scmp.ne.s32.totalorder %s47, %s50
      %p56 = scmp.eq.s32.totalorder %s11, 0
      %p57 = por %p55, %p56
      %p58 = scmp.ne.s32.totalorder %s47, %s50
      %p59 = scmp.eq.s32.totalorder %s16, 1
      %p60 = por %p58, %p59
      %p61 = scmp.ne.s32.totalorder %s50, %s51
      %p62 = scmp.eq.s32.totalorder %s16, 0
      %p63 = por %p61, %p62
      %p64 = scmp.ne.s32.totalorder %s50, %s51
      %p65 = scmp.eq.s32.totalorder %s17, 1
      %p66 = por %p64, %p65
      %p68 = scmp.ne.s32.totalorder %s51, %s67
      %p69 = scmp.eq.s32.totalorder %s17, 0
      %p70 = por %p68, %p69
      %s72 = sadd.s32 %s71, 1
      %p75 = scmp.eq.s32.totalorder %s11, 1
      %p76 = scmp.ne.s32.totalorder %s71, %s73
      %p77 = scmp.eq.s32.totalorder %s11, 0
      %p78 = por %p76, %p77
      %p79 = scmp.ne.s32.totalorder %s71, %s73
      %p80 = scmp.eq.s32.totalorder %s16, 1
      %p81 = por %p79, %p80
      %p82 = scmp.ne.s32.totalorder %s73, %s74
      %p83 = scmp.eq.s32.totalorder %s16, 0
      %p84 = por %p82, %p83
      %p85 = scmp.ne.s32.totalorder %s73, %s74
      %p86 = scmp.eq.s32.totalorder %s17, 1
      %p87 = por %p85, %p86
      %p89 = scmp.ne.s32.totalorder %s74, %s88
      %p90 = scmp.eq.s32.totalorder %s17, 0
      %p91 = por %p89, %p90
      %s93 = sadd.s32 %s92, 1
      %p96 = scmp.eq.s32.totalorder %s11, 1
      %p97 = scmp.ne.s32.totalorder %s92, %s94
      %p98 = scmp.eq.s32.totalorder %s11, 0
      %p99 = por %p97, %p98
      %p100 = scmp.ne.s32.totalorder %s92, %s94
      %p101 = scmp.eq.s32.totalorder %s16, 1
      %p102 = por %p100, %p101
      %p103 = scmp.ne.s32.totalorder %s94, %s95
      %p104 = scmp.eq.s32.totalorder %s16, 0
      %p105 = por %p103, %p104
      %p106 = scmp.ne.s32.totalorder %s94, %s95
      %p107 = scmp.eq.s32.totalorder %s17, 1
      %p108 = por %p106, %p107
      %p110 = scmp.ne.s32.totalorder %s95, %s109
      %p111 = scmp.eq.s32.totalorder %s17, 0
      %p112 = por %p110, %p111
      %s113 = ssub.s32 %s11, %s18
      %p114 = scmp.eq.s32.totalorder %s113, 0
      %s116 = sadd.s32 %s115, 1
      %s117 = scalar_select %p114, %s115, %s116
      %p120 = pneg %p114
      %p121 = scmp.eq.s32.totalorder %s11, 1
      %p122 = por %p120, %p121
      %p123 = scmp.ne.s32.totalorder %s115, %s118
      %p124 = scmp.eq.s32.totalorder %s11, 0
      %p125 = por %p123, %p124
      %p126 = scmp.ne.s32.totalorder %s115, %s118
      %p127 = scmp.eq.s32.totalorder %s16, 1
      %p128 = por %p126, %p127
      %p129 = scmp.ne.s32.totalorder %s118, %s119
      %p130 = scmp.eq.s32.totalorder %s16, 0
      %p131 = por %p129, %p130
      %p132 = scmp.ne.s32.totalorder %s118, %s119
      %p133 = scmp.eq.s32.totalorder %s17, 1
      %p134 = por %p132, %p133
      %p136 = scmp.ne.s32.totalorder %s119, %s135
      %p137 = scmp.eq.s32.totalorder %s17, 0
      %p138 = por %p136, %p137
      %p139 = scmp.le.s32.totalorder 1, %s11
      %p140 = scmp.lt.s32.totalorder %s11, 3
      %p141 = pnand %p139, %p140
      %p142 = pneg %p141
      // Predicated region
      $region9: #{transformer_forward.58} parent=5 // pred_check
        _
      $region10: #{transformer_forward.58} parent=5 // pred_check_branch
        %144 = sbr.rel (%p141) target = $region12
      $region11: #{transformer_forward.58} parent=5 // pred_region
        %s145 = ssub.s32 %s11, 1
        // Predicated region
        $region13: #{transformer_forward.58} parent=11 // pred_check
          %p146 = pneg %p84
        $region14: #{transformer_forward.58} parent=11 // pred_check_branch
          %148 = sbr.rel (%p146) target = $region16
        $region15: #{transformer_forward.58} parent=11 // pred_region
          _
        $region16: #{transformer_forward.58} parent=11 // pred_fallthru
          _
        // Predicated region
        $region17: #{transformer_forward.58} parent=11 // pred_check
          %p149 = pneg %p105
        $region18: #{transformer_forward.58} parent=11 // pred_check_branch
          %151 = sbr.rel (%p149) target = $region20
        $region19: #{transformer_forward.58} parent=11 // pred_region
          %153 = vsyncadd [#allocation3], 0
          %s155 = sshll.u32 %s3, 4
          %s156 = int_to_ptr.hbm [resolvable:$true] %s155
          %s157 = sshll.u32 [#allocation2], 4
          %s158 = int_to_ptr.vmem [resolvable:$true] %s157
          %160 = dma.hbm_to_vmem [thread:$0]  %s156, 16, %s158, [#allocation3]
        $region20: #{transformer_forward.58} parent=11 // pred_fallthru
          _
      $region12: #{transformer_forward.58} parent=5 // pred_fallthru
        _
      %p161 = scmp.lt.s32.totalorder %s11, 2
      // Predicated region
      $region21: #{transformer_forward.58} parent=5 // pred_check
        %p162 = pneg %p161
      $region22: #{transformer_forward.58} parent=5 // pred_check_branch
        %164 = sbr.rel (%p162) target = $region24
      $region23: #{transformer_forward.58} parent=5 // pred_region
        // Predicated region
        $region25: #{transformer_forward.58} parent=23 // pred_check
          %p165 = pneg %p31
        $region26: #{transformer_forward.58} parent=23 // pred_check_branch
          %167 = sbr.rel (%p165) target = $region28
        $region27: #{transformer_forward.58} parent=23 // pred_region
          %p168 = scmp.lt.s32.totalorder %s11, 1
          %s169 = scalar_select %p168, %s11, 1
          %s170 = smul.addr %s169, 4
          %s171 = scalar_lea.vmem %s0, %s170
        $region28: #{transformer_forward.58} parent=23 // pred_fallthru
          _
        // Predicated region
        $region29: #{transformer_forward.58} parent=23 // pred_check
          %p172 = pneg %p57
        $region30: #{transformer_forward.58} parent=23 // pred_check_branch
          %174 = sbr.rel (%p172) target = $region32
        $region31: #{transformer_forward.58} parent=23 // pred_region
          %p175 = scmp.lt.s32.totalorder %s11, 1
          %s176 = scalar_select %p175, %s11, 1
          %s177 = smul.addr %s176, 4
          %s178 = scalar_lea.vmem %s1, %s177
        $region32: #{transformer_forward.58} parent=23 // pred_fallthru
          _
      $region24: #{transformer_forward.58} parent=5 // pred_fallthru
        _
      %p179 = scmp.le.s32.totalorder 1, %s11
      %p180 = scmp.lt.s32.totalorder %s11, 3
      %p181 = pnand %p179, %p180
      %p182 = pneg %p181
      // Predicated region
      $region33: #{transformer_forward.58} parent=5 // pred_check
        _
      $region34: #{transformer_forward.58} parent=5 // pred_check_branch
        %184 = sbr.rel (%p181) target = $region36
      $region35: #{transformer_forward.58} parent=5 // pred_region
        %s185 = ssub.s32 %s11, 1
        // Predicated region
        $region37: #{transformer_forward.58} parent=35 // pred_check
          %p186 = pneg %p105
        $region38: #{transformer_forward.58} parent=35 // pred_check_branch
          %188 = sbr.rel (%p186) target = $region40
        $region39: #{transformer_forward.58} parent=35 // pred_region
          %190 = dma.done [#allocation3], 16
        $region40: #{transformer_forward.58} parent=35 // pred_fallthru
          _
        %p191 = scmp.lt.s32.totalorder %s16, 1
        %s192 = scalar_select %p191, %s16, 1
        %s193 = smul.addr %s192, 4
        %s194 = scalar_lea.vmem %s0, %s193
        %p195 = pneg %p37
        %p196 = pneg %p34
        %p197 = scmp.lt.s32.totalorder %s16, 1
        %s198 = scalar_select %p197, %s16, 1
        %s199 = smul.addr %s198, 4
        %s200 = scalar_lea.vmem %s1, %s199
        %p201 = pneg %p63
        %p202 = pneg %p60
        %p203 = pneg %p84
        %p204 = pneg %p81
        %p205 = pneg %p105
        %p206 = pneg %p102
        %p207 = pneg %p131
        %p208 = pneg %p128
        %p209 = scmp.lt.s32.totalorder %s16, 1
        %s210 = scalar_select %p209, %s16, 1
        %s211 = smul.addr %s210, 4
        %s212 = scalar_lea.vmem %s4, %s211
        %p213 = scmp.lt.s32.totalorder %s16, 1
        %s214 = scalar_select %p213, %s16, 1
        %s215 = smul.addr %s214, 4
        %s216 = scalar_lea.vmem %s0, %s215
        %p217 = scmp.lt.s32.totalorder %s16, 1
        %s218 = scalar_select %p217, %s16, 1
        %s219 = smul.addr %s218, 4
        %s220 = scalar_lea.vmem %s1, %s219
        %p221 = scmp.lt.s32.totalorder %s16, 1
        %s222 = scalar_select %p221, %s16, 1
        %s223 = smul.addr %s222, 4
        %s224 = scalar_lea.vmem %s4, %s223
        %v225 = vld [vmem:[%s216] sm:$0xf]
        %v226 = vunpack.c.l.bf16 %v225
        %v227 = vld [vmem:[%s220] sm:$0xf]
        %v228 = vunpack.c.l.bf16 %v227
        %v229 = vadd.f32 %v226, %v228
        %vm230 = vcmask 261120
        %v231 = vsel %vm230, %v229, 0.0
        %232 = vadd.xlane.f32.xlu0 %v231
        %v233 = vpop.xlane.xlu0 %232
        %v234 = vrcp.pop 32.0
        %v235 = vmul.f32 32.0, %v234
        %v236 = vsub.f32 1.0, %v235
        %v237 = vmul.f32 %v234, %v236
        %v238 = vadd.f32 %v234, %v237
        %vm239 = vweird.f32 %v234
        %v240 = vsel %vm239, %v234, %v238
        %v241 = vmul.f32 %v233, %v240
        %v242 = vmul.f32 %v229, %v229
        %v243 = vsel %vm230, %v242, 0.0
        %244 = vadd.xlane.f32.xlu0 %v243
        %v245 = vpop.xlane.xlu0 %244
        %v246 = vmul.f32 %v245, %v240
        %v247 = vsub.f32 %v229, %v241
        %v248 = vmul.f32 %v241, %v241
        %v249 = vsub.f32 %v246, %v248
        %v250 = vadd.f32 %v249, 1e-05
        %v251 = vrsqrt.pop %v250
        %v252 = vmul.f32 %v251, %v250
        %v253 = vmul.f32 %v252, %v251
        %v254 = vmul.f32 0.5, %v253
        %v255 = vsub.f32 1.5, %v254
        %v256 = vmul.f32 %v251, %v255
        %vm257 = vweird.f32 %v250
        %vm258 = vweird.f32 %v251
        %vm259 = vmor %vm257, %vm258
        %v260 = vsel %vm259, %v251, %v256
        %v261 = vmul.f32 %v247, %v260
        %v262 = vld [vmem:[%s2] sm:$0x1]
        %v264 = vperm.slane %v262, 0
        %v266 = vmul.f32 %v261, %v264
        %v267 = vld [vmem:[#allocation2] sm:$0x1]
        %v269 = vperm.slane %v267, 0
        %v271 = vadd.f32 %v266, %v269
        %v272 = vpack.c.bf16 %v271, %v271
        %vm273 = vcmask 257024
        %274 = vst.msk [vmem:[%s224] sm:$0xf] %vm273, %v272
        %p275 = scmp.lt.s32.totalorder %s16, 1
        %s276 = scalar_select %p275, %s16, 1
        %s277 = smul.addr %s276, 4
        %s278 = scalar_lea.vmem %s4, %s277
        // Predicated region
        $region41: #{transformer_forward.58} parent=35 // pred_check
          %p279 = pneg %p128
        $region42: #{transformer_forward.58} parent=35 // pred_check_branch
          %281 = sbr.rel (%p279) target = $region44
        $region43: #{transformer_forward.58} parent=35 // pred_region
          _
        $region44: #{transformer_forward.58} parent=35 // pred_fallthru
          _
      $region36: #{transformer_forward.58} parent=5 // pred_fallthru
        _
      %p282 = scmp.le.s32.totalorder 2, %s11
      // Predicated region
      $region45: #{transformer_forward.58} parent=5 // pred_check
        %p283 = pneg %p282
      $region46: #{transformer_forward.58} parent=5 // pred_check_branch
        %285 = sbr.rel (%p283) target = $region48
      $region47: #{transformer_forward.58} parent=5 // pred_region
        %s286 = ssub.s32 %s11, 2
        // Predicated region
        $region49: #{transformer_forward.58} parent=47 // pred_check
          %p287 = pneg %p134
        $region50: #{transformer_forward.58} parent=47 // pred_check_branch
          %289 = sbr.rel (%p287) target = $region52
        $region51: #{transformer_forward.58} parent=47 // pred_region
          %p290 = scmp.lt.s32.totalorder %s17, 1
          %s291 = scalar_select %p290, %s17, 1
          %s292 = smul.addr %s291, 4
          %s293 = scalar_lea.vmem %s4, %s292
        $region52: #{transformer_forward.58} parent=47 // pred_fallthru
          _
      $region48: #{transformer_forward.58} parent=5 // pred_fallthru
        _
    $region6: #{transformer_forward.58} parent=1 // loop_footer
      %s15 = sadd.s32 1, %s11
    $region7: #{transformer_forward.58} parent=1 // loop_footer_branch
      %10 = sbr.rel target = $region3
    $region8: #{transformer_forward.58} parent=1 // loop_exit
      _
    %294 = vsyncpa [#allocation3], 1
    %s295 = scalar_lea.sflag [#allocation3], 1
    %296 = vsyncpa %s295, 1

// kernel: transformer_forward.59
$region0: #{transformer_forward.59}
  #allocation0 [shape = 'u32[]', space=smem, size = 0x4, offset = 0x4, fixed_abs, tag = 'smem constant byte address 0x4 - core index']
  #allocation1 [shape = 'u32[72,128]{1,0:T(1,128)}', space=vmem, size = 0x9000, scoped, tag = 'internal scratch']
  #allocation2 [shape = 'f32[8,32]{1,0:T(8,128)}', space=vmem, size = 0x1000, scoped, tag = 'scratch operand']
  %s0 = inlined_call_operand.vmem [shape: bf16[16,32], index: 0, kind: input, shape index: {}]
  %s1 = inlined_call_operand.vmem [shape: bf16[32,64], index: 1, kind: input, shape index: {}]
  %s2 = inlined_call_operand.hbm [shape: f32[1,64], index: 2, kind: input, shape index: {}]
  %s3 = inlined_call_operand.vmem [shape: bf16[64,32], index: 3, kind: input, shape index: {}]
  %s4 = inlined_call_operand.hbm [shape: f32[1,32], index: 4, kind: input, shape index: {}]
  %s5 = inlined_call_operand.vmem [shape: bf16[16,32], index: 5, kind: output, shape index: {}]
  %s6 = sld [smem:[#allocation0]]
  $region69: #{transformer_forward.59} parent=0
    _
  %s8 = ssub.s32 1, %s6
  %s9 = scalar_select 0, %s8, %s6
  $region1: #{transformer_forward.59} parent=0
    #allocation3 [shape = 'u8[512]{0}', space=vmem, size = 0x400, scoped, tag = 'input window, operand 2, single buffered']
    #allocation4 [shape = 's32[2]{0}', space=sflag, size = 0x8, scoped, tag = 'scoped memory for transformer_forward.59']
    #allocation5 [shape = 'u8[512]{0}', space=vmem, size = 0x400, scoped, tag = 'input window, operand 4, single buffered']
    #allocation6 [shape = 's32[1]{0}', space=sflag, size = 0x4, scoped, tag = 'scoped memory for transformer_forward.59']
    %10 = vsyncpa [#allocation4], 0
    %11 = vsyncpa [#allocation6], 0
    loop: start=0, step=1, limit=4
    $region2: #{transformer_forward.59} parent=1 // loop_pre_header
      _
    $region3: #{transformer_forward.59} parent=1 // loop_header
      %s13 = sphi 0, %s17
      %p14 = scmp.ge.s32.totalorder %s13, 4
      %s20 = sphi 0, %s32
      %s21 = sphi 0, %s28
      %s22 = sphi 0, %s20
      %s23 = sphi 0, %s21
      %s24 = sphi 0, %s22
      %s25 = sphi 0, %s23
      %s35 = sphi 0, %s37
      %s38 = sphi 0, %s35
      %s39 = sphi 0, %s38
      %s55 = sphi 0, %s39
      %s61 = sphi 0, %s63
      %s64 = sphi 0, %s61
      %s65 = sphi 0, %s64
      %s81 = sphi 0, %s65
      %s87 = sphi 0, %s89
      %s90 = sphi 0, %s87
      %s91 = sphi 0, %s90
      %s107 = sphi 0, %s91
      %s113 = sphi 0, %s115
      %s116 = sphi 0, %s113
      %s117 = sphi 0, %s116
      %s133 = sphi 0, %s117
      %s137 = sphi 0, %s137
      %s139 = sphi 0, %s137
      %s140 = sphi 0, %s139
      %s154 = sphi 0, %s140
      %s160 = sphi 0, %s162
      %s163 = sphi 0, %s160
      %s164 = sphi 0, %s163
      %s180 = sphi 0, %s164
    $region4: #{transformer_forward.59} parent=1 // loop_header_branch
      %16 = sbr.rel (%p14) target = $region8
    $region5: #{transformer_forward.59} parent=1 // loop_body
      %s18 = ssub.s32 %s13, 1
      %s19 = ssub.s32 %s13, 2
      %s26 = sadd.s32 1, %s21
      %p27 = scmp.ge.s32.totalorder %s26, 1
      %s28 = scalar_select %p27, 0, %s26
      %s29 = sadd.s32 1, %s20
      %s30 = scalar_select %p27, %s29, %s20
      %p31 = scmp.ge.s32.totalorder %s30, 2
      %s32 = scalar_select %p31, 0, %s30
      %s33 = ssub.s32 %s20, %s32
      %p34 = scmp.eq.s32.totalorder %s33, 0
      %s36 = sadd.s32 %s35, 1
      %s37 = scalar_select %p34, %s35, %s36
      %p40 = pneg %p34
      %p41 = scmp.eq.s32.totalorder %s13, 1
      %p42 = por %p40, %p41
      %p43 = scmp.ne.s32.totalorder %s35, %s38
      %p44 = scmp.eq.s32.totalorder %s13, 0
      %p45 = por %p43, %p44
      %p46 = scmp.ne.s32.totalorder %s35, %s38
      %p47 = scmp.eq.s32.totalorder %s18, 1
      %p48 = por %p46, %p47
      %p49 = scmp.ne.s32.totalorder %s38, %s39
      %p50 = scmp.eq.s32.totalorder %s18, 0
      %p51 = por %p49, %p50
      %p52 = scmp.ne.s32.totalorder %s38, %s39
      %p53 = scmp.eq.s32.totalorder %s19, 1
      %p54 = por %p52, %p53
      %p56 = scmp.ne.s32.totalorder %s39, %s55
      %p57 = scmp.eq.s32.totalorder %s19, 0
      %p58 = por %p56, %p57
      %s59 = ssub.s32 %s21, %s28
      %p60 = scmp.eq.s32.totalorder %s59, 0
      %s62 = sadd.s32 %s61, 1
      %s63 = scalar_select %p60, %s61, %s62
      %p66 = pneg %p60
      %p67 = scmp.eq.s32.totalorder %s13, 1
      %p68 = por %p66, %p67
      %p69 = scmp.ne.s32.totalorder %s61, %s64
      %p70 = scmp.eq.s32.totalorder %s13, 0
      %p71 = por %p69, %p70
      %p72 = scmp.ne.s32.totalorder %s61, %s64
      %p73 = scmp.eq.s32.totalorder %s18, 1
      %p74 = por %p72, %p73
      %p75 = scmp.ne.s32.totalorder %s64, %s65
      %p76 = scmp.eq.s32.totalorder %s18, 0
      %p77 = por %p75, %p76
      %p78 = scmp.ne.s32.totalorder %s64, %s65
      %p79 = scmp.eq.s32.totalorder %s19, 1
      %p80 = por %p78, %p79
      %p82 = scmp.ne.s32.totalorder %s65, %s81
      %p83 = scmp.eq.s32.totalorder %s19, 0
      %p84 = por %p82, %p83
      %s85 = ssub.s32 %s21, %s28
      %p86 = scmp.eq.s32.totalorder %s85, 0
      %s88 = sadd.s32 %s87, 1
      %s89 = scalar_select %p86, %s87, %s88
      %p92 = pneg %p86
      %p93 = scmp.eq.s32.totalorder %s13, 1
      %p94 = por %p92, %p93
      %p95 = scmp.ne.s32.totalorder %s87, %s90
      %p96 = scmp.eq.s32.totalorder %s13, 0
      %p97 = por %p95, %p96
      %p98 = scmp.ne.s32.totalorder %s87, %s90
      %p99 = scmp.eq.s32.totalorder %s18, 1
      %p100 = por %p98, %p99
      %p101 = scmp.ne.s32.totalorder %s90, %s91
      %p102 = scmp.eq.s32.totalorder %s18, 0
      %p103 = por %p101, %p102
      %p104 = scmp.ne.s32.totalorder %s90, %s91
      %p105 = scmp.eq.s32.totalorder %s19, 1
      %p106 = por %p104, %p105
      %p108 = scmp.ne.s32.totalorder %s91, %s107
      %p109 = scmp.eq.s32.totalorder %s19, 0
      %p110 = por %p108, %p109
      %s111 = ssub.s32 %s21, %s28
      %p112 = scmp.eq.s32.totalorder %s111, 0
      %s114 = sadd.s32 %s113, 1
      %s115 = scalar_select %p112, %s113, %s114
      %p118 = pneg %p112
      %p119 = scmp.eq.s32.totalorder %s13, 1
      %p120 = por %p118, %p119
      %p121 = scmp.ne.s32.totalorder %s113, %s116
      %p122 = scmp.eq.s32.totalorder %s13, 0
      %p123 = por %p121, %p122
      %p124 = scmp.ne.s32.totalorder %s113, %s116
      %p125 = scmp.eq.s32.totalorder %s18, 1
      %p126 = por %p124, %p125
      %p127 = scmp.ne.s32.totalorder %s116, %s117
      %p128 = scmp.eq.s32.totalorder %s18, 0
      %p129 = por %p127, %p128
      %p130 = scmp.ne.s32.totalorder %s116, %s117
      %p131 = scmp.eq.s32.totalorder %s19, 1
      %p132 = por %p130, %p131
      %p134 = scmp.ne.s32.totalorder %s117, %s133
      %p135 = scmp.eq.s32.totalorder %s19, 0
      %p136 = por %p134, %p135
      %s138 = sadd.s32 %s137, 1
      %p141 = scmp.eq.s32.totalorder %s13, 1
      %p142 = scmp.ne.s32.totalorder %s137, %s139
      %p143 = scmp.eq.s32.totalorder %s13, 0
      %p144 = por %p142, %p143
      %p145 = scmp.ne.s32.totalorder %s137, %s139
      %p146 = scmp.eq.s32.totalorder %s18, 1
      %p147 = por %p145, %p146
      %p148 = scmp.ne.s32.totalorder %s139, %s140
      %p149 = scmp.eq.s32.totalorder %s18, 0
      %p150 = por %p148, %p149
      %p151 = scmp.ne.s32.totalorder %s139, %s140
      %p152 = scmp.eq.s32.totalorder %s19, 1
      %p153 = por %p151, %p152
      %p155 = scmp.ne.s32.totalorder %s140, %s154
      %p156 = scmp.eq.s32.totalorder %s19, 0
      %p157 = por %p155, %p156
      %s158 = ssub.s32 %s20, %s32
      %p159 = scmp.eq.s32.totalorder %s158, 0
      %s161 = sadd.s32 %s160, 1
      %s162 = scalar_select %p159, %s160, %s161
      %p165 = pneg %p159
      %p166 = scmp.eq.s32.totalorder %s13, 1
      %p167 = por %p165, %p166
      %p168 = scmp.ne.s32.totalorder %s160, %s163
      %p169 = scmp.eq.s32.totalorder %s13, 0
      %p170 = por %p168, %p169
      %p171 = scmp.ne.s32.totalorder %s160, %s163
      %p172 = scmp.eq.s32.totalorder %s18, 1
      %p173 = por %p171, %p172
      %p174 = scmp.ne.s32.totalorder %s163, %s164
      %p175 = scmp.eq.s32.totalorder %s18, 0
      %p176 = por %p174, %p175
      %p177 = scmp.ne.s32.totalorder %s163, %s164
      %p178 = scmp.eq.s32.totalorder %s19, 1
      %p179 = por %p177, %p178
      %p181 = scmp.ne.s32.totalorder %s164, %s180
      %p182 = scmp.eq.s32.totalorder %s19, 0
      %p183 = por %p181, %p182
      %p184 = scmp.le.s32.totalorder 1, %s13
      %p185 = scmp.lt.s32.totalorder %s13, 3
      %p186 = pnand %p184, %p185
      %p187 = pneg %p186
      // Predicated region
      $region9: #{transformer_forward.59} parent=5 // pred_check
        _
      $region10: #{transformer_forward.59} parent=5 // pred_check_branch
        %189 = sbr.rel (%p186) target = $region12
      $region11: #{transformer_forward.59} parent=5 // pred_region
        %s190 = ssub.s32 %s13, 1
        // Predicated region
        $region13: #{transformer_forward.59} parent=11 // pred_check
          %p191 = pneg %p77
        $region14: #{transformer_forward.59} parent=11 // pred_check_branch
          %193 = sbr.rel (%p191) target = $region16
        $region15: #{transformer_forward.59} parent=11 // pred_region
          %p194 = scmp.lt.s32.totalorder %s23, 0
          %s195 = scalar_select %p194, %s23, 0
          %s196 = smul.addr %s195, 4
          %s197 = scalar_lea.vmem %s1, %s196
        $region16: #{transformer_forward.59} parent=11 // pred_fallthru
          _
        // Predicated region
        $region17: #{transformer_forward.59} parent=11 // pred_check
          %p198 = pneg %p103
        $region18: #{transformer_forward.59} parent=11 // pred_check_branch
          %200 = sbr.rel (%p198) target = $region20
        $region19: #{transformer_forward.59} parent=11 // pred_region
          %202 = vsyncadd [#allocation4], 0
          %s203 = scalar_lea.hbm %s2, %s23
          %s205 = sshll.u32 %s203, 4
          %s206 = int_to_ptr.hbm [resolvable:$true] %s205
          %s207 = sshll.u32 [#allocation3], 4
          %s208 = int_to_ptr.vmem [resolvable:$true] %s207
          %210 = dma.hbm_to_vmem [thread:$0]  %s206, 16, %s208, [#allocation4]
        $region20: #{transformer_forward.59} parent=11 // pred_fallthru
          _
        // Predicated region
        $region21: #{transformer_forward.59} parent=11 // pred_check
          %p211 = pneg %p129
        $region22: #{transformer_forward.59} parent=11 // pred_check_branch
          %213 = sbr.rel (%p211) target = $region24
        $region23: #{transformer_forward.59} parent=11 // pred_region
          %s214 = smul.u32 8, %s23
          %p215 = scmp.lt.s32.totalorder %s214, 7
          %s216 = scalar_select %p215, %s214, 7
          %s217 = smul.addr %s216, 4
          %s218 = scalar_lea.vmem %s3, %s217
          %s219 = smul.u32 8, %s23
        $region24: #{transformer_forward.59} parent=11 // pred_fallthru
          _
        // Predicated region
        $region25: #{transformer_forward.59} parent=11 // pred_check
          %p220 = pneg %p150
        $region26: #{transformer_forward.59} parent=11 // pred_check_branch
          %222 = sbr.rel (%p220) target = $region28
        $region27: #{transformer_forward.59} parent=11 // pred_region
          %224 = vsyncadd [#allocation6], 0
          %s226 = sshll.u32 %s4, 4
          %s227 = int_to_ptr.hbm [resolvable:$true] %s226
          %s228 = sshll.u32 [#allocation5], 4
          %s229 = int_to_ptr.vmem [resolvable:$true] %s228
          %231 = dma.hbm_to_vmem [thread:$0]  %s227, 16, %s229, [#allocation6]
        $region28: #{transformer_forward.59} parent=11 // pred_fallthru
          _
      $region12: #{transformer_forward.59} parent=5 // pred_fallthru
        _
      %p232 = scmp.lt.s32.totalorder %s13, 2
      // Predicated region
      $region29: #{transformer_forward.59} parent=5 // pred_check
        %p233 = pneg %p232
      $region30: #{transformer_forward.59} parent=5 // pred_check_branch
        %235 = sbr.rel (%p233) target = $region32
      $region31: #{transformer_forward.59} parent=5 // pred_region
        // Predicated region
        $region33: #{transformer_forward.59} parent=31 // pred_check
          %p236 = pneg %p45
        $region34: #{transformer_forward.59} parent=31 // pred_check_branch
          %238 = sbr.rel (%p236) target = $region36
        $region35: #{transformer_forward.59} parent=31 // pred_region
          %p239 = scmp.lt.s32.totalorder %s20, 1
          %s240 = scalar_select %p239, %s20, 1
          %s241 = smul.addr %s240, 4
          %s242 = scalar_lea.vmem %s0, %s241
        $region36: #{transformer_forward.59} parent=31 // pred_fallthru
          _
      $region32: #{transformer_forward.59} parent=5 // pred_fallthru
        _
      %p243 = scmp.le.s32.totalorder 1, %s13
      %p244 = scmp.lt.s32.totalorder %s13, 3
      %p245 = pnand %p243, %p244
      %p246 = pneg %p245
      // Predicated region
      $region37: #{transformer_forward.59} parent=5 // pred_check
        _
      $region38: #{transformer_forward.59} parent=5 // pred_check_branch
        %248 = sbr.rel (%p245) target = $region40
      $region39: #{transformer_forward.59} parent=5 // pred_region
        %s249 = ssub.s32 %s13, 1
        // Predicated region
        $region41: #{transformer_forward.59} parent=39 // pred_check
          %p250 = pneg %p103
        $region42: #{transformer_forward.59} parent=39 // pred_check_branch
          %252 = sbr.rel (%p250) target = $region44
        $region43: #{transformer_forward.59} parent=39 // pred_region
          %254 = dma.done [#allocation4], 16
        $region44: #{transformer_forward.59} parent=39 // pred_fallthru
          _
        // Predicated region
        $region45: #{transformer_forward.59} parent=39 // pred_check
          %p255 = pneg %p150
        $region46: #{transformer_forward.59} parent=39 // pred_check_branch
          %257 = sbr.rel (%p255) target = $region48
        $region47: #{transformer_forward.59} parent=39 // pred_region
          %259 = dma.done [#allocation6], 16
        $region48: #{transformer_forward.59} parent=39 // pred_fallthru
          _
        %p260 = scmp.lt.s32.totalorder %s22, 1
        %s261 = scalar_select %p260, %s22, 1
        %s262 = smul.addr %s261, 4
        %s263 = scalar_lea.vmem %s0, %s262
        %p264 = pneg %p51
        %p265 = pneg %p48
        %p266 = scmp.lt.s32.totalorder %s23, 0
        %s267 = scalar_select %p266, %s23, 0
        %s268 = smul.addr %s267, 4
        %s269 = scalar_lea.vmem %s1, %s268
        %p270 = pneg %p77
        %p271 = pneg %p74
        %p272 = pneg %p103
        %p273 = pneg %p100
        %s274 = smul.u32 8, %s23
        %p275 = scmp.lt.s32.totalorder %s274, 7
        %s276 = scalar_select %p275, %s274, 7
        %s277 = smul.addr %s276, 4
        %s278 = scalar_lea.vmem %s3, %s277
        %p279 = pneg %p129
        %p280 = pneg %p126
        %p281 = pneg %p150
        %p282 = pneg %p147
        %p283 = pneg %p176
        %p284 = pneg %p173
        %p285 = scmp.lt.s32.totalorder %s22, 1
        %s286 = scalar_select %p285, %s22, 1
        %s287 = smul.addr %s286, 4
        %s288 = scalar_lea.vmem %s5, %s287
        %p289 = scmp.lt.s32.totalorder %s22, 1
        %s290 = scalar_select %p289, %s22, 1
        %s291 = smul.addr %s290, 4
        %s292 = scalar_lea.vmem %s0, %s291
        %p293 = scmp.lt.s32.totalorder %s23, 0
        %s294 = scalar_select %p293, %s23, 0
        %s295 = smul.addr %s294, 4
        %s296 = scalar_lea.vmem %s1, %s295
        %s297 = smul.u32 8, %s23
        %p298 = scmp.lt.s32.totalorder %s297, 7
        %s299 = scalar_select %p298, %s297, 7
        %s300 = smul.addr %s299, 4
        %s301 = scalar_lea.vmem %s3, %s300
        %s302 = smul.u32 8, %s23
        %p303 = scmp.lt.s32.totalorder %s22, 1
        %s304 = scalar_select %p303, %s22, 1
        %s305 = smul.addr %s304, 4
        %s306 = scalar_lea.vmem %s5, %s305
        %p308 = scmp.eq.s32.totalorder %s23, 0
        // Predicated region
        $region49: #{transformer_forward.59} parent=39 // pred_check
          %p309 = pneg %p308
        $region50: #{transformer_forward.59} parent=39 // pred_check_branch
          %311 = sbr.rel (%p309) target = $region52
        $region51: #{transformer_forward.59} parent=39 // pred_region
          %vm312 = vcmask 261120
          %313 = vst.msk [vmem:[#allocation2] sm:$0xff] %vm312, 0.0
        $region52: #{transformer_forward.59} parent=39 // pred_fallthru
          _
        %v314 = vld [vmem:[%s292] sm:$0xf]
        %v315 = vld [vmem:[%s296] sm:$0xf]
        %v316 = vld [vmem:[%s296 + $0x4] sm:$0xf]
        %v317 = vld [vmem:[%s296 + $0x8] sm:$0xf]
        %v318 = vld [vmem:[%s296 + $0xc] sm:$0xf]
        %v319 = vld [vmem:[#allocation3] sm:$0x1]
        %v321 = vperm.slane %v319, 0
        %v327 = vunpack.c.l.b16 %v315
        %v328 = vunpack.c.l.b16 %v316
        %v329 = vunpack.c.l.b16 %v317
        %v330 = vunpack.c.l.b16 %v318
        %v331 = vpack.c.b16 %v328, %v327
        %v332 = vpack.c.b16 %v330, %v329
        %vm335 = vcmask 261120
        %v337 = vsel %vm335, %v314, 0
        %339 = vmatpush.bf16.msra.mxu0 0
        %340 = vmatpush.bf16.msra.mxu0 0
        %341 = vmatpush.bf16.msra.mxu0 0
        %342 = vmatpush.bf16.msra.mxu0 0
        %343 = vmatpush.bf16.msra.mxu0 0
        %344 = vmatpush.bf16.msra.mxu0 0
        %345 = vmatpush.bf16.msra.mxu0 %v332
        %346 = vmatpush.bf16.msra.mxu0 %v331
        %347 = vmatmul.bf16.gmra.mxu0 %v337
        %v348 = vpop.f32.mrf.mxu0
        %v349 = vadd.f32 %v321, %v348
        %v350 = vpop.f32.mrf.mxu0
        %351 = vdwg.mxu0
        %v352 = vmax.f32 %v349, 0.0
        %v353 = vld [vmem:[#allocation2] sm:$0xff]
        %v354 = vpack.c.bf16 %v352, %v352
        %v355 = vld [vmem:[%s301] sm:$0xf]
        %v356 = vld [vmem:[%s301 + $0x4] sm:$0xf]
        %v357 = vld [vmem:[%s301 + $0x8] sm:$0xf]
        %v358 = vld [vmem:[%s301 + $0xc] sm:$0xf]
        %v359 = vld [vmem:[%s301 + $0x10] sm:$0xf]
        %v360 = vld [vmem:[%s301 + $0x14] sm:$0xf]
        %v361 = vld [vmem:[%s301 + $0x18] sm:$0xf]
        %v362 = vld [vmem:[%s301 + $0x1c] sm:$0xf]
        %v371 = vunpack.c.l.b16 %v355
        %v372 = vunpack.c.l.b16 %v356
        %v373 = vunpack.c.l.b16 %v357
        %v374 = vunpack.c.l.b16 %v358
        %v375 = vunpack.c.l.b16 %v359
        %v376 = vunpack.c.l.b16 %v360
        %v377 = vunpack.c.l.b16 %v361
        %v378 = vunpack.c.l.b16 %v362
        %v379 = vpack.c.b16 %v372, %v371
        %v380 = vpack.c.b16 %v374, %v373
        %v381 = vpack.c.b16 %v376, %v375
        %v382 = vpack.c.b16 %v378, %v377
        %vm387 = vcmask 523264
        %v389 = vsel %vm387, %v354, 0
        %391 = vmatpush.bf16.msra.mxu0 0
        %392 = vmatpush.bf16.msra.mxu0 0
        %393 = vmatpush.bf16.msra.mxu0 0
        %394 = vmatpush.bf16.msra.mxu0 0
        %395 = vmatpush.bf16.msra.mxu0 %v382
        %396 = vmatpush.bf16.msra.mxu0 %v381
        %397 = vmatpush.bf16.msra.mxu0 %v380
        %398 = vmatpush.bf16.msra.mxu0 %v379
        %399 = vmatmul.bf16.gmra.mxu0 %v389
        %v400 = vpop.f32.mrf.mxu0
        %v401 = vadd.f32 0.0, %v400
        %v402 = vpop.f32.mrf.mxu0
        %403 = vdwg.mxu0
        %v404 = vadd.f32 %v353, %v401
        %405 = vst.msk [vmem:[#allocation2] sm:$0xff] %vm335, %v404
        // Predicated region
        $region53: #{transformer_forward.59} parent=39 // pred_check
          %p406 = pneg %p308
        $region54: #{transformer_forward.59} parent=39 // pred_check_branch
          %408 = sbr.rel (%p406) target = $region56
        $region55: #{transformer_forward.59} parent=39 // pred_region
          %v409 = vld [vmem:[#allocation2] sm:$0xff]
          %v410 = vld [vmem:[#allocation5] sm:$0x1]
          %v412 = vperm.slane %v410, 0
          %v414 = vadd.f32 %v409, %v412
          %v415 = vpack.c.bf16 %v414, %v414
          %vm416 = vcmask 257024
          %417 = vst.msk [vmem:[%s306] sm:$0xf] %vm416, %v415
        $region56: #{transformer_forward.59} parent=39 // pred_fallthru
          _
        %p418 = scmp.lt.s32.totalorder %s22, 1
        %s419 = scalar_select %p418, %s22, 1
        %s420 = smul.addr %s419, 4
        %s421 = scalar_lea.vmem %s5, %s420
        // Predicated region
        $region57: #{transformer_forward.59} parent=39 // pred_check
          %p422 = pneg %p173
        $region58: #{transformer_forward.59} parent=39 // pred_check_branch
          %424 = sbr.rel (%p422) target = $region60
        $region59: #{transformer_forward.59} parent=39 // pred_region
          _
        $region60: #{transformer_forward.59} parent=39 // pred_fallthru
          _
      $region40: #{transformer_forward.59} parent=5 // pred_fallthru
        _
      %p425 = scmp.le.s32.totalorder 2, %s13
      // Predicated region
      $region61: #{transformer_forward.59} parent=5 // pred_check
        %p426 = pneg %p425
      $region62: #{transformer_forward.59} parent=5 // pred_check_branch
        %428 = sbr.rel (%p426) target = $region64
      $region63: #{transformer_forward.59} parent=5 // pred_region
        %s429 = ssub.s32 %s13, 2
        // Predicated region
        $region65: #{transformer_forward.59} parent=63 // pred_check
          %p430 = pneg %p179
        $region66: #{transformer_forward.59} parent=63 // pred_check_branch
          %432 = sbr.rel (%p430) target = $region68
        $region67: #{transformer_forward.59} parent=63 // pred_region
          %p433 = scmp.lt.s32.totalorder %s24, 1
          %s434 = scalar_select %p433, %s24, 1
          %s435 = smul.addr %s434, 4
          %s436 = scalar_lea.vmem %s5, %s435
        $region68: #{transformer_forward.59} parent=63 // pred_fallthru
          _
      $region64: #{transformer_forward.59} parent=5 // pred_fallthru
        _
    $region6: #{transformer_forward.59} parent=1 // loop_footer
      %s17 = sadd.s32 1, %s13
    $region7: #{transformer_forward.59} parent=1 // loop_footer_branch
      %12 = sbr.rel target = $region3
    $region8: #{transformer_forward.59} parent=1 // loop_exit
      _
    %437 = vsyncpa [#allocation4], 1
    %s438 = scalar_lea.sflag [#allocation4], 1
    %439 = vsyncpa %s438, 1
    %440 = vsyncpa [#allocation6], 1

// kernel: transformer_forward.60
$region0: #{transformer_forward.60}
  #allocation0 [shape = 'u32[]', space=smem, size = 0x4, offset = 0x4, fixed_abs, tag = 'smem constant byte address 0x4 - core index']
  #allocation1 [shape = 'u32[72,128]{1,0:T(1,128)}', space=vmem, size = 0x9000, scoped, tag = 'internal scratch']
  %s0 = inlined_call_operand.vmem [shape: bf16[16,32], index: 0, kind: input, shape index: {}]
  %s1 = inlined_call_operand.vmem [shape: bf16[16,32], index: 1, kind: input, shape index: {}]
  %s2 = inlined_call_operand.hbm [shape: f32[1,32], index: 2, kind: input, shape index: {}]
  %s3 = inlined_call_operand.hbm [shape: f32[1,32], index: 3, kind: input, shape index: {}]
  %s4 = inlined_call_operand.vmem [shape: bf16[16,32], index: 4, kind: output, shape index: {}]
  %s5 = sld [smem:[#allocation0]]
  $region57: #{transformer_forward.60} parent=0
    _
  %s7 = ssub.s32 1, %s5
  %s8 = scalar_select 0, %s7, %s5
  $region1: #{transformer_forward.60} parent=0
    #allocation2 [shape = 'u8[512]{0}', space=vmem, size = 0x400, scoped, tag = 'input window, operand 2, single buffered']
    #allocation3 [shape = 's32[2]{0}', space=sflag, size = 0x8, scoped, tag = 'scoped memory for transformer_forward.60']
    #allocation4 [shape = 'u8[512]{0}', space=vmem, size = 0x400, scoped, tag = 'input window, operand 3, single buffered']
    #allocation5 [shape = 's32[1]{0}', space=sflag, size = 0x4, scoped, tag = 'scoped memory for transformer_forward.60']
    %9 = vsyncpa [#allocation3], 0
    %10 = vsyncpa [#allocation5], 0
    loop: start=0, step=1, limit=4
    $region2: #{transformer_forward.60} parent=1 // loop_pre_header
      _
    $region3: #{transformer_forward.60} parent=1 // loop_header
      %s12 = sphi 0, %s16
      %p13 = scmp.ge.s32.totalorder %s12, 4
      %s22 = sphi 0, %s24
      %s25 = sphi 0, %s22
      %s26 = sphi 0, %s25
      %s42 = sphi 0, %s26
      %s48 = sphi 0, %s50
      %s51 = sphi 0, %s48
      %s52 = sphi 0, %s51
      %s68 = sphi 0, %s52
      %s72 = sphi 0, %s72
      %s74 = sphi 0, %s72
      %s75 = sphi 0, %s74
      %s89 = sphi 0, %s75
      %s93 = sphi 0, %s93
      %s95 = sphi 0, %s93
      %s96 = sphi 0, %s95
      %s110 = sphi 0, %s96
      %s116 = sphi 0, %s118
      %s119 = sphi 0, %s116
      %s120 = sphi 0, %s119
      %s136 = sphi 0, %s120
    $region4: #{transformer_forward.60} parent=1 // loop_header_branch
      %15 = sbr.rel (%p13) target = $region8
    $region5: #{transformer_forward.60} parent=1 // loop_body
      %s17 = ssub.s32 %s12, 1
      %s18 = ssub.s32 %s12, 2
      %s19 = sadd.s32 %s12, 1
      %s20 = ssub.s32 %s12, %s19
      %p21 = scmp.eq.s32.totalorder %s20, 0
      %s23 = sadd.s32 %s22, 1
      %s24 = scalar_select %p21, %s22, %s23
      %p27 = pneg %p21
      %p28 = scmp.eq.s32.totalorder %s12, 1
      %p29 = por %p27, %p28
      %p30 = scmp.ne.s32.totalorder %s22, %s25
      %p31 = scmp.eq.s32.totalorder %s12, 0
      %p32 = por %p30, %p31
      %p33 = scmp.ne.s32.totalorder %s22, %s25
      %p34 = scmp.eq.s32.totalorder %s17, 1
      %p35 = por %p33, %p34
      %p36 = scmp.ne.s32.totalorder %s25, %s26
      %p37 = scmp.eq.s32.totalorder %s17, 0
      %p38 = por %p36, %p37
      %p39 = scmp.ne.s32.totalorder %s25, %s26
      %p40 = scmp.eq.s32.totalorder %s18, 1
      %p41 = por %p39, %p40
      %p43 = scmp.ne.s32.totalorder %s26, %s42
      %p44 = scmp.eq.s32.totalorder %s18, 0
      %p45 = por %p43, %p44
      %s46 = ssub.s32 %s12, %s19
      %p47 = scmp.eq.s32.totalorder %s46, 0
      %s49 = sadd.s32 %s48, 1
      %s50 = scalar_select %p47, %s48, %s49
      %p53 = pneg %p47
      %p54 = scmp.eq.s32.totalorder %s12, 1
      %p55 = por %p53, %p54
      %p56 = scmp.ne.s32.totalorder %s48, %s51
      %p57 = scmp.eq.s32.totalorder %s12, 0
      %p58 = por %p56, %p57
      %p59 = scmp.ne.s32.totalorder %s48, %s51
      %p60 = scmp.eq.s32.totalorder %s17, 1
      %p61 = por %p59, %p60
      %p62 = scmp.ne.s32.totalorder %s51, %s52
      %p63 = scmp.eq.s32.totalorder %s17, 0
      %p64 = por %p62, %p63
      %p65 = scmp.ne.s32.totalorder %s51, %s52
      %p66 = scmp.eq.s32.totalorder %s18, 1
      %p67 = por %p65, %p66
      %p69 = scmp.ne.s32.totalorder %s52, %s68
      %p70 = scmp.eq.s32.totalorder %s18, 0
      %p71 = por %p69, %p70
      %s73 = sadd.s32 %s72, 1
      %p76 = scmp.eq.s32.totalorder %s12, 1
      %p77 = scmp.ne.s32.totalorder %s72, %s74
      %p78 = scmp.eq.s32.totalorder %s12, 0
      %p79 = por %p77, %p78
      %p80 = scmp.ne.s32.totalorder %s72, %s74
      %p81 = scmp.eq.s32.totalorder %s17, 1
      %p82 = por %p80, %p81
      %p83 = scmp.ne.s32.totalorder %s74, %s75
      %p84 = scmp.eq.s32.totalorder %s17, 0
      %p85 = por %p83, %p84
      %p86 = scmp.ne.s32.totalorder %s74, %s75
      %p87 = scmp.eq.s32.totalorder %s18, 1
      %p88 = por %p86, %p87
      %p90 = scmp.ne.s32.totalorder %s75, %s89
      %p91 = scmp.eq.s32.totalorder %s18, 0
      %p92 = por %p90, %p91
      %s94 = sadd.s32 %s93, 1
      %p97 = scmp.eq.s32.totalorder %s12, 1
      %p98 = scmp.ne.s32.totalorder %s93, %s95
      %p99 = scmp.eq.s32.totalorder %s12, 0
      %p100 = por %p98, %p99
      %p101 = scmp.ne.s32.totalorder %s93, %s95
      %p102 = scmp.eq.s32.totalorder %s17, 1
      %p103 = por %p101, %p102
      %p104 = scmp.ne.s32.totalorder %s95, %s96
      %p105 = scmp.eq.s32.totalorder %s17, 0
      %p106 = por %p104, %p105
      %p107 = scmp.ne.s32.totalorder %s95, %s96
      %p108 = scmp.eq.s32.totalorder %s18, 1
      %p109 = por %p107, %p108
      %p111 = scmp.ne.s32.totalorder %s96, %s110
      %p112 = scmp.eq.s32.totalorder %s18, 0
      %p113 = por %p111, %p112
      %s114 = ssub.s32 %s12, %s19
      %p115 = scmp.eq.s32.totalorder %s114, 0
      %s117 = sadd.s32 %s116, 1
      %s118 = scalar_select %p115, %s116, %s117
      %p121 = pneg %p115
      %p122 = scmp.eq.s32.totalorder %s12, 1
      %p123 = por %p121, %p122
      %p124 = scmp.ne.s32.totalorder %s116, %s119
      %p125 = scmp.eq.s32.totalorder %s12, 0
      %p126 = por %p124, %p125
      %p127 = scmp.ne.s32.totalorder %s116, %s119
      %p128 = scmp.eq.s32.totalorder %s17, 1
      %p129 = por %p127, %p128
      %p130 = scmp.ne.s32.totalorder %s119, %s120
      %p131 = scmp.eq.s32.totalorder %s17, 0
      %p132 = por %p130, %p131
      %p133 = scmp.ne.s32.totalorder %s119, %s120
      %p134 = scmp.eq.s32.totalorder %s18, 1
      %p135 = por %p133, %p134
      %p137 = scmp.ne.s32.totalorder %s120, %s136
      %p138 = scmp.eq.s32.totalorder %s18, 0
      %p139 = por %p137, %p138
      %p140 = scmp.le.s32.totalorder 1, %s12
      %p141 = scmp.lt.s32.totalorder %s12, 3
      %p142 = pnand %p140, %p141
      %p143 = pneg %p142
      // Predicated region
      $region9: #{transformer_forward.60} parent=5 // pred_check
        _
      $region10: #{transformer_forward.60} parent=5 // pred_check_branch
        %145 = sbr.rel (%p142) target = $region12
      $region11: #{transformer_forward.60} parent=5 // pred_region
        %s146 = ssub.s32 %s12, 1
        // Predicated region
        $region13: #{transformer_forward.60} parent=11 // pred_check
          %p147 = pneg %p85
        $region14: #{transformer_forward.60} parent=11 // pred_check_branch
          %149 = sbr.rel (%p147) target = $region16
        $region15: #{transformer_forward.60} parent=11 // pred_region
          %151 = vsyncadd [#allocation3], 0
          %s153 = sshll.u32 %s2, 4
          %s154 = int_to_ptr.hbm [resolvable:$true] %s153
          %s155 = sshll.u32 [#allocation2], 4
          %s156 = int_to_ptr.vmem [resolvable:$true] %s155
          %158 = dma.hbm_to_vmem [thread:$0]  %s154, 16, %s156, [#allocation3]
        $region16: #{transformer_forward.60} parent=11 // pred_fallthru
          _
        // Predicated region
        $region17: #{transformer_forward.60} parent=11 // pred_check
          %p159 = pneg %p106
        $region18: #{transformer_forward.60} parent=11 // pred_check_branch
          %161 = sbr.rel (%p159) target = $region20
        $region19: #{transformer_forward.60} parent=11 // pred_region
          %163 = vsyncadd [#allocation5], 0
          %s165 = sshll.u32 %s3, 4
          %s166 = int_to_ptr.hbm [resolvable:$true] %s165
          %s167 = sshll.u32 [#allocation4], 4
          %s168 = int_to_ptr.vmem [resolvable:$true] %s167
          %170 = dma.hbm_to_vmem [thread:$0]  %s166, 16, %s168, [#allocation5]
        $region20: #{transformer_forward.60} parent=11 // pred_fallthru
          _
      $region12: #{transformer_forward.60} parent=5 // pred_fallthru
        _
      %p171 = scmp.lt.s32.totalorder %s12, 2
      // Predicated region
      $region21: #{transformer_forward.60} parent=5 // pred_check
        %p172 = pneg %p171
      $region22: #{transformer_forward.60} parent=5 // pred_check_branch
        %174 = sbr.rel (%p172) target = $region24
      $region23: #{transformer_forward.60} parent=5 // pred_region
        // Predicated region
        $region25: #{transformer_forward.60} parent=23 // pred_check
          %p175 = pneg %p32
        $region26: #{transformer_forward.60} parent=23 // pred_check_branch
          %177 = sbr.rel (%p175) target = $region28
        $region27: #{transformer_forward.60} parent=23 // pred_region
          %p178 = scmp.lt.s32.totalorder %s12, 1
          %s179 = scalar_select %p178, %s12, 1
          %s180 = smul.addr %s179, 4
          %s181 = scalar_lea.vmem %s0, %s180
        $region28: #{transformer_forward.60} parent=23 // pred_fallthru
          _
        // Predicated region
        $region29: #{transformer_forward.60} parent=23 // pred_check
          %p182 = pneg %p58
        $region30: #{transformer_forward.60} parent=23 // pred_check_branch
          %184 = sbr.rel (%p182) target = $region32
        $region31: #{transformer_forward.60} parent=23 // pred_region
          %p185 = scmp.lt.s32.totalorder %s12, 1
          %s186 = scalar_select %p185, %s12, 1
          %s187 = smul.addr %s186, 4
          %s188 = scalar_lea.vmem %s1, %s187
        $region32: #{transformer_forward.60} parent=23 // pred_fallthru
          _
      $region24: #{transformer_forward.60} parent=5 // pred_fallthru
        _
      %p189 = scmp.le.s32.totalorder 1, %s12
      %p190 = scmp.lt.s32.totalorder %s12, 3
      %p191 = pnand %p189, %p190
      %p192 = pneg %p191
      // Predicated region
      $region33: #{transformer_forward.60} parent=5 // pred_check
        _
      $region34: #{transformer_forward.60} parent=5 // pred_check_branch
        %194 = sbr.rel (%p191) target = $region36
      $region35: #{transformer_forward.60} parent=5 // pred_region
        %s195 = ssub.s32 %s12, 1
        // Predicated region
        $region37: #{transformer_forward.60} parent=35 // pred_check
          %p196 = pneg %p85
        $region38: #{transformer_forward.60} parent=35 // pred_check_branch
          %198 = sbr.rel (%p196) target = $region40
        $region39: #{transformer_forward.60} parent=35 // pred_region
          %200 = dma.done [#allocation3], 16
        $region40: #{transformer_forward.60} parent=35 // pred_fallthru
          _
        // Predicated region
        $region41: #{transformer_forward.60} parent=35 // pred_check
          %p201 = pneg %p106
        $region42: #{transformer_forward.60} parent=35 // pred_check_branch
          %203 = sbr.rel (%p201) target = $region44
        $region43: #{transformer_forward.60} parent=35 // pred_region
          %205 = dma.done [#allocation5], 16
        $region44: #{transformer_forward.60} parent=35 // pred_fallthru
          _
        %p206 = scmp.lt.s32.totalorder %s17, 1
        %s207 = scalar_select %p206, %s17, 1
        %s208 = smul.addr %s207, 4
        %s209 = scalar_lea.vmem %s0, %s208
        %p210 = pneg %p38
        %p211 = pneg %p35
        %p212 = scmp.lt.s32.totalorder %s17, 1
        %s213 = scalar_select %p212, %s17, 1
        %s214 = smul.addr %s213, 4
        %s215 = scalar_lea.vmem %s1, %s214
        %p216 = pneg %p64
        %p217 = pneg %p61
        %p218 = pneg %p85
        %p219 = pneg %p82
        %p220 = pneg %p106
        %p221 = pneg %p103
        %p222 = pneg %p132
        %p223 = pneg %p129
        %p224 = scmp.lt.s32.totalorder %s17, 1
        %s225 = scalar_select %p224, %s17, 1
        %s226 = smul.addr %s225, 4
        %s227 = scalar_lea.vmem %s4, %s226
        %p228 = scmp.lt.s32.totalorder %s17, 1
        %s229 = scalar_select %p228, %s17, 1
        %s230 = smul.addr %s229, 4
        %s231 = scalar_lea.vmem %s0, %s230
        %p232 = scmp.lt.s32.totalorder %s17, 1
        %s233 = scalar_select %p232, %s17, 1
        %s234 = smul.addr %s233, 4
        %s235 = scalar_lea.vmem %s1, %s234
        %p236 = scmp.lt.s32.totalorder %s17, 1
        %s237 = scalar_select %p236, %s17, 1
        %s238 = smul.addr %s237, 4
        %s239 = scalar_lea.vmem %s4, %s238
        %v240 = vld [vmem:[%s231] sm:$0xf]
        %v241 = vunpack.c.l.bf16 %v240
        %v242 = vld [vmem:[%s235] sm:$0xf]
        %v243 = vunpack.c.l.bf16 %v242
        %v244 = vadd.f32 %v241, %v243
        %vm245 = vcmask 261120
        %v246 = vsel %vm245, %v244, 0.0
        %247 = vadd.xlane.f32.xlu0 %v246
        %v248 = vpop.xlane.xlu0 %247
        %v249 = vrcp.pop 32.0
        %v250 = vmul.f32 32.0, %v249
        %v251 = vsub.f32 1.0, %v250
        %v252 = vmul.f32 %v249, %v251
        %v253 = vadd.f32 %v249, %v252
        %vm254 = vweird.f32 %v249
        %v255 = vsel %vm254, %v249, %v253
        %v256 = vmul.f32 %v248, %v255
        %v257 = vmul.f32 %v244, %v244
        %v258 = vsel %vm245, %v257, 0.0
        %259 = vadd.xlane.f32.xlu0 %v258
        %v260 = vpop.xlane.xlu0 %259
        %v261 = vmul.f32 %v260, %v255
        %v262 = vsub.f32 %v244, %v256
        %v263 = vmul.f32 %v256, %v256
        %v264 = vsub.f32 %v261, %v263
        %v265 = vadd.f32 %v264, 1e-05
        %v266 = vrsqrt.pop %v265
        %v267 = vmul.f32 %v266, %v265
        %v268 = vmul.f32 %v267, %v266
        %v269 = vmul.f32 0.5, %v268
        %v270 = vsub.f32 1.5, %v269
        %v271 = vmul.f32 %v266, %v270
        %vm272 = vweird.f32 %v265
        %vm273 = vweird.f32 %v266
        %vm274 = vmor %vm272, %vm273
        %v275 = vsel %vm274, %v266, %v271
        %v276 = vmul.f32 %v262, %v275
        %v277 = vld [vmem:[#allocation2] sm:$0x1]
        %v279 = vperm.slane %v277, 0
        %v281 = vmul.f32 %v276, %v279
        %v282 = vld [vmem:[#allocation4] sm:$0x1]
        %v284 = vperm.slane %v282, 0
        %v286 = vadd.f32 %v281, %v284
        %v287 = vpack.c.bf16 %v286, %v286
        %vm288 = vcmask 257024
        %289 = vst.msk [vmem:[%s239] sm:$0xf] %vm288, %v287
        %p290 = scmp.lt.s32.totalorder %s17, 1
        %s291 = scalar_select %p290, %s17, 1
        %s292 = smul.addr %s291, 4
        %s293 = scalar_lea.vmem %s4, %s292
        // Predicated region
        $region45: #{transformer_forward.60} parent=35 // pred_check
          %p294 = pneg %p129
        $region46: #{transformer_forward.60} parent=35 // pred_check_branch
          %296 = sbr.rel (%p294) target = $region48
        $region47: #{transformer_forward.60} parent=35 // pred_region
          _
        $region48: #{transformer_forward.60} parent=35 // pred_fallthru
          _
      $region36: #{transformer_forward.60} parent=5 // pred_fallthru
        _
      %p297 = scmp.le.s32.totalorder 2, %s12
      // Predicated region
      $region49: #{transformer_forward.60} parent=5 // pred_check
        %p298 = pneg %p297
      $region50: #{transformer_forward.60} parent=5 // pred_check_branch
        %300 = sbr.rel (%p298) target = $region52
      $region51: #{transformer_forward.60} parent=5 // pred_region
        %s301 = ssub.s32 %s12, 2
        // Predicated region
        $region53: #{transformer_forward.60} parent=51 // pred_check
          %p302 = pneg %p135
        $region54: #{transformer_forward.60} parent=51 // pred_check_branch
          %304 = sbr.rel (%p302) target = $region56
        $region55: #{transformer_forward.60} parent=51 // pred_region
          %p305 = scmp.lt.s32.totalorder %s18, 1
          %s306 = scalar_select %p305, %s18, 1
          %s307 = smul.addr %s306, 4
          %s308 = scalar_lea.vmem %s4, %s307
        $region56: #{transformer_forward.60} parent=51 // pred_fallthru
          _
      $region52: #{transformer_forward.60} parent=5 // pred_fallthru
        _
    $region6: #{transformer_forward.60} parent=1 // loop_footer
      %s16 = sadd.s32 1, %s12
    $region7: #{transformer_forward.60} parent=1 // loop_footer_branch
      %11 = sbr.rel target = $region3
    $region8: #{transformer_forward.60} parent=1 // loop_exit
      _
    %309 = vsyncpa [#allocation3], 1
    %s310 = scalar_lea.sflag [#allocation3], 1
    %311 = vsyncpa %s310, 1
    %312 = vsyncpa [#allocation5], 1

// kernel: transformer_forward.61
$region0: #{transformer_forward.61}
  #allocation0 [shape = 'u32[]', space=smem, size = 0x4, offset = 0x4, fixed_abs, tag = 'smem constant byte address 0x4 - core index']
  #allocation1 [shape = 'u32[72,128]{1,0:T(1,128)}', space=vmem, size = 0x9000, scoped, tag = 'internal scratch']
  #allocation2 [shape = 'f32[8,96]{1,0:T(8,128)}', space=vmem, size = 0x1000, scoped, tag = 'scratch operand']
  %s0 = inlined_call_operand.vmem [shape: bf16[16,32], index: 0, kind: input, shape index: {}]
  %s1 = inlined_call_operand.vmem [shape: bf16[32,96], index: 1, kind: input, shape index: {}]
  %s2 = inlined_call_operand.hbm [shape: f32[1,96], index: 2, kind: input, shape index: {}]
  %s3 = inlined_call_operand.vmem [shape: bf16[16,32], index: 3, kind: output, shape index: {0}]
  %s4 = inlined_call_operand.vmem [shape: bf16[16,32], index: 4, kind: output, shape index: {1}]
  %s5 = inlined_call_operand.vmem [shape: bf16[16,32], index: 5, kind: output, shape index: {2}]
  %6 = xla_tuple %s3, %s4, %s5
  %s7 = sld [smem:[#allocation0]]
  $region73: #{transformer_forward.61} parent=0
    _
  %s9 = ssub.s32 1, %s7
  %s10 = scalar_select 0, %s9, %s7
  $region1: #{transformer_forward.61} parent=0
    #allocation3 [shape = 'u8[512]{0}', space=vmem, size = 0x400, scoped, tag = 'input window, operand 2, single buffered']
    #allocation4 [shape = 's32[2]{0}', space=sflag, size = 0x8, scoped, tag = 'scoped memory for transformer_forward.61']
    %11 = vsyncpa [#allocation4], 0
    loop: start=0, step=1, limit=4
    $region2: #{transformer_forward.61} parent=1 // loop_pre_header
      _
    $region3: #{transformer_forward.61} parent=1 // loop_header
      %s13 = sphi 0, %s17
      %p14 = scmp.ge.s32.totalorder %s13, 4
      %s20 = sphi 0, %s32
      %s21 = sphi 0, %s28
      %s22 = sphi 0, %s20
      %s23 = sphi 0, %s21
      %s24 = sphi 0, %s22
      %s25 = sphi 0, %s23
      %s37 = sphi 0, %s39
      %s40 = sphi 0, %s37
      %s41 = sphi 0, %s40
      %s57 = sphi 0, %s41
      %s63 = sphi 0, %s65
      %s66 = sphi 0, %s63
      %s67 = sphi 0, %s66
      %s83 = sphi 0, %s67
      %s87 = sphi 0, %s87
      %s89 = sphi 0, %s87
      %s90 = sphi 0, %s89
      %s104 = sphi 0, %s90
      %s110 = sphi 0, %s112
      %s113 = sphi 0, %s110
      %s114 = sphi 0, %s113
      %s130 = sphi 0, %s114
      %s136 = sphi 0, %s138
      %s139 = sphi 0, %s136
      %s140 = sphi 0, %s139
      %s156 = sphi 0, %s140
      %s162 = sphi 0, %s164
      %s165 = sphi 0, %s162
      %s166 = sphi 0, %s165
      %s182 = sphi 0, %s166
    $region4: #{transformer_forward.61} parent=1 // loop_header_branch
      %16 = sbr.rel (%p14) target = $region8
    $region5: #{transformer_forward.61} parent=1 // loop_body
      %s18 = ssub.s32 %s13, 1
      %s19 = ssub.s32 %s13, 2
      %s26 = sadd.s32 1, %s21
      %p27 = scmp.ge.s32.totalorder %s26, 1
      %s28 = scalar_select %p27, 0, %s26
      %s29 = sadd.s32 1, %s20
      %s30 = scalar_select %p27, %s29, %s20
      %p31 = scmp.ge.s32.totalorder %s30, 2
      %s32 = scalar_select %p31, 0, %s30
      %s33 = ssub.s32 %s20, %s32
      %s34 = ssub.s32 %s21, %s28
      %s35 = sor.u32 %s33, %s34
      %p36 = scmp.eq.s32.totalorder %s35, 0
      %s38 = sadd.s32 %s37, 1
      %s39 = scalar_select %p36, %s37, %s38
      %p42 = pneg %p36
      %p43 = scmp.eq.s32.totalorder %s13, 1
      %p44 = por %p42, %p43
      %p45 = scmp.ne.s32.totalorder %s37, %s40
      %p46 = scmp.eq.s32.totalorder %s13, 0
      %p47 = por %p45, %p46
      %p48 = scmp.ne.s32.totalorder %s37, %s40
      %p49 = scmp.eq.s32.totalorder %s18, 1
      %p50 = por %p48, %p49
      %p51 = scmp.ne.s32.totalorder %s40, %s41
      %p52 = scmp.eq.s32.totalorder %s18, 0
      %p53 = por %p51, %p52
      %p54 = scmp.ne.s32.totalorder %s40, %s41
      %p55 = scmp.eq.s32.totalorder %s19, 1
      %p56 = por %p54, %p55
      %p58 = scmp.ne.s32.totalorder %s41, %s57
      %p59 = scmp.eq.s32.totalorder %s19, 0
      %p60 = por %p58, %p59
      %s61 = ssub.s32 %s21, %s28
      %p62 = scmp.eq.s32.totalorder %s61, 0
      %s64 = sadd.s32 %s63, 1
      %s65 = scalar_select %p62, %s63, %s64
      %p68 = pneg %p62
      %p69 = scmp.eq.s32.totalorder %s13, 1
      %p70 = por %p68, %p69
      %p71 = scmp.ne.s32.totalorder %s63, %s66
      %p72 = scmp.eq.s32.totalorder %s13, 0
      %p73 = por %p71, %p72
      %p74 = scmp.ne.s32.totalorder %s63, %s66
      %p75 = scmp.eq.s32.totalorder %s18, 1
      %p76 = por %p74, %p75
      %p77 = scmp.ne.s32.totalorder %s66, %s67
      %p78 = scmp.eq.s32.totalorder %s18, 0
      %p79 = por %p77, %p78
      %p80 = scmp.ne.s32.totalorder %s66, %s67
      %p81 = scmp.eq.s32.totalorder %s19, 1
      %p82 = por %p80, %p81
      %p84 = scmp.ne.s32.totalorder %s67, %s83
      %p85 = scmp.eq.s32.totalorder %s19, 0
      %p86 = por %p84, %p85
      %s88 = sadd.s32 %s87, 1
      %p91 = scmp.eq.s32.totalorder %s13, 1
      %p92 = scmp.ne.s32.totalorder %s87, %s89
      %p93 = scmp.eq.s32.totalorder %s13, 0
      %p94 = por %p92, %p93
      %p95 = scmp.ne.s32.totalorder %s87, %s89
      %p96 = scmp.eq.s32.totalorder %s18, 1
      %p97 = por %p95, %p96
      %p98 = scmp.ne.s32.totalorder %s89, %s90
      %p99 = scmp.eq.s32.totalorder %s18, 0
      %p100 = por %p98, %p99
      %p101 = scmp.ne.s32.totalorder %s89, %s90
      %p102 = scmp.eq.s32.totalorder %s19, 1
      %p103 = por %p101, %p102
      %p105 = scmp.ne.s32.totalorder %s90, %s104
      %p106 = scmp.eq.s32.totalorder %s19, 0
      %p107 = por %p105, %p106
      %s108 = ssub.s32 %s20, %s32
      %p109 = scmp.eq.s32.totalorder %s108, 0
      %s111 = sadd.s32 %s110, 1
      %s112 = scalar_select %p109, %s110, %s111
      %p115 = pneg %p109
      %p116 = scmp.eq.s32.totalorder %s13, 1
      %p117 = por %p115, %p116
      %p118 = scmp.ne.s32.totalorder %s110, %s113
      %p119 = scmp.eq.s32.totalorder %s13, 0
      %p120 = por %p118, %p119
      %p121 = scmp.ne.s32.totalorder %s110, %s113
      %p122 = scmp.eq.s32.totalorder %s18, 1
      %p123 = por %p121, %p122
      %p124 = scmp.ne.s32.totalorder %s113, %s114
      %p125 = scmp.eq.s32.totalorder %s18, 0
      %p126 = por %p124, %p125
      %p127 = scmp.ne.s32.totalorder %s113, %s114
      %p128 = scmp.eq.s32.totalorder %s19, 1
      %p129 = por %p127, %p128
      %p131 = scmp.ne.s32.totalorder %s114, %s130
      %p132 = scmp.eq.s32.totalorder %s19, 0
      %p133 = por %p131, %p132
      %s134 = ssub.s32 %s20, %s32
      %p135 = scmp.eq.s32.totalorder %s134, 0
      %s137 = sadd.s32 %s136, 1
      %s138 = scalar_select %p135, %s136, %s137
      %p141 = pneg %p135
      %p142 = scmp.eq.s32.totalorder %s13, 1
      %p143 = por %p141, %p142
      %p144 = scmp.ne.s32.totalorder %s136, %s139
      %p145 = scmp.eq.s32.totalorder %s13, 0
      %p146 = por %p144, %p145
      %p147 = scmp.ne.s32.totalorder %s136, %s139
      %p148 = scmp.eq.s32.totalorder %s18, 1
      %p149 = por %p147, %p148
      %p150 = scmp.ne.s32.totalorder %s139, %s140
      %p151 = scmp.eq.s32.totalorder %s18, 0
      %p152 = por %p150, %p151
      %p153 = scmp.ne.s32.totalorder %s139, %s140
      %p154 = scmp.eq.s32.totalorder %s19, 1
      %p155 = por %p153, %p154
      %p157 = scmp.ne.s32.totalorder %s140, %s156
      %p158 = scmp.eq.s32.totalorder %s19, 0
      %p159 = por %p157, %p158
      %s160 = ssub.s32 %s20, %s32
      %p161 = scmp.eq.s32.totalorder %s160, 0
      %s163 = sadd.s32 %s162, 1
      %s164 = scalar_select %p161, %s162, %s163
      %p167 = pneg %p161
      %p168 = scmp.eq.s32.totalorder %s13, 1
      %p169 = por %p167, %p168
      %p170 = scmp.ne.s32.totalorder %s162, %s165
      %p171 = scmp.eq.s32.totalorder %s13, 0
      %p172 = por %p170, %p171
      %p173 = scmp.ne.s32.totalorder %s162, %s165
      %p174 = scmp.eq.s32.totalorder %s18, 1
      %p175 = por %p173, %p174
      %p176 = scmp.ne.s32.totalorder %s165, %s166
      %p177 = scmp.eq.s32.totalorder %s18, 0
      %p178 = por %p176, %p177
      %p179 = scmp.ne.s32.totalorder %s165, %s166
      %p180 = scmp.eq.s32.totalorder %s19, 1
      %p181 = por %p179, %p180
      %p183 = scmp.ne.s32.totalorder %s166, %s182
      %p184 = scmp.eq.s32.totalorder %s19, 0
      %p185 = por %p183, %p184
      %p186 = scmp.le.s32.totalorder 1, %s13
      %p187 = scmp.lt.s32.totalorder %s13, 3
      %p188 = pnand %p186, %p187
      %p189 = pneg %p188
      // Predicated region
      $region9: #{transformer_forward.61} parent=5 // pred_check
        _
      $region10: #{transformer_forward.61} parent=5 // pred_check_branch
        %191 = sbr.rel (%p188) target = $region12
      $region11: #{transformer_forward.61} parent=5 // pred_region
        %s192 = ssub.s32 %s13, 1
        // Predicated region
        $region13: #{transformer_forward.61} parent=11 // pred_check
          %p193 = pneg %p79
        $region14: #{transformer_forward.61} parent=11 // pred_check_branch
          %195 = sbr.rel (%p193) target = $region16
        $region15: #{transformer_forward.61} parent=11 // pred_region
          %s196 = smul.u32 4, %s23
          %p197 = scmp.lt.s32.totalorder %s196, 3
          %s198 = scalar_select %p197, %s196, 3
          %s199 = smul.addr %s198, 4
          %s200 = scalar_lea.vmem %s1, %s199
          %s201 = smul.u32 4, %s23
        $region16: #{transformer_forward.61} parent=11 // pred_fallthru
          _
        // Predicated region
        $region17: #{transformer_forward.61} parent=11 // pred_check
          %p202 = pneg %p100
        $region18: #{transformer_forward.61} parent=11 // pred_check_branch
          %204 = sbr.rel (%p202) target = $region20
        $region19: #{transformer_forward.61} parent=11 // pred_region
          %206 = vsyncadd [#allocation4], 0
          %s208 = sshll.u32 %s2, 4
          %s209 = int_to_ptr.hbm [resolvable:$true] %s208
          %s210 = sshll.u32 [#allocation3], 4
          %s211 = int_to_ptr.vmem [resolvable:$true] %s210
          %213 = dma.hbm_to_vmem [thread:$0]  %s209, 16, %s211, [#allocation4]
        $region20: #{transformer_forward.61} parent=11 // pred_fallthru
          _
      $region12: #{transformer_forward.61} parent=5 // pred_fallthru
        _
      %p214 = scmp.lt.s32.totalorder %s13, 2
      // Predicated region
      $region21: #{transformer_forward.61} parent=5 // pred_check
        %p215 = pneg %p214
      $region22: #{transformer_forward.61} parent=5 // pred_check_branch
        %217 = sbr.rel (%p215) target = $region24
      $region23: #{transformer_forward.61} parent=5 // pred_region
        // Predicated region
        $region25: #{transformer_forward.61} parent=23 // pred_check
          %p218 = pneg %p47
        $region26: #{transformer_forward.61} parent=23 // pred_check_branch
          %220 = sbr.rel (%p218) target = $region28
        $region27: #{transformer_forward.61} parent=23 // pred_region
          %p221 = scmp.lt.s32.totalorder %s20, 1
          %s222 = scalar_select %p221, %s20, 1
          %p223 = scmp.lt.s32.totalorder %s21, 0
          %s224 = scalar_select %p223, %s21, 0
          %s225 = sadd.s32 %s224, %s222
          %s226 = smul.addr %s225, 4
          %s227 = scalar_lea.vmem %s0, %s226
        $region28: #{transformer_forward.61} parent=23 // pred_fallthru
          _
      $region24: #{transformer_forward.61} parent=5 // pred_fallthru
        _
      %p228 = scmp.le.s32.totalorder 1, %s13
      %p229 = scmp.lt.s32.totalorder %s13, 3
      %p230 = pnand %p228, %p229
      %p231 = pneg %p230
      // Predicated region
      $region29: #{transformer_forward.61} parent=5 // pred_check
        _
      $region30: #{transformer_forward.61} parent=5 // pred_check_branch
        %233 = sbr.rel (%p230) target = $region32
      $region31: #{transformer_forward.61} parent=5 // pred_region
        %s234 = ssub.s32 %s13, 1
        // Predicated region
        $region33: #{transformer_forward.61} parent=31 // pred_check
          %p235 = pneg %p100
        $region34: #{transformer_forward.61} parent=31 // pred_check_branch
          %237 = sbr.rel (%p235) target = $region36
        $region35: #{transformer_forward.61} parent=31 // pred_region
          %239 = dma.done [#allocation4], 16
        $region36: #{transformer_forward.61} parent=31 // pred_fallthru
          _
        %p240 = scmp.lt.s32.totalorder %s22, 1
        %s241 = scalar_select %p240, %s22, 1
        %p242 = scmp.lt.s32.totalorder %s23, 0
        %s243 = scalar_select %p242, %s23, 0
        %s244 = sadd.s32 %s243, %s241
        %s245 = smul.addr %s244, 4
        %s246 = scalar_lea.vmem %s0, %s245
        %p247 = pneg %p53
        %p248 = pneg %p50
        %s249 = smul.u32 4, %s23
        %p250 = scmp.lt.s32.totalorder %s249, 3
        %s251 = scalar_select %p250, %s249, 3
        %s252 = smul.addr %s251, 4
        %s253 = scalar_lea.vmem %s1, %s252
        %p254 = pneg %p79
        %p255 = pneg %p76
        %p256 = pneg %p100
        %p257 = pneg %p97
        %p258 = pneg %p126
        %p259 = pneg %p123
        %p260 = scmp.lt.s32.totalorder %s22, 1
        %s261 = scalar_select %p260, %s22, 1
        %s262 = smul.addr %s261, 4
        %s263 = scalar_lea.vmem %s3, %s262
        %p264 = pneg %p152
        %p265 = pneg %p149
        %p266 = scmp.lt.s32.totalorder %s22, 1
        %s267 = scalar_select %p266, %s22, 1
        %s268 = smul.addr %s267, 4
        %s269 = scalar_lea.vmem %s4, %s268
        %p270 = pneg %p178
        %p271 = pneg %p175
        %p272 = scmp.lt.s32.totalorder %s22, 1
        %s273 = scalar_select %p272, %s22, 1
        %s274 = smul.addr %s273, 4
        %s275 = scalar_lea.vmem %s5, %s274
        %p276 = scmp.lt.s32.totalorder %s22, 1
        %s277 = scalar_select %p276, %s22, 1
        %p278 = scmp.lt.s32.totalorder %s23, 0
        %s279 = scalar_select %p278, %s23, 0
        %s280 = sadd.s32 %s279, %s277
        %s281 = smul.addr %s280, 4
        %s282 = scalar_lea.vmem %s0, %s281
        %s283 = smul.u32 4, %s23
        %p284 = scmp.lt.s32.totalorder %s283, 3
        %s285 = scalar_select %p284, %s283, 3
        %s286 = smul.addr %s285, 4
        %s287 = scalar_lea.vmem %s1, %s286
        %s288 = smul.u32 4, %s23
        %p289 = scmp.lt.s32.totalorder %s22, 1
        %s290 = scalar_select %p289, %s22, 1
        %s291 = smul.addr %s290, 4
        %s292 = scalar_lea.vmem %s3, %s291
        %p293 = scmp.lt.s32.totalorder %s22, 1
        %s294 = scalar_select %p293, %s22, 1
        %s295 = smul.addr %s294, 4
        %s296 = scalar_lea.vmem %s4, %s295
        %p297 = scmp.lt.s32.totalorder %s22, 1
        %s298 = scalar_select %p297, %s22, 1
        %s299 = smul.addr %s298, 4
        %s300 = scalar_lea.vmem %s5, %s299
        %p302 = scmp.eq.s32.totalorder %s23, 0
        // Predicated region
        $region37: #{transformer_forward.61} parent=31 // pred_check
          %p303 = pneg %p302
        $region38: #{transformer_forward.61} parent=31 // pred_check_branch
          %305 = sbr.rel (%p303) target = $region40
        $region39: #{transformer_forward.61} parent=31 // pred_region
          %vm306 = vcmask 785408
          %307 = vst.msk [vmem:[#allocation2] sm:$0xff] %vm306, 0.0
        $region40: #{transformer_forward.61} parent=31 // pred_fallthru
          _
        %v308 = vld [vmem:[#allocation2] sm:$0xff]
        %v309 = vld [vmem:[%s282] sm:$0xf]
        %v310 = vld [vmem:[%s287] sm:$0xf]
        %v311 = vld [vmem:[%s287 + $0x4] sm:$0xf]
        %v312 = vld [vmem:[%s287 + $0x8] sm:$0xf]
        %v313 = vld [vmem:[%s287 + $0xc] sm:$0xf]
        %v318 = vunpack.c.l.b16 %v310
        %v319 = vunpack.c.l.b16 %v311
        %v320 = vunpack.c.l.b16 %v312
        %v321 = vunpack.c.l.b16 %v313
        %v322 = vpack.c.b16 %v319, %v318
        %v323 = vpack.c.b16 %v321, %v320
        %vm326 = vcmask 261120
        %v328 = vsel %vm326, %v309, 0
        %330 = vmatpush.bf16.msra.mxu0 0
        %331 = vmatpush.bf16.msra.mxu0 0
        %332 = vmatpush.bf16.msra.mxu0 0
        %333 = vmatpush.bf16.msra.mxu0 0
        %334 = vmatpush.bf16.msra.mxu0 0
        %335 = vmatpush.bf16.msra.mxu0 0
        %336 = vmatpush.bf16.msra.mxu0 %v323
        %337 = vmatpush.bf16.msra.mxu0 %v322
        %338 = vmatmul.bf16.gmra.mxu0 %v328
        %v339 = vpop.f32.mrf.mxu0
        %v340 = vadd.f32 0.0, %v339
        %v341 = vpop.f32.mrf.mxu0
        %342 = vdwg.mxu0
        %v343 = vadd.f32 %v308, %v340
        %vm344 = vcmask 785408
        %345 = vst.msk [vmem:[#allocation2] sm:$0xff] %vm344, %v343
        // Predicated region
        $region41: #{transformer_forward.61} parent=31 // pred_check
          %p346 = pneg %p302
        $region42: #{transformer_forward.61} parent=31 // pred_check_branch
          %348 = sbr.rel (%p346) target = $region44
        $region43: #{transformer_forward.61} parent=31 // pred_region
          %v349 = vld [vmem:[#allocation2] sm:$0xff]
          %v350 = vld [vmem:[#allocation3] sm:$0x1]
          %v352 = vperm.slane %v350, 0
          %v354 = vadd.f32 %v349, %v352
          %v355 = vpack.c.bf16 %v354, %v354
          %vm356 = vcmask 257024
          %357 = vst.msk [vmem:[%s292] sm:$0xf] %vm356, %v355
          %359 = vrot.lane.b32.xlu0 %v355, 96
          %v360 = vpop.permute.xlu0 %359
          %362 = vst.msk [vmem:[%s296] sm:$0xf] %vm356, %v360
          %363 = vrot.lane.b32.xlu0 %v355, 64
          %v364 = vpop.permute.xlu0 %363
          %366 = vst.msk [vmem:[%s300] sm:$0xf] %vm356, %v364
        $region44: #{transformer_forward.61} parent=31 // pred_fallthru
          _
        %p367 = scmp.lt.s32.totalorder %s22, 1
        %s368 = scalar_select %p367, %s22, 1
        %s369 = smul.addr %s368, 4
        %s370 = scalar_lea.vmem %s3, %s369
        %p371 = scmp.lt.s32.totalorder %s22, 1
        %s372 = scalar_select %p371, %s22, 1
        %s373 = smul.addr %s372, 4
        %s374 = scalar_lea.vmem %s4, %s373
        %p375 = scmp.lt.s32.totalorder %s22, 1
        %s376 = scalar_select %p375, %s22, 1
        %s377 = smul.addr %s376, 4
        %s378 = scalar_lea.vmem %s5, %s377
        // Predicated region
        $region45: #{transformer_forward.61} parent=31 // pred_check
          %p379 = pneg %p123
        $region46: #{transformer_forward.61} parent=31 // pred_check_branch
          %381 = sbr.rel (%p379) target = $region48
        $region47: #{transformer_forward.61} parent=31 // pred_region
          _
        $region48: #{transformer_forward.61} parent=31 // pred_fallthru
          _
        // Predicated region
        $region49: #{transformer_forward.61} parent=31 // pred_check
          %p382 = pneg %p149
        $region50: #{transformer_forward.61} parent=31 // pred_check_branch
          %384 = sbr.rel (%p382) target = $region52
        $region51: #{transformer_forward.61} parent=31 // pred_region
          _
        $region52: #{transformer_forward.61} parent=31 // pred_fallthru
          _
        // Predicated region
        $region53: #{transformer_forward.61} parent=31 // pred_check
          %p385 = pneg %p175
        $region54: #{transformer_forward.61} parent=31 // pred_check_branch
          %387 = sbr.rel (%p385) target = $region56
        $region55: #{transformer_forward.61} parent=31 // pred_region
          _
        $region56: #{transformer_forward.61} parent=31 // pred_fallthru
          _
      $region32: #{transformer_forward.61} parent=5 // pred_fallthru
        _
      %p388 = scmp.le.s32.totalorder 2, %s13
      // Predicated region
      $region57: #{transformer_forward.61} parent=5 // pred_check
        %p389 = pneg %p388
      $region58: #{transformer_forward.61} parent=5 // pred_check_branch
        %391 = sbr.rel (%p389) target = $region60
      $region59: #{transformer_forward.61} parent=5 // pred_region
        %s392 = ssub.s32 %s13, 2
        // Predicated region
        $region61: #{transformer_forward.61} parent=59 // pred_check
          %p393 = pneg %p129
        $region62: #{transformer_forward.61} parent=59 // pred_check_branch
          %395 = sbr.rel (%p393) target = $region64
        $region63: #{transformer_forward.61} parent=59 // pred_region
          %p396 = scmp.lt.s32.totalorder %s24, 1
          %s397 = scalar_select %p396, %s24, 1
          %s398 = smul.addr %s397, 4
          %s399 = scalar_lea.vmem %s3, %s398
        $region64: #{transformer_forward.61} parent=59 // pred_fallthru
          _
        // Predicated region
        $region65: #{transformer_forward.61} parent=59 // pred_check
          %p400 = pneg %p155
        $region66: #{transformer_forward.61} parent=59 // pred_check_branch
          %402 = sbr.rel (%p400) target = $region68
        $region67: #{transformer_forward.61} parent=59 // pred_region
          %p403 = scmp.lt.s32.totalorder %s24, 1
          %s404 = scalar_select %p403, %s24, 1
          %s405 = smul.addr %s404, 4
          %s406 = scalar_lea.vmem %s4, %s405
        $region68: #{transformer_forward.61} parent=59 // pred_fallthru
          _
        // Predicated region
        $region69: #{transformer_forward.61} parent=59 // pred_check
          %p407 = pneg %p181
        $region70: #{transformer_forward.61} parent=59 // pred_check_branch
          %409 = sbr.rel (%p407) target = $region72
        $region71: #{transformer_forward.61} parent=59 // pred_region
          %p410 = scmp.lt.s32.totalorder %s24, 1
          %s411 = scalar_select %p410, %s24, 1
          %s412 = smul.addr %s411, 4
          %s413 = scalar_lea.vmem %s5, %s412
        $region72: #{transformer_forward.61} parent=59 // pred_fallthru
          _
      $region60: #{transformer_forward.61} parent=5 // pred_fallthru
        _
    $region6: #{transformer_forward.61} parent=1 // loop_footer
      %s17 = sadd.s32 1, %s13
    $region7: #{transformer_forward.61} parent=1 // loop_footer_branch
      %12 = sbr.rel target = $region3
    $region8: #{transformer_forward.61} parent=1 // loop_exit
      _
    %414 = vsyncpa [#allocation4], 1
    %s415 = scalar_lea.sflag [#allocation4], 1
    %416 = vsyncpa %s415, 1

// kernel: transformer_forward.63
$region0: #{transformer_forward.63}
  #allocation0 [shape = 'u32[]', space=smem, size = 0x4, offset = 0x4, fixed_abs, tag = 'smem constant byte address 0x4 - core index']
  #allocation1 [shape = 'u32[72,128]{1,0:T(1,128)}', space=vmem, size = 0x9000, scoped, tag = 'internal scratch']
  #allocation2 [shape = 'f32[8,32]{1,0:T(8,128)}', space=vmem, size = 0x1000, scoped, tag = 'scratch operand']
  %s0 = inlined_call_operand.vmem [shape: bf16[16,32], index: 0, kind: input, shape index: {}]
  %s1 = inlined_call_operand.vmem [shape: bf16[32,32], index: 1, kind: input, shape index: {}]
  %s2 = inlined_call_operand.hbm [shape: f32[1,32], index: 2, kind: input, shape index: {}]
  %s3 = inlined_call_operand.vmem [shape: bf16[16,32], index: 3, kind: output, shape index: {}]
  %s4 = sld [smem:[#allocation0]]
  $region57: #{transformer_forward.63} parent=0
    _
  %s6 = ssub.s32 1, %s4
  %s7 = scalar_select 0, %s6, %s4
  $region1: #{transformer_forward.63} parent=0
    #allocation3 [shape = 'u8[512]{0}', space=vmem, size = 0x400, scoped, tag = 'input window, operand 2, single buffered']
    #allocation4 [shape = 's32[2]{0}', space=sflag, size = 0x8, scoped, tag = 'scoped memory for transformer_forward.63']
    %8 = vsyncpa [#allocation4], 0
    loop: start=0, step=1, limit=4
    $region2: #{transformer_forward.63} parent=1 // loop_pre_header
      _
    $region3: #{transformer_forward.63} parent=1 // loop_header
      %s10 = sphi 0, %s14
      %p11 = scmp.ge.s32.totalorder %s10, 4
      %s17 = sphi 0, %s36
      %s18 = sphi 0, %s32
      %s19 = sphi 0, %s28
      %s20 = sphi 0, %s17
      %s21 = sphi 0, %s18
      %s22 = sphi 0, %s19
      %s23 = sphi 0, %s20
      %s24 = sphi 0, %s21
      %s25 = sphi 0, %s22
      %s41 = sphi 0, %s43
      %s44 = sphi 0, %s41
      %s45 = sphi 0, %s44
      %s61 = sphi 0, %s45
      %s69 = sphi 0, %s71
      %s72 = sphi 0, %s69
      %s73 = sphi 0, %s72
      %s89 = sphi 0, %s73
      %s95 = sphi 0, %s97
      %s98 = sphi 0, %s95
      %s99 = sphi 0, %s98
      %s115 = sphi 0, %s99
      %s123 = sphi 0, %s125
      %s126 = sphi 0, %s123
      %s127 = sphi 0, %s126
      %s143 = sphi 0, %s127
    $region4: #{transformer_forward.63} parent=1 // loop_header_branch
      %13 = sbr.rel (%p11) target = $region8
    $region5: #{transformer_forward.63} parent=1 // loop_body
      %s15 = ssub.s32 %s10, 1
      %s16 = ssub.s32 %s10, 2
      %s26 = sadd.s32 1, %s19
      %p27 = scmp.ge.s32.totalorder %s26, 1
      %s28 = scalar_select %p27, 0, %s26
      %s29 = sadd.s32 1, %s18
      %s30 = scalar_select %p27, %s29, %s18
      %p31 = scmp.ge.s32.totalorder %s30, 1
      %s32 = scalar_select %p31, 0, %s30
      %s33 = sadd.s32 1, %s17
      %s34 = scalar_select %p31, %s33, %s17
      %p35 = scmp.ge.s32.totalorder %s34, 2
      %s36 = scalar_select %p35, 0, %s34
      %s37 = ssub.s32 %s17, %s36
      %s38 = ssub.s32 %s19, %s28
      %s39 = sor.u32 %s37, %s38
      %p40 = scmp.eq.s32.totalorder %s39, 0
      %s42 = sadd.s32 %s41, 1
      %s43 = scalar_select %p40, %s41, %s42
      %p46 = pneg %p40
      %p47 = scmp.eq.s32.totalorder %s10, 1
      %p48 = por %p46, %p47
      %p49 = scmp.ne.s32.totalorder %s41, %s44
      %p50 = scmp.eq.s32.totalorder %s10, 0
      %p51 = por %p49, %p50
      %p52 = scmp.ne.s32.totalorder %s41, %s44
      %p53 = scmp.eq.s32.totalorder %s15, 1
      %p54 = por %p52, %p53
      %p55 = scmp.ne.s32.totalorder %s44, %s45
      %p56 = scmp.eq.s32.totalorder %s15, 0
      %p57 = por %p55, %p56
      %p58 = scmp.ne.s32.totalorder %s44, %s45
      %p59 = scmp.eq.s32.totalorder %s16, 1
      %p60 = por %p58, %p59
      %p62 = scmp.ne.s32.totalorder %s45, %s61
      %p63 = scmp.eq.s32.totalorder %s16, 0
      %p64 = por %p62, %p63
      %s65 = ssub.s32 %s19, %s28
      %s66 = ssub.s32 %s18, %s32
      %s67 = sor.u32 %s65, %s66
      %p68 = scmp.eq.s32.totalorder %s67, 0
      %s70 = sadd.s32 %s69, 1
      %s71 = scalar_select %p68, %s69, %s70
      %p74 = pneg %p68
      %p75 = scmp.eq.s32.totalorder %s10, 1
      %p76 = por %p74, %p75
      %p77 = scmp.ne.s32.totalorder %s69, %s72
      %p78 = scmp.eq.s32.totalorder %s10, 0
      %p79 = por %p77, %p78
      %p80 = scmp.ne.s32.totalorder %s69, %s72
      %p81 = scmp.eq.s32.totalorder %s15, 1
      %p82 = por %p80, %p81
      %p83 = scmp.ne.s32.totalorder %s72, %s73
      %p84 = scmp.eq.s32.totalorder %s15, 0
      %p85 = por %p83, %p84
      %p86 = scmp.ne.s32.totalorder %s72, %s73
      %p87 = scmp.eq.s32.totalorder %s16, 1
      %p88 = por %p86, %p87
      %p90 = scmp.ne.s32.totalorder %s73, %s89
      %p91 = scmp.eq.s32.totalorder %s16, 0
      %p92 = por %p90, %p91
      %s93 = ssub.s32 %s18, %s32
      %p94 = scmp.eq.s32.totalorder %s93, 0
      %s96 = sadd.s32 %s95, 1
      %s97 = scalar_select %p94, %s95, %s96
      %p100 = pneg %p94
      %p101 = scmp.eq.s32.totalorder %s10, 1
      %p102 = por %p100, %p101
      %p103 = scmp.ne.s32.totalorder %s95, %s98
      %p104 = scmp.eq.s32.totalorder %s10, 0
      %p105 = por %p103, %p104
      %p106 = scmp.ne.s32.totalorder %s95, %s98
      %p107 = scmp.eq.s32.totalorder %s15, 1
      %p108 = por %p106, %p107
      %p109 = scmp.ne.s32.totalorder %s98, %s99
      %p110 = scmp.eq.s32.totalorder %s15, 0
      %p111 = por %p109, %p110
      %p112 = scmp.ne.s32.totalorder %s98, %s99
      %p113 = scmp.eq.s32.totalorder %s16, 1
      %p114 = por %p112, %p113
      %p116 = scmp.ne.s32.totalorder %s99, %s115
      %p117 = scmp.eq.s32.totalorder %s16, 0
      %p118 = por %p116, %p117
      %s119 = ssub.s32 %s17, %s36
      %s120 = ssub.s32 %s18, %s32
      %s121 = sor.u32 %s119, %s120
      %p122 = scmp.eq.s32.totalorder %s121, 0
      %s124 = sadd.s32 %s123, 1
      %s125 = scalar_select %p122, %s123, %s124
      %p128 = pneg %p122
      %p129 = scmp.eq.s32.totalorder %s10, 1
      %p130 = por %p128, %p129
      %p131 = scmp.ne.s32.totalorder %s123, %s126
      %p132 = scmp.eq.s32.totalorder %s10, 0
      %p133 = por %p131, %p132
      %p134 = scmp.ne.s32.totalorder %s123, %s126
      %p135 = scmp.eq.s32.totalorder %s15, 1
      %p136 = por %p134, %p135
      %p137 = scmp.ne.s32.totalorder %s126, %s127
      %p138 = scmp.eq.s32.totalorder %s15, 0
      %p139 = por %p137, %p138
      %p140 = scmp.ne.s32.totalorder %s126, %s127
      %p141 = scmp.eq.s32.totalorder %s16, 1
      %p142 = por %p140, %p141
      %p144 = scmp.ne.s32.totalorder %s127, %s143
      %p145 = scmp.eq.s32.totalorder %s16, 0
      %p146 = por %p144, %p145
      %p147 = scmp.le.s32.totalorder 1, %s10
      %p148 = scmp.lt.s32.totalorder %s10, 3
      %p149 = pnand %p147, %p148
      %p150 = pneg %p149
      // Predicated region
      $region9: #{transformer_forward.63} parent=5 // pred_check
        _
      $region10: #{transformer_forward.63} parent=5 // pred_check_branch
        %152 = sbr.rel (%p149) target = $region12
      $region11: #{transformer_forward.63} parent=5 // pred_region
        %s153 = ssub.s32 %s10, 1
        // Predicated region
        $region13: #{transformer_forward.63} parent=11 // pred_check
          %p154 = pneg %p85
        $region14: #{transformer_forward.63} parent=11 // pred_check_branch
          %156 = sbr.rel (%p154) target = $region16
        $region15: #{transformer_forward.63} parent=11 // pred_region
          %s157 = smul.u32 4, %s22
          %p158 = scmp.lt.s32.totalorder %s157, 3
          %s159 = scalar_select %p158, %s157, 3
          %p160 = scmp.lt.s32.totalorder %s21, 0
          %s161 = scalar_select %p160, %s21, 0
          %s162 = sadd.s32 %s161, %s159
          %s163 = smul.addr %s162, 4
          %s164 = scalar_lea.vmem %s1, %s163
          %s165 = smul.u32 4, %s22
        $region16: #{transformer_forward.63} parent=11 // pred_fallthru
          _
        // Predicated region
        $region17: #{transformer_forward.63} parent=11 // pred_check
          %p166 = pneg %p111
        $region18: #{transformer_forward.63} parent=11 // pred_check_branch
          %168 = sbr.rel (%p166) target = $region20
        $region19: #{transformer_forward.63} parent=11 // pred_region
          %170 = vsyncadd [#allocation4], 0
          %s171 = scalar_lea.hbm %s2, %s21
          %s173 = sshll.u32 %s171, 4
          %s174 = int_to_ptr.hbm [resolvable:$true] %s173
          %s175 = sshll.u32 [#allocation3], 4
          %s176 = int_to_ptr.vmem [resolvable:$true] %s175
          %178 = dma.hbm_to_vmem [thread:$0]  %s174, 16, %s176, [#allocation4]
        $region20: #{transformer_forward.63} parent=11 // pred_fallthru
          _
      $region12: #{transformer_forward.63} parent=5 // pred_fallthru
        _
      %p179 = scmp.lt.s32.totalorder %s10, 2
      // Predicated region
      $region21: #{transformer_forward.63} parent=5 // pred_check
        %p180 = pneg %p179
      $region22: #{transformer_forward.63} parent=5 // pred_check_branch
        %182 = sbr.rel (%p180) target = $region24
      $region23: #{transformer_forward.63} parent=5 // pred_region
        // Predicated region
        $region25: #{transformer_forward.63} parent=23 // pred_check
          %p183 = pneg %p51
        $region26: #{transformer_forward.63} parent=23 // pred_check_branch
          %185 = sbr.rel (%p183) target = $region28
        $region27: #{transformer_forward.63} parent=23 // pred_region
          %p186 = scmp.lt.s32.totalorder %s17, 1
          %s187 = scalar_select %p186, %s17, 1
          %p188 = scmp.lt.s32.totalorder %s19, 0
          %s189 = scalar_select %p188, %s19, 0
          %s190 = sadd.s32 %s189, %s187
          %s191 = smul.addr %s190, 4
          %s192 = scalar_lea.vmem %s0, %s191
        $region28: #{transformer_forward.63} parent=23 // pred_fallthru
          _
      $region24: #{transformer_forward.63} parent=5 // pred_fallthru
        _
      %p193 = scmp.le.s32.totalorder 1, %s10
      %p194 = scmp.lt.s32.totalorder %s10, 3
      %p195 = pnand %p193, %p194
      %p196 = pneg %p195
      // Predicated region
      $region29: #{transformer_forward.63} parent=5 // pred_check
        _
      $region30: #{transformer_forward.63} parent=5 // pred_check_branch
        %198 = sbr.rel (%p195) target = $region32
      $region31: #{transformer_forward.63} parent=5 // pred_region
        %s199 = ssub.s32 %s10, 1
        // Predicated region
        $region33: #{transformer_forward.63} parent=31 // pred_check
          %p200 = pneg %p111
        $region34: #{transformer_forward.63} parent=31 // pred_check_branch
          %202 = sbr.rel (%p200) target = $region36
        $region35: #{transformer_forward.63} parent=31 // pred_region
          %204 = dma.done [#allocation4], 16
        $region36: #{transformer_forward.63} parent=31 // pred_fallthru
          _
        %p205 = scmp.lt.s32.totalorder %s20, 1
        %s206 = scalar_select %p205, %s20, 1
        %p207 = scmp.lt.s32.totalorder %s22, 0
        %s208 = scalar_select %p207, %s22, 0
        %s209 = sadd.s32 %s208, %s206
        %s210 = smul.addr %s209, 4
        %s211 = scalar_lea.vmem %s0, %s210
        %p212 = pneg %p57
        %p213 = pneg %p54
        %s214 = smul.u32 4, %s22
        %p215 = scmp.lt.s32.totalorder %s214, 3
        %s216 = scalar_select %p215, %s214, 3
        %p217 = scmp.lt.s32.totalorder %s21, 0
        %s218 = scalar_select %p217, %s21, 0
        %s219 = sadd.s32 %s218, %s216
        %s220 = smul.addr %s219, 4
        %s221 = scalar_lea.vmem %s1, %s220
        %p222 = pneg %p85
        %p223 = pneg %p82
        %p224 = pneg %p111
        %p225 = pneg %p108
        %p226 = pneg %p139
        %p227 = pneg %p136
        %p228 = scmp.lt.s32.totalorder %s20, 1
        %s229 = scalar_select %p228, %s20, 1
        %p230 = scmp.lt.s32.totalorder %s21, 0
        %s231 = scalar_select %p230, %s21, 0
        %s232 = sadd.s32 %s231, %s229
        %s233 = smul.addr %s232, 4
        %s234 = scalar_lea.vmem %s3, %s233
        %p235 = scmp.lt.s32.totalorder %s20, 1
        %s236 = scalar_select %p235, %s20, 1
        %p237 = scmp.lt.s32.totalorder %s22, 0
        %s238 = scalar_select %p237, %s22, 0
        %s239 = sadd.s32 %s238, %s236
        %s240 = smul.addr %s239, 4
        %s241 = scalar_lea.vmem %s0, %s240
        %s242 = smul.u32 4, %s22
        %p243 = scmp.lt.s32.totalorder %s242, 3
        %s244 = scalar_select %p243, %s242, 3
        %p245 = scmp.lt.s32.totalorder %s21, 0
        %s246 = scalar_select %p245, %s21, 0
        %s247 = sadd.s32 %s246, %s244
        %s248 = smul.addr %s247, 4
        %s249 = scalar_lea.vmem %s1, %s248
        %s250 = smul.u32 4, %s22
        %p251 = scmp.lt.s32.totalorder %s20, 1
        %s252 = scalar_select %p251, %s20, 1
        %p253 = scmp.lt.s32.totalorder %s21, 0
        %s254 = scalar_select %p253, %s21, 0
        %s255 = sadd.s32 %s254, %s252
        %s256 = smul.addr %s255, 4
        %s257 = scalar_lea.vmem %s3, %s256
        %p259 = scmp.eq.s32.totalorder %s22, 0
        // Predicated region
        $region37: #{transformer_forward.63} parent=31 // pred_check
          %p260 = pneg %p259
        $region38: #{transformer_forward.63} parent=31 // pred_check_branch
          %262 = sbr.rel (%p260) target = $region40
        $region39: #{transformer_forward.63} parent=31 // pred_region
          %vm263 = vcmask 261120
          %264 = vst.msk [vmem:[#allocation2] sm:$0xff] %vm263, 0.0
        $region40: #{transformer_forward.63} parent=31 // pred_fallthru
          _
        %v265 = vld [vmem:[#allocation2] sm:$0xff]
        %v266 = vld [vmem:[%s241] sm:$0xf]
        %v267 = vld [vmem:[%s249] sm:$0xf]
        %v268 = vld [vmem:[%s249 + $0x4] sm:$0xf]
        %v269 = vld [vmem:[%s249 + $0x8] sm:$0xf]
        %v270 = vld [vmem:[%s249 + $0xc] sm:$0xf]
        %v275 = vunpack.c.l.b16 %v267
        %v276 = vunpack.c.l.b16 %v268
        %v277 = vunpack.c.l.b16 %v269
        %v278 = vunpack.c.l.b16 %v270
        %v279 = vpack.c.b16 %v276, %v275
        %v280 = vpack.c.b16 %v278, %v277
        %vm283 = vcmask 261120
        %v285 = vsel %vm283, %v266, 0
        %287 = vmatpush.bf16.msra.mxu0 0
        %288 = vmatpush.bf16.msra.mxu0 0
        %289 = vmatpush.bf16.msra.mxu0 0
        %290 = vmatpush.bf16.msra.mxu0 0
        %291 = vmatpush.bf16.msra.mxu0 0
        %292 = vmatpush.bf16.msra.mxu0 0
        %293 = vmatpush.bf16.msra.mxu0 %v280
        %294 = vmatpush.bf16.msra.mxu0 %v279
        %295 = vmatmul.bf16.gmra.mxu0 %v285
        %v296 = vpop.f32.mrf.mxu0
        %v297 = vadd.f32 0.0, %v296
        %v298 = vpop.f32.mrf.mxu0
        %299 = vdwg.mxu0
        %v300 = vadd.f32 %v265, %v297
        %301 = vst.msk [vmem:[#allocation2] sm:$0xff] %vm283, %v300
        // Predicated region
        $region41: #{transformer_forward.63} parent=31 // pred_check
          %p302 = pneg %p259
        $region42: #{transformer_forward.63} parent=31 // pred_check_branch
          %304 = sbr.rel (%p302) target = $region44
        $region43: #{transformer_forward.63} parent=31 // pred_region
          %v305 = vld [vmem:[#allocation2] sm:$0xff]
          %v306 = vld [vmem:[#allocation3] sm:$0x1]
          %v308 = vperm.slane %v306, 0
          %v310 = vadd.f32 %v305, %v308
          %v311 = vpack.c.bf16 %v310, %v310
          %vm312 = vcmask 257024
          %313 = vst.msk [vmem:[%s257] sm:$0xf] %vm312, %v311
        $region44: #{transformer_forward.63} parent=31 // pred_fallthru
          _
        %p314 = scmp.lt.s32.totalorder %s20, 1
        %s315 = scalar_select %p314, %s20, 1
        %p316 = scmp.lt.s32.totalorder %s21, 0
        %s317 = scalar_select %p316, %s21, 0
        %s318 = sadd.s32 %s317, %s315
        %s319 = smul.addr %s318, 4
        %s320 = scalar_lea.vmem %s3, %s319
        // Predicated region
        $region45: #{transformer_forward.63} parent=31 // pred_check
          %p321 = pneg %p136
        $region46: #{transformer_forward.63} parent=31 // pred_check_branch
          %323 = sbr.rel (%p321) target = $region48
        $region47: #{transformer_forward.63} parent=31 // pred_region
          _
        $region48: #{transformer_forward.63} parent=31 // pred_fallthru
          _
      $region32: #{transformer_forward.63} parent=5 // pred_fallthru
        _
      %p324 = scmp.le.s32.totalorder 2, %s10
      // Predicated region
      $region49: #{transformer_forward.63} parent=5 // pred_check
        %p325 = pneg %p324
      $region50: #{transformer_forward.63} parent=5 // pred_check_branch
        %327 = sbr.rel (%p325) target = $region52
      $region51: #{transformer_forward.63} parent=5 // pred_region
        %s328 = ssub.s32 %s10, 2
        // Predicated region
        $region53: #{transformer_forward.63} parent=51 // pred_check
          %p329 = pneg %p142
        $region54: #{transformer_forward.63} parent=51 // pred_check_branch
          %331 = sbr.rel (%p329) target = $region56
        $region55: #{transformer_forward.63} parent=51 // pred_region
          %p332 = scmp.lt.s32.totalorder %s23, 1
          %s333 = scalar_select %p332, %s23, 1
          %p334 = scmp.lt.s32.totalorder %s24, 0
          %s335 = scalar_select %p334, %s24, 0
          %s336 = sadd.s32 %s335, %s333
          %s337 = smul.addr %s336, 4
          %s338 = scalar_lea.vmem %s3, %s337
        $region56: #{transformer_forward.63} parent=51 // pred_fallthru
          _
      $region52: #{transformer_forward.63} parent=5 // pred_fallthru
        _
    $region6: #{transformer_forward.63} parent=1 // loop_footer
      %s14 = sadd.s32 1, %s10
    $region7: #{transformer_forward.63} parent=1 // loop_footer_branch
      %9 = sbr.rel target = $region3
    $region8: #{transformer_forward.63} parent=1 // loop_exit
      _
    %339 = vsyncpa [#allocation4], 1
    %s340 = scalar_lea.sflag [#allocation4], 1
    %341 = vsyncpa %s340, 1

// kernel: transformer_forward.66
$region0: #{transformer_forward.66}
  #allocation0 [shape = 'u32[]', space=smem, size = 0x4, offset = 0x4, fixed_abs, tag = 'smem constant byte address 0x4 - core index']
  #allocation1 [shape = 'u32[72,128]{1,0:T(1,128)}', space=vmem, size = 0x9000, scoped, tag = 'internal scratch']
  #allocation2 [shape = 'f32[8,64]{1,0:T(8,128)}', space=vmem, size = 0x1000, scoped, tag = 'scratch operand']
  %s0 = inlined_call_operand.vmem [shape: bf16[16,32], index: 0, kind: input, shape index: {}]
  %s1 = inlined_call_operand.vmem [shape: bf16[32,64], index: 1, kind: input, shape index: {}]
  %s2 = inlined_call_operand.hbm [shape: f32[1,64], index: 2, kind: input, shape index: {}]
  %s3 = inlined_call_operand.vmem [shape: bf16[16,32], index: 3, kind: output, shape index: {0}]
  %s4 = inlined_call_operand.vmem [shape: bf16[16,32], index: 4, kind: output, shape index: {1}]
  %5 = xla_tuple %s3, %s4
  %s6 = sld [smem:[#allocation0]]
  $region65: #{transformer_forward.66} parent=0
    _
  %s8 = ssub.s32 1, %s6
  %s9 = scalar_select 0, %s8, %s6
  $region1: #{transformer_forward.66} parent=0
    #allocation3 [shape = 'u8[512]{0}', space=vmem, size = 0x400, scoped, tag = 'input window, operand 2, single buffered']
    #allocation4 [shape = 's32[2]{0}', space=sflag, size = 0x8, scoped, tag = 'scoped memory for transformer_forward.66']
    %10 = vsyncpa [#allocation4], 0
    loop: start=0, step=1, limit=4
    $region2: #{transformer_forward.66} parent=1 // loop_pre_header
      _
    $region3: #{transformer_forward.66} parent=1 // loop_header
      %s12 = sphi 0, %s16
      %p13 = scmp.ge.s32.totalorder %s12, 4
      %s19 = sphi 0, %s31
      %s20 = sphi 0, %s27
      %s21 = sphi 0, %s19
      %s22 = sphi 0, %s20
      %s23 = sphi 0, %s21
      %s24 = sphi 0, %s22
      %s36 = sphi 0, %s38
      %s39 = sphi 0, %s36
      %s40 = sphi 0, %s39
      %s56 = sphi 0, %s40
      %s62 = sphi 0, %s64
      %s65 = sphi 0, %s62
      %s66 = sphi 0, %s65
      %s82 = sphi 0, %s66
      %s86 = sphi 0, %s86
      %s88 = sphi 0, %s86
      %s89 = sphi 0, %s88
      %s103 = sphi 0, %s89
      %s109 = sphi 0, %s111
      %s112 = sphi 0, %s109
      %s113 = sphi 0, %s112
      %s129 = sphi 0, %s113
      %s135 = sphi 0, %s137
      %s138 = sphi 0, %s135
      %s139 = sphi 0, %s138
      %s155 = sphi 0, %s139
    $region4: #{transformer_forward.66} parent=1 // loop_header_branch
      %15 = sbr.rel (%p13) target = $region8
    $region5: #{transformer_forward.66} parent=1 // loop_body
      %s17 = ssub.s32 %s12, 1
      %s18 = ssub.s32 %s12, 2
      %s25 = sadd.s32 1, %s20
      %p26 = scmp.ge.s32.totalorder %s25, 1
      %s27 = scalar_select %p26, 0, %s25
      %s28 = sadd.s32 1, %s19
      %s29 = scalar_select %p26, %s28, %s19
      %p30 = scmp.ge.s32.totalorder %s29, 2
      %s31 = scalar_select %p30, 0, %s29
      %s32 = ssub.s32 %s19, %s31
      %s33 = ssub.s32 %s20, %s27
      %s34 = sor.u32 %s32, %s33
      %p35 = scmp.eq.s32.totalorder %s34, 0
      %s37 = sadd.s32 %s36, 1
      %s38 = scalar_select %p35, %s36, %s37
      %p41 = pneg %p35
      %p42 = scmp.eq.s32.totalorder %s12, 1
      %p43 = por %p41, %p42
      %p44 = scmp.ne.s32.totalorder %s36, %s39
      %p45 = scmp.eq.s32.totalorder %s12, 0
      %p46 = por %p44, %p45
      %p47 = scmp.ne.s32.totalorder %s36, %s39
      %p48 = scmp.eq.s32.totalorder %s17, 1
      %p49 = por %p47, %p48
      %p50 = scmp.ne.s32.totalorder %s39, %s40
      %p51 = scmp.eq.s32.totalorder %s17, 0
      %p52 = por %p50, %p51
      %p53 = scmp.ne.s32.totalorder %s39, %s40
      %p54 = scmp.eq.s32.totalorder %s18, 1
      %p55 = por %p53, %p54
      %p57 = scmp.ne.s32.totalorder %s40, %s56
      %p58 = scmp.eq.s32.totalorder %s18, 0
      %p59 = por %p57, %p58
      %s60 = ssub.s32 %s20, %s27
      %p61 = scmp.eq.s32.totalorder %s60, 0
      %s63 = sadd.s32 %s62, 1
      %s64 = scalar_select %p61, %s62, %s63
      %p67 = pneg %p61
      %p68 = scmp.eq.s32.totalorder %s12, 1
      %p69 = por %p67, %p68
      %p70 = scmp.ne.s32.totalorder %s62, %s65
      %p71 = scmp.eq.s32.totalorder %s12, 0
      %p72 = por %p70, %p71
      %p73 = scmp.ne.s32.totalorder %s62, %s65
      %p74 = scmp.eq.s32.totalorder %s17, 1
      %p75 = por %p73, %p74
      %p76 = scmp.ne.s32.totalorder %s65, %s66
      %p77 = scmp.eq.s32.totalorder %s17, 0
      %p78 = por %p76, %p77
      %p79 = scmp.ne.s32.totalorder %s65, %s66
      %p80 = scmp.eq.s32.totalorder %s18, 1
      %p81 = por %p79, %p80
      %p83 = scmp.ne.s32.totalorder %s66, %s82
      %p84 = scmp.eq.s32.totalorder %s18, 0
      %p85 = por %p83, %p84
      %s87 = sadd.s32 %s86, 1
      %p90 = scmp.eq.s32.totalorder %s12, 1
      %p91 = scmp.ne.s32.totalorder %s86, %s88
      %p92 = scmp.eq.s32.totalorder %s12, 0
      %p93 = por %p91, %p92
      %p94 = scmp.ne.s32.totalorder %s86, %s88
      %p95 = scmp.eq.s32.totalorder %s17, 1
      %p96 = por %p94, %p95
      %p97 = scmp.ne.s32.totalorder %s88, %s89
      %p98 = scmp.eq.s32.totalorder %s17, 0
      %p99 = por %p97, %p98
      %p100 = scmp.ne.s32.totalorder %s88, %s89
      %p101 = scmp.eq.s32.totalorder %s18, 1
      %p102 = por %p100, %p101
      %p104 = scmp.ne.s32.totalorder %s89, %s103
      %p105 = scmp.eq.s32.totalorder %s18, 0
      %p106 = por %p104, %p105
      %s107 = ssub.s32 %s19, %s31
      %p108 = scmp.eq.s32.totalorder %s107, 0
      %s110 = sadd.s32 %s109, 1
      %s111 = scalar_select %p108, %s109, %s110
      %p114 = pneg %p108
      %p115 = scmp.eq.s32.totalorder %s12, 1
      %p116 = por %p114, %p115
      %p117 = scmp.ne.s32.totalorder %s109, %s112
      %p118 = scmp.eq.s32.totalorder %s12, 0
      %p119 = por %p117, %p118
      %p120 = scmp.ne.s32.totalorder %s109, %s112
      %p121 = scmp.eq.s32.totalorder %s17, 1
      %p122 = por %p120, %p121
      %p123 = scmp.ne.s32.totalorder %s112, %s113
      %p124 = scmp.eq.s32.totalorder %s17, 0
      %p125 = por %p123, %p124
      %p126 = scmp.ne.s32.totalorder %s112, %s113
      %p127 = scmp.eq.s32.totalorder %s18, 1
      %p128 = por %p126, %p127
      %p130 = scmp.ne.s32.totalorder %s113, %s129
      %p131 = scmp.eq.s32.totalorder %s18, 0
      %p132 = por %p130, %p131
      %s133 = ssub.s32 %s19, %s31
      %p134 = scmp.eq.s32.totalorder %s133, 0
      %s136 = sadd.s32 %s135, 1
      %s137 = scalar_select %p134, %s135, %s136
      %p140 = pneg %p134
      %p141 = scmp.eq.s32.totalorder %s12, 1
      %p142 = por %p140, %p141
      %p143 = scmp.ne.s32.totalorder %s135, %s138
      %p144 = scmp.eq.s32.totalorder %s12, 0
      %p145 = por %p143, %p144
      %p146 = scmp.ne.s32.totalorder %s135, %s138
      %p147 = scmp.eq.s32.totalorder %s17, 1
      %p148 = por %p146, %p147
      %p149 = scmp.ne.s32.totalorder %s138, %s139
      %p150 = scmp.eq.s32.totalorder %s17, 0
      %p151 = por %p149, %p150
      %p152 = scmp.ne.s32.totalorder %s138, %s139
      %p153 = scmp.eq.s32.totalorder %s18, 1
      %p154 = por %p152, %p153
      %p156 = scmp.ne.s32.totalorder %s139, %s155
      %p157 = scmp.eq.s32.totalorder %s18, 0
      %p158 = por %p156, %p157
      %p159 = scmp.le.s32.totalorder 1, %s12
      %p160 = scmp.lt.s32.totalorder %s12, 3
      %p161 = pnand %p159, %p160
      %p162 = pneg %p161
      // Predicated region
      $region9: #{transformer_forward.66} parent=5 // pred_check
        _
      $region10: #{transformer_forward.66} parent=5 // pred_check_branch
        %164 = sbr.rel (%p161) target = $region12
      $region11: #{transformer_forward.66} parent=5 // pred_region
        %s165 = ssub.s32 %s12, 1
        // Predicated region
        $region13: #{transformer_forward.66} parent=11 // pred_check
          %p166 = pneg %p78
        $region14: #{transformer_forward.66} parent=11 // pred_check_branch
          %168 = sbr.rel (%p166) target = $region16
        $region15: #{transformer_forward.66} parent=11 // pred_region
          %s169 = smul.u32 4, %s22
          %p170 = scmp.lt.s32.totalorder %s169, 3
          %s171 = scalar_select %p170, %s169, 3
          %s172 = smul.addr %s171, 4
          %s173 = scalar_lea.vmem %s1, %s172
          %s174 = smul.u32 4, %s22
        $region16: #{transformer_forward.66} parent=11 // pred_fallthru
          _
        // Predicated region
        $region17: #{transformer_forward.66} parent=11 // pred_check
          %p175 = pneg %p99
        $region18: #{transformer_forward.66} parent=11 // pred_check_branch
          %177 = sbr.rel (%p175) target = $region20
        $region19: #{transformer_forward.66} parent=11 // pred_region
          %179 = vsyncadd [#allocation4], 0
          %s181 = sshll.u32 %s2, 4
          %s182 = int_to_ptr.hbm [resolvable:$true] %s181
          %s183 = sshll.u32 [#allocation3], 4
          %s184 = int_to_ptr.vmem [resolvable:$true] %s183
          %186 = dma.hbm_to_vmem [thread:$0]  %s182, 16, %s184, [#allocation4]
        $region20: #{transformer_forward.66} parent=11 // pred_fallthru
          _
      $region12: #{transformer_forward.66} parent=5 // pred_fallthru
        _
      %p187 = scmp.lt.s32.totalorder %s12, 2
      // Predicated region
      $region21: #{transformer_forward.66} parent=5 // pred_check
        %p188 = pneg %p187
      $region22: #{transformer_forward.66} parent=5 // pred_check_branch
        %190 = sbr.rel (%p188) target = $region24
      $region23: #{transformer_forward.66} parent=5 // pred_region
        // Predicated region
        $region25: #{transformer_forward.66} parent=23 // pred_check
          %p191 = pneg %p46
        $region26: #{transformer_forward.66} parent=23 // pred_check_branch
          %193 = sbr.rel (%p191) target = $region28
        $region27: #{transformer_forward.66} parent=23 // pred_region
          %p194 = scmp.lt.s32.totalorder %s19, 1
          %s195 = scalar_select %p194, %s19, 1
          %p196 = scmp.lt.s32.totalorder %s20, 0
          %s197 = scalar_select %p196, %s20, 0
          %s198 = sadd.s32 %s197, %s195
          %s199 = smul.addr %s198, 4
          %s200 = scalar_lea.vmem %s0, %s199
        $region28: #{transformer_forward.66} parent=23 // pred_fallthru
          _
      $region24: #{transformer_forward.66} parent=5 // pred_fallthru
        _
      %p201 = scmp.le.s32.totalorder 1, %s12
      %p202 = scmp.lt.s32.totalorder %s12, 3
      %p203 = pnand %p201, %p202
      %p204 = pneg %p203
      // Predicated region
      $region29: #{transformer_forward.66} parent=5 // pred_check
        _
      $region30: #{transformer_forward.66} parent=5 // pred_check_branch
        %206 = sbr.rel (%p203) target = $region32
      $region31: #{transformer_forward.66} parent=5 // pred_region
        %s207 = ssub.s32 %s12, 1
        // Predicated region
        $region33: #{transformer_forward.66} parent=31 // pred_check
          %p208 = pneg %p99
        $region34: #{transformer_forward.66} parent=31 // pred_check_branch
          %210 = sbr.rel (%p208) target = $region36
        $region35: #{transformer_forward.66} parent=31 // pred_region
          %212 = dma.done [#allocation4], 16
        $region36: #{transformer_forward.66} parent=31 // pred_fallthru
          _
        %p213 = scmp.lt.s32.totalorder %s21, 1
        %s214 = scalar_select %p213, %s21, 1
        %p215 = scmp.lt.s32.totalorder %s22, 0
        %s216 = scalar_select %p215, %s22, 0
        %s217 = sadd.s32 %s216, %s214
        %s218 = smul.addr %s217, 4
        %s219 = scalar_lea.vmem %s0, %s218
        %p220 = pneg %p52
        %p221 = pneg %p49
        %s222 = smul.u32 4, %s22
        %p223 = scmp.lt.s32.totalorder %s222, 3
        %s224 = scalar_select %p223, %s222, 3
        %s225 = smul.addr %s224, 4
        %s226 = scalar_lea.vmem %s1, %s225
        %p227 = pneg %p78
        %p228 = pneg %p75
        %p229 = pneg %p99
        %p230 = pneg %p96
        %p231 = pneg %p125
        %p232 = pneg %p122
        %p233 = scmp.lt.s32.totalorder %s21, 1
        %s234 = scalar_select %p233, %s21, 1
        %s235 = smul.addr %s234, 4
        %s236 = scalar_lea.vmem %s3, %s235
        %p237 = pneg %p151
        %p238 = pneg %p148
        %p239 = scmp.lt.s32.totalorder %s21, 1
        %s240 = scalar_select %p239, %s21, 1
        %s241 = smul.addr %s240, 4
        %s242 = scalar_lea.vmem %s4, %s241
        %p243 = scmp.lt.s32.totalorder %s21, 1
        %s244 = scalar_select %p243, %s21, 1
        %p245 = scmp.lt.s32.totalorder %s22, 0
        %s246 = scalar_select %p245, %s22, 0
        %s247 = sadd.s32 %s246, %s244
        %s248 = smul.addr %s247, 4
        %s249 = scalar_lea.vmem %s0, %s248
        %s250 = smul.u32 4, %s22
        %p251 = scmp.lt.s32.totalorder %s250, 3
        %s252 = scalar_select %p251, %s250, 3
        %s253 = smul.addr %s252, 4
        %s254 = scalar_lea.vmem %s1, %s253
        %s255 = smul.u32 4, %s22
        %p256 = scmp.lt.s32.totalorder %s21, 1
        %s257 = scalar_select %p256, %s21, 1
        %s258 = smul.addr %s257, 4
        %s259 = scalar_lea.vmem %s3, %s258
        %p260 = scmp.lt.s32.totalorder %s21, 1
        %s261 = scalar_select %p260, %s21, 1
        %s262 = smul.addr %s261, 4
        %s263 = scalar_lea.vmem %s4, %s262
        %p265 = scmp.eq.s32.totalorder %s22, 0
        // Predicated region
        $region37: #{transformer_forward.66} parent=31 // pred_check
          %p266 = pneg %p265
        $region38: #{transformer_forward.66} parent=31 // pred_check_branch
          %268 = sbr.rel (%p266) target = $region40
        $region39: #{transformer_forward.66} parent=31 // pred_region
          %vm269 = vcmask 523264
          %270 = vst.msk [vmem:[#allocation2] sm:$0xff] %vm269, 0.0
        $region40: #{transformer_forward.66} parent=31 // pred_fallthru
          _
        %v271 = vld [vmem:[#allocation2] sm:$0xff]
        %v272 = vld [vmem:[%s249] sm:$0xf]
        %v273 = vld [vmem:[%s254] sm:$0xf]
        %v274 = vld [vmem:[%s254 + $0x4] sm:$0xf]
        %v275 = vld [vmem:[%s254 + $0x8] sm:$0xf]
        %v276 = vld [vmem:[%s254 + $0xc] sm:$0xf]
        %v281 = vunpack.c.l.b16 %v273
        %v282 = vunpack.c.l.b16 %v274
        %v283 = vunpack.c.l.b16 %v275
        %v284 = vunpack.c.l.b16 %v276
        %v285 = vpack.c.b16 %v282, %v281
        %v286 = vpack.c.b16 %v284, %v283
        %vm289 = vcmask 261120
        %v291 = vsel %vm289, %v272, 0
        %293 = vmatpush.bf16.msra.mxu0 0
        %294 = vmatpush.bf16.msra.mxu0 0
        %295 = vmatpush.bf16.msra.mxu0 0
        %296 = vmatpush.bf16.msra.mxu0 0
        %297 = vmatpush.bf16.msra.mxu0 0
        %298 = vmatpush.bf16.msra.mxu0 0
        %299 = vmatpush.bf16.msra.mxu0 %v286
        %300 = vmatpush.bf16.msra.mxu0 %v285
        %301 = vmatmul.bf16.gmra.mxu0 %v291
        %v302 = vpop.f32.mrf.mxu0
        %v303 = vadd.f32 0.0, %v302
        %v304 = vpop.f32.mrf.mxu0
        %305 = vdwg.mxu0
        %v306 = vadd.f32 %v271, %v303
        %vm307 = vcmask 523264
        %308 = vst.msk [vmem:[#allocation2] sm:$0xff] %vm307, %v306
        // Predicated region
        $region41: #{transformer_forward.66} parent=31 // pred_check
          %p309 = pneg %p265
        $region42: #{transformer_forward.66} parent=31 // pred_check_branch
          %311 = sbr.rel (%p309) target = $region44
        $region43: #{transformer_forward.66} parent=31 // pred_region
          %v312 = vld [vmem:[#allocation2] sm:$0xff]
          %v313 = vld [vmem:[#allocation3] sm:$0x1]
          %v315 = vperm.slane %v313, 0
          %v317 = vadd.f32 %v312, %v315
          %v318 = vpack.c.bf16 %v317, %v317
          %vm319 = vcmask 257024
          %320 = vst.msk [vmem:[%s259] sm:$0xf] %vm319, %v318
          %322 = vrot.lane.b32.xlu0 %v318, 96
          %v323 = vpop.permute.xlu0 %322
          %325 = vst.msk [vmem:[%s263] sm:$0xf] %vm319, %v323
        $region44: #{transformer_forward.66} parent=31 // pred_fallthru
          _
        %p326 = scmp.lt.s32.totalorder %s21, 1
        %s327 = scalar_select %p326, %s21, 1
        %s328 = smul.addr %s327, 4
        %s329 = scalar_lea.vmem %s3, %s328
        %p330 = scmp.lt.s32.totalorder %s21, 1
        %s331 = scalar_select %p330, %s21, 1
        %s332 = smul.addr %s331, 4
        %s333 = scalar_lea.vmem %s4, %s332
        // Predicated region
        $region45: #{transformer_forward.66} parent=31 // pred_check
          %p334 = pneg %p122
        $region46: #{transformer_forward.66} parent=31 // pred_check_branch
          %336 = sbr.rel (%p334) target = $region48
        $region47: #{transformer_forward.66} parent=31 // pred_region
          _
        $region48: #{transformer_forward.66} parent=31 // pred_fallthru
          _
        // Predicated region
        $region49: #{transformer_forward.66} parent=31 // pred_check
          %p337 = pneg %p148
        $region50: #{transformer_forward.66} parent=31 // pred_check_branch
          %339 = sbr.rel (%p337) target = $region52
        $region51: #{transformer_forward.66} parent=31 // pred_region
          _
        $region52: #{transformer_forward.66} parent=31 // pred_fallthru
          _
      $region32: #{transformer_forward.66} parent=5 // pred_fallthru
        _
      %p340 = scmp.le.s32.totalorder 2, %s12
      // Predicated region
      $region53: #{transformer_forward.66} parent=5 // pred_check
        %p341 = pneg %p340
      $region54: #{transformer_forward.66} parent=5 // pred_check_branch
        %343 = sbr.rel (%p341) target = $region56
      $region55: #{transformer_forward.66} parent=5 // pred_region
        %s344 = ssub.s32 %s12, 2
        // Predicated region
        $region57: #{transformer_forward.66} parent=55 // pred_check
          %p345 = pneg %p128
        $region58: #{transformer_forward.66} parent=55 // pred_check_branch
          %347 = sbr.rel (%p345) target = $region60
        $region59: #{transformer_forward.66} parent=55 // pred_region
          %p348 = scmp.lt.s32.totalorder %s23, 1
          %s349 = scalar_select %p348, %s23, 1
          %s350 = smul.addr %s349, 4
          %s351 = scalar_lea.vmem %s3, %s350
        $region60: #{transformer_forward.66} parent=55 // pred_fallthru
          _
        // Predicated region
        $region61: #{transformer_forward.66} parent=55 // pred_check
          %p352 = pneg %p154
        $region62: #{transformer_forward.66} parent=55 // pred_check_branch
          %354 = sbr.rel (%p352) target = $region64
        $region63: #{transformer_forward.66} parent=55 // pred_region
          %p355 = scmp.lt.s32.totalorder %s23, 1
          %s356 = scalar_select %p355, %s23, 1
          %s357 = smul.addr %s356, 4
          %s358 = scalar_lea.vmem %s4, %s357
        $region64: #{transformer_forward.66} parent=55 // pred_fallthru
          _
      $region56: #{transformer_forward.66} parent=5 // pred_fallthru
        _
    $region6: #{transformer_forward.66} parent=1 // loop_footer
      %s16 = sadd.s32 1, %s12
    $region7: #{transformer_forward.66} parent=1 // loop_footer_branch
      %11 = sbr.rel target = $region3
    $region8: #{transformer_forward.66} parent=1 // loop_exit
      _
    %359 = vsyncpa [#allocation4], 1
    %s360 = scalar_lea.sflag [#allocation4], 1
    %361 = vsyncpa %s360, 1

// kernel: transformer_forward.73
$region0: #{transformer_forward.73}
  #allocation0 [shape = 'u32[]', space=smem, size = 0x4, offset = 0x4, fixed_abs, tag = 'smem constant byte address 0x4 - core index']
  #allocation1 [shape = 'u32[72,128]{1,0:T(1,128)}', space=vmem, size = 0x9000, scoped, tag = 'internal scratch']
  #allocation2 [shape = 'f32[8,16]{1,0:T(8,128)}', space=vmem, size = 0x1000, scoped, tag = 'scratch operand']
  %s0 = inlined_call_operand.vmem [shape: bf16[16,32], index: 0, kind: input, shape index: {}]
  %s1 = inlined_call_operand.vmem [shape: bf16[32,16], index: 1, kind: input, shape index: {}]
  %s2 = inlined_call_operand.vmem [shape: f32[1,16], index: 2, kind: input, shape index: {}]
  %s3 = inlined_call_operand.hbm [shape: f32[16,16], index: 3, kind: output, shape index: {}]
  %s4 = sld [smem:[#allocation0]]
  $region53: #{transformer_forward.73} parent=0
    _
  %s6 = ssub.s32 1, %s4
  %s7 = scalar_select 0, %s6, %s4
  $region1: #{transformer_forward.73} parent=0
    #allocation3 [shape = 'u8[8192]{0}', space=vmem, size = 0x2000, scoped, tag = 'output window, operand 0']
    #allocation4 [shape = 's32[2]{0}', space=sflag, size = 0x8, scoped, tag = 'scoped memory for transformer_forward.73']
    %8 = vsyncpa [#allocation4], 0
    %s9 = scalar_lea.sflag [#allocation4], 1
    %10 = vsyncpa %s9, 0
    loop: start=0, step=1, limit=4
    $region2: #{transformer_forward.73} parent=1 // loop_pre_header
      _
    $region3: #{transformer_forward.73} parent=1 // loop_header
      %s12 = sphi 0, %s16
      %p13 = scmp.ge.s32.totalorder %s12, 4
      %s19 = sphi 0, %s38
      %s20 = sphi 0, %s34
      %s21 = sphi 0, %s30
      %s22 = sphi 0, %s19
      %s23 = sphi 0, %s20
      %s24 = sphi 0, %s21
      %s25 = sphi 0, %s22
      %s26 = sphi 0, %s23
      %s27 = sphi 0, %s24
      %s43 = sphi 0, %s45
      %s46 = sphi 0, %s43
      %s47 = sphi 0, %s46
      %s63 = sphi 0, %s47
      %s71 = sphi 0, %s73
      %s74 = sphi 0, %s71
      %s75 = sphi 0, %s74
      %s91 = sphi 0, %s75
      %s97 = sphi 0, %s99
      %s100 = sphi 0, %s97
      %s101 = sphi 0, %s100
      %s117 = sphi 0, %s101
      %s125 = sphi 0, %s127
      %s128 = sphi 0, %s125
      %s129 = sphi 0, %s128
      %s145 = sphi 0, %s129
    $region4: #{transformer_forward.73} parent=1 // loop_header_branch
      %15 = sbr.rel (%p13) target = $region8
    $region5: #{transformer_forward.73} parent=1 // loop_body
      %s17 = ssub.s32 %s12, 1
      %s18 = ssub.s32 %s12, 2
      %s28 = sadd.s32 1, %s21
      %p29 = scmp.ge.s32.totalorder %s28, 1
      %s30 = scalar_select %p29, 0, %s28
      %s31 = sadd.s32 1, %s20
      %s32 = scalar_select %p29, %s31, %s20
      %p33 = scmp.ge.s32.totalorder %s32, 1
      %s34 = scalar_select %p33, 0, %s32
      %s35 = sadd.s32 1, %s19
      %s36 = scalar_select %p33, %s35, %s19
      %p37 = scmp.ge.s32.totalorder %s36, 2
      %s38 = scalar_select %p37, 0, %s36
      %s39 = ssub.s32 %s19, %s38
      %s40 = ssub.s32 %s21, %s30
      %s41 = sor.u32 %s39, %s40
      %p42 = scmp.eq.s32.totalorder %s41, 0
      %s44 = sadd.s32 %s43, 1
      %s45 = scalar_select %p42, %s43, %s44
      %p48 = pneg %p42
      %p49 = scmp.eq.s32.totalorder %s12, 1
      %p50 = por %p48, %p49
      %p51 = scmp.ne.s32.totalorder %s43, %s46
      %p52 = scmp.eq.s32.totalorder %s12, 0
      %p53 = por %p51, %p52
      %p54 = scmp.ne.s32.totalorder %s43, %s46
      %p55 = scmp.eq.s32.totalorder %s17, 1
      %p56 = por %p54, %p55
      %p57 = scmp.ne.s32.totalorder %s46, %s47
      %p58 = scmp.eq.s32.totalorder %s17, 0
      %p59 = por %p57, %p58
      %p60 = scmp.ne.s32.totalorder %s46, %s47
      %p61 = scmp.eq.s32.totalorder %s18, 1
      %p62 = por %p60, %p61
      %p64 = scmp.ne.s32.totalorder %s47, %s63
      %p65 = scmp.eq.s32.totalorder %s18, 0
      %p66 = por %p64, %p65
      %s67 = ssub.s32 %s21, %s30
      %s68 = ssub.s32 %s20, %s34
      %s69 = sor.u32 %s67, %s68
      %p70 = scmp.eq.s32.totalorder %s69, 0
      %s72 = sadd.s32 %s71, 1
      %s73 = scalar_select %p70, %s71, %s72
      %p76 = pneg %p70
      %p77 = scmp.eq.s32.totalorder %s12, 1
      %p78 = por %p76, %p77
      %p79 = scmp.ne.s32.totalorder %s71, %s74
      %p80 = scmp.eq.s32.totalorder %s12, 0
      %p81 = por %p79, %p80
      %p82 = scmp.ne.s32.totalorder %s71, %s74
      %p83 = scmp.eq.s32.totalorder %s17, 1
      %p84 = por %p82, %p83
      %p85 = scmp.ne.s32.totalorder %s74, %s75
      %p86 = scmp.eq.s32.totalorder %s17, 0
      %p87 = por %p85, %p86
      %p88 = scmp.ne.s32.totalorder %s74, %s75
      %p89 = scmp.eq.s32.totalorder %s18, 1
      %p90 = por %p88, %p89
      %p92 = scmp.ne.s32.totalorder %s75, %s91
      %p93 = scmp.eq.s32.totalorder %s18, 0
      %p94 = por %p92, %p93
      %s95 = ssub.s32 %s20, %s34
      %p96 = scmp.eq.s32.totalorder %s95, 0
      %s98 = sadd.s32 %s97, 1
      %s99 = scalar_select %p96, %s97, %s98
      %p102 = pneg %p96
      %p103 = scmp.eq.s32.totalorder %s12, 1
      %p104 = por %p102, %p103
      %p105 = scmp.ne.s32.totalorder %s97, %s100
      %p106 = scmp.eq.s32.totalorder %s12, 0
      %p107 = por %p105, %p106
      %p108 = scmp.ne.s32.totalorder %s97, %s100
      %p109 = scmp.eq.s32.totalorder %s17, 1
      %p110 = por %p108, %p109
      %p111 = scmp.ne.s32.totalorder %s100, %s101
      %p112 = scmp.eq.s32.totalorder %s17, 0
      %p113 = por %p111, %p112
      %p114 = scmp.ne.s32.totalorder %s100, %s101
      %p115 = scmp.eq.s32.totalorder %s18, 1
      %p116 = por %p114, %p115
      %p118 = scmp.ne.s32.totalorder %s101, %s117
      %p119 = scmp.eq.s32.totalorder %s18, 0
      %p120 = por %p118, %p119
      %s121 = ssub.s32 %s19, %s38
      %s122 = ssub.s32 %s20, %s34
      %s123 = sor.u32 %s121, %s122
      %p124 = scmp.eq.s32.totalorder %s123, 0
      %s126 = sadd.s32 %s125, 1
      %s127 = scalar_select %p124, %s125, %s126
      %p130 = pneg %p124
      %p131 = scmp.eq.s32.totalorder %s12, 1
      %p132 = por %p130, %p131
      %p133 = scmp.ne.s32.totalorder %s125, %s128
      %p134 = scmp.eq.s32.totalorder %s12, 0
      %p135 = por %p133, %p134
      %p136 = scmp.ne.s32.totalorder %s125, %s128
      %p137 = scmp.eq.s32.totalorder %s17, 1
      %p138 = por %p136, %p137
      %p139 = scmp.ne.s32.totalorder %s128, %s129
      %p140 = scmp.eq.s32.totalorder %s17, 0
      %p141 = por %p139, %p140
      %p142 = scmp.ne.s32.totalorder %s128, %s129
      %p143 = scmp.eq.s32.totalorder %s18, 1
      %p144 = por %p142, %p143
      %p146 = scmp.ne.s32.totalorder %s129, %s145
      %p147 = scmp.eq.s32.totalorder %s18, 0
      %p148 = por %p146, %p147
      %p149 = scmp.le.s32.totalorder 1, %s12
      %p150 = scmp.lt.s32.totalorder %s12, 3
      %p151 = pnand %p149, %p150
      %p152 = pneg %p151
      // Predicated region
      $region9: #{transformer_forward.73} parent=5 // pred_check
        _
      $region10: #{transformer_forward.73} parent=5 // pred_check_branch
        %154 = sbr.rel (%p151) target = $region12
      $region11: #{transformer_forward.73} parent=5 // pred_region
        %s155 = ssub.s32 %s12, 1
        // Predicated region
        $region13: #{transformer_forward.73} parent=11 // pred_check
          %p156 = pneg %p87
        $region14: #{transformer_forward.73} parent=11 // pred_check_branch
          %158 = sbr.rel (%p156) target = $region16
        $region15: #{transformer_forward.73} parent=11 // pred_region
          %s159 = smul.u32 4, %s24
          %p160 = scmp.lt.s32.totalorder %s159, 3
          %s161 = scalar_select %p160, %s159, 3
          %p162 = scmp.lt.s32.totalorder %s23, 0
          %s163 = scalar_select %p162, %s23, 0
          %s164 = sadd.s32 %s163, %s161
          %s165 = smul.addr %s164, 4
          %s166 = scalar_lea.vmem %s1, %s165
          %s167 = smul.u32 4, %s24
        $region16: #{transformer_forward.73} parent=11 // pred_fallthru
          _
        // Predicated region
        $region17: #{transformer_forward.73} parent=11 // pred_check
          %p168 = pneg %p113
        $region18: #{transformer_forward.73} parent=11 // pred_check_branch
          %170 = sbr.rel (%p168) target = $region20
        $region19: #{transformer_forward.73} parent=11 // pred_region
          %p171 = scmp.lt.s32.totalorder %s23, 0
          %s172 = scalar_select %p171, %s23, 0
          %s173 = scalar_lea.vmem %s2, %s172
        $region20: #{transformer_forward.73} parent=11 // pred_fallthru
          _
      $region12: #{transformer_forward.73} parent=5 // pred_fallthru
        _
      %p174 = scmp.lt.s32.totalorder %s12, 2
      // Predicated region
      $region21: #{transformer_forward.73} parent=5 // pred_check
        %p175 = pneg %p174
      $region22: #{transformer_forward.73} parent=5 // pred_check_branch
        %177 = sbr.rel (%p175) target = $region24
      $region23: #{transformer_forward.73} parent=5 // pred_region
        // Predicated region
        $region25: #{transformer_forward.73} parent=23 // pred_check
          %p178 = pneg %p53
        $region26: #{transformer_forward.73} parent=23 // pred_check_branch
          %180 = sbr.rel (%p178) target = $region28
        $region27: #{transformer_forward.73} parent=23 // pred_region
          %p181 = scmp.lt.s32.totalorder %s19, 1
          %s182 = scalar_select %p181, %s19, 1
          %p183 = scmp.lt.s32.totalorder %s21, 0
          %s184 = scalar_select %p183, %s21, 0
          %s185 = sadd.s32 %s184, %s182
          %s186 = smul.addr %s185, 4
          %s187 = scalar_lea.vmem %s0, %s186
        $region28: #{transformer_forward.73} parent=23 // pred_fallthru
          _
      $region24: #{transformer_forward.73} parent=5 // pred_fallthru
        _
      %p188 = scmp.le.s32.totalorder 1, %s12
      %p189 = scmp.lt.s32.totalorder %s12, 3
      %p190 = pnand %p188, %p189
      %p191 = pneg %p190
      // Predicated region
      $region29: #{transformer_forward.73} parent=5 // pred_check
        _
      $region30: #{transformer_forward.73} parent=5 // pred_check_branch
        %193 = sbr.rel (%p190) target = $region32
      $region31: #{transformer_forward.73} parent=5 // pred_region
        %s194 = ssub.s32 %s12, 1
        %p195 = scmp.lt.s32.totalorder %s22, 1
        %s196 = scalar_select %p195, %s22, 1
        %p197 = scmp.lt.s32.totalorder %s24, 0
        %s198 = scalar_select %p197, %s24, 0
        %s199 = sadd.s32 %s198, %s196
        %s200 = smul.addr %s199, 4
        %s201 = scalar_lea.vmem %s0, %s200
        %p202 = pneg %p59
        %p203 = pneg %p56
        %s204 = smul.u32 4, %s24
        %p205 = scmp.lt.s32.totalorder %s204, 3
        %s206 = scalar_select %p205, %s204, 3
        %p207 = scmp.lt.s32.totalorder %s23, 0
        %s208 = scalar_select %p207, %s23, 0
        %s209 = sadd.s32 %s208, %s206
        %s210 = smul.addr %s209, 4
        %s211 = scalar_lea.vmem %s1, %s210
        %p212 = pneg %p87
        %p213 = pneg %p84
        %p214 = scmp.lt.s32.totalorder %s23, 0
        %s215 = scalar_select %p214, %s23, 0
        %s216 = scalar_lea.vmem %s2, %s215
        %p217 = pneg %p113
        %p218 = pneg %p110
        %p219 = pneg %p141
        %p220 = pneg %p138
        %s221 = sand.u32 %s128, 1
        %s222 = scalar_lea.sflag [#allocation4], %s221
        %s223 = sand.u32 %s128, 1
        %s224 = smul.addr %s223, 8
        %s225 = scalar_lea.vmem [#allocation3], %s224
        %p226 = scmp.lt.s32.totalorder %s22, 1
        %s227 = scalar_select %p226, %s22, 1
        %p228 = scmp.lt.s32.totalorder %s24, 0
        %s229 = scalar_select %p228, %s24, 0
        %s230 = sadd.s32 %s229, %s227
        %s231 = smul.addr %s230, 4
        %s232 = scalar_lea.vmem %s0, %s231
        %s233 = smul.u32 4, %s24
        %p234 = scmp.lt.s32.totalorder %s233, 3
        %s235 = scalar_select %p234, %s233, 3
        %p236 = scmp.lt.s32.totalorder %s23, 0
        %s237 = scalar_select %p236, %s23, 0
        %s238 = sadd.s32 %s237, %s235
        %s239 = smul.addr %s238, 4
        %s240 = scalar_lea.vmem %s1, %s239
        %s241 = smul.u32 4, %s24
        %p242 = scmp.lt.s32.totalorder %s23, 0
        %s243 = scalar_select %p242, %s23, 0
        %s244 = scalar_lea.vmem %s2, %s243
        %p246 = scmp.eq.s32.totalorder %s24, 0
        // Predicated region
        $region33: #{transformer_forward.73} parent=31 // pred_check
          %p247 = pneg %p246
        $region34: #{transformer_forward.73} parent=31 // pred_check_branch
          %249 = sbr.rel (%p247) target = $region36
        $region35: #{transformer_forward.73} parent=31 // pred_region
          %vm250 = vcmask 130048
          %251 = vst.msk [vmem:[#allocation2] sm:$0xff] %vm250, 0.0
        $region36: #{transformer_forward.73} parent=31 // pred_fallthru
          _
        %v252 = vld [vmem:[#allocation2] sm:$0xff]
        %v253 = vld [vmem:[%s232] sm:$0xf]
        %v254 = vld [vmem:[%s240] sm:$0xf]
        %v255 = vld [vmem:[%s240 + $0x4] sm:$0xf]
        %v256 = vld [vmem:[%s240 + $0x8] sm:$0xf]
        %v257 = vld [vmem:[%s240 + $0xc] sm:$0xf]
        %v262 = vunpack.c.l.b16 %v254
        %v263 = vunpack.c.l.b16 %v255
        %v264 = vunpack.c.l.b16 %v256
        %v265 = vunpack.c.l.b16 %v257
        %v266 = vpack.c.b16 %v263, %v262
        %v267 = vpack.c.b16 %v265, %v264
        %vm270 = vcmask 261120
        %v272 = vsel %vm270, %v253, 0
        %274 = vmatpush.bf16.msra.mxu0 0
        %275 = vmatpush.bf16.msra.mxu0 0
        %276 = vmatpush.bf16.msra.mxu0 0
        %277 = vmatpush.bf16.msra.mxu0 0
        %278 = vmatpush.bf16.msra.mxu0 0
        %279 = vmatpush.bf16.msra.mxu0 0
        %280 = vmatpush.bf16.msra.mxu0 %v267
        %281 = vmatpush.bf16.msra.mxu0 %v266
        %282 = vmatmul.bf16.gmra.mxu0 %v272
        %v283 = vpop.f32.mrf.mxu0
        %v284 = vadd.f32 0.0, %v283
        %v285 = vpop.f32.mrf.mxu0
        %286 = vdwg.mxu0
        %v287 = vadd.f32 %v252, %v284
        %vm288 = vcmask 130048
        %289 = vst.msk [vmem:[#allocation2] sm:$0xff] %vm288, %v287
        // Predicated region
        $region37: #{transformer_forward.73} parent=31 // pred_check
          %p290 = pneg %p246
        $region38: #{transformer_forward.73} parent=31 // pred_check_branch
          %292 = sbr.rel (%p290) target = $region40
        $region39: #{transformer_forward.73} parent=31 // pred_region
          %v293 = vld [vmem:[#allocation2] sm:$0xff]
          %v294 = vld [vmem:[%s244] sm:$0x1]
          %v296 = vperm.slane %v294, 0
          %v298 = vadd.f32 %v293, %v296
          %299 = vst.msk [vmem:[%s225] sm:$0xff] %vm288, %v298
        $region40: #{transformer_forward.73} parent=31 // pred_fallthru
          _
        %s300 = sand.u32 %s128, 1
        %s301 = scalar_lea.sflag [#allocation4], %s300
        %s302 = sand.u32 %s128, 1
        %s303 = smul.addr %s302, 8
        %s304 = scalar_lea.vmem [#allocation3], %s303
        // Predicated region
        $region41: #{transformer_forward.73} parent=31 // pred_check
          %p305 = pneg %p138
        $region42: #{transformer_forward.73} parent=31 // pred_check_branch
          %307 = sbr.rel (%p305) target = $region44
        $region43: #{transformer_forward.73} parent=31 // pred_region
          %309 = vsyncadd %s301, 0
          %s310 = sadd.s32 %s23, %s22
          %s311 = smul.addr %s310, 8
          %s312 = scalar_lea.hbm %s3, %s311
          %s314 = sshll.u32 %s304, 4
          %s315 = int_to_ptr.vmem [resolvable:$true] %s314
          %s316 = sshll.u32 %s312, 4
          %s317 = int_to_ptr.hbm [resolvable:$true] %s316
          %319 = dma.vmem_to_hbm [thread:$0]  %s315, 128, %s317, %s301
        $region44: #{transformer_forward.73} parent=31 // pred_fallthru
          _
      $region32: #{transformer_forward.73} parent=5 // pred_fallthru
        _
      %p320 = scmp.le.s32.totalorder 2, %s12
      // Predicated region
      $region45: #{transformer_forward.73} parent=5 // pred_check
        %p321 = pneg %p320
      $region46: #{transformer_forward.73} parent=5 // pred_check_branch
        %323 = sbr.rel (%p321) target = $region48
      $region47: #{transformer_forward.73} parent=5 // pred_region
        %s324 = ssub.s32 %s12, 2
        // Predicated region
        $region49: #{transformer_forward.73} parent=47 // pred_check
          %p325 = pneg %p144
        $region50: #{transformer_forward.73} parent=47 // pred_check_branch
          %327 = sbr.rel (%p325) target = $region52
        $region51: #{transformer_forward.73} parent=47 // pred_region
          %s328 = sand.u32 %s129, 1
          %s329 = scalar_lea.sflag [#allocation4], %s328
          %s330 = sand.u32 %s129, 1
          %s331 = smul.addr %s330, 8
          %s332 = scalar_lea.vmem [#allocation3], %s331
          %334 = dma.done %s329, 128
        $region52: #{transformer_forward.73} parent=47 // pred_fallthru
          _
      $region48: #{transformer_forward.73} parent=5 // pred_fallthru
        _
    $region6: #{transformer_forward.73} parent=1 // loop_footer
      %s16 = sadd.s32 1, %s12
    $region7: #{transformer_forward.73} parent=1 // loop_footer_branch
      %11 = sbr.rel target = $region3
    $region8: #{transformer_forward.73} parent=1 // loop_exit
      _
    %335 = vsyncpa [#allocation4], 1
    %s336 = scalar_lea.sflag [#allocation4], 1
    %337 = vsyncpa %s336, 1

</llo_original>
